<compile_context>
chip_gen: v5e
topology: v5e:2x2
jax: 0.10.0
libtpu: 0.0.40
codegen_flags: <defaults>
</compile_context>

<pallas_src>
from functools import partial

import jax
import jax.numpy as jnp
from jax.experimental import pallas as pl
from jax.experimental.pallas import tpu as pltpu


# ----------------------------------------------------------------------------
# In-kernel helpers (operate on per-sample values resident in VMEM/vregs).
# ----------------------------------------------------------------------------
def _reflect_pad_hw(y):
    """(H, W, C) -> (H+2, W+2, C) with reflect padding of 1 (PyTorch 'reflect')."""
    H, W = y.shape[0], y.shape[1]
    y = jnp.concatenate([y[1:2], y, y[H - 2:H - 1]], axis=0)
    y = jnp.concatenate([y[:, 1:2, :], y, y[:, W - 2:W - 1, :]], axis=1)
    return y


def _im2col_4x4(xp, oh, ow, stride):
    """Reflect-padded (Hp, Wp, C) -> (oh*ow, 16*C) im2col for the 4x4 conv.

    All 16 taps are concatenated along the contraction (lane) axis so the conv
    becomes one MXU matmul.  Stride-2 is handled with row/column (pair, parity)
    split-reshapes: static ops only, no strided loads, no masks.
    """
    Hp, Wp, C = xp.shape
    cols = []
    if stride == 1:
        for kh in range(4):
            for kw in range(4):
                v = xp[kh:kh + oh, kw:kw + ow, :]
                cols.append(v.reshape(oh * ow, C))
    else:  # stride == 2  (Hp, Wp are even)
        hq, wq = Hp // 2, Wp // 2
        xr = xp.reshape(hq, 2, Wp, C)                        # row -> (pair, parity)
        for kh in range(4):
            rows = xr[kh // 2:kh // 2 + oh, kh % 2]          # (oh, Wp, C)
            rc = rows.reshape(oh, wq, 2, C)                  # col -> (pair, parity)
            for kw in range(4):
                v = rc[:, kw // 2:kw // 2 + ow, kw % 2, :]   # (oh, ow, C)
                cols.append(v.reshape(oh * ow, C))
    return jnp.concatenate(cols, axis=-1)                    # (oh*ow, 16*C)


def _fused_conv_layer(y, wm, b, g, bt, stride, act, eps=1e-5):
    """Conv2d(k=4, s=stride, p=1 reflect, bias) [+ InstanceNorm(affine)] + act.

    y: (H, W, Cin) value; wm: (16*Cin, Cout); b/g/bt: (1, Cout) or None.
    Returns the flat (oh*ow, Cout) activation and the output spatial dims.
    """
    H, W = y.shape[0], y.shape[1]
    oh, ow = (H // 2, W // 2) if stride == 2 else (H - 1, W - 1)

    lhs = _im2col_4x4(_reflect_pad_hw(y), oh, ow, stride)
    acc = jnp.dot(lhs, wm, preferred_element_type=jnp.float32) + b

    if g is not None:  # InstanceNorm2d(affine=True): per-sample, per-channel stats
        mu = jnp.mean(acc, axis=0, keepdims=True)
        xc = acc - mu
        var = jnp.mean(xc * xc, axis=0, keepdims=True)       # biased, as in torch
        acc = xc * jax.lax.rsqrt(var + eps) * g + bt

    if act == "lrelu":
        acc = jnp.where(acc > 0, acc, 0.2 * acc)
    elif act == "sigmoid":
        acc = 0.5 * (jnp.tanh(0.5 * acc) + 1.0)              # stable sigmoid (EUP tanh)
    return acc, oh, ow


def _discriminator_kernel(cfg, x_ref, *refs):
    """Whole 5-layer forward for one sample; activations never leave VMEM."""
    out_ref = refs[-1]
    prm = refs[:-1]

    y = x_ref[0]                                             # (H, W, Cin) f32
    acc = None
    pi = 0
    for li, (stride, act, has_norm) in enumerate(cfg):
        wm = prm[pi][...]
        b = prm[pi + 1][...]
        pi += 2
        if has_norm:
            g = prm[pi][...]
            bt = prm[pi + 1][...]
            pi += 2
        else:
            g = bt = None
        acc, oh, ow = _fused_conv_layer(y, wm, b, g, bt, stride, act)
        if li + 1 < len(cfg):
            y = acc.reshape(oh, ow, acc.shape[-1])
    out_ref[0] = acc                                         # (oh*ow, 1) patch logits


# ----------------------------------------------------------------------------
# Host-side wrapper: one pallas_call for the whole network.
# ----------------------------------------------------------------------------
def discriminator_forward(x_nchw, params):
    """NCHW input -> NCHW PatchGAN map; fully fused on-TPU."""
    x = jnp.transpose(x_nchw, (0, 2, 3, 1)).astype(jnp.float32)   # NHWC once
    N, H, W, Cin = x.shape

    flat, cfg = [], []

    def add(w, b, gamma, beta, stride, act):
        cout, cin = w.shape[0], w.shape[1]
        # (Cout, Cin, 4, 4) -> (kh, kw, Cin, Cout) -> (16*Cin, Cout): matches the
        # im2col column ordering (tap-major, channel-minor).
        wm = jnp.transpose(w, (2, 3, 1, 0)).reshape(16 * cin, cout)
        flat.append(wm.astype(jnp.float32))
        flat.append(b.reshape(1, cout).astype(jnp.float32))
        if gamma is not None:
            flat.append(gamma.reshape(1, cout).astype(jnp.float32))
            flat.append(beta.reshape(1, cout).astype(jnp.float32))
        cfg.append((stride, act, gamma is not None))

    add(params["init_w"], params["init_b"], None, None, 2, "lrelu")
    nblk = len(params["blocks"])
    for i, blk in enumerate(params["blocks"]):
        add(blk["w"], blk["b"], blk["gamma"], blk["beta"],
            1 if i == nblk - 1 else 2, "lrelu")
    add(params["final_w"], params["final_b"], None, None, 1, "sigmoid")

    oh, ow = H, W
    for stride, _, _ in cfg:
        oh, ow = (oh // 2, ow // 2) if stride == 2 else (oh - 1, ow - 1)

    in_specs = [pl.BlockSpec((1, H, W, Cin), lambda n: (n, 0, 0, 0))]
    in_specs += [pl.BlockSpec(p.shape, lambda n: (0, 0)) for p in flat]

    out = pl.pallas_call(
        partial(_discriminator_kernel, tuple(cfg)),
        out_shape=jax.ShapeDtypeStruct((N, oh * ow, 1), jnp.float32),
        grid=(N,),
        in_specs=in_specs,
        out_specs=pl.BlockSpec((1, oh * ow, 1), lambda n: (n, 0, 0)),
        compiler_params=pltpu.CompilerParams(
            # Batch axis: one sample per TensorCore on multi-core parts; a cheap
            # 2-step serial loop (each step = a full 5-layer forward) on v5e/v6e.
            dimension_semantics=("parallel",),
            # Explicit scoped-VMEM budget (tiny fraction is used at these shapes;
            # safe on every generation incl. v7x's 64 MiB physical VMEM).
            vmem_limit_bytes=32 * 1024 * 1024,
        ),
    )(x, *flat)

    # (N, oh*ow, 1) -> NCHW (N, 1, oh, ow): one tiny boundary reshape/transpose.
    return out.reshape(N, oh, ow, 1).transpose(0, 3, 1, 2)


# ----------------------------------------------------------------------------
# Parameters + pure-JAX reference (for a correctness check in __main__).
# ----------------------------------------------------------------------------
def init_discriminator_params(key, in_channels=3, features=(8, 16, 32, 64)):
    params = {}
    k = key

    def nrm(kk, shape, scale=0.05):
        return jax.random.normal(kk, shape, jnp.float32) * scale

    k, k1, k2 = jax.random.split(k, 3)
    params["init_w"] = nrm(k1, (features[0], in_channels, 4, 4))
    params["init_b"] = nrm(k2, (features[0],))

    blocks = []
    cin = features[0]
    for feature in features[1:]:
        k, k1, k2, k3, k4 = jax.random.split(k, 5)
        blocks.append({
            "w": nrm(k1, (feature, cin, 4, 4)),
            "b": nrm(k2, (feature,)),
            "gamma": 1.0 + nrm(k3, (feature,)),   # InstanceNorm2d(affine=True)
            "beta": nrm(k4, (feature,)),
        })
        cin = feature
    params["blocks"] = blocks

    k, k1, k2 = jax.random.split(k, 3)
    params["final_w"] = nrm(k1, (1, cin, 4, 4))
    params["final_b"] = nrm(k2, (1,))
    return params


def _reference_forward(x_nchw, params):
    """Pure-JAX (lax.conv) reference of the PyTorch module, NCHW end to end."""
    def conv(x, w, b, stride):
        xp = jnp.pad(x, ((0, 0), (0, 0), (1, 1), (1, 1)), mode="reflect")
        y = jax.lax.conv_general_dilated(
            xp, w, (stride, stride), "VALID",
            dimension_numbers=("NCHW", "OIHW", "NCHW"),
            precision=jax.lax.Precision.HIGHEST)
        return y + b.reshape(1, -1, 1, 1)

    def inorm(x, g, bt, eps=1e-5):
        mu = x.mean(axis=(2, 3), keepdims=True)
        var = ((x - mu) ** 2).mean(axis=(2, 3), keepdims=True)
        return (x - mu) * jax.lax.rsqrt(var + eps) * g.reshape(1, -1, 1, 1) \
            + bt.reshape(1, -1, 1, 1)

    lrelu = lambda v: jnp.where(v > 0, v, 0.2 * v)

    y = lrelu(conv(x_nchw, params["init_w"], params["init_b"], 2))
    nblk = len(params["blocks"])
    for i, blk in enumerate(params["blocks"]):
        s = 1 if i == nblk - 1 else 2
        y = lrelu(inorm(conv(y, blk["w"], blk["b"], s), blk["gamma"], blk["beta"]))
    y = conv(y, params["final_w"], params["final_b"], 1)
    return jax.nn.sigmoid(y)


if __name__ == "__main__":
    key = jax.random.PRNGKey(0)
    kx, kp = jax.random.split(key)

    # Small shapes consistent with the module: NCHW input, scaled-down features.
    N, C, H, W = 2, 3, 32, 32
    x = jax.random.normal(kx, (N, C, H, W), jnp.float32)
    params = init_discriminator_params(kp, in_channels=C, features=(8, 16, 32, 64))

    fwd = jax.jit(discriminator_forward)
    out = jax.block_until_ready(fwd(x, params))

    # Shape / range sanity: 32 -> 16 -> 8 -> 4 -> 3 -> 2 spatial, 1 channel, sigmoid.
    assert out.shape == (N, 1, 2, 2), out.shape
    assert bool(jnp.all(jnp.isfinite(out)))
    assert bool(jnp.all((out >= 0.0) & (out <= 1.0)))

    # Numerical check against a pure-JAX reference (tolerance covers MXU
    # precision differences between the Pallas matmuls and lax.conv).
    ref = jax.block_until_ready(jax.jit(_reference_forward)(x, params))
    err = float(jnp.max(jnp.abs(out - ref)))
    assert err < 2e-2, f"max abs err vs reference: {err}"

    print("KERNEL_OK")
</pallas_src>

<mosaic_0001>
module attributes {stable_mosaic.version = 11 : i64} {
  func.func @_discriminator_kernel(%arg0: i32, %arg1: memref<1x32x32x3xf32, #tpu.memory_space<vmem>>, %arg2: memref<48x8xf32, #tpu.memory_space<vmem>>, %arg3: memref<1x8xf32, #tpu.memory_space<vmem>>, %arg4: memref<128x16xf32, #tpu.memory_space<vmem>>, %arg5: memref<1x16xf32, #tpu.memory_space<vmem>>, %arg6: memref<1x16xf32, #tpu.memory_space<vmem>>, %arg7: memref<1x16xf32, #tpu.memory_space<vmem>>, %arg8: memref<256x32xf32, #tpu.memory_space<vmem>>, %arg9: memref<1x32xf32, #tpu.memory_space<vmem>>, %arg10: memref<1x32xf32, #tpu.memory_space<vmem>>, %arg11: memref<1x32xf32, #tpu.memory_space<vmem>>, %arg12: memref<512x64xf32, #tpu.memory_space<vmem>>, %arg13: memref<1x64xf32, #tpu.memory_space<vmem>>, %arg14: memref<1x64xf32, #tpu.memory_space<vmem>>, %arg15: memref<1x64xf32, #tpu.memory_space<vmem>>, %arg16: memref<1024x1xf32, #tpu.memory_space<vmem>>, %arg17: memref<1x1xf32, #tpu.memory_space<vmem>>, %arg18: memref<1x4x1xf32, #tpu.memory_space<vmem>>) attributes {dimension_semantics = [#tpu.dimension_semantics<parallel>], iteration_bounds = array<i64: 2>, scalar_prefetch = 0 : i64, scratch_operands = 0 : i64, tpu.core_type = #tpu.core_type<tc>, window_params = [{transform_indices = @transform_0, window_bounds = array<i64: 1, 32, 32, 3>}, {pipeline_mode = #tpu.pipeline_mode<synchronous>, transform_indices = @transform_1, window_bounds = array<i64: 48, 8>}, {pipeline_mode = #tpu.pipeline_mode<synchronous>, transform_indices = @transform_2, window_bounds = array<i64: 1, 8>}, {pipeline_mode = #tpu.pipeline_mode<synchronous>, transform_indices = @transform_3, window_bounds = array<i64: 128, 16>}, {pipeline_mode = #tpu.pipeline_mode<synchronous>, transform_indices = @transform_4, window_bounds = array<i64: 1, 16>}, {pipeline_mode = #tpu.pipeline_mode<synchronous>, transform_indices = @transform_5, window_bounds = array<i64: 1, 16>}, {pipeline_mode = #tpu.pipeline_mode<synchronous>, transform_indices = @transform_6, window_bounds = array<i64: 1, 16>}, {pipeline_mode = #tpu.pipeline_mode<synchronous>, transform_indices = @transform_7, window_bounds = array<i64: 256, 32>}, {pipeline_mode = #tpu.pipeline_mode<synchronous>, transform_indices = @transform_8, window_bounds = array<i64: 1, 32>}, {pipeline_mode = #tpu.pipeline_mode<synchronous>, transform_indices = @transform_9, window_bounds = array<i64: 1, 32>}, {pipeline_mode = #tpu.pipeline_mode<synchronous>, transform_indices = @transform_10, window_bounds = array<i64: 1, 32>}, {pipeline_mode = #tpu.pipeline_mode<synchronous>, transform_indices = @transform_11, window_bounds = array<i64: 512, 64>}, {pipeline_mode = #tpu.pipeline_mode<synchronous>, transform_indices = @transform_12, window_bounds = array<i64: 1, 64>}, {pipeline_mode = #tpu.pipeline_mode<synchronous>, transform_indices = @transform_13, window_bounds = array<i64: 1, 64>}, {pipeline_mode = #tpu.pipeline_mode<synchronous>, transform_indices = @transform_14, window_bounds = array<i64: 1, 64>}, {pipeline_mode = #tpu.pipeline_mode<synchronous>, transform_indices = @transform_15, window_bounds = array<i64: 1024, 1>}, {pipeline_mode = #tpu.pipeline_mode<synchronous>, transform_indices = @transform_16, window_bounds = array<i64: 1, 1>}, {transform_indices = @transform_17, window_bounds = array<i64: 1, 4, 1>}]} {
    %c0 = arith.constant 0 : index
    %c0_0 = arith.constant 0 : index
    %c0_1 = arith.constant 0 : index
    %c0_2 = arith.constant 0 : index
    %0 = vector.load %arg1[%c0, %c0_0, %c0_1, %c0_2] : memref<1x32x32x3xf32, #tpu.memory_space<vmem>>, vector<1x32x32x3xf32>
    %1 = vector.shape_cast %0 : vector<1x32x32x3xf32> to vector<32x32x3xf32>
    %c0_3 = arith.constant 0 : index
    %c0_4 = arith.constant 0 : index
    %2 = vector.load %arg2[%c0_3, %c0_4] : memref<48x8xf32, #tpu.memory_space<vmem>>, vector<48x8xf32>
    %c0_5 = arith.constant 0 : index
    %c0_6 = arith.constant 0 : index
    %3 = vector.load %arg3[%c0_5, %c0_6] : memref<1x8xf32, #tpu.memory_space<vmem>>, vector<1x8xf32>
    %4 = vector.extract_strided_slice %1 {offsets = [1, 0, 0], sizes = [1, 32, 3], strides = [1, 1, 1]} : vector<32x32x3xf32> to vector<1x32x3xf32>
    %5 = vector.extract_strided_slice %1 {offsets = [30, 0, 0], sizes = [1, 32, 3], strides = [1, 1, 1]} : vector<32x32x3xf32> to vector<1x32x3xf32>
    %6 = tpu.concatenate %4, %1, %5 in 0 : vector<1x32x3xf32>, vector<32x32x3xf32>, vector<1x32x3xf32> -> vector<34x32x3xf32>
    %7 = vector.extract_strided_slice %6 {offsets = [0, 1, 0], sizes = [34, 1, 3], strides = [1, 1, 1]} : vector<34x32x3xf32> to vector<34x1x3xf32>
    %8 = vector.extract_strided_slice %6 {offsets = [0, 30, 0], sizes = [34, 1, 3], strides = [1, 1, 1]} : vector<34x32x3xf32> to vector<34x1x3xf32>
    %9 = tpu.concatenate %7, %6, %8 in 1 : vector<34x1x3xf32>, vector<34x32x3xf32>, vector<34x1x3xf32> -> vector<34x34x3xf32>
    %10 = vector.shape_cast %9 : vector<34x34x3xf32> to vector<17x2x34x3xf32>
    %11 = vector.extract_strided_slice %10 {offsets = [0, 0, 0, 0], sizes = [16, 1, 34, 3], strides = [1, 1, 1, 1]} : vector<17x2x34x3xf32> to vector<16x1x34x3xf32>
    %12 = vector.shape_cast %11 : vector<16x1x34x3xf32> to vector<16x34x3xf32>
    %13 = vector.shape_cast %12 : vector<16x34x3xf32> to vector<16x17x2x3xf32>
    %14 = vector.extract_strided_slice %13 {offsets = [0, 0, 0, 0], sizes = [16, 16, 1, 3], strides = [1, 1, 1, 1]} : vector<16x17x2x3xf32> to vector<16x16x1x3xf32>
    %15 = vector.shape_cast %14 : vector<16x16x1x3xf32> to vector<16x16x3xf32>
    %16 = vector.shape_cast %15 : vector<16x16x3xf32> to vector<256x3xf32>
    %17 = vector.extract_strided_slice %13 {offsets = [0, 0, 1, 0], sizes = [16, 16, 1, 3], strides = [1, 1, 1, 1]} : vector<16x17x2x3xf32> to vector<16x16x1x3xf32>
    %18 = vector.shape_cast %17 : vector<16x16x1x3xf32> to vector<16x16x3xf32>
    %19 = vector.shape_cast %18 : vector<16x16x3xf32> to vector<256x3xf32>
    %20 = vector.extract_strided_slice %13 {offsets = [0, 1, 0, 0], sizes = [16, 16, 1, 3], strides = [1, 1, 1, 1]} : vector<16x17x2x3xf32> to vector<16x16x1x3xf32>
    %21 = vector.shape_cast %20 : vector<16x16x1x3xf32> to vector<16x16x3xf32>
    %22 = vector.shape_cast %21 : vector<16x16x3xf32> to vector<256x3xf32>
    %23 = vector.extract_strided_slice %13 {offsets = [0, 1, 1, 0], sizes = [16, 16, 1, 3], strides = [1, 1, 1, 1]} : vector<16x17x2x3xf32> to vector<16x16x1x3xf32>
    %24 = vector.shape_cast %23 : vector<16x16x1x3xf32> to vector<16x16x3xf32>
    %25 = vector.shape_cast %24 : vector<16x16x3xf32> to vector<256x3xf32>
    %26 = vector.extract_strided_slice %10 {offsets = [0, 1, 0, 0], sizes = [16, 1, 34, 3], strides = [1, 1, 1, 1]} : vector<17x2x34x3xf32> to vector<16x1x34x3xf32>
    %27 = vector.shape_cast %26 : vector<16x1x34x3xf32> to vector<16x34x3xf32>
    %28 = vector.shape_cast %27 : vector<16x34x3xf32> to vector<16x17x2x3xf32>
    %29 = vector.extract_strided_slice %28 {offsets = [0, 0, 0, 0], sizes = [16, 16, 1, 3], strides = [1, 1, 1, 1]} : vector<16x17x2x3xf32> to vector<16x16x1x3xf32>
    %30 = vector.shape_cast %29 : vector<16x16x1x3xf32> to vector<16x16x3xf32>
    %31 = vector.shape_cast %30 : vector<16x16x3xf32> to vector<256x3xf32>
    %32 = vector.extract_strided_slice %28 {offsets = [0, 0, 1, 0], sizes = [16, 16, 1, 3], strides = [1, 1, 1, 1]} : vector<16x17x2x3xf32> to vector<16x16x1x3xf32>
    %33 = vector.shape_cast %32 : vector<16x16x1x3xf32> to vector<16x16x3xf32>
    %34 = vector.shape_cast %33 : vector<16x16x3xf32> to vector<256x3xf32>
    %35 = vector.extract_strided_slice %28 {offsets = [0, 1, 0, 0], sizes = [16, 16, 1, 3], strides = [1, 1, 1, 1]} : vector<16x17x2x3xf32> to vector<16x16x1x3xf32>
    %36 = vector.shape_cast %35 : vector<16x16x1x3xf32> to vector<16x16x3xf32>
    %37 = vector.shape_cast %36 : vector<16x16x3xf32> to vector<256x3xf32>
    %38 = vector.extract_strided_slice %28 {offsets = [0, 1, 1, 0], sizes = [16, 16, 1, 3], strides = [1, 1, 1, 1]} : vector<16x17x2x3xf32> to vector<16x16x1x3xf32>
    %39 = vector.shape_cast %38 : vector<16x16x1x3xf32> to vector<16x16x3xf32>
    %40 = vector.shape_cast %39 : vector<16x16x3xf32> to vector<256x3xf32>
    %41 = vector.extract_strided_slice %10 {offsets = [1, 0, 0, 0], sizes = [16, 1, 34, 3], strides = [1, 1, 1, 1]} : vector<17x2x34x3xf32> to vector<16x1x34x3xf32>
    %42 = vector.shape_cast %41 : vector<16x1x34x3xf32> to vector<16x34x3xf32>
    %43 = vector.shape_cast %42 : vector<16x34x3xf32> to vector<16x17x2x3xf32>
    %44 = vector.extract_strided_slice %43 {offsets = [0, 0, 0, 0], sizes = [16, 16, 1, 3], strides = [1, 1, 1, 1]} : vector<16x17x2x3xf32> to vector<16x16x1x3xf32>
    %45 = vector.shape_cast %44 : vector<16x16x1x3xf32> to vector<16x16x3xf32>
    %46 = vector.shape_cast %45 : vector<16x16x3xf32> to vector<256x3xf32>
    %47 = vector.extract_strided_slice %43 {offsets = [0, 0, 1, 0], sizes = [16, 16, 1, 3], strides = [1, 1, 1, 1]} : vector<16x17x2x3xf32> to vector<16x16x1x3xf32>
    %48 = vector.shape_cast %47 : vector<16x16x1x3xf32> to vector<16x16x3xf32>
    %49 = vector.shape_cast %48 : vector<16x16x3xf32> to vector<256x3xf32>
    %50 = vector.extract_strided_slice %43 {offsets = [0, 1, 0, 0], sizes = [16, 16, 1, 3], strides = [1, 1, 1, 1]} : vector<16x17x2x3xf32> to vector<16x16x1x3xf32>
    %51 = vector.shape_cast %50 : vector<16x16x1x3xf32> to vector<16x16x3xf32>
    %52 = vector.shape_cast %51 : vector<16x16x3xf32> to vector<256x3xf32>
    %53 = vector.extract_strided_slice %43 {offsets = [0, 1, 1, 0], sizes = [16, 16, 1, 3], strides = [1, 1, 1, 1]} : vector<16x17x2x3xf32> to vector<16x16x1x3xf32>
    %54 = vector.shape_cast %53 : vector<16x16x1x3xf32> to vector<16x16x3xf32>
    %55 = vector.shape_cast %54 : vector<16x16x3xf32> to vector<256x3xf32>
    %56 = vector.extract_strided_slice %10 {offsets = [1, 1, 0, 0], sizes = [16, 1, 34, 3], strides = [1, 1, 1, 1]} : vector<17x2x34x3xf32> to vector<16x1x34x3xf32>
    %57 = vector.shape_cast %56 : vector<16x1x34x3xf32> to vector<16x34x3xf32>
    %58 = vector.shape_cast %57 : vector<16x34x3xf32> to vector<16x17x2x3xf32>
    %59 = vector.extract_strided_slice %58 {offsets = [0, 0, 0, 0], sizes = [16, 16, 1, 3], strides = [1, 1, 1, 1]} : vector<16x17x2x3xf32> to vector<16x16x1x3xf32>
    %60 = vector.shape_cast %59 : vector<16x16x1x3xf32> to vector<16x16x3xf32>
    %61 = vector.shape_cast %60 : vector<16x16x3xf32> to vector<256x3xf32>
    %62 = vector.extract_strided_slice %58 {offsets = [0, 0, 1, 0], sizes = [16, 16, 1, 3], strides = [1, 1, 1, 1]} : vector<16x17x2x3xf32> to vector<16x16x1x3xf32>
    %63 = vector.shape_cast %62 : vector<16x16x1x3xf32> to vector<16x16x3xf32>
    %64 = vector.shape_cast %63 : vector<16x16x3xf32> to vector<256x3xf32>
    %65 = vector.extract_strided_slice %58 {offsets = [0, 1, 0, 0], sizes = [16, 16, 1, 3], strides = [1, 1, 1, 1]} : vector<16x17x2x3xf32> to vector<16x16x1x3xf32>
    %66 = vector.shape_cast %65 : vector<16x16x1x3xf32> to vector<16x16x3xf32>
    %67 = vector.shape_cast %66 : vector<16x16x3xf32> to vector<256x3xf32>
    %68 = vector.extract_strided_slice %58 {offsets = [0, 1, 1, 0], sizes = [16, 16, 1, 3], strides = [1, 1, 1, 1]} : vector<16x17x2x3xf32> to vector<16x16x1x3xf32>
    %69 = vector.shape_cast %68 : vector<16x16x1x3xf32> to vector<16x16x3xf32>
    %70 = vector.shape_cast %69 : vector<16x16x3xf32> to vector<256x3xf32>
    %71 = tpu.concatenate %16, %19, %22, %25, %31, %34, %37, %40, %46, %49, %52, %55, %61, %64, %67, %70 in 1 : vector<256x3xf32>, vector<256x3xf32>, vector<256x3xf32>, vector<256x3xf32>, vector<256x3xf32>, vector<256x3xf32>, vector<256x3xf32>, vector<256x3xf32>, vector<256x3xf32>, vector<256x3xf32>, vector<256x3xf32>, vector<256x3xf32>, vector<256x3xf32>, vector<256x3xf32>, vector<256x3xf32>, vector<256x3xf32> -> vector<256x48xf32>
    %cst = arith.constant dense<0.000000e+00> : vector<256x8xf32>
    %72 = tpu.matmul %71, %2, %cst {dimension_numbers = #tpu.dot_dimension_numbers<[1], [0], [0], [1], [0, 0, 1, 1], [], []>} : vector<256x48xf32>, vector<48x8xf32>, vector<256x8xf32> -> vector<256x8xf32>
    %73 = vector.broadcast %3 : vector<1x8xf32> to vector<256x8xf32>
    %74 = arith.addf %72, %73 : vector<256x8xf32>
    %cst_7 = arith.constant 0.000000e+00 : f32
    %75 = vector.broadcast %cst_7 : f32 to vector<256x8xf32>
    %76 = arith.cmpf ogt, %74, %75 : vector<256x8xf32>
    %cst_8 = arith.constant 2.000000e-01 : f32
    %77 = vector.broadcast %cst_8 : f32 to vector<256x8xf32>
    %78 = arith.mulf %77, %74 : vector<256x8xf32>
    %79 = arith.select %76, %74, %78 : vector<256x8xi1>, vector<256x8xf32>
    %80 = vector.shape_cast %79 : vector<256x8xf32> to vector<16x16x8xf32>
    %c0_9 = arith.constant 0 : index
    %c0_10 = arith.constant 0 : index
    %81 = vector.load %arg4[%c0_9, %c0_10] : memref<128x16xf32, #tpu.memory_space<vmem>>, vector<128x16xf32>
    %c0_11 = arith.constant 0 : index
    %c0_12 = arith.constant 0 : index
    %82 = vector.load %arg5[%c0_11, %c0_12] : memref<1x16xf32, #tpu.memory_space<vmem>>, vector<1x16xf32>
    %c0_13 = arith.constant 0 : index
    %c0_14 = arith.constant 0 : index
    %83 = vector.load %arg6[%c0_13, %c0_14] : memref<1x16xf32, #tpu.memory_space<vmem>>, vector<1x16xf32>
    %c0_15 = arith.constant 0 : index
    %c0_16 = arith.constant 0 : index
    %84 = vector.load %arg7[%c0_15, %c0_16] : memref<1x16xf32, #tpu.memory_space<vmem>>, vector<1x16xf32>
    %85 = vector.extract_strided_slice %80 {offsets = [1, 0, 0], sizes = [1, 16, 8], strides = [1, 1, 1]} : vector<16x16x8xf32> to vector<1x16x8xf32>
    %86 = vector.extract_strided_slice %80 {offsets = [14, 0, 0], sizes = [1, 16, 8], strides = [1, 1, 1]} : vector<16x16x8xf32> to vector<1x16x8xf32>
    %87 = tpu.concatenate %85, %80, %86 in 0 : vector<1x16x8xf32>, vector<16x16x8xf32>, vector<1x16x8xf32> -> vector<18x16x8xf32>
    %88 = vector.extract_strided_slice %87 {offsets = [0, 1, 0], sizes = [18, 1, 8], strides = [1, 1, 1]} : vector<18x16x8xf32> to vector<18x1x8xf32>
    %89 = vector.extract_strided_slice %87 {offsets = [0, 14, 0], sizes = [18, 1, 8], strides = [1, 1, 1]} : vector<18x16x8xf32> to vector<18x1x8xf32>
    %90 = tpu.concatenate %88, %87, %89 in 1 : vector<18x1x8xf32>, vector<18x16x8xf32>, vector<18x1x8xf32> -> vector<18x18x8xf32>
    %91 = vector.shape_cast %90 : vector<18x18x8xf32> to vector<9x2x18x8xf32>
    %92 = vector.extract_strided_slice %91 {offsets = [0, 0, 0, 0], sizes = [8, 1, 18, 8], strides = [1, 1, 1, 1]} : vector<9x2x18x8xf32> to vector<8x1x18x8xf32>
    %93 = vector.shape_cast %92 : vector<8x1x18x8xf32> to vector<8x18x8xf32>
    %94 = vector.shape_cast %93 : vector<8x18x8xf32> to vector<8x9x2x8xf32>
    %95 = vector.extract_strided_slice %94 {offsets = [0, 0, 0, 0], sizes = [8, 8, 1, 8], strides = [1, 1, 1, 1]} : vector<8x9x2x8xf32> to vector<8x8x1x8xf32>
    %96 = vector.shape_cast %95 : vector<8x8x1x8xf32> to vector<8x8x8xf32>
    %97 = vector.shape_cast %96 : vector<8x8x8xf32> to vector<64x8xf32>
    %98 = vector.extract_strided_slice %94 {offsets = [0, 0, 1, 0], sizes = [8, 8, 1, 8], strides = [1, 1, 1, 1]} : vector<8x9x2x8xf32> to vector<8x8x1x8xf32>
    %99 = vector.shape_cast %98 : vector<8x8x1x8xf32> to vector<8x8x8xf32>
    %100 = vector.shape_cast %99 : vector<8x8x8xf32> to vector<64x8xf32>
    %101 = vector.extract_strided_slice %94 {offsets = [0, 1, 0, 0], sizes = [8, 8, 1, 8], strides = [1, 1, 1, 1]} : vector<8x9x2x8xf32> to vector<8x8x1x8xf32>
    %102 = vector.shape_cast %101 : vector<8x8x1x8xf32> to vector<8x8x8xf32>
    %103 = vector.shape_cast %102 : vector<8x8x8xf32> to vector<64x8xf32>
    %104 = vector.extract_strided_slice %94 {offsets = [0, 1, 1, 0], sizes = [8, 8, 1, 8], strides = [1, 1, 1, 1]} : vector<8x9x2x8xf32> to vector<8x8x1x8xf32>
    %105 = vector.shape_cast %104 : vector<8x8x1x8xf32> to vector<8x8x8xf32>
    %106 = vector.shape_cast %105 : vector<8x8x8xf32> to vector<64x8xf32>
    %107 = vector.extract_strided_slice %91 {offsets = [0, 1, 0, 0], sizes = [8, 1, 18, 8], strides = [1, 1, 1, 1]} : vector<9x2x18x8xf32> to vector<8x1x18x8xf32>
    %108 = vector.shape_cast %107 : vector<8x1x18x8xf32> to vector<8x18x8xf32>
    %109 = vector.shape_cast %108 : vector<8x18x8xf32> to vector<8x9x2x8xf32>
    %110 = vector.extract_strided_slice %109 {offsets = [0, 0, 0, 0], sizes = [8, 8, 1, 8], strides = [1, 1, 1, 1]} : vector<8x9x2x8xf32> to vector<8x8x1x8xf32>
    %111 = vector.shape_cast %110 : vector<8x8x1x8xf32> to vector<8x8x8xf32>
    %112 = vector.shape_cast %111 : vector<8x8x8xf32> to vector<64x8xf32>
    %113 = vector.extract_strided_slice %109 {offsets = [0, 0, 1, 0], sizes = [8, 8, 1, 8], strides = [1, 1, 1, 1]} : vector<8x9x2x8xf32> to vector<8x8x1x8xf32>
    %114 = vector.shape_cast %113 : vector<8x8x1x8xf32> to vector<8x8x8xf32>
    %115 = vector.shape_cast %114 : vector<8x8x8xf32> to vector<64x8xf32>
    %116 = vector.extract_strided_slice %109 {offsets = [0, 1, 0, 0], sizes = [8, 8, 1, 8], strides = [1, 1, 1, 1]} : vector<8x9x2x8xf32> to vector<8x8x1x8xf32>
    %117 = vector.shape_cast %116 : vector<8x8x1x8xf32> to vector<8x8x8xf32>
    %118 = vector.shape_cast %117 : vector<8x8x8xf32> to vector<64x8xf32>
    %119 = vector.extract_strided_slice %109 {offsets = [0, 1, 1, 0], sizes = [8, 8, 1, 8], strides = [1, 1, 1, 1]} : vector<8x9x2x8xf32> to vector<8x8x1x8xf32>
    %120 = vector.shape_cast %119 : vector<8x8x1x8xf32> to vector<8x8x8xf32>
    %121 = vector.shape_cast %120 : vector<8x8x8xf32> to vector<64x8xf32>
    %122 = vector.extract_strided_slice %91 {offsets = [1, 0, 0, 0], sizes = [8, 1, 18, 8], strides = [1, 1, 1, 1]} : vector<9x2x18x8xf32> to vector<8x1x18x8xf32>
    %123 = vector.shape_cast %122 : vector<8x1x18x8xf32> to vector<8x18x8xf32>
    %124 = vector.shape_cast %123 : vector<8x18x8xf32> to vector<8x9x2x8xf32>
    %125 = vector.extract_strided_slice %124 {offsets = [0, 0, 0, 0], sizes = [8, 8, 1, 8], strides = [1, 1, 1, 1]} : vector<8x9x2x8xf32> to vector<8x8x1x8xf32>
    %126 = vector.shape_cast %125 : vector<8x8x1x8xf32> to vector<8x8x8xf32>
    %127 = vector.shape_cast %126 : vector<8x8x8xf32> to vector<64x8xf32>
    %128 = vector.extract_strided_slice %124 {offsets = [0, 0, 1, 0], sizes = [8, 8, 1, 8], strides = [1, 1, 1, 1]} : vector<8x9x2x8xf32> to vector<8x8x1x8xf32>
    %129 = vector.shape_cast %128 : vector<8x8x1x8xf32> to vector<8x8x8xf32>
    %130 = vector.shape_cast %129 : vector<8x8x8xf32> to vector<64x8xf32>
    %131 = vector.extract_strided_slice %124 {offsets = [0, 1, 0, 0], sizes = [8, 8, 1, 8], strides = [1, 1, 1, 1]} : vector<8x9x2x8xf32> to vector<8x8x1x8xf32>
    %132 = vector.shape_cast %131 : vector<8x8x1x8xf32> to vector<8x8x8xf32>
    %133 = vector.shape_cast %132 : vector<8x8x8xf32> to vector<64x8xf32>
    %134 = vector.extract_strided_slice %124 {offsets = [0, 1, 1, 0], sizes = [8, 8, 1, 8], strides = [1, 1, 1, 1]} : vector<8x9x2x8xf32> to vector<8x8x1x8xf32>
    %135 = vector.shape_cast %134 : vector<8x8x1x8xf32> to vector<8x8x8xf32>
    %136 = vector.shape_cast %135 : vector<8x8x8xf32> to vector<64x8xf32>
    %137 = vector.extract_strided_slice %91 {offsets = [1, 1, 0, 0], sizes = [8, 1, 18, 8], strides = [1, 1, 1, 1]} : vector<9x2x18x8xf32> to vector<8x1x18x8xf32>
    %138 = vector.shape_cast %137 : vector<8x1x18x8xf32> to vector<8x18x8xf32>
    %139 = vector.shape_cast %138 : vector<8x18x8xf32> to vector<8x9x2x8xf32>
    %140 = vector.extract_strided_slice %139 {offsets = [0, 0, 0, 0], sizes = [8, 8, 1, 8], strides = [1, 1, 1, 1]} : vector<8x9x2x8xf32> to vector<8x8x1x8xf32>
    %141 = vector.shape_cast %140 : vector<8x8x1x8xf32> to vector<8x8x8xf32>
    %142 = vector.shape_cast %141 : vector<8x8x8xf32> to vector<64x8xf32>
    %143 = vector.extract_strided_slice %139 {offsets = [0, 0, 1, 0], sizes = [8, 8, 1, 8], strides = [1, 1, 1, 1]} : vector<8x9x2x8xf32> to vector<8x8x1x8xf32>
    %144 = vector.shape_cast %143 : vector<8x8x1x8xf32> to vector<8x8x8xf32>
    %145 = vector.shape_cast %144 : vector<8x8x8xf32> to vector<64x8xf32>
    %146 = vector.extract_strided_slice %139 {offsets = [0, 1, 0, 0], sizes = [8, 8, 1, 8], strides = [1, 1, 1, 1]} : vector<8x9x2x8xf32> to vector<8x8x1x8xf32>
    %147 = vector.shape_cast %146 : vector<8x8x1x8xf32> to vector<8x8x8xf32>
    %148 = vector.shape_cast %147 : vector<8x8x8xf32> to vector<64x8xf32>
    %149 = vector.extract_strided_slice %139 {offsets = [0, 1, 1, 0], sizes = [8, 8, 1, 8], strides = [1, 1, 1, 1]} : vector<8x9x2x8xf32> to vector<8x8x1x8xf32>
    %150 = vector.shape_cast %149 : vector<8x8x1x8xf32> to vector<8x8x8xf32>
    %151 = vector.shape_cast %150 : vector<8x8x8xf32> to vector<64x8xf32>
    %152 = tpu.concatenate %97, %100, %103, %106, %112, %115, %118, %121, %127, %130, %133, %136, %142, %145, %148, %151 in 1 : vector<64x8xf32>, vector<64x8xf32>, vector<64x8xf32>, vector<64x8xf32>, vector<64x8xf32>, vector<64x8xf32>, vector<64x8xf32>, vector<64x8xf32>, vector<64x8xf32>, vector<64x8xf32>, vector<64x8xf32>, vector<64x8xf32>, vector<64x8xf32>, vector<64x8xf32>, vector<64x8xf32>, vector<64x8xf32> -> vector<64x128xf32>
    %cst_17 = arith.constant dense<0.000000e+00> : vector<64x16xf32>
    %153 = tpu.matmul %152, %81, %cst_17 {dimension_numbers = #tpu.dot_dimension_numbers<[1], [0], [0], [1], [0, 0, 1, 1], [], []>} : vector<64x128xf32>, vector<128x16xf32>, vector<64x16xf32> -> vector<64x16xf32>
    %154 = vector.broadcast %82 : vector<1x16xf32> to vector<64x16xf32>
    %155 = arith.addf %153, %154 : vector<64x16xf32>
    %cst_18 = arith.constant dense<0.000000e+00> : vector<16xf32>
    %156 = vector.multi_reduction <add>, %155, %cst_18 [0] : vector<64x16xf32> to vector<16xf32>
    %157 = vector.shape_cast %156 : vector<16xf32> to vector<1x16xf32>
    %cst_19 = arith.constant 6.400000e+01 : f32
    %158 = vector.broadcast %cst_19 : f32 to vector<1x16xf32>
    %159 = arith.divf %157, %158 : vector<1x16xf32>
    %160 = vector.broadcast %159 : vector<1x16xf32> to vector<64x16xf32>
    %161 = arith.subf %155, %160 : vector<64x16xf32>
    %162 = arith.mulf %161, %161 : vector<64x16xf32>
    %cst_20 = arith.constant dense<0.000000e+00> : vector<16xf32>
    %163 = vector.multi_reduction <add>, %162, %cst_20 [0] : vector<64x16xf32> to vector<16xf32>
    %164 = vector.shape_cast %163 : vector<16xf32> to vector<1x16xf32>
    %cst_21 = arith.constant 6.400000e+01 : f32
    %165 = vector.broadcast %cst_21 : f32 to vector<1x16xf32>
    %166 = arith.divf %164, %165 : vector<1x16xf32>
    %cst_22 = arith.constant 9.99999974E-6 : f32
    %167 = vector.broadcast %cst_22 : f32 to vector<1x16xf32>
    %168 = arith.addf %166, %167 : vector<1x16xf32>
    %169 = math.rsqrt %168 : vector<1x16xf32>
    %170 = vector.broadcast %169 : vector<1x16xf32> to vector<64x16xf32>
    %171 = arith.mulf %161, %170 : vector<64x16xf32>
    %172 = vector.broadcast %83 : vector<1x16xf32> to vector<64x16xf32>
    %173 = arith.mulf %171, %172 : vector<64x16xf32>
    %174 = vector.broadcast %84 : vector<1x16xf32> to vector<64x16xf32>
    %175 = arith.addf %173, %174 : vector<64x16xf32>
    %cst_23 = arith.constant 0.000000e+00 : f32
    %176 = vector.broadcast %cst_23 : f32 to vector<64x16xf32>
    %177 = arith.cmpf ogt, %175, %176 : vector<64x16xf32>
    %cst_24 = arith.constant 2.000000e-01 : f32
    %178 = vector.broadcast %cst_24 : f32 to vector<64x16xf32>
    %179 = arith.mulf %178, %175 : vector<64x16xf32>
    %180 = arith.select %177, %175, %179 : vector<64x16xi1>, vector<64x16xf32>
    %181 = vector.shape_cast %180 : vector<64x16xf32> to vector<8x8x16xf32>
    %c0_25 = arith.constant 0 : index
    %c0_26 = arith.constant 0 : index
    %182 = vector.load %arg8[%c0_25, %c0_26] : memref<256x32xf32, #tpu.memory_space<vmem>>, vector<256x32xf32>
    %c0_27 = arith.constant 0 : index
    %c0_28 = arith.constant 0 : index
    %183 = vector.load %arg9[%c0_27, %c0_28] : memref<1x32xf32, #tpu.memory_space<vmem>>, vector<1x32xf32>
    %c0_29 = arith.constant 0 : index
    %c0_30 = arith.constant 0 : index
    %184 = vector.load %arg10[%c0_29, %c0_30] : memref<1x32xf32, #tpu.memory_space<vmem>>, vector<1x32xf32>
    %c0_31 = arith.constant 0 : index
    %c0_32 = arith.constant 0 : index
    %185 = vector.load %arg11[%c0_31, %c0_32] : memref<1x32xf32, #tpu.memory_space<vmem>>, vector<1x32xf32>
    %186 = vector.extract_strided_slice %181 {offsets = [1, 0, 0], sizes = [1, 8, 16], strides = [1, 1, 1]} : vector<8x8x16xf32> to vector<1x8x16xf32>
    %187 = vector.extract_strided_slice %181 {offsets = [6, 0, 0], sizes = [1, 8, 16], strides = [1, 1, 1]} : vector<8x8x16xf32> to vector<1x8x16xf32>
    %188 = tpu.concatenate %186, %181, %187 in 0 : vector<1x8x16xf32>, vector<8x8x16xf32>, vector<1x8x16xf32> -> vector<10x8x16xf32>
    %189 = vector.extract_strided_slice %188 {offsets = [0, 1, 0], sizes = [10, 1, 16], strides = [1, 1, 1]} : vector<10x8x16xf32> to vector<10x1x16xf32>
    %190 = vector.extract_strided_slice %188 {offsets = [0, 6, 0], sizes = [10, 1, 16], strides = [1, 1, 1]} : vector<10x8x16xf32> to vector<10x1x16xf32>
    %191 = tpu.concatenate %189, %188, %190 in 1 : vector<10x1x16xf32>, vector<10x8x16xf32>, vector<10x1x16xf32> -> vector<10x10x16xf32>
    %192 = vector.shape_cast %191 : vector<10x10x16xf32> to vector<5x2x10x16xf32>
    %193 = vector.extract_strided_slice %192 {offsets = [0, 0, 0, 0], sizes = [4, 1, 10, 16], strides = [1, 1, 1, 1]} : vector<5x2x10x16xf32> to vector<4x1x10x16xf32>
    %194 = vector.shape_cast %193 : vector<4x1x10x16xf32> to vector<4x10x16xf32>
    %195 = vector.shape_cast %194 : vector<4x10x16xf32> to vector<4x5x2x16xf32>
    %196 = vector.extract_strided_slice %195 {offsets = [0, 0, 0, 0], sizes = [4, 4, 1, 16], strides = [1, 1, 1, 1]} : vector<4x5x2x16xf32> to vector<4x4x1x16xf32>
    %197 = vector.shape_cast %196 : vector<4x4x1x16xf32> to vector<4x4x16xf32>
    %198 = vector.shape_cast %197 : vector<4x4x16xf32> to vector<16x16xf32>
    %199 = vector.extract_strided_slice %195 {offsets = [0, 0, 1, 0], sizes = [4, 4, 1, 16], strides = [1, 1, 1, 1]} : vector<4x5x2x16xf32> to vector<4x4x1x16xf32>
    %200 = vector.shape_cast %199 : vector<4x4x1x16xf32> to vector<4x4x16xf32>
    %201 = vector.shape_cast %200 : vector<4x4x16xf32> to vector<16x16xf32>
    %202 = vector.extract_strided_slice %195 {offsets = [0, 1, 0, 0], sizes = [4, 4, 1, 16], strides = [1, 1, 1, 1]} : vector<4x5x2x16xf32> to vector<4x4x1x16xf32>
    %203 = vector.shape_cast %202 : vector<4x4x1x16xf32> to vector<4x4x16xf32>
    %204 = vector.shape_cast %203 : vector<4x4x16xf32> to vector<16x16xf32>
    %205 = vector.extract_strided_slice %195 {offsets = [0, 1, 1, 0], sizes = [4, 4, 1, 16], strides = [1, 1, 1, 1]} : vector<4x5x2x16xf32> to vector<4x4x1x16xf32>
    %206 = vector.shape_cast %205 : vector<4x4x1x16xf32> to vector<4x4x16xf32>
    %207 = vector.shape_cast %206 : vector<4x4x16xf32> to vector<16x16xf32>
    %208 = vector.extract_strided_slice %192 {offsets = [0, 1, 0, 0], sizes = [4, 1, 10, 16], strides = [1, 1, 1, 1]} : vector<5x2x10x16xf32> to vector<4x1x10x16xf32>
    %209 = vector.shape_cast %208 : vector<4x1x10x16xf32> to vector<4x10x16xf32>
    %210 = vector.shape_cast %209 : vector<4x10x16xf32> to vector<4x5x2x16xf32>
    %211 = vector.extract_strided_slice %210 {offsets = [0, 0, 0, 0], sizes = [4, 4, 1, 16], strides = [1, 1, 1, 1]} : vector<4x5x2x16xf32> to vector<4x4x1x16xf32>
    %212 = vector.shape_cast %211 : vector<4x4x1x16xf32> to vector<4x4x16xf32>
    %213 = vector.shape_cast %212 : vector<4x4x16xf32> to vector<16x16xf32>
    %214 = vector.extract_strided_slice %210 {offsets = [0, 0, 1, 0], sizes = [4, 4, 1, 16], strides = [1, 1, 1, 1]} : vector<4x5x2x16xf32> to vector<4x4x1x16xf32>
    %215 = vector.shape_cast %214 : vector<4x4x1x16xf32> to vector<4x4x16xf32>
    %216 = vector.shape_cast %215 : vector<4x4x16xf32> to vector<16x16xf32>
    %217 = vector.extract_strided_slice %210 {offsets = [0, 1, 0, 0], sizes = [4, 4, 1, 16], strides = [1, 1, 1, 1]} : vector<4x5x2x16xf32> to vector<4x4x1x16xf32>
    %218 = vector.shape_cast %217 : vector<4x4x1x16xf32> to vector<4x4x16xf32>
    %219 = vector.shape_cast %218 : vector<4x4x16xf32> to vector<16x16xf32>
    %220 = vector.extract_strided_slice %210 {offsets = [0, 1, 1, 0], sizes = [4, 4, 1, 16], strides = [1, 1, 1, 1]} : vector<4x5x2x16xf32> to vector<4x4x1x16xf32>
    %221 = vector.shape_cast %220 : vector<4x4x1x16xf32> to vector<4x4x16xf32>
    %222 = vector.shape_cast %221 : vector<4x4x16xf32> to vector<16x16xf32>
    %223 = vector.extract_strided_slice %192 {offsets = [1, 0, 0, 0], sizes = [4, 1, 10, 16], strides = [1, 1, 1, 1]} : vector<5x2x10x16xf32> to vector<4x1x10x16xf32>
    %224 = vector.shape_cast %223 : vector<4x1x10x16xf32> to vector<4x10x16xf32>
    %225 = vector.shape_cast %224 : vector<4x10x16xf32> to vector<4x5x2x16xf32>
    %226 = vector.extract_strided_slice %225 {offsets = [0, 0, 0, 0], sizes = [4, 4, 1, 16], strides = [1, 1, 1, 1]} : vector<4x5x2x16xf32> to vector<4x4x1x16xf32>
    %227 = vector.shape_cast %226 : vector<4x4x1x16xf32> to vector<4x4x16xf32>
    %228 = vector.shape_cast %227 : vector<4x4x16xf32> to vector<16x16xf32>
    %229 = vector.extract_strided_slice %225 {offsets = [0, 0, 1, 0], sizes = [4, 4, 1, 16], strides = [1, 1, 1, 1]} : vector<4x5x2x16xf32> to vector<4x4x1x16xf32>
    %230 = vector.shape_cast %229 : vector<4x4x1x16xf32> to vector<4x4x16xf32>
    %231 = vector.shape_cast %230 : vector<4x4x16xf32> to vector<16x16xf32>
    %232 = vector.extract_strided_slice %225 {offsets = [0, 1, 0, 0], sizes = [4, 4, 1, 16], strides = [1, 1, 1, 1]} : vector<4x5x2x16xf32> to vector<4x4x1x16xf32>
    %233 = vector.shape_cast %232 : vector<4x4x1x16xf32> to vector<4x4x16xf32>
    %234 = vector.shape_cast %233 : vector<4x4x16xf32> to vector<16x16xf32>
    %235 = vector.extract_strided_slice %225 {offsets = [0, 1, 1, 0], sizes = [4, 4, 1, 16], strides = [1, 1, 1, 1]} : vector<4x5x2x16xf32> to vector<4x4x1x16xf32>
    %236 = vector.shape_cast %235 : vector<4x4x1x16xf32> to vector<4x4x16xf32>
    %237 = vector.shape_cast %236 : vector<4x4x16xf32> to vector<16x16xf32>
    %238 = vector.extract_strided_slice %192 {offsets = [1, 1, 0, 0], sizes = [4, 1, 10, 16], strides = [1, 1, 1, 1]} : vector<5x2x10x16xf32> to vector<4x1x10x16xf32>
    %239 = vector.shape_cast %238 : vector<4x1x10x16xf32> to vector<4x10x16xf32>
    %240 = vector.shape_cast %239 : vector<4x10x16xf32> to vector<4x5x2x16xf32>
    %241 = vector.extract_strided_slice %240 {offsets = [0, 0, 0, 0], sizes = [4, 4, 1, 16], strides = [1, 1, 1, 1]} : vector<4x5x2x16xf32> to vector<4x4x1x16xf32>
    %242 = vector.shape_cast %241 : vector<4x4x1x16xf32> to vector<4x4x16xf32>
    %243 = vector.shape_cast %242 : vector<4x4x16xf32> to vector<16x16xf32>
    %244 = vector.extract_strided_slice %240 {offsets = [0, 0, 1, 0], sizes = [4, 4, 1, 16], strides = [1, 1, 1, 1]} : vector<4x5x2x16xf32> to vector<4x4x1x16xf32>
    %245 = vector.shape_cast %244 : vector<4x4x1x16xf32> to vector<4x4x16xf32>
    %246 = vector.shape_cast %245 : vector<4x4x16xf32> to vector<16x16xf32>
    %247 = vector.extract_strided_slice %240 {offsets = [0, 1, 0, 0], sizes = [4, 4, 1, 16], strides = [1, 1, 1, 1]} : vector<4x5x2x16xf32> to vector<4x4x1x16xf32>
    %248 = vector.shape_cast %247 : vector<4x4x1x16xf32> to vector<4x4x16xf32>
    %249 = vector.shape_cast %248 : vector<4x4x16xf32> to vector<16x16xf32>
    %250 = vector.extract_strided_slice %240 {offsets = [0, 1, 1, 0], sizes = [4, 4, 1, 16], strides = [1, 1, 1, 1]} : vector<4x5x2x16xf32> to vector<4x4x1x16xf32>
    %251 = vector.shape_cast %250 : vector<4x4x1x16xf32> to vector<4x4x16xf32>
    %252 = vector.shape_cast %251 : vector<4x4x16xf32> to vector<16x16xf32>
    %253 = tpu.concatenate %198, %201, %204, %207, %213, %216, %219, %222, %228, %231, %234, %237, %243, %246, %249, %252 in 1 : vector<16x16xf32>, vector<16x16xf32>, vector<16x16xf32>, vector<16x16xf32>, vector<16x16xf32>, vector<16x16xf32>, vector<16x16xf32>, vector<16x16xf32>, vector<16x16xf32>, vector<16x16xf32>, vector<16x16xf32>, vector<16x16xf32>, vector<16x16xf32>, vector<16x16xf32>, vector<16x16xf32>, vector<16x16xf32> -> vector<16x256xf32>
    %cst_33 = arith.constant dense<0.000000e+00> : vector<16x32xf32>
    %254 = tpu.matmul %253, %182, %cst_33 {dimension_numbers = #tpu.dot_dimension_numbers<[1], [0], [0], [1], [0, 0, 1, 1], [], []>} : vector<16x256xf32>, vector<256x32xf32>, vector<16x32xf32> -> vector<16x32xf32>
    %255 = vector.broadcast %183 : vector<1x32xf32> to vector<16x32xf32>
    %256 = arith.addf %254, %255 : vector<16x32xf32>
    %cst_34 = arith.constant dense<0.000000e+00> : vector<32xf32>
    %257 = vector.multi_reduction <add>, %256, %cst_34 [0] : vector<16x32xf32> to vector<32xf32>
    %258 = vector.shape_cast %257 : vector<32xf32> to vector<1x32xf32>
    %cst_35 = arith.constant 1.600000e+01 : f32
    %259 = vector.broadcast %cst_35 : f32 to vector<1x32xf32>
    %260 = arith.divf %258, %259 : vector<1x32xf32>
    %261 = vector.broadcast %260 : vector<1x32xf32> to vector<16x32xf32>
    %262 = arith.subf %256, %261 : vector<16x32xf32>
    %263 = arith.mulf %262, %262 : vector<16x32xf32>
    %cst_36 = arith.constant dense<0.000000e+00> : vector<32xf32>
    %264 = vector.multi_reduction <add>, %263, %cst_36 [0] : vector<16x32xf32> to vector<32xf32>
    %265 = vector.shape_cast %264 : vector<32xf32> to vector<1x32xf32>
    %cst_37 = arith.constant 1.600000e+01 : f32
    %266 = vector.broadcast %cst_37 : f32 to vector<1x32xf32>
    %267 = arith.divf %265, %266 : vector<1x32xf32>
    %cst_38 = arith.constant 9.99999974E-6 : f32
    %268 = vector.broadcast %cst_38 : f32 to vector<1x32xf32>
    %269 = arith.addf %267, %268 : vector<1x32xf32>
    %270 = math.rsqrt %269 : vector<1x32xf32>
    %271 = vector.broadcast %270 : vector<1x32xf32> to vector<16x32xf32>
    %272 = arith.mulf %262, %271 : vector<16x32xf32>
    %273 = vector.broadcast %184 : vector<1x32xf32> to vector<16x32xf32>
    %274 = arith.mulf %272, %273 : vector<16x32xf32>
    %275 = vector.broadcast %185 : vector<1x32xf32> to vector<16x32xf32>
    %276 = arith.addf %274, %275 : vector<16x32xf32>
    %cst_39 = arith.constant 0.000000e+00 : f32
    %277 = vector.broadcast %cst_39 : f32 to vector<16x32xf32>
    %278 = arith.cmpf ogt, %276, %277 : vector<16x32xf32>
    %cst_40 = arith.constant 2.000000e-01 : f32
    %279 = vector.broadcast %cst_40 : f32 to vector<16x32xf32>
    %280 = arith.mulf %279, %276 : vector<16x32xf32>
    %281 = arith.select %278, %276, %280 : vector<16x32xi1>, vector<16x32xf32>
    %282 = vector.shape_cast %281 : vector<16x32xf32> to vector<4x4x32xf32>
    %c0_41 = arith.constant 0 : index
    %c0_42 = arith.constant 0 : index
    %283 = vector.load %arg12[%c0_41, %c0_42] : memref<512x64xf32, #tpu.memory_space<vmem>>, vector<512x64xf32>
    %c0_43 = arith.constant 0 : index
    %c0_44 = arith.constant 0 : index
    %284 = vector.load %arg13[%c0_43, %c0_44] : memref<1x64xf32, #tpu.memory_space<vmem>>, vector<1x64xf32>
    %c0_45 = arith.constant 0 : index
    %c0_46 = arith.constant 0 : index
    %285 = vector.load %arg14[%c0_45, %c0_46] : memref<1x64xf32, #tpu.memory_space<vmem>>, vector<1x64xf32>
    %c0_47 = arith.constant 0 : index
    %c0_48 = arith.constant 0 : index
    %286 = vector.load %arg15[%c0_47, %c0_48] : memref<1x64xf32, #tpu.memory_space<vmem>>, vector<1x64xf32>
    %287 = vector.extract_strided_slice %282 {offsets = [1, 0, 0], sizes = [1, 4, 32], strides = [1, 1, 1]} : vector<4x4x32xf32> to vector<1x4x32xf32>
    %288 = vector.extract_strided_slice %282 {offsets = [2, 0, 0], sizes = [1, 4, 32], strides = [1, 1, 1]} : vector<4x4x32xf32> to vector<1x4x32xf32>
    %289 = tpu.concatenate %287, %282, %288 in 0 : vector<1x4x32xf32>, vector<4x4x32xf32>, vector<1x4x32xf32> -> vector<6x4x32xf32>
    %290 = vector.extract_strided_slice %289 {offsets = [0, 1, 0], sizes = [6, 1, 32], strides = [1, 1, 1]} : vector<6x4x32xf32> to vector<6x1x32xf32>
    %291 = vector.extract_strided_slice %289 {offsets = [0, 2, 0], sizes = [6, 1, 32], strides = [1, 1, 1]} : vector<6x4x32xf32> to vector<6x1x32xf32>
    %292 = tpu.concatenate %290, %289, %291 in 1 : vector<6x1x32xf32>, vector<6x4x32xf32>, vector<6x1x32xf32> -> vector<6x6x32xf32>
    %293 = vector.extract_strided_slice %292 {offsets = [0, 0, 0], sizes = [3, 3, 32], strides = [1, 1, 1]} : vector<6x6x32xf32> to vector<3x3x32xf32>
    %294 = vector.shape_cast %293 : vector<3x3x32xf32> to vector<9x32xf32>
    %295 = vector.extract_strided_slice %292 {offsets = [0, 1, 0], sizes = [3, 3, 32], strides = [1, 1, 1]} : vector<6x6x32xf32> to vector<3x3x32xf32>
    %296 = vector.shape_cast %295 : vector<3x3x32xf32> to vector<9x32xf32>
    %297 = vector.extract_strided_slice %292 {offsets = [0, 2, 0], sizes = [3, 3, 32], strides = [1, 1, 1]} : vector<6x6x32xf32> to vector<3x3x32xf32>
    %298 = vector.shape_cast %297 : vector<3x3x32xf32> to vector<9x32xf32>
    %299 = vector.extract_strided_slice %292 {offsets = [0, 3, 0], sizes = [3, 3, 32], strides = [1, 1, 1]} : vector<6x6x32xf32> to vector<3x3x32xf32>
    %300 = vector.shape_cast %299 : vector<3x3x32xf32> to vector<9x32xf32>
    %301 = vector.extract_strided_slice %292 {offsets = [1, 0, 0], sizes = [3, 3, 32], strides = [1, 1, 1]} : vector<6x6x32xf32> to vector<3x3x32xf32>
    %302 = vector.shape_cast %301 : vector<3x3x32xf32> to vector<9x32xf32>
    %303 = vector.extract_strided_slice %292 {offsets = [1, 1, 0], sizes = [3, 3, 32], strides = [1, 1, 1]} : vector<6x6x32xf32> to vector<3x3x32xf32>
    %304 = vector.shape_cast %303 : vector<3x3x32xf32> to vector<9x32xf32>
    %305 = vector.extract_strided_slice %292 {offsets = [1, 2, 0], sizes = [3, 3, 32], strides = [1, 1, 1]} : vector<6x6x32xf32> to vector<3x3x32xf32>
    %306 = vector.shape_cast %305 : vector<3x3x32xf32> to vector<9x32xf32>
    %307 = vector.extract_strided_slice %292 {offsets = [1, 3, 0], sizes = [3, 3, 32], strides = [1, 1, 1]} : vector<6x6x32xf32> to vector<3x3x32xf32>
    %308 = vector.shape_cast %307 : vector<3x3x32xf32> to vector<9x32xf32>
    %309 = vector.extract_strided_slice %292 {offsets = [2, 0, 0], sizes = [3, 3, 32], strides = [1, 1, 1]} : vector<6x6x32xf32> to vector<3x3x32xf32>
    %310 = vector.shape_cast %309 : vector<3x3x32xf32> to vector<9x32xf32>
    %311 = vector.extract_strided_slice %292 {offsets = [2, 1, 0], sizes = [3, 3, 32], strides = [1, 1, 1]} : vector<6x6x32xf32> to vector<3x3x32xf32>
    %312 = vector.shape_cast %311 : vector<3x3x32xf32> to vector<9x32xf32>
    %313 = vector.extract_strided_slice %292 {offsets = [2, 2, 0], sizes = [3, 3, 32], strides = [1, 1, 1]} : vector<6x6x32xf32> to vector<3x3x32xf32>
    %314 = vector.shape_cast %313 : vector<3x3x32xf32> to vector<9x32xf32>
    %315 = vector.extract_strided_slice %292 {offsets = [2, 3, 0], sizes = [3, 3, 32], strides = [1, 1, 1]} : vector<6x6x32xf32> to vector<3x3x32xf32>
    %316 = vector.shape_cast %315 : vector<3x3x32xf32> to vector<9x32xf32>
    %317 = vector.extract_strided_slice %292 {offsets = [3, 0, 0], sizes = [3, 3, 32], strides = [1, 1, 1]} : vector<6x6x32xf32> to vector<3x3x32xf32>
    %318 = vector.shape_cast %317 : vector<3x3x32xf32> to vector<9x32xf32>
    %319 = vector.extract_strided_slice %292 {offsets = [3, 1, 0], sizes = [3, 3, 32], strides = [1, 1, 1]} : vector<6x6x32xf32> to vector<3x3x32xf32>
    %320 = vector.shape_cast %319 : vector<3x3x32xf32> to vector<9x32xf32>
    %321 = vector.extract_strided_slice %292 {offsets = [3, 2, 0], sizes = [3, 3, 32], strides = [1, 1, 1]} : vector<6x6x32xf32> to vector<3x3x32xf32>
    %322 = vector.shape_cast %321 : vector<3x3x32xf32> to vector<9x32xf32>
    %323 = vector.extract_strided_slice %292 {offsets = [3, 3, 0], sizes = [3, 3, 32], strides = [1, 1, 1]} : vector<6x6x32xf32> to vector<3x3x32xf32>
    %324 = vector.shape_cast %323 : vector<3x3x32xf32> to vector<9x32xf32>
    %325 = tpu.concatenate %294, %296, %298, %300, %302, %304, %306, %308, %310, %312, %314, %316, %318, %320, %322, %324 in 1 : vector<9x32xf32>, vector<9x32xf32>, vector<9x32xf32>, vector<9x32xf32>, vector<9x32xf32>, vector<9x32xf32>, vector<9x32xf32>, vector<9x32xf32>, vector<9x32xf32>, vector<9x32xf32>, vector<9x32xf32>, vector<9x32xf32>, vector<9x32xf32>, vector<9x32xf32>, vector<9x32xf32>, vector<9x32xf32> -> vector<9x512xf32>
    %cst_49 = arith.constant dense<0.000000e+00> : vector<9x64xf32>
    %326 = tpu.matmul %325, %283, %cst_49 {dimension_numbers = #tpu.dot_dimension_numbers<[1], [0], [0], [1], [0, 0, 1, 1], [], []>} : vector<9x512xf32>, vector<512x64xf32>, vector<9x64xf32> -> vector<9x64xf32>
    %327 = vector.broadcast %284 : vector<1x64xf32> to vector<9x64xf32>
    %328 = arith.addf %326, %327 : vector<9x64xf32>
    %cst_50 = arith.constant dense<0.000000e+00> : vector<64xf32>
    %329 = vector.multi_reduction <add>, %328, %cst_50 [0] : vector<9x64xf32> to vector<64xf32>
    %330 = vector.shape_cast %329 : vector<64xf32> to vector<1x64xf32>
    %cst_51 = arith.constant 9.000000e+00 : f32
    %331 = vector.broadcast %cst_51 : f32 to vector<1x64xf32>
    %332 = arith.divf %330, %331 : vector<1x64xf32>
    %333 = vector.broadcast %332 : vector<1x64xf32> to vector<9x64xf32>
    %334 = arith.subf %328, %333 : vector<9x64xf32>
    %335 = arith.mulf %334, %334 : vector<9x64xf32>
    %cst_52 = arith.constant dense<0.000000e+00> : vector<64xf32>
    %336 = vector.multi_reduction <add>, %335, %cst_52 [0] : vector<9x64xf32> to vector<64xf32>
    %337 = vector.shape_cast %336 : vector<64xf32> to vector<1x64xf32>
    %cst_53 = arith.constant 9.000000e+00 : f32
    %338 = vector.broadcast %cst_53 : f32 to vector<1x64xf32>
    %339 = arith.divf %337, %338 : vector<1x64xf32>
    %cst_54 = arith.constant 9.99999974E-6 : f32
    %340 = vector.broadcast %cst_54 : f32 to vector<1x64xf32>
    %341 = arith.addf %339, %340 : vector<1x64xf32>
    %342 = math.rsqrt %341 : vector<1x64xf32>
    %343 = vector.broadcast %342 : vector<1x64xf32> to vector<9x64xf32>
    %344 = arith.mulf %334, %343 : vector<9x64xf32>
    %345 = vector.broadcast %285 : vector<1x64xf32> to vector<9x64xf32>
    %346 = arith.mulf %344, %345 : vector<9x64xf32>
    %347 = vector.broadcast %286 : vector<1x64xf32> to vector<9x64xf32>
    %348 = arith.addf %346, %347 : vector<9x64xf32>
    %cst_55 = arith.constant 0.000000e+00 : f32
    %349 = vector.broadcast %cst_55 : f32 to vector<9x64xf32>
    %350 = arith.cmpf ogt, %348, %349 : vector<9x64xf32>
    %cst_56 = arith.constant 2.000000e-01 : f32
    %351 = vector.broadcast %cst_56 : f32 to vector<9x64xf32>
    %352 = arith.mulf %351, %348 : vector<9x64xf32>
    %353 = arith.select %350, %348, %352 : vector<9x64xi1>, vector<9x64xf32>
    %354 = vector.shape_cast %353 : vector<9x64xf32> to vector<3x3x64xf32>
    %c0_57 = arith.constant 0 : index
    %c0_58 = arith.constant 0 : index
    %355 = vector.load %arg16[%c0_57, %c0_58] : memref<1024x1xf32, #tpu.memory_space<vmem>>, vector<1024x1xf32>
    %c0_59 = arith.constant 0 : index
    %c0_60 = arith.constant 0 : index
    %356 = vector.load %arg17[%c0_59, %c0_60] : memref<1x1xf32, #tpu.memory_space<vmem>>, vector<1x1xf32>
    %357 = vector.extract_strided_slice %354 {offsets = [1, 0, 0], sizes = [1, 3, 64], strides = [1, 1, 1]} : vector<3x3x64xf32> to vector<1x3x64xf32>
    %358 = vector.extract_strided_slice %354 {offsets = [1, 0, 0], sizes = [1, 3, 64], strides = [1, 1, 1]} : vector<3x3x64xf32> to vector<1x3x64xf32>
    %359 = tpu.concatenate %357, %354, %358 in 0 : vector<1x3x64xf32>, vector<3x3x64xf32>, vector<1x3x64xf32> -> vector<5x3x64xf32>
    %360 = vector.extract_strided_slice %359 {offsets = [0, 1, 0], sizes = [5, 1, 64], strides = [1, 1, 1]} : vector<5x3x64xf32> to vector<5x1x64xf32>
    %361 = vector.extract_strided_slice %359 {offsets = [0, 1, 0], sizes = [5, 1, 64], strides = [1, 1, 1]} : vector<5x3x64xf32> to vector<5x1x64xf32>
    %362 = tpu.concatenate %360, %359, %361 in 1 : vector<5x1x64xf32>, vector<5x3x64xf32>, vector<5x1x64xf32> -> vector<5x5x64xf32>
    %363 = vector.extract_strided_slice %362 {offsets = [0, 0, 0], sizes = [2, 2, 64], strides = [1, 1, 1]} : vector<5x5x64xf32> to vector<2x2x64xf32>
    %364 = vector.shape_cast %363 : vector<2x2x64xf32> to vector<4x64xf32>
    %365 = vector.extract_strided_slice %362 {offsets = [0, 1, 0], sizes = [2, 2, 64], strides = [1, 1, 1]} : vector<5x5x64xf32> to vector<2x2x64xf32>
    %366 = vector.shape_cast %365 : vector<2x2x64xf32> to vector<4x64xf32>
    %367 = vector.extract_strided_slice %362 {offsets = [0, 2, 0], sizes = [2, 2, 64], strides = [1, 1, 1]} : vector<5x5x64xf32> to vector<2x2x64xf32>
    %368 = vector.shape_cast %367 : vector<2x2x64xf32> to vector<4x64xf32>
    %369 = vector.extract_strided_slice %362 {offsets = [0, 3, 0], sizes = [2, 2, 64], strides = [1, 1, 1]} : vector<5x5x64xf32> to vector<2x2x64xf32>
    %370 = vector.shape_cast %369 : vector<2x2x64xf32> to vector<4x64xf32>
    %371 = vector.extract_strided_slice %362 {offsets = [1, 0, 0], sizes = [2, 2, 64], strides = [1, 1, 1]} : vector<5x5x64xf32> to vector<2x2x64xf32>
    %372 = vector.shape_cast %371 : vector<2x2x64xf32> to vector<4x64xf32>
    %373 = vector.extract_strided_slice %362 {offsets = [1, 1, 0], sizes = [2, 2, 64], strides = [1, 1, 1]} : vector<5x5x64xf32> to vector<2x2x64xf32>
    %374 = vector.shape_cast %373 : vector<2x2x64xf32> to vector<4x64xf32>
    %375 = vector.extract_strided_slice %362 {offsets = [1, 2, 0], sizes = [2, 2, 64], strides = [1, 1, 1]} : vector<5x5x64xf32> to vector<2x2x64xf32>
    %376 = vector.shape_cast %375 : vector<2x2x64xf32> to vector<4x64xf32>
    %377 = vector.extract_strided_slice %362 {offsets = [1, 3, 0], sizes = [2, 2, 64], strides = [1, 1, 1]} : vector<5x5x64xf32> to vector<2x2x64xf32>
    %378 = vector.shape_cast %377 : vector<2x2x64xf32> to vector<4x64xf32>
    %379 = vector.extract_strided_slice %362 {offsets = [2, 0, 0], sizes = [2, 2, 64], strides = [1, 1, 1]} : vector<5x5x64xf32> to vector<2x2x64xf32>
    %380 = vector.shape_cast %379 : vector<2x2x64xf32> to vector<4x64xf32>
    %381 = vector.extract_strided_slice %362 {offsets = [2, 1, 0], sizes = [2, 2, 64], strides = [1, 1, 1]} : vector<5x5x64xf32> to vector<2x2x64xf32>
    %382 = vector.shape_cast %381 : vector<2x2x64xf32> to vector<4x64xf32>
    %383 = vector.extract_strided_slice %362 {offsets = [2, 2, 0], sizes = [2, 2, 64], strides = [1, 1, 1]} : vector<5x5x64xf32> to vector<2x2x64xf32>
    %384 = vector.shape_cast %383 : vector<2x2x64xf32> to vector<4x64xf32>
    %385 = vector.extract_strided_slice %362 {offsets = [2, 3, 0], sizes = [2, 2, 64], strides = [1, 1, 1]} : vector<5x5x64xf32> to vector<2x2x64xf32>
    %386 = vector.shape_cast %385 : vector<2x2x64xf32> to vector<4x64xf32>
    %387 = vector.extract_strided_slice %362 {offsets = [3, 0, 0], sizes = [2, 2, 64], strides = [1, 1, 1]} : vector<5x5x64xf32> to vector<2x2x64xf32>
    %388 = vector.shape_cast %387 : vector<2x2x64xf32> to vector<4x64xf32>
    %389 = vector.extract_strided_slice %362 {offsets = [3, 1, 0], sizes = [2, 2, 64], strides = [1, 1, 1]} : vector<5x5x64xf32> to vector<2x2x64xf32>
    %390 = vector.shape_cast %389 : vector<2x2x64xf32> to vector<4x64xf32>
    %391 = vector.extract_strided_slice %362 {offsets = [3, 2, 0], sizes = [2, 2, 64], strides = [1, 1, 1]} : vector<5x5x64xf32> to vector<2x2x64xf32>
    %392 = vector.shape_cast %391 : vector<2x2x64xf32> to vector<4x64xf32>
    %393 = vector.extract_strided_slice %362 {offsets = [3, 3, 0], sizes = [2, 2, 64], strides = [1, 1, 1]} : vector<5x5x64xf32> to vector<2x2x64xf32>
    %394 = vector.shape_cast %393 : vector<2x2x64xf32> to vector<4x64xf32>
    %395 = tpu.concatenate %364, %366, %368, %370, %372, %374, %376, %378, %380, %382, %384, %386, %388, %390, %392, %394 in 1 : vector<4x64xf32>, vector<4x64xf32>, vector<4x64xf32>, vector<4x64xf32>, vector<4x64xf32>, vector<4x64xf32>, vector<4x64xf32>, vector<4x64xf32>, vector<4x64xf32>, vector<4x64xf32>, vector<4x64xf32>, vector<4x64xf32>, vector<4x64xf32>, vector<4x64xf32>, vector<4x64xf32>, vector<4x64xf32> -> vector<4x1024xf32>
    %cst_61 = arith.constant dense<0.000000e+00> : vector<4x1xf32>
    %396 = tpu.matmul %395, %355, %cst_61 {dimension_numbers = #tpu.dot_dimension_numbers<[1], [0], [0], [1], [0, 0, 1, 1], [], []>} : vector<4x1024xf32>, vector<1024x1xf32>, vector<4x1xf32> -> vector<4x1xf32>
    %397 = vector.broadcast %356 : vector<1x1xf32> to vector<4x1xf32>
    %398 = arith.addf %396, %397 : vector<4x1xf32>
    %cst_62 = arith.constant 5.000000e-01 : f32
    %399 = vector.broadcast %cst_62 : f32 to vector<4x1xf32>
    %400 = arith.mulf %399, %398 : vector<4x1xf32>
    %401 = math.tanh %400 : vector<4x1xf32>
    %cst_63 = arith.constant 1.000000e+00 : f32
    %402 = vector.broadcast %cst_63 : f32 to vector<4x1xf32>
    %403 = arith.addf %401, %402 : vector<4x1xf32>
    %cst_64 = arith.constant 5.000000e-01 : f32
    %404 = vector.broadcast %cst_64 : f32 to vector<4x1xf32>
    %405 = arith.mulf %404, %403 : vector<4x1xf32>
    %c0_65 = arith.constant 0 : index
    %c0_66 = arith.constant 0 : index
    %c0_67 = arith.constant 0 : index
    %406 = vector.load %arg18[%c0_65, %c0_66, %c0_67] : memref<1x4x1xf32, #tpu.memory_space<vmem>>, vector<1x4x1xf32>
    %407 = vector.shape_cast %406 : vector<1x4x1xf32> to vector<4x1xf32>
    %408 = vector.shape_cast %405 : vector<4x1xf32> to vector<1x4x1xf32>
    tpu.vector_store %arg18[%c0_65, %c0_66, %c0_67], %408 {strides = array<i32>} : memref<1x4x1xf32, #tpu.memory_space<vmem>>, vector<1x4x1xf32>,
    return
  }
  func.func @transform_0(%arg0: i32) -> (i32, i32, i32, i32) {
    %c0_i32 = arith.constant 0 : i32
    %c0_i32_0 = arith.constant 0 : i32
    %c0_i32_1 = arith.constant 0 : i32
    %c0_i32_2 = arith.constant 0 : i32
    return %arg0, %c0_i32, %c0_i32_0, %c0_i32_1 : i32, i32, i32, i32
  }
  func.func @transform_1(%arg0: i32) -> (i32, i32) {
    %c0_i32 = arith.constant 0 : i32
    %c0_i32_0 = arith.constant 0 : i32
    %c0_i32_1 = arith.constant 0 : i32
    return %c0_i32, %c0_i32_0 : i32, i32
  }
  func.func @transform_2(%arg0: i32) -> (i32, i32) {
    %c0_i32 = arith.constant 0 : i32
    %c0_i32_0 = arith.constant 0 : i32
    %c0_i32_1 = arith.constant 0 : i32
    return %c0_i32, %c0_i32_0 : i32, i32
  }
  func.func @transform_3(%arg0: i32) -> (i32, i32) {
    %c0_i32 = arith.constant 0 : i32
    %c0_i32_0 = arith.constant 0 : i32
    %c0_i32_1 = arith.constant 0 : i32
    return %c0_i32, %c0_i32_0 : i32, i32
  }
  func.func @transform_4(%arg0: i32) -> (i32, i32) {
    %c0_i32 = arith.constant 0 : i32
    %c0_i32_0 = arith.constant 0 : i32
    %c0_i32_1 = arith.constant 0 : i32
    return %c0_i32, %c0_i32_0 : i32, i32
  }
  func.func @transform_5(%arg0: i32) -> (i32, i32) {
    %c0_i32 = arith.constant 0 : i32
    %c0_i32_0 = arith.constant 0 : i32
    %c0_i32_1 = arith.constant 0 : i32
    return %c0_i32, %c0_i32_0 : i32, i32
  }
  func.func @transform_6(%arg0: i32) -> (i32, i32) {
    %c0_i32 = arith.constant 0 : i32
    %c0_i32_0 = arith.constant 0 : i32
    %c0_i32_1 = arith.constant 0 : i32
    return %c0_i32, %c0_i32_0 : i32, i32
  }
  func.func @transform_7(%arg0: i32) -> (i32, i32) {
    %c0_i32 = arith.constant 0 : i32
    %c0_i32_0 = arith.constant 0 : i32
    %c0_i32_1 = arith.constant 0 : i32
    return %c0_i32, %c0_i32_0 : i32, i32
  }
  func.func @transform_8(%arg0: i32) -> (i32, i32) {
    %c0_i32 = arith.constant 0 : i32
    %c0_i32_0 = arith.constant 0 : i32
    %c0_i32_1 = arith.constant 0 : i32
    return %c0_i32, %c0_i32_0 : i32, i32
  }
  func.func @transform_9(%arg0: i32) -> (i32, i32) {
    %c0_i32 = arith.constant 0 : i32
    %c0_i32_0 = arith.constant 0 : i32
    %c0_i32_1 = arith.constant 0 : i32
    return %c0_i32, %c0_i32_0 : i32, i32
  }
  func.func @transform_10(%arg0: i32) -> (i32, i32) {
    %c0_i32 = arith.constant 0 : i32
    %c0_i32_0 = arith.constant 0 : i32
    %c0_i32_1 = arith.constant 0 : i32
    return %c0_i32, %c0_i32_0 : i32, i32
  }
  func.func @transform_11(%arg0: i32) -> (i32, i32) {
    %c0_i32 = arith.constant 0 : i32
    %c0_i32_0 = arith.constant 0 : i32
    %c0_i32_1 = arith.constant 0 : i32
    return %c0_i32, %c0_i32_0 : i32, i32
  }
  func.func @transform_12(%arg0: i32) -> (i32, i32) {
    %c0_i32 = arith.constant 0 : i32
    %c0_i32_0 = arith.constant 0 : i32
    %c0_i32_1 = arith.constant 0 : i32
    return %c0_i32, %c0_i32_0 : i32, i32
  }
  func.func @transform_13(%arg0: i32) -> (i32, i32) {
    %c0_i32 = arith.constant 0 : i32
    %c0_i32_0 = arith.constant 0 : i32
    %c0_i32_1 = arith.constant 0 : i32
    return %c0_i32, %c0_i32_0 : i32, i32
  }
  func.func @transform_14(%arg0: i32) -> (i32, i32) {
    %c0_i32 = arith.constant 0 : i32
    %c0_i32_0 = arith.constant 0 : i32
    %c0_i32_1 = arith.constant 0 : i32
    return %c0_i32, %c0_i32_0 : i32, i32
  }
  func.func @transform_15(%arg0: i32) -> (i32, i32) {
    %c0_i32 = arith.constant 0 : i32
    %c0_i32_0 = arith.constant 0 : i32
    %c0_i32_1 = arith.constant 0 : i32
    return %c0_i32, %c0_i32_0 : i32, i32
  }
  func.func @transform_16(%arg0: i32) -> (i32, i32) {
    %c0_i32 = arith.constant 0 : i32
    %c0_i32_0 = arith.constant 0 : i32
    %c0_i32_1 = arith.constant 0 : i32
    return %c0_i32, %c0_i32_0 : i32, i32
  }
  func.func @transform_17(%arg0: i32) -> (i32, i32, i32) {
    %c0_i32 = arith.constant 0 : i32
    %c0_i32_0 = arith.constant 0 : i32
    %c0_i32_1 = arith.constant 0 : i32
    return %arg0, %c0_i32, %c0_i32_0 : i32, i32, i32
  }
}

</mosaic_0001>

<llo_original>
// kernel: discriminator_forward.1
$region0: #{discriminator_forward.1}
  #allocation0 [shape = 'u32[]', space=smem, size = 0x4, offset = 0x4, fixed_abs, tag = 'smem constant byte address 0x4 - core index']
  #allocation1 [shape = 'u32[72,128]{1,0:T(1,128)}', space=vmem, size = 0x9000, scoped, tag = 'internal scratch']
  #allocation2 [shape = 'f32[1,1]{1,0:T(1,128)S(1)}', space=vmem, size = 0x200, scoped, tag = 'scoped memory for discriminator_forward.1']
  %s0 = inlined_call_operand.vmem [shape: f32[2,32,32,3], index: 0, kind: input, shape index: {}]
  %s1 = inlined_call_operand.vmem [shape: f32[48,8], index: 1, kind: input, shape index: {}]
  %s2 = inlined_call_operand.vmem [shape: f32[1,8], index: 2, kind: input, shape index: {}]
  %s3 = inlined_call_operand.vmem [shape: f32[128,16], index: 3, kind: input, shape index: {}]
  %s4 = inlined_call_operand.vmem [shape: f32[1,16], index: 4, kind: input, shape index: {}]
  %s5 = inlined_call_operand.vmem [shape: f32[1,16], index: 5, kind: input, shape index: {}]
  %s6 = inlined_call_operand.vmem [shape: f32[1,16], index: 6, kind: input, shape index: {}]
  %s7 = inlined_call_operand.vmem [shape: f32[256,32], index: 7, kind: input, shape index: {}]
  %s8 = inlined_call_operand.vmem [shape: f32[1,32], index: 8, kind: input, shape index: {}]
  %s9 = inlined_call_operand.vmem [shape: f32[1,32], index: 9, kind: input, shape index: {}]
  %s10 = inlined_call_operand.vmem [shape: f32[1,32], index: 10, kind: input, shape index: {}]
  %s11 = inlined_call_operand.vmem [shape: f32[512,64], index: 11, kind: input, shape index: {}]
  %s12 = inlined_call_operand.vmem [shape: f32[1,64], index: 12, kind: input, shape index: {}]
  %s13 = inlined_call_operand.vmem [shape: f32[1,64], index: 13, kind: input, shape index: {}]
  %s14 = inlined_call_operand.vmem [shape: f32[1,64], index: 14, kind: input, shape index: {}]
  %s15 = inlined_call_operand.vmem [shape: f32[1024,1], index: 15, kind: input, shape index: {}]
  %s16 = inlined_call_operand.<no memory space> [shape: f32[1,1], index: 16, kind: input, shape index: {}]
  %s17 = inlined_call_operand.vmem [shape: f32[2,4,1], index: 17, kind: output, shape index: {}]
  %s18 = sld [smem:[#allocation0]]
  $region101: #{discriminator_forward.1} parent=0
    _
  %s20 = ssub.s32 1, %s18
  %s21 = scalar_select 0, %s20, %s18
  %v22 = vstv %s16
  %23 = vst [vmem:[#allocation2] sm:$0x1] %v22
  loop: start=0, step=1, limit=4
  $region2: #{discriminator_forward.1} parent=0 // loop_pre_header
    _
  $region3: #{discriminator_forward.1} parent=0 // loop_header
    %s25 = sphi 0, %s29
    %p26 = scmp.ge.s32.totalorder %s25, 4
    %s35 = sphi 0, %s37
    %s38 = sphi 0, %s35
    %s39 = sphi 0, %s38
    %s55 = sphi 0, %s39
    %s59 = sphi 0, %s59
    %s61 = sphi 0, %s59
    %s62 = sphi 0, %s61
    %s76 = sphi 0, %s62
    %s80 = sphi 0, %s80
    %s82 = sphi 0, %s80
    %s83 = sphi 0, %s82
    %s97 = sphi 0, %s83
    %s101 = sphi 0, %s101
    %s103 = sphi 0, %s101
    %s104 = sphi 0, %s103
    %s118 = sphi 0, %s104
    %s122 = sphi 0, %s122
    %s124 = sphi 0, %s122
    %s125 = sphi 0, %s124
    %s139 = sphi 0, %s125
    %s143 = sphi 0, %s143
    %s145 = sphi 0, %s143
    %s146 = sphi 0, %s145
    %s160 = sphi 0, %s146
    %s164 = sphi 0, %s164
    %s166 = sphi 0, %s164
    %s167 = sphi 0, %s166
    %s181 = sphi 0, %s167
    %s185 = sphi 0, %s185
    %s187 = sphi 0, %s185
    %s188 = sphi 0, %s187
    %s202 = sphi 0, %s188
    %s206 = sphi 0, %s206
    %s208 = sphi 0, %s206
    %s209 = sphi 0, %s208
    %s223 = sphi 0, %s209
    %s227 = sphi 0, %s227
    %s229 = sphi 0, %s227
    %s230 = sphi 0, %s229
    %s244 = sphi 0, %s230
    %s248 = sphi 0, %s248
    %s250 = sphi 0, %s248
    %s251 = sphi 0, %s250
    %s265 = sphi 0, %s251
    %s269 = sphi 0, %s269
    %s271 = sphi 0, %s269
    %s272 = sphi 0, %s271
    %s286 = sphi 0, %s272
    %s290 = sphi 0, %s290
    %s292 = sphi 0, %s290
    %s293 = sphi 0, %s292
    %s307 = sphi 0, %s293
    %s311 = sphi 0, %s311
    %s313 = sphi 0, %s311
    %s314 = sphi 0, %s313
    %s328 = sphi 0, %s314
    %s332 = sphi 0, %s332
    %s334 = sphi 0, %s332
    %s335 = sphi 0, %s334
    %s349 = sphi 0, %s335
    %s353 = sphi 0, %s353
    %s355 = sphi 0, %s353
    %s356 = sphi 0, %s355
    %s370 = sphi 0, %s356
    %s374 = sphi 0, %s374
    %s376 = sphi 0, %s374
    %s377 = sphi 0, %s376
    %s391 = sphi 0, %s377
    %s397 = sphi 0, %s399
    %s400 = sphi 0, %s397
    %s401 = sphi 0, %s400
    %s417 = sphi 0, %s401
  $region4: #{discriminator_forward.1} parent=0 // loop_header_branch
    %28 = sbr.rel (%p26) target = $region8
  $region5: #{discriminator_forward.1} parent=0 // loop_body
    %s30 = ssub.s32 %s25, 1
    %s31 = ssub.s32 %s25, 2
    %s32 = sadd.s32 %s25, 1
    %s33 = ssub.s32 %s25, %s32
    %p34 = scmp.eq.s32.totalorder %s33, 0
    %s36 = sadd.s32 %s35, 1
    %s37 = scalar_select %p34, %s35, %s36
    %p40 = pneg %p34
    %p41 = scmp.eq.s32.totalorder %s25, 1
    %p42 = por %p40, %p41
    %p43 = scmp.ne.s32.totalorder %s35, %s38
    %p44 = scmp.eq.s32.totalorder %s25, 0
    %p45 = por %p43, %p44
    %p46 = scmp.ne.s32.totalorder %s35, %s38
    %p47 = scmp.eq.s32.totalorder %s30, 1
    %p48 = por %p46, %p47
    %p49 = scmp.ne.s32.totalorder %s38, %s39
    %p50 = scmp.eq.s32.totalorder %s30, 0
    %p51 = por %p49, %p50
    %p52 = scmp.ne.s32.totalorder %s38, %s39
    %p53 = scmp.eq.s32.totalorder %s31, 1
    %p54 = por %p52, %p53
    %p56 = scmp.ne.s32.totalorder %s39, %s55
    %p57 = scmp.eq.s32.totalorder %s31, 0
    %p58 = por %p56, %p57
    %s60 = sadd.s32 %s59, 1
    %p63 = scmp.eq.s32.totalorder %s25, 1
    %p64 = scmp.ne.s32.totalorder %s59, %s61
    %p65 = scmp.eq.s32.totalorder %s25, 0
    %p66 = por %p64, %p65
    %p67 = scmp.ne.s32.totalorder %s59, %s61
    %p68 = scmp.eq.s32.totalorder %s30, 1
    %p69 = por %p67, %p68
    %p70 = scmp.ne.s32.totalorder %s61, %s62
    %p71 = scmp.eq.s32.totalorder %s30, 0
    %p72 = por %p70, %p71
    %p73 = scmp.ne.s32.totalorder %s61, %s62
    %p74 = scmp.eq.s32.totalorder %s31, 1
    %p75 = por %p73, %p74
    %p77 = scmp.ne.s32.totalorder %s62, %s76
    %p78 = scmp.eq.s32.totalorder %s31, 0
    %p79 = por %p77, %p78
    %s81 = sadd.s32 %s80, 1
    %p84 = scmp.eq.s32.totalorder %s25, 1
    %p85 = scmp.ne.s32.totalorder %s80, %s82
    %p86 = scmp.eq.s32.totalorder %s25, 0
    %p87 = por %p85, %p86
    %p88 = scmp.ne.s32.totalorder %s80, %s82
    %p89 = scmp.eq.s32.totalorder %s30, 1
    %p90 = por %p88, %p89
    %p91 = scmp.ne.s32.totalorder %s82, %s83
    %p92 = scmp.eq.s32.totalorder %s30, 0
    %p93 = por %p91, %p92
    %p94 = scmp.ne.s32.totalorder %s82, %s83
    %p95 = scmp.eq.s32.totalorder %s31, 1
    %p96 = por %p94, %p95
    %p98 = scmp.ne.s32.totalorder %s83, %s97
    %p99 = scmp.eq.s32.totalorder %s31, 0
    %p100 = por %p98, %p99
    %s102 = sadd.s32 %s101, 1
    %p105 = scmp.eq.s32.totalorder %s25, 1
    %p106 = scmp.ne.s32.totalorder %s101, %s103
    %p107 = scmp.eq.s32.totalorder %s25, 0
    %p108 = por %p106, %p107
    %p109 = scmp.ne.s32.totalorder %s101, %s103
    %p110 = scmp.eq.s32.totalorder %s30, 1
    %p111 = por %p109, %p110
    %p112 = scmp.ne.s32.totalorder %s103, %s104
    %p113 = scmp.eq.s32.totalorder %s30, 0
    %p114 = por %p112, %p113
    %p115 = scmp.ne.s32.totalorder %s103, %s104
    %p116 = scmp.eq.s32.totalorder %s31, 1
    %p117 = por %p115, %p116
    %p119 = scmp.ne.s32.totalorder %s104, %s118
    %p120 = scmp.eq.s32.totalorder %s31, 0
    %p121 = por %p119, %p120
    %s123 = sadd.s32 %s122, 1
    %p126 = scmp.eq.s32.totalorder %s25, 1
    %p127 = scmp.ne.s32.totalorder %s122, %s124
    %p128 = scmp.eq.s32.totalorder %s25, 0
    %p129 = por %p127, %p128
    %p130 = scmp.ne.s32.totalorder %s122, %s124
    %p131 = scmp.eq.s32.totalorder %s30, 1
    %p132 = por %p130, %p131
    %p133 = scmp.ne.s32.totalorder %s124, %s125
    %p134 = scmp.eq.s32.totalorder %s30, 0
    %p135 = por %p133, %p134
    %p136 = scmp.ne.s32.totalorder %s124, %s125
    %p137 = scmp.eq.s32.totalorder %s31, 1
    %p138 = por %p136, %p137
    %p140 = scmp.ne.s32.totalorder %s125, %s139
    %p141 = scmp.eq.s32.totalorder %s31, 0
    %p142 = por %p140, %p141
    %s144 = sadd.s32 %s143, 1
    %p147 = scmp.eq.s32.totalorder %s25, 1
    %p148 = scmp.ne.s32.totalorder %s143, %s145
    %p149 = scmp.eq.s32.totalorder %s25, 0
    %p150 = por %p148, %p149
    %p151 = scmp.ne.s32.totalorder %s143, %s145
    %p152 = scmp.eq.s32.totalorder %s30, 1
    %p153 = por %p151, %p152
    %p154 = scmp.ne.s32.totalorder %s145, %s146
    %p155 = scmp.eq.s32.totalorder %s30, 0
    %p156 = por %p154, %p155
    %p157 = scmp.ne.s32.totalorder %s145, %s146
    %p158 = scmp.eq.s32.totalorder %s31, 1
    %p159 = por %p157, %p158
    %p161 = scmp.ne.s32.totalorder %s146, %s160
    %p162 = scmp.eq.s32.totalorder %s31, 0
    %p163 = por %p161, %p162
    %s165 = sadd.s32 %s164, 1
    %p168 = scmp.eq.s32.totalorder %s25, 1
    %p169 = scmp.ne.s32.totalorder %s164, %s166
    %p170 = scmp.eq.s32.totalorder %s25, 0
    %p171 = por %p169, %p170
    %p172 = scmp.ne.s32.totalorder %s164, %s166
    %p173 = scmp.eq.s32.totalorder %s30, 1
    %p174 = por %p172, %p173
    %p175 = scmp.ne.s32.totalorder %s166, %s167
    %p176 = scmp.eq.s32.totalorder %s30, 0
    %p177 = por %p175, %p176
    %p178 = scmp.ne.s32.totalorder %s166, %s167
    %p179 = scmp.eq.s32.totalorder %s31, 1
    %p180 = por %p178, %p179
    %p182 = scmp.ne.s32.totalorder %s167, %s181
    %p183 = scmp.eq.s32.totalorder %s31, 0
    %p184 = por %p182, %p183
    %s186 = sadd.s32 %s185, 1
    %p189 = scmp.eq.s32.totalorder %s25, 1
    %p190 = scmp.ne.s32.totalorder %s185, %s187
    %p191 = scmp.eq.s32.totalorder %s25, 0
    %p192 = por %p190, %p191
    %p193 = scmp.ne.s32.totalorder %s185, %s187
    %p194 = scmp.eq.s32.totalorder %s30, 1
    %p195 = por %p193, %p194
    %p196 = scmp.ne.s32.totalorder %s187, %s188
    %p197 = scmp.eq.s32.totalorder %s30, 0
    %p198 = por %p196, %p197
    %p199 = scmp.ne.s32.totalorder %s187, %s188
    %p200 = scmp.eq.s32.totalorder %s31, 1
    %p201 = por %p199, %p200
    %p203 = scmp.ne.s32.totalorder %s188, %s202
    %p204 = scmp.eq.s32.totalorder %s31, 0
    %p205 = por %p203, %p204
    %s207 = sadd.s32 %s206, 1
    %p210 = scmp.eq.s32.totalorder %s25, 1
    %p211 = scmp.ne.s32.totalorder %s206, %s208
    %p212 = scmp.eq.s32.totalorder %s25, 0
    %p213 = por %p211, %p212
    %p214 = scmp.ne.s32.totalorder %s206, %s208
    %p215 = scmp.eq.s32.totalorder %s30, 1
    %p216 = por %p214, %p215
    %p217 = scmp.ne.s32.totalorder %s208, %s209
    %p218 = scmp.eq.s32.totalorder %s30, 0
    %p219 = por %p217, %p218
    %p220 = scmp.ne.s32.totalorder %s208, %s209
    %p221 = scmp.eq.s32.totalorder %s31, 1
    %p222 = por %p220, %p221
    %p224 = scmp.ne.s32.totalorder %s209, %s223
    %p225 = scmp.eq.s32.totalorder %s31, 0
    %p226 = por %p224, %p225
    %s228 = sadd.s32 %s227, 1
    %p231 = scmp.eq.s32.totalorder %s25, 1
    %p232 = scmp.ne.s32.totalorder %s227, %s229
    %p233 = scmp.eq.s32.totalorder %s25, 0
    %p234 = por %p232, %p233
    %p235 = scmp.ne.s32.totalorder %s227, %s229
    %p236 = scmp.eq.s32.totalorder %s30, 1
    %p237 = por %p235, %p236
    %p238 = scmp.ne.s32.totalorder %s229, %s230
    %p239 = scmp.eq.s32.totalorder %s30, 0
    %p240 = por %p238, %p239
    %p241 = scmp.ne.s32.totalorder %s229, %s230
    %p242 = scmp.eq.s32.totalorder %s31, 1
    %p243 = por %p241, %p242
    %p245 = scmp.ne.s32.totalorder %s230, %s244
    %p246 = scmp.eq.s32.totalorder %s31, 0
    %p247 = por %p245, %p246
    %s249 = sadd.s32 %s248, 1
    %p252 = scmp.eq.s32.totalorder %s25, 1
    %p253 = scmp.ne.s32.totalorder %s248, %s250
    %p254 = scmp.eq.s32.totalorder %s25, 0
    %p255 = por %p253, %p254
    %p256 = scmp.ne.s32.totalorder %s248, %s250
    %p257 = scmp.eq.s32.totalorder %s30, 1
    %p258 = por %p256, %p257
    %p259 = scmp.ne.s32.totalorder %s250, %s251
    %p260 = scmp.eq.s32.totalorder %s30, 0
    %p261 = por %p259, %p260
    %p262 = scmp.ne.s32.totalorder %s250, %s251
    %p263 = scmp.eq.s32.totalorder %s31, 1
    %p264 = por %p262, %p263
    %p266 = scmp.ne.s32.totalorder %s251, %s265
    %p267 = scmp.eq.s32.totalorder %s31, 0
    %p268 = por %p266, %p267
    %s270 = sadd.s32 %s269, 1
    %p273 = scmp.eq.s32.totalorder %s25, 1
    %p274 = scmp.ne.s32.totalorder %s269, %s271
    %p275 = scmp.eq.s32.totalorder %s25, 0
    %p276 = por %p274, %p275
    %p277 = scmp.ne.s32.totalorder %s269, %s271
    %p278 = scmp.eq.s32.totalorder %s30, 1
    %p279 = por %p277, %p278
    %p280 = scmp.ne.s32.totalorder %s271, %s272
    %p281 = scmp.eq.s32.totalorder %s30, 0
    %p282 = por %p280, %p281
    %p283 = scmp.ne.s32.totalorder %s271, %s272
    %p284 = scmp.eq.s32.totalorder %s31, 1
    %p285 = por %p283, %p284
    %p287 = scmp.ne.s32.totalorder %s272, %s286
    %p288 = scmp.eq.s32.totalorder %s31, 0
    %p289 = por %p287, %p288
    %s291 = sadd.s32 %s290, 1
    %p294 = scmp.eq.s32.totalorder %s25, 1
    %p295 = scmp.ne.s32.totalorder %s290, %s292
    %p296 = scmp.eq.s32.totalorder %s25, 0
    %p297 = por %p295, %p296
    %p298 = scmp.ne.s32.totalorder %s290, %s292
    %p299 = scmp.eq.s32.totalorder %s30, 1
    %p300 = por %p298, %p299
    %p301 = scmp.ne.s32.totalorder %s292, %s293
    %p302 = scmp.eq.s32.totalorder %s30, 0
    %p303 = por %p301, %p302
    %p304 = scmp.ne.s32.totalorder %s292, %s293
    %p305 = scmp.eq.s32.totalorder %s31, 1
    %p306 = por %p304, %p305
    %p308 = scmp.ne.s32.totalorder %s293, %s307
    %p309 = scmp.eq.s32.totalorder %s31, 0
    %p310 = por %p308, %p309
    %s312 = sadd.s32 %s311, 1
    %p315 = scmp.eq.s32.totalorder %s25, 1
    %p316 = scmp.ne.s32.totalorder %s311, %s313
    %p317 = scmp.eq.s32.totalorder %s25, 0
    %p318 = por %p316, %p317
    %p319 = scmp.ne.s32.totalorder %s311, %s313
    %p320 = scmp.eq.s32.totalorder %s30, 1
    %p321 = por %p319, %p320
    %p322 = scmp.ne.s32.totalorder %s313, %s314
    %p323 = scmp.eq.s32.totalorder %s30, 0
    %p324 = por %p322, %p323
    %p325 = scmp.ne.s32.totalorder %s313, %s314
    %p326 = scmp.eq.s32.totalorder %s31, 1
    %p327 = por %p325, %p326
    %p329 = scmp.ne.s32.totalorder %s314, %s328
    %p330 = scmp.eq.s32.totalorder %s31, 0
    %p331 = por %p329, %p330
    %s333 = sadd.s32 %s332, 1
    %p336 = scmp.eq.s32.totalorder %s25, 1
    %p337 = scmp.ne.s32.totalorder %s332, %s334
    %p338 = scmp.eq.s32.totalorder %s25, 0
    %p339 = por %p337, %p338
    %p340 = scmp.ne.s32.totalorder %s332, %s334
    %p341 = scmp.eq.s32.totalorder %s30, 1
    %p342 = por %p340, %p341
    %p343 = scmp.ne.s32.totalorder %s334, %s335
    %p344 = scmp.eq.s32.totalorder %s30, 0
    %p345 = por %p343, %p344
    %p346 = scmp.ne.s32.totalorder %s334, %s335
    %p347 = scmp.eq.s32.totalorder %s31, 1
    %p348 = por %p346, %p347
    %p350 = scmp.ne.s32.totalorder %s335, %s349
    %p351 = scmp.eq.s32.totalorder %s31, 0
    %p352 = por %p350, %p351
    %s354 = sadd.s32 %s353, 1
    %p357 = scmp.eq.s32.totalorder %s25, 1
    %p358 = scmp.ne.s32.totalorder %s353, %s355
    %p359 = scmp.eq.s32.totalorder %s25, 0
    %p360 = por %p358, %p359
    %p361 = scmp.ne.s32.totalorder %s353, %s355
    %p362 = scmp.eq.s32.totalorder %s30, 1
    %p363 = por %p361, %p362
    %p364 = scmp.ne.s32.totalorder %s355, %s356
    %p365 = scmp.eq.s32.totalorder %s30, 0
    %p366 = por %p364, %p365
    %p367 = scmp.ne.s32.totalorder %s355, %s356
    %p368 = scmp.eq.s32.totalorder %s31, 1
    %p369 = por %p367, %p368
    %p371 = scmp.ne.s32.totalorder %s356, %s370
    %p372 = scmp.eq.s32.totalorder %s31, 0
    %p373 = por %p371, %p372
    %s375 = sadd.s32 %s374, 1
    %p378 = scmp.eq.s32.totalorder %s25, 1
    %p379 = scmp.ne.s32.totalorder %s374, %s376
    %p380 = scmp.eq.s32.totalorder %s25, 0
    %p381 = por %p379, %p380
    %p382 = scmp.ne.s32.totalorder %s374, %s376
    %p383 = scmp.eq.s32.totalorder %s30, 1
    %p384 = por %p382, %p383
    %p385 = scmp.ne.s32.totalorder %s376, %s377
    %p386 = scmp.eq.s32.totalorder %s30, 0
    %p387 = por %p385, %p386
    %p388 = scmp.ne.s32.totalorder %s376, %s377
    %p389 = scmp.eq.s32.totalorder %s31, 1
    %p390 = por %p388, %p389
    %p392 = scmp.ne.s32.totalorder %s377, %s391
    %p393 = scmp.eq.s32.totalorder %s31, 0
    %p394 = por %p392, %p393
    %s395 = ssub.s32 %s25, %s32
    %p396 = scmp.eq.s32.totalorder %s395, 0
    %s398 = sadd.s32 %s397, 1
    %s399 = scalar_select %p396, %s397, %s398
    %p402 = pneg %p396
    %p403 = scmp.eq.s32.totalorder %s25, 1
    %p404 = por %p402, %p403
    %p405 = scmp.ne.s32.totalorder %s397, %s400
    %p406 = scmp.eq.s32.totalorder %s25, 0
    %p407 = por %p405, %p406
    %p408 = scmp.ne.s32.totalorder %s397, %s400
    %p409 = scmp.eq.s32.totalorder %s30, 1
    %p410 = por %p408, %p409
    %p411 = scmp.ne.s32.totalorder %s400, %s401
    %p412 = scmp.eq.s32.totalorder %s30, 0
    %p413 = por %p411, %p412
    %p414 = scmp.ne.s32.totalorder %s400, %s401
    %p415 = scmp.eq.s32.totalorder %s31, 1
    %p416 = por %p414, %p415
    %p418 = scmp.ne.s32.totalorder %s401, %s417
    %p419 = scmp.eq.s32.totalorder %s31, 0
    %p420 = por %p418, %p419
    %p421 = scmp.le.s32.totalorder 1, %s25
    %p422 = scmp.lt.s32.totalorder %s25, 3
    %p423 = pnand %p421, %p422
    %p424 = pneg %p423
    // Predicated region
    $region9: #{discriminator_forward.1} parent=5 // pred_check
      _
    $region10: #{discriminator_forward.1} parent=5 // pred_check_branch
      %426 = sbr.rel (%p423) target = $region12
    $region11: #{discriminator_forward.1} parent=5 // pred_region
      %s427 = ssub.s32 %s25, 1
      // Predicated region
      $region13: #{discriminator_forward.1} parent=11 // pred_check
        %p428 = pneg %p72
      $region14: #{discriminator_forward.1} parent=11 // pred_check_branch
        %430 = sbr.rel (%p428) target = $region16
      $region15: #{discriminator_forward.1} parent=11 // pred_region
        _
      $region16: #{discriminator_forward.1} parent=11 // pred_fallthru
        _
      // Predicated region
      $region17: #{discriminator_forward.1} parent=11 // pred_check
        %p431 = pneg %p93
      $region18: #{discriminator_forward.1} parent=11 // pred_check_branch
        %433 = sbr.rel (%p431) target = $region20
      $region19: #{discriminator_forward.1} parent=11 // pred_region
        _
      $region20: #{discriminator_forward.1} parent=11 // pred_fallthru
        _
      // Predicated region
      $region21: #{discriminator_forward.1} parent=11 // pred_check
        %p434 = pneg %p114
      $region22: #{discriminator_forward.1} parent=11 // pred_check_branch
        %436 = sbr.rel (%p434) target = $region24
      $region23: #{discriminator_forward.1} parent=11 // pred_region
        _
      $region24: #{discriminator_forward.1} parent=11 // pred_fallthru
        _
      // Predicated region
      $region25: #{discriminator_forward.1} parent=11 // pred_check
        %p437 = pneg %p135
      $region26: #{discriminator_forward.1} parent=11 // pred_check_branch
        %439 = sbr.rel (%p437) target = $region28
      $region27: #{discriminator_forward.1} parent=11 // pred_region
        _
      $region28: #{discriminator_forward.1} parent=11 // pred_fallthru
        _
      // Predicated region
      $region29: #{discriminator_forward.1} parent=11 // pred_check
        %p440 = pneg %p156
      $region30: #{discriminator_forward.1} parent=11 // pred_check_branch
        %442 = sbr.rel (%p440) target = $region32
      $region31: #{discriminator_forward.1} parent=11 // pred_region
        _
      $region32: #{discriminator_forward.1} parent=11 // pred_fallthru
        _
      // Predicated region
      $region33: #{discriminator_forward.1} parent=11 // pred_check
        %p443 = pneg %p177
      $region34: #{discriminator_forward.1} parent=11 // pred_check_branch
        %445 = sbr.rel (%p443) target = $region36
      $region35: #{discriminator_forward.1} parent=11 // pred_region
        _
      $region36: #{discriminator_forward.1} parent=11 // pred_fallthru
        _
      // Predicated region
      $region37: #{discriminator_forward.1} parent=11 // pred_check
        %p446 = pneg %p198
      $region38: #{discriminator_forward.1} parent=11 // pred_check_branch
        %448 = sbr.rel (%p446) target = $region40
      $region39: #{discriminator_forward.1} parent=11 // pred_region
        _
      $region40: #{discriminator_forward.1} parent=11 // pred_fallthru
        _
      // Predicated region
      $region41: #{discriminator_forward.1} parent=11 // pred_check
        %p449 = pneg %p219
      $region42: #{discriminator_forward.1} parent=11 // pred_check_branch
        %451 = sbr.rel (%p449) target = $region44
      $region43: #{discriminator_forward.1} parent=11 // pred_region
        _
      $region44: #{discriminator_forward.1} parent=11 // pred_fallthru
        _
      // Predicated region
      $region45: #{discriminator_forward.1} parent=11 // pred_check
        %p452 = pneg %p240
      $region46: #{discriminator_forward.1} parent=11 // pred_check_branch
        %454 = sbr.rel (%p452) target = $region48
      $region47: #{discriminator_forward.1} parent=11 // pred_region
        _
      $region48: #{discriminator_forward.1} parent=11 // pred_fallthru
        _
      // Predicated region
      $region49: #{discriminator_forward.1} parent=11 // pred_check
        %p455 = pneg %p261
      $region50: #{discriminator_forward.1} parent=11 // pred_check_branch
        %457 = sbr.rel (%p455) target = $region52
      $region51: #{discriminator_forward.1} parent=11 // pred_region
        _
      $region52: #{discriminator_forward.1} parent=11 // pred_fallthru
        _
      // Predicated region
      $region53: #{discriminator_forward.1} parent=11 // pred_check
        %p458 = pneg %p282
      $region54: #{discriminator_forward.1} parent=11 // pred_check_branch
        %460 = sbr.rel (%p458) target = $region56
      $region55: #{discriminator_forward.1} parent=11 // pred_region
        _
      $region56: #{discriminator_forward.1} parent=11 // pred_fallthru
        _
      // Predicated region
      $region57: #{discriminator_forward.1} parent=11 // pred_check
        %p461 = pneg %p303
      $region58: #{discriminator_forward.1} parent=11 // pred_check_branch
        %463 = sbr.rel (%p461) target = $region60
      $region59: #{discriminator_forward.1} parent=11 // pred_region
        _
      $region60: #{discriminator_forward.1} parent=11 // pred_fallthru
        _
      // Predicated region
      $region61: #{discriminator_forward.1} parent=11 // pred_check
        %p464 = pneg %p324
      $region62: #{discriminator_forward.1} parent=11 // pred_check_branch
        %466 = sbr.rel (%p464) target = $region64
      $region63: #{discriminator_forward.1} parent=11 // pred_region
        _
      $region64: #{discriminator_forward.1} parent=11 // pred_fallthru
        _
      // Predicated region
      $region65: #{discriminator_forward.1} parent=11 // pred_check
        %p467 = pneg %p345
      $region66: #{discriminator_forward.1} parent=11 // pred_check_branch
        %469 = sbr.rel (%p467) target = $region68
      $region67: #{discriminator_forward.1} parent=11 // pred_region
        _
      $region68: #{discriminator_forward.1} parent=11 // pred_fallthru
        _
      // Predicated region
      $region69: #{discriminator_forward.1} parent=11 // pred_check
        %p470 = pneg %p366
      $region70: #{discriminator_forward.1} parent=11 // pred_check_branch
        %472 = sbr.rel (%p470) target = $region72
      $region71: #{discriminator_forward.1} parent=11 // pred_region
        _
      $region72: #{discriminator_forward.1} parent=11 // pred_fallthru
        _
      // Predicated region
      $region73: #{discriminator_forward.1} parent=11 // pred_check
        %p473 = pneg %p387
      $region74: #{discriminator_forward.1} parent=11 // pred_check_branch
        %475 = sbr.rel (%p473) target = $region76
      $region75: #{discriminator_forward.1} parent=11 // pred_region
        _
      $region76: #{discriminator_forward.1} parent=11 // pred_fallthru
        _
    $region12: #{discriminator_forward.1} parent=5 // pred_fallthru
      _
    %p476 = scmp.lt.s32.totalorder %s25, 2
    // Predicated region
    $region77: #{discriminator_forward.1} parent=5 // pred_check
      %p477 = pneg %p476
    $region78: #{discriminator_forward.1} parent=5 // pred_check_branch
      %479 = sbr.rel (%p477) target = $region80
    $region79: #{discriminator_forward.1} parent=5 // pred_region
      // Predicated region
      $region81: #{discriminator_forward.1} parent=79 // pred_check
        %p480 = pneg %p45
      $region82: #{discriminator_forward.1} parent=79 // pred_check_branch
        %482 = sbr.rel (%p480) target = $region84
      $region83: #{discriminator_forward.1} parent=79 // pred_region
        %p483 = scmp.lt.s32.totalorder %s25, 1
        %s484 = scalar_select %p483, %s25, 1
        %s485 = smul.addr %s484, 128
        %s486 = smul.addr %s485, 8
        %s487 = scalar_lea.vmem %s0, %s486
      $region84: #{discriminator_forward.1} parent=79 // pred_fallthru
        _
    $region80: #{discriminator_forward.1} parent=5 // pred_fallthru
      _
    %p488 = scmp.le.s32.totalorder 1, %s25
    %p489 = scmp.lt.s32.totalorder %s25, 3
    %p490 = pnand %p488, %p489
    %p491 = pneg %p490
    // Predicated region
    $region85: #{discriminator_forward.1} parent=5 // pred_check
      _
    $region86: #{discriminator_forward.1} parent=5 // pred_check_branch
      %493 = sbr.rel (%p490) target = $region88
    $region87: #{discriminator_forward.1} parent=5 // pred_region
      %s494 = ssub.s32 %s25, 1
      %p495 = scmp.lt.s32.totalorder %s30, 1
      %s496 = scalar_select %p495, %s30, 1
      %s497 = smul.addr %s496, 128
      %s498 = smul.addr %s497, 8
      %s499 = scalar_lea.vmem %s0, %s498
      %p500 = pneg %p51
      %p501 = pneg %p48
      %p502 = pneg %p72
      %p503 = pneg %p69
      %p504 = pneg %p93
      %p505 = pneg %p90
      %p506 = pneg %p114
      %p507 = pneg %p111
      %p508 = pneg %p135
      %p509 = pneg %p132
      %p510 = pneg %p156
      %p511 = pneg %p153
      %p512 = pneg %p177
      %p513 = pneg %p174
      %p514 = pneg %p198
      %p515 = pneg %p195
      %p516 = pneg %p219
      %p517 = pneg %p216
      %p518 = pneg %p240
      %p519 = pneg %p237
      %p520 = pneg %p261
      %p521 = pneg %p258
      %p522 = pneg %p282
      %p523 = pneg %p279
      %p524 = pneg %p303
      %p525 = pneg %p300
      %p526 = pneg %p324
      %p527 = pneg %p321
      %p528 = pneg %p345
      %p529 = pneg %p342
      %p530 = pneg %p366
      %p531 = pneg %p363
      %p532 = pneg %p387
      %p533 = pneg %p384
      %p534 = pneg %p413
      %p535 = pneg %p410
      %p536 = scmp.lt.s32.totalorder %s30, 1
      %s537 = scalar_select %p536, %s30, 1
      %s538 = smul.addr %s537, 4
      %s539 = scalar_lea.vmem %s17, %s538
      %p540 = scmp.lt.s32.totalorder %s30, 1
      %s541 = scalar_select %p540, %s30, 1
      %s542 = smul.addr %s541, 128
      %s543 = smul.addr %s542, 8
      %s544 = scalar_lea.vmem %s0, %s543
      %p545 = scmp.lt.s32.totalorder %s30, 1
      %s546 = scalar_select %p545, %s30, 1
      %s547 = smul.addr %s546, 4
      %s548 = scalar_lea.vmem %s17, %s547
      %v549 = vld [vmem:[%s544] sm:$0xff]
      %v550 = vld [vmem:[%s544 + $0x8] sm:$0xff]
      %v551 = vld [vmem:[%s544 + $0x10] sm:$0xff]
      %v552 = vld [vmem:[%s544 + $0x18] sm:$0xff]
      %v553 = vld [vmem:[%s544 + $0x20] sm:$0xff]
      %v554 = vld [vmem:[%s544 + $0x28] sm:$0xff]
      %v555 = vld [vmem:[%s544 + $0x30] sm:$0xff]
      %v556 = vld [vmem:[%s544 + $0x38] sm:$0xff]
      %v557 = vld [vmem:[%s544 + $0x40] sm:$0xff]
      %v558 = vld [vmem:[%s544 + $0x48] sm:$0xff]
      %v559 = vld [vmem:[%s544 + $0x50] sm:$0xff]
      %v560 = vld [vmem:[%s544 + $0x58] sm:$0xff]
      %v561 = vld [vmem:[%s544 + $0x60] sm:$0xff]
      %v562 = vld [vmem:[%s544 + $0x68] sm:$0xff]
      %v563 = vld [vmem:[%s544 + $0x70] sm:$0xff]
      %v564 = vld [vmem:[%s544 + $0x78] sm:$0xff]
      %v565 = vld [vmem:[%s544 + $0x80] sm:$0xff]
      %v566 = vld [vmem:[%s544 + $0x88] sm:$0xff]
      %v567 = vld [vmem:[%s544 + $0x90] sm:$0xff]
      %v568 = vld [vmem:[%s544 + $0x98] sm:$0xff]
      %v569 = vld [vmem:[%s544 + $0xa0] sm:$0xff]
      %v570 = vld [vmem:[%s544 + $0xa8] sm:$0xff]
      %v571 = vld [vmem:[%s544 + $0xb0] sm:$0xff]
      %v572 = vld [vmem:[%s544 + $0xb8] sm:$0xff]
      %v573 = vld [vmem:[%s544 + $0xc0] sm:$0xff]
      %v574 = vld [vmem:[%s544 + $0xc8] sm:$0xff]
      %v575 = vld [vmem:[%s544 + $0xd0] sm:$0xff]
      %v576 = vld [vmem:[%s544 + $0xd8] sm:$0xff]
      %v577 = vld [vmem:[%s544 + $0xe0] sm:$0xff]
      %v578 = vld [vmem:[%s544 + $0xe8] sm:$0xff]
      %v579 = vld [vmem:[%s544 + $0xf0] sm:$0xff]
      %v580 = vld [vmem:[%s544 + $0xf8] sm:$0xff]
      %v581 = vld [vmem:[%s544 + $0x100] sm:$0xff]
      %v582 = vld [vmem:[%s544 + $0x108] sm:$0xff]
      %v583 = vld [vmem:[%s544 + $0x110] sm:$0xff]
      %v584 = vld [vmem:[%s544 + $0x118] sm:$0xff]
      %v585 = vld [vmem:[%s544 + $0x120] sm:$0xff]
      %v586 = vld [vmem:[%s544 + $0x128] sm:$0xff]
      %v587 = vld [vmem:[%s544 + $0x130] sm:$0xff]
      %v588 = vld [vmem:[%s544 + $0x138] sm:$0xff]
      %v589 = vld [vmem:[%s544 + $0x140] sm:$0xff]
      %v590 = vld [vmem:[%s544 + $0x148] sm:$0xff]
      %v591 = vld [vmem:[%s544 + $0x150] sm:$0xff]
      %v592 = vld [vmem:[%s544 + $0x158] sm:$0xff]
      %v593 = vld [vmem:[%s544 + $0x160] sm:$0xff]
      %v594 = vld [vmem:[%s544 + $0x168] sm:$0xff]
      %v595 = vld [vmem:[%s544 + $0x170] sm:$0xff]
      %v596 = vld [vmem:[%s544 + $0x178] sm:$0xff]
      %v597 = vld [vmem:[%s544 + $0x180] sm:$0xff]
      %v598 = vld [vmem:[%s544 + $0x188] sm:$0xff]
      %v599 = vld [vmem:[%s544 + $0x190] sm:$0xff]
      %v600 = vld [vmem:[%s544 + $0x198] sm:$0xff]
      %v601 = vld [vmem:[%s544 + $0x1a0] sm:$0xff]
      %v602 = vld [vmem:[%s544 + $0x1a8] sm:$0xff]
      %v603 = vld [vmem:[%s544 + $0x1b0] sm:$0xff]
      %v604 = vld [vmem:[%s544 + $0x1b8] sm:$0xff]
      %v605 = vld [vmem:[%s544 + $0x1c0] sm:$0xff]
      %v606 = vld [vmem:[%s544 + $0x1c8] sm:$0xff]
      %v607 = vld [vmem:[%s544 + $0x1d0] sm:$0xff]
      %v608 = vld [vmem:[%s544 + $0x1d8] sm:$0xff]
      %v609 = vld [vmem:[%s544 + $0x1e0] sm:$0xff]
      %v610 = vld [vmem:[%s544 + $0x1e8] sm:$0xff]
      %v611 = vld [vmem:[%s544 + $0x1f0] sm:$0xff]
      %v612 = vld [vmem:[%s544 + $0x1f8] sm:$0xff]
      %v613 = vld [vmem:[%s544 + $0x200] sm:$0xff]
      %v614 = vld [vmem:[%s544 + $0x208] sm:$0xff]
      %v615 = vld [vmem:[%s544 + $0x210] sm:$0xff]
      %v616 = vld [vmem:[%s544 + $0x218] sm:$0xff]
      %v617 = vld [vmem:[%s544 + $0x220] sm:$0xff]
      %v618 = vld [vmem:[%s544 + $0x228] sm:$0xff]
      %v619 = vld [vmem:[%s544 + $0x230] sm:$0xff]
      %v620 = vld [vmem:[%s544 + $0x238] sm:$0xff]
      %v621 = vld [vmem:[%s544 + $0x240] sm:$0xff]
      %v622 = vld [vmem:[%s544 + $0x248] sm:$0xff]
      %v623 = vld [vmem:[%s544 + $0x250] sm:$0xff]
      %v624 = vld [vmem:[%s544 + $0x258] sm:$0xff]
      %v625 = vld [vmem:[%s544 + $0x260] sm:$0xff]
      %v626 = vld [vmem:[%s544 + $0x268] sm:$0xff]
      %v627 = vld [vmem:[%s544 + $0x270] sm:$0xff]
      %v628 = vld [vmem:[%s544 + $0x278] sm:$0xff]
      %v629 = vld [vmem:[%s544 + $0x280] sm:$0xff]
      %v630 = vld [vmem:[%s544 + $0x288] sm:$0xff]
      %v631 = vld [vmem:[%s544 + $0x290] sm:$0xff]
      %v632 = vld [vmem:[%s544 + $0x298] sm:$0xff]
      %v633 = vld [vmem:[%s544 + $0x2a0] sm:$0xff]
      %v634 = vld [vmem:[%s544 + $0x2a8] sm:$0xff]
      %v635 = vld [vmem:[%s544 + $0x2b0] sm:$0xff]
      %v636 = vld [vmem:[%s544 + $0x2b8] sm:$0xff]
      %v637 = vld [vmem:[%s544 + $0x2c0] sm:$0xff]
      %v638 = vld [vmem:[%s544 + $0x2c8] sm:$0xff]
      %v639 = vld [vmem:[%s544 + $0x2d0] sm:$0xff]
      %v640 = vld [vmem:[%s544 + $0x2d8] sm:$0xff]
      %v641 = vld [vmem:[%s544 + $0x2e0] sm:$0xff]
      %v642 = vld [vmem:[%s544 + $0x2e8] sm:$0xff]
      %v643 = vld [vmem:[%s544 + $0x2f0] sm:$0xff]
      %v644 = vld [vmem:[%s544 + $0x2f8] sm:$0xff]
      %v645 = vld [vmem:[%s544 + $0x300] sm:$0xff]
      %v646 = vld [vmem:[%s544 + $0x308] sm:$0xff]
      %v647 = vld [vmem:[%s544 + $0x310] sm:$0xff]
      %v648 = vld [vmem:[%s544 + $0x318] sm:$0xff]
      %v649 = vld [vmem:[%s544 + $0x320] sm:$0xff]
      %v650 = vld [vmem:[%s544 + $0x328] sm:$0xff]
      %v651 = vld [vmem:[%s544 + $0x330] sm:$0xff]
      %v652 = vld [vmem:[%s544 + $0x338] sm:$0xff]
      %v653 = vld [vmem:[%s544 + $0x340] sm:$0xff]
      %v654 = vld [vmem:[%s544 + $0x348] sm:$0xff]
      %v655 = vld [vmem:[%s544 + $0x350] sm:$0xff]
      %v656 = vld [vmem:[%s544 + $0x358] sm:$0xff]
      %v657 = vld [vmem:[%s544 + $0x360] sm:$0xff]
      %v658 = vld [vmem:[%s544 + $0x368] sm:$0xff]
      %v659 = vld [vmem:[%s544 + $0x370] sm:$0xff]
      %v660 = vld [vmem:[%s544 + $0x378] sm:$0xff]
      %v661 = vld [vmem:[%s544 + $0x380] sm:$0xff]
      %v662 = vld [vmem:[%s544 + $0x388] sm:$0xff]
      %v663 = vld [vmem:[%s544 + $0x390] sm:$0xff]
      %v664 = vld [vmem:[%s544 + $0x398] sm:$0xff]
      %v665 = vld [vmem:[%s544 + $0x3a0] sm:$0xff]
      %v666 = vld [vmem:[%s544 + $0x3a8] sm:$0xff]
      %v667 = vld [vmem:[%s544 + $0x3b0] sm:$0xff]
      %v668 = vld [vmem:[%s544 + $0x3b8] sm:$0xff]
      %v669 = vld [vmem:[%s544 + $0x3c0] sm:$0xff]
      %v670 = vld [vmem:[%s544 + $0x3c8] sm:$0xff]
      %v671 = vld [vmem:[%s544 + $0x3d0] sm:$0xff]
      %v672 = vld [vmem:[%s544 + $0x3d8] sm:$0xff]
      %v673 = vld [vmem:[%s544 + $0x3e0] sm:$0xff]
      %v674 = vld [vmem:[%s544 + $0x3e8] sm:$0xff]
      %v675 = vld [vmem:[%s544 + $0x3f0] sm:$0xff]
      %v676 = vld [vmem:[%s544 + $0x3f8] sm:$0xff]
      %v677 = vld [vmem:[%s1] sm:$0xff]
      %v678 = vld [vmem:[%s1 + $0x8] sm:$0xff]
      %v679 = vld [vmem:[%s1 + $0x10] sm:$0xff]
      %v680 = vld [vmem:[%s1 + $0x18] sm:$0xff]
      %v681 = vld [vmem:[%s1 + $0x20] sm:$0xff]
      %v682 = vld [vmem:[%s1 + $0x28] sm:$0xff]
      %v683 = vld [vmem:[%s2] sm:$0x1]
      %v716 = vrot.slane %v553, 1
      %v717 = vrot.slane %v549, 1
      %v718 = vrot.slane %v557, 1
      %v719 = vrot.slane %v561, 1
      %v720 = vrot.slane %v565, 1
      %v721 = vrot.slane %v569, 1
      %v722 = vrot.slane %v573, 1
      %v723 = vrot.slane %v577, 1
      %v724 = vrot.slane %v581, 1
      %v725 = vrot.slane %v585, 1
      %v726 = vrot.slane %v589, 1
      %v727 = vrot.slane %v593, 1
      %v728 = vrot.slane %v597, 1
      %v729 = vrot.slane %v601, 1
      %v730 = vrot.slane %v605, 1
      %v731 = vrot.slane %v609, 1
      %v732 = vrot.slane %v613, 1
      %v733 = vrot.slane %v617, 1
      %v734 = vrot.slane %v621, 1
      %v735 = vrot.slane %v625, 1
      %v736 = vrot.slane %v629, 1
      %v737 = vrot.slane %v633, 1
      %v738 = vrot.slane %v637, 1
      %v739 = vrot.slane %v641, 1
      %v740 = vrot.slane %v645, 1
      %v741 = vrot.slane %v649, 1
      %v742 = vrot.slane %v653, 1
      %v743 = vrot.slane %v657, 1
      %v744 = vrot.slane %v661, 1
      %v745 = vrot.slane %v665, 1
      %v746 = vrot.slane %v669, 1
      %v747 = vrot.slane %v673, 1
      %vm876 = vcmask 1040384
      %v877 = vrot.slane %v553, 7
      %v878 = vrot.slane %v554, 7
      %v879 = vsel %vm876, %v877, %v878
      %v880 = vrot.slane %v555, 7
      %v881 = vsel %vm876, %v878, %v880
      %v882 = vrot.slane %v556, 7
      %v883 = vsel %vm876, %v880, %v882
      %v884 = vrot.slane %v549, 7
      %v885 = vrot.slane %v550, 7
      %v886 = vsel %vm876, %v884, %v885
      %v887 = vrot.slane %v551, 7
      %v888 = vsel %vm876, %v885, %v887
      %v889 = vrot.slane %v552, 7
      %v890 = vsel %vm876, %v887, %v889
      %v891 = vrot.slane %v557, 7
      %v892 = vrot.slane %v558, 7
      %v893 = vsel %vm876, %v891, %v892
      %v894 = vrot.slane %v559, 7
      %v895 = vsel %vm876, %v892, %v894
      %v896 = vrot.slane %v560, 7
      %v897 = vsel %vm876, %v894, %v896
      %v898 = vrot.slane %v561, 7
      %v899 = vrot.slane %v562, 7
      %v900 = vsel %vm876, %v898, %v899
      %v901 = vrot.slane %v563, 7
      %v902 = vsel %vm876, %v899, %v901
      %v903 = vrot.slane %v564, 7
      %v904 = vsel %vm876, %v901, %v903
      %v905 = vrot.slane %v565, 7
      %v906 = vrot.slane %v566, 7
      %v907 = vsel %vm876, %v905, %v906
      %v908 = vrot.slane %v567, 7
      %v909 = vsel %vm876, %v906, %v908
      %v910 = vrot.slane %v568, 7
      %v911 = vsel %vm876, %v908, %v910
      %v912 = vrot.slane %v569, 7
      %v913 = vrot.slane %v570, 7
      %v914 = vsel %vm876, %v912, %v913
      %v915 = vrot.slane %v571, 7
      %v916 = vsel %vm876, %v913, %v915
      %v917 = vrot.slane %v572, 7
      %v918 = vsel %vm876, %v915, %v917
      %v919 = vrot.slane %v573, 7
      %v920 = vrot.slane %v574, 7
      %v921 = vsel %vm876, %v919, %v920
      %v922 = vrot.slane %v575, 7
      %v923 = vsel %vm876, %v920, %v922
      %v924 = vrot.slane %v576, 7
      %v925 = vsel %vm876, %v922, %v924
      %v926 = vrot.slane %v577, 7
      %v927 = vrot.slane %v578, 7
      %v928 = vsel %vm876, %v926, %v927
      %v929 = vrot.slane %v579, 7
      %v930 = vsel %vm876, %v927, %v929
      %v931 = vrot.slane %v580, 7
      %v932 = vsel %vm876, %v929, %v931
      %v933 = vrot.slane %v581, 7
      %v934 = vrot.slane %v582, 7
      %v935 = vsel %vm876, %v933, %v934
      %v936 = vrot.slane %v583, 7
      %v937 = vsel %vm876, %v934, %v936
      %v938 = vrot.slane %v584, 7
      %v939 = vsel %vm876, %v936, %v938
      %v940 = vrot.slane %v585, 7
      %v941 = vrot.slane %v586, 7
      %v942 = vsel %vm876, %v940, %v941
      %v943 = vrot.slane %v587, 7
      %v944 = vsel %vm876, %v941, %v943
      %v945 = vrot.slane %v588, 7
      %v946 = vsel %vm876, %v943, %v945
      %v947 = vrot.slane %v589, 7
      %v948 = vrot.slane %v590, 7
      %v949 = vsel %vm876, %v947, %v948
      %v950 = vrot.slane %v591, 7
      %v951 = vsel %vm876, %v948, %v950
      %v952 = vrot.slane %v592, 7
      %v953 = vsel %vm876, %v950, %v952
      %v954 = vrot.slane %v593, 7
      %v955 = vrot.slane %v594, 7
      %v956 = vsel %vm876, %v954, %v955
      %v957 = vrot.slane %v595, 7
      %v958 = vsel %vm876, %v955, %v957
      %v959 = vrot.slane %v596, 7
      %v960 = vsel %vm876, %v957, %v959
      %v961 = vrot.slane %v597, 7
      %v962 = vrot.slane %v598, 7
      %v963 = vsel %vm876, %v961, %v962
      %v964 = vrot.slane %v599, 7
      %v965 = vsel %vm876, %v962, %v964
      %v966 = vrot.slane %v600, 7
      %v967 = vsel %vm876, %v964, %v966
      %v968 = vrot.slane %v601, 7
      %v969 = vrot.slane %v602, 7
      %v970 = vsel %vm876, %v968, %v969
      %v971 = vrot.slane %v603, 7
      %v972 = vsel %vm876, %v969, %v971
      %v973 = vrot.slane %v604, 7
      %v974 = vsel %vm876, %v971, %v973
      %v975 = vrot.slane %v605, 7
      %v976 = vrot.slane %v606, 7
      %v977 = vsel %vm876, %v975, %v976
      %v978 = vrot.slane %v607, 7
      %v979 = vsel %vm876, %v976, %v978
      %v980 = vrot.slane %v608, 7
      %v981 = vsel %vm876, %v978, %v980
      %v982 = vrot.slane %v609, 7
      %v983 = vrot.slane %v610, 7
      %v984 = vsel %vm876, %v982, %v983
      %v985 = vrot.slane %v611, 7
      %v986 = vsel %vm876, %v983, %v985
      %v987 = vrot.slane %v612, 7
      %v988 = vsel %vm876, %v985, %v987
      %v989 = vrot.slane %v613, 7
      %v990 = vrot.slane %v614, 7
      %v991 = vsel %vm876, %v989, %v990
      %v992 = vrot.slane %v615, 7
      %v993 = vsel %vm876, %v990, %v992
      %v994 = vrot.slane %v616, 7
      %v995 = vsel %vm876, %v992, %v994
      %v996 = vrot.slane %v617, 7
      %v997 = vrot.slane %v618, 7
      %v998 = vsel %vm876, %v996, %v997
      %v999 = vrot.slane %v619, 7
      %v1000 = vsel %vm876, %v997, %v999
      %v1001 = vrot.slane %v620, 7
      %v1002 = vsel %vm876, %v999, %v1001
      %v1003 = vrot.slane %v621, 7
      %v1004 = vrot.slane %v622, 7
      %v1005 = vsel %vm876, %v1003, %v1004
      %v1006 = vrot.slane %v623, 7
      %v1007 = vsel %vm876, %v1004, %v1006
      %v1008 = vrot.slane %v624, 7
      %v1009 = vsel %vm876, %v1006, %v1008
      %v1010 = vrot.slane %v625, 7
      %v1011 = vrot.slane %v626, 7
      %v1012 = vsel %vm876, %v1010, %v1011
      %v1013 = vrot.slane %v627, 7
      %v1014 = vsel %vm876, %v1011, %v1013
      %v1015 = vrot.slane %v628, 7
      %v1016 = vsel %vm876, %v1013, %v1015
      %v1017 = vrot.slane %v629, 7
      %v1018 = vrot.slane %v630, 7
      %v1019 = vsel %vm876, %v1017, %v1018
      %v1020 = vrot.slane %v631, 7
      %v1021 = vsel %vm876, %v1018, %v1020
      %v1022 = vrot.slane %v632, 7
      %v1023 = vsel %vm876, %v1020, %v1022
      %v1024 = vrot.slane %v633, 7
      %v1025 = vrot.slane %v634, 7
      %v1026 = vsel %vm876, %v1024, %v1025
      %v1027 = vrot.slane %v635, 7
      %v1028 = vsel %vm876, %v1025, %v1027
      %v1029 = vrot.slane %v636, 7
      %v1030 = vsel %vm876, %v1027, %v1029
      %v1031 = vrot.slane %v637, 7
      %v1032 = vrot.slane %v638, 7
      %v1033 = vsel %vm876, %v1031, %v1032
      %v1034 = vrot.slane %v639, 7
      %v1035 = vsel %vm876, %v1032, %v1034
      %v1036 = vrot.slane %v640, 7
      %v1037 = vsel %vm876, %v1034, %v1036
      %v1038 = vrot.slane %v641, 7
      %v1039 = vrot.slane %v642, 7
      %v1040 = vsel %vm876, %v1038, %v1039
      %v1041 = vrot.slane %v643, 7
      %v1042 = vsel %vm876, %v1039, %v1041
      %v1043 = vrot.slane %v644, 7
      %v1044 = vsel %vm876, %v1041, %v1043
      %v1045 = vrot.slane %v645, 7
      %v1046 = vrot.slane %v646, 7
      %v1047 = vsel %vm876, %v1045, %v1046
      %v1048 = vrot.slane %v647, 7
      %v1049 = vsel %vm876, %v1046, %v1048
      %v1050 = vrot.slane %v648, 7
      %v1051 = vsel %vm876, %v1048, %v1050
      %v1052 = vrot.slane %v649, 7
      %v1053 = vrot.slane %v650, 7
      %v1054 = vsel %vm876, %v1052, %v1053
      %v1055 = vrot.slane %v651, 7
      %v1056 = vsel %vm876, %v1053, %v1055
      %v1057 = vrot.slane %v652, 7
      %v1058 = vsel %vm876, %v1055, %v1057
      %v1059 = vrot.slane %v653, 7
      %v1060 = vrot.slane %v654, 7
      %v1061 = vsel %vm876, %v1059, %v1060
      %v1062 = vrot.slane %v655, 7
      %v1063 = vsel %vm876, %v1060, %v1062
      %v1064 = vrot.slane %v656, 7
      %v1065 = vsel %vm876, %v1062, %v1064
      %v1066 = vrot.slane %v657, 7
      %v1067 = vrot.slane %v658, 7
      %v1068 = vsel %vm876, %v1066, %v1067
      %v1069 = vrot.slane %v659, 7
      %v1070 = vsel %vm876, %v1067, %v1069
      %v1071 = vrot.slane %v660, 7
      %v1072 = vsel %vm876, %v1069, %v1071
      %v1073 = vrot.slane %v661, 7
      %v1074 = vrot.slane %v662, 7
      %v1075 = vsel %vm876, %v1073, %v1074
      %v1076 = vrot.slane %v663, 7
      %v1077 = vsel %vm876, %v1074, %v1076
      %v1078 = vrot.slane %v664, 7
      %v1079 = vsel %vm876, %v1076, %v1078
      %v1080 = vrot.slane %v665, 7
      %v1081 = vrot.slane %v666, 7
      %v1082 = vsel %vm876, %v1080, %v1081
      %v1083 = vrot.slane %v667, 7
      %v1084 = vsel %vm876, %v1081, %v1083
      %v1085 = vrot.slane %v668, 7
      %v1086 = vsel %vm876, %v1083, %v1085
      %v1087 = vrot.slane %v669, 7
      %v1088 = vrot.slane %v670, 7
      %v1089 = vsel %vm876, %v1087, %v1088
      %v1090 = vrot.slane %v671, 7
      %v1091 = vsel %vm876, %v1088, %v1090
      %v1092 = vrot.slane %v672, 7
      %v1093 = vsel %vm876, %v1090, %v1092
      %v1094 = vrot.slane %v673, 7
      %v1095 = vrot.slane %v674, 7
      %v1096 = vsel %vm876, %v1094, %v1095
      %v1097 = vrot.slane %v675, 7
      %v1098 = vsel %vm876, %v1095, %v1097
      %v1099 = vrot.slane %v676, 7
      %v1100 = vsel %vm876, %v1097, %v1099
      %v1165 = vrot.slane %v556, 5
      %v1166 = vrot.slane %v552, 5
      %v1167 = vrot.slane %v560, 5
      %v1168 = vrot.slane %v564, 5
      %v1169 = vrot.slane %v568, 5
      %v1170 = vrot.slane %v572, 5
      %v1171 = vrot.slane %v576, 5
      %v1172 = vrot.slane %v580, 5
      %v1173 = vrot.slane %v584, 5
      %v1174 = vrot.slane %v588, 5
      %v1175 = vrot.slane %v592, 5
      %v1176 = vrot.slane %v596, 5
      %v1177 = vrot.slane %v600, 5
      %v1178 = vrot.slane %v604, 5
      %v1179 = vrot.slane %v608, 5
      %v1180 = vrot.slane %v612, 5
      %v1181 = vrot.slane %v616, 5
      %v1182 = vrot.slane %v620, 5
      %v1183 = vrot.slane %v624, 5
      %v1184 = vrot.slane %v628, 5
      %v1185 = vrot.slane %v632, 5
      %v1186 = vrot.slane %v636, 5
      %v1187 = vrot.slane %v640, 5
      %v1188 = vrot.slane %v644, 5
      %v1189 = vrot.slane %v648, 5
      %v1190 = vrot.slane %v652, 5
      %v1191 = vrot.slane %v656, 5
      %v1192 = vrot.slane %v660, 5
      %v1193 = vrot.slane %v664, 5
      %v1194 = vrot.slane %v668, 5
      %v1195 = vrot.slane %v672, 5
      %v1196 = vrot.slane %v676, 5
      %v1229 = vsel %vm876, %v716, %v877
      %v1230 = vsel %vm876, %v717, %v884
      %v1231 = vsel %vm876, %v718, %v891
      %v1232 = vsel %vm876, %v719, %v898
      %v1233 = vsel %vm876, %v720, %v905
      %v1234 = vsel %vm876, %v721, %v912
      %v1235 = vsel %vm876, %v722, %v919
      %v1236 = vsel %vm876, %v723, %v926
      %v1237 = vsel %vm876, %v724, %v933
      %v1238 = vsel %vm876, %v725, %v940
      %v1239 = vsel %vm876, %v726, %v947
      %v1240 = vsel %vm876, %v727, %v954
      %v1241 = vsel %vm876, %v728, %v961
      %v1242 = vsel %vm876, %v729, %v968
      %v1243 = vsel %vm876, %v730, %v975
      %v1244 = vsel %vm876, %v731, %v982
      %v1245 = vsel %vm876, %v732, %v989
      %v1246 = vsel %vm876, %v733, %v996
      %v1247 = vsel %vm876, %v734, %v1003
      %v1248 = vsel %vm876, %v735, %v1010
      %v1249 = vsel %vm876, %v736, %v1017
      %v1250 = vsel %vm876, %v737, %v1024
      %v1251 = vsel %vm876, %v738, %v1031
      %v1252 = vsel %vm876, %v739, %v1038
      %v1253 = vsel %vm876, %v740, %v1045
      %v1254 = vsel %vm876, %v741, %v1052
      %v1255 = vsel %vm876, %v742, %v1059
      %v1256 = vsel %vm876, %v743, %v1066
      %v1257 = vsel %vm876, %v744, %v1073
      %v1258 = vsel %vm876, %v745, %v1080
      %v1259 = vsel %vm876, %v746, %v1087
      %v1260 = vsel %vm876, %v747, %v1094
      %v1261 = vsel %vm876, %v882, %v1165
      %v1262 = vsel %vm876, %v889, %v1166
      %v1263 = vsel %vm876, %v896, %v1167
      %v1264 = vsel %vm876, %v903, %v1168
      %v1265 = vsel %vm876, %v910, %v1169
      %v1266 = vsel %vm876, %v917, %v1170
      %v1267 = vsel %vm876, %v924, %v1171
      %v1268 = vsel %vm876, %v931, %v1172
      %v1269 = vsel %vm876, %v938, %v1173
      %v1270 = vsel %vm876, %v945, %v1174
      %v1271 = vsel %vm876, %v952, %v1175
      %v1272 = vsel %vm876, %v959, %v1176
      %v1273 = vsel %vm876, %v966, %v1177
      %v1274 = vsel %vm876, %v973, %v1178
      %v1275 = vsel %vm876, %v980, %v1179
      %v1276 = vsel %vm876, %v987, %v1180
      %v1277 = vsel %vm876, %v994, %v1181
      %v1278 = vsel %vm876, %v1001, %v1182
      %v1279 = vsel %vm876, %v1008, %v1183
      %v1280 = vsel %vm876, %v1015, %v1184
      %v1281 = vsel %vm876, %v1022, %v1185
      %v1282 = vsel %vm876, %v1029, %v1186
      %v1283 = vsel %vm876, %v1036, %v1187
      %v1284 = vsel %vm876, %v1043, %v1188
      %v1285 = vsel %vm876, %v1050, %v1189
      %v1286 = vsel %vm876, %v1057, %v1190
      %v1287 = vsel %vm876, %v1064, %v1191
      %v1288 = vsel %vm876, %v1071, %v1192
      %v1289 = vsel %vm876, %v1078, %v1193
      %v1290 = vsel %vm876, %v1085, %v1194
      %v1291 = vsel %vm876, %v1092, %v1195
      %v1292 = vsel %vm876, %v1099, %v1196
      %v1323 = vrot.slane %v1229, 2
      %v1324 = vrot.slane %v1229, 4
      %v1325 = vrot.slane %v1229, 6
      %v1326 = vrot.slane %v879, 2
      %v1327 = vrot.slane %v879, 4
      %v1328 = vrot.slane %v879, 6
      %v1329 = vrot.slane %v881, 2
      %v1330 = vrot.slane %v881, 4
      %v1331 = vrot.slane %v881, 6
      %v1332 = vrot.slane %v883, 2
      %v1333 = vrot.slane %v883, 4
      %v1334 = vrot.slane %v883, 6
      %v1335 = vrot.slane %v1232, 2
      %v1336 = vrot.slane %v1232, 4
      %v1337 = vrot.slane %v1232, 6
      %v1338 = vrot.slane %v900, 2
      %v1339 = vrot.slane %v900, 4
      %v1340 = vrot.slane %v900, 6
      %v1341 = vrot.slane %v902, 2
      %v1342 = vrot.slane %v902, 4
      %v1343 = vrot.slane %v902, 6
      %v1344 = vrot.slane %v904, 2
      %v1345 = vrot.slane %v904, 4
      %v1346 = vrot.slane %v904, 6
      %v1347 = vrot.slane %v1234, 2
      %v1348 = vrot.slane %v1234, 4
      %v1349 = vrot.slane %v1234, 6
      %v1350 = vrot.slane %v914, 2
      %v1351 = vrot.slane %v914, 4
      %v1352 = vrot.slane %v914, 6
      %v1353 = vrot.slane %v916, 2
      %v1354 = vrot.slane %v916, 4
      %v1355 = vrot.slane %v916, 6
      %v1356 = vrot.slane %v918, 2
      %v1357 = vrot.slane %v918, 4
      %v1358 = vrot.slane %v918, 6
      %v1359 = vrot.slane %v1236, 2
      %v1360 = vrot.slane %v1236, 4
      %v1361 = vrot.slane %v1236, 6
      %v1362 = vrot.slane %v928, 2
      %v1363 = vrot.slane %v928, 4
      %v1364 = vrot.slane %v928, 6
      %v1365 = vrot.slane %v930, 2
      %v1366 = vrot.slane %v930, 4
      %v1367 = vrot.slane %v930, 6
      %v1368 = vrot.slane %v932, 2
      %v1369 = vrot.slane %v932, 4
      %v1370 = vrot.slane %v932, 6
      %v1371 = vrot.slane %v1238, 2
      %v1372 = vrot.slane %v1238, 4
      %v1373 = vrot.slane %v1238, 6
      %v1374 = vrot.slane %v942, 2
      %v1375 = vrot.slane %v942, 4
      %v1376 = vrot.slane %v942, 6
      %v1377 = vrot.slane %v944, 2
      %v1378 = vrot.slane %v944, 4
      %v1379 = vrot.slane %v944, 6
      %v1380 = vrot.slane %v946, 2
      %v1381 = vrot.slane %v946, 4
      %v1382 = vrot.slane %v946, 6
      %v1383 = vrot.slane %v1240, 2
      %v1384 = vrot.slane %v1240, 4
      %v1385 = vrot.slane %v1240, 6
      %v1386 = vrot.slane %v956, 2
      %v1387 = vrot.slane %v956, 4
      %v1388 = vrot.slane %v956, 6
      %v1389 = vrot.slane %v958, 2
      %v1390 = vrot.slane %v958, 4
      %v1391 = vrot.slane %v958, 6
      %v1392 = vrot.slane %v960, 2
      %v1393 = vrot.slane %v960, 4
      %v1394 = vrot.slane %v960, 6
      %v1395 = vrot.slane %v1242, 2
      %v1396 = vrot.slane %v1242, 4
      %v1397 = vrot.slane %v1242, 6
      %v1398 = vrot.slane %v970, 2
      %v1399 = vrot.slane %v970, 4
      %v1400 = vrot.slane %v970, 6
      %v1401 = vrot.slane %v972, 2
      %v1402 = vrot.slane %v972, 4
      %v1403 = vrot.slane %v972, 6
      %v1404 = vrot.slane %v974, 2
      %v1405 = vrot.slane %v974, 4
      %v1406 = vrot.slane %v974, 6
      %v1407 = vrot.slane %v1244, 2
      %v1408 = vrot.slane %v1244, 4
      %v1409 = vrot.slane %v1244, 6
      %v1410 = vrot.slane %v984, 2
      %v1411 = vrot.slane %v984, 4
      %v1412 = vrot.slane %v984, 6
      %v1413 = vrot.slane %v986, 2
      %v1414 = vrot.slane %v986, 4
      %v1415 = vrot.slane %v986, 6
      %v1416 = vrot.slane %v988, 2
      %v1417 = vrot.slane %v988, 4
      %v1418 = vrot.slane %v988, 6
      %v1419 = vrot.slane %v1246, 2
      %v1420 = vrot.slane %v1246, 4
      %v1421 = vrot.slane %v1246, 6
      %v1422 = vrot.slane %v998, 2
      %v1423 = vrot.slane %v998, 4
      %v1424 = vrot.slane %v998, 6
      %v1425 = vrot.slane %v1000, 2
      %v1426 = vrot.slane %v1000, 4
      %v1427 = vrot.slane %v1000, 6
      %v1428 = vrot.slane %v1002, 2
      %v1429 = vrot.slane %v1002, 4
      %v1430 = vrot.slane %v1002, 6
      %v1431 = vrot.slane %v1248, 2
      %v1432 = vrot.slane %v1248, 4
      %v1433 = vrot.slane %v1248, 6
      %v1434 = vrot.slane %v1012, 2
      %v1435 = vrot.slane %v1012, 4
      %v1436 = vrot.slane %v1012, 6
      %v1437 = vrot.slane %v1014, 2
      %v1438 = vrot.slane %v1014, 4
      %v1439 = vrot.slane %v1014, 6
      %v1440 = vrot.slane %v1016, 2
      %v1441 = vrot.slane %v1016, 4
      %v1442 = vrot.slane %v1016, 6
      %v1443 = vrot.slane %v1250, 2
      %v1444 = vrot.slane %v1250, 4
      %v1445 = vrot.slane %v1250, 6
      %v1446 = vrot.slane %v1026, 2
      %v1447 = vrot.slane %v1026, 4
      %v1448 = vrot.slane %v1026, 6
      %v1449 = vrot.slane %v1028, 2
      %v1450 = vrot.slane %v1028, 4
      %v1451 = vrot.slane %v1028, 6
      %v1452 = vrot.slane %v1030, 2
      %v1453 = vrot.slane %v1030, 4
      %v1454 = vrot.slane %v1030, 6
      %v1455 = vrot.slane %v1252, 2
      %v1456 = vrot.slane %v1252, 4
      %v1457 = vrot.slane %v1252, 6
      %v1458 = vrot.slane %v1040, 2
      %v1459 = vrot.slane %v1040, 4
      %v1460 = vrot.slane %v1040, 6
      %v1461 = vrot.slane %v1042, 2
      %v1462 = vrot.slane %v1042, 4
      %v1463 = vrot.slane %v1042, 6
      %v1464 = vrot.slane %v1044, 2
      %v1465 = vrot.slane %v1044, 4
      %v1466 = vrot.slane %v1044, 6
      %v1467 = vrot.slane %v1254, 2
      %v1468 = vrot.slane %v1254, 4
      %v1469 = vrot.slane %v1254, 6
      %v1470 = vrot.slane %v1054, 2
      %v1471 = vrot.slane %v1054, 4
      %v1472 = vrot.slane %v1054, 6
      %v1473 = vrot.slane %v1056, 2
      %v1474 = vrot.slane %v1056, 4
      %v1475 = vrot.slane %v1056, 6
      %v1476 = vrot.slane %v1058, 2
      %v1477 = vrot.slane %v1058, 4
      %v1478 = vrot.slane %v1058, 6
      %v1479 = vrot.slane %v1256, 2
      %v1480 = vrot.slane %v1256, 4
      %v1481 = vrot.slane %v1256, 6
      %v1482 = vrot.slane %v1068, 2
      %v1483 = vrot.slane %v1068, 4
      %v1484 = vrot.slane %v1068, 6
      %v1485 = vrot.slane %v1070, 2
      %v1486 = vrot.slane %v1070, 4
      %v1487 = vrot.slane %v1070, 6
      %v1488 = vrot.slane %v1072, 2
      %v1489 = vrot.slane %v1072, 4
      %v1490 = vrot.slane %v1072, 6
      %v1491 = vrot.slane %v1258, 2
      %v1492 = vrot.slane %v1258, 4
      %v1493 = vrot.slane %v1258, 6
      %v1494 = vrot.slane %v1082, 2
      %v1495 = vrot.slane %v1082, 4
      %v1496 = vrot.slane %v1082, 6
      %v1497 = vrot.slane %v1084, 2
      %v1498 = vrot.slane %v1084, 4
      %v1499 = vrot.slane %v1084, 6
      %v1500 = vrot.slane %v1086, 2
      %v1501 = vrot.slane %v1086, 4
      %v1502 = vrot.slane %v1086, 6
      %v1535 = vrot.slane %v1230, 2
      %v1536 = vrot.slane %v1230, 4
      %v1537 = vrot.slane %v1230, 6
      %v1538 = vrot.slane %v886, 2
      %v1539 = vrot.slane %v886, 4
      %v1540 = vrot.slane %v886, 6
      %v1541 = vrot.slane %v888, 2
      %v1542 = vrot.slane %v888, 4
      %v1543 = vrot.slane %v888, 6
      %v1544 = vrot.slane %v890, 2
      %v1545 = vrot.slane %v890, 4
      %v1546 = vrot.slane %v890, 6
      %v1547 = vrot.slane %v1231, 2
      %v1548 = vrot.slane %v1231, 4
      %v1549 = vrot.slane %v1231, 6
      %v1550 = vrot.slane %v893, 2
      %v1551 = vrot.slane %v893, 4
      %v1552 = vrot.slane %v893, 6
      %v1553 = vrot.slane %v895, 2
      %v1554 = vrot.slane %v895, 4
      %v1555 = vrot.slane %v895, 6
      %v1556 = vrot.slane %v897, 2
      %v1557 = vrot.slane %v897, 4
      %v1558 = vrot.slane %v897, 6
      %v1559 = vrot.slane %v1233, 2
      %v1560 = vrot.slane %v1233, 4
      %v1561 = vrot.slane %v1233, 6
      %v1562 = vrot.slane %v907, 2
      %v1563 = vrot.slane %v907, 4
      %v1564 = vrot.slane %v907, 6
      %v1565 = vrot.slane %v909, 2
      %v1566 = vrot.slane %v909, 4
      %v1567 = vrot.slane %v909, 6
      %v1568 = vrot.slane %v911, 2
      %v1569 = vrot.slane %v911, 4
      %v1570 = vrot.slane %v911, 6
      %v1571 = vrot.slane %v1235, 2
      %v1572 = vrot.slane %v1235, 4
      %v1573 = vrot.slane %v1235, 6
      %v1574 = vrot.slane %v921, 2
      %v1575 = vrot.slane %v921, 4
      %v1576 = vrot.slane %v921, 6
      %v1577 = vrot.slane %v923, 2
      %v1578 = vrot.slane %v923, 4
      %v1579 = vrot.slane %v923, 6
      %v1580 = vrot.slane %v925, 2
      %v1581 = vrot.slane %v925, 4
      %v1582 = vrot.slane %v925, 6
      %v1583 = vrot.slane %v1237, 2
      %v1584 = vrot.slane %v1237, 4
      %v1585 = vrot.slane %v1237, 6
      %v1586 = vrot.slane %v935, 2
      %v1587 = vrot.slane %v935, 4
      %v1588 = vrot.slane %v935, 6
      %v1589 = vrot.slane %v937, 2
      %v1590 = vrot.slane %v937, 4
      %v1591 = vrot.slane %v937, 6
      %v1592 = vrot.slane %v939, 2
      %v1593 = vrot.slane %v939, 4
      %v1594 = vrot.slane %v939, 6
      %v1595 = vrot.slane %v1239, 2
      %v1596 = vrot.slane %v1239, 4
      %v1597 = vrot.slane %v1239, 6
      %v1598 = vrot.slane %v949, 2
      %v1599 = vrot.slane %v949, 4
      %v1600 = vrot.slane %v949, 6
      %v1601 = vrot.slane %v951, 2
      %v1602 = vrot.slane %v951, 4
      %v1603 = vrot.slane %v951, 6
      %v1604 = vrot.slane %v953, 2
      %v1605 = vrot.slane %v953, 4
      %v1606 = vrot.slane %v953, 6
      %v1607 = vrot.slane %v1241, 2
      %v1608 = vrot.slane %v1241, 4
      %v1609 = vrot.slane %v1241, 6
      %v1610 = vrot.slane %v963, 2
      %v1611 = vrot.slane %v963, 4
      %v1612 = vrot.slane %v963, 6
      %v1613 = vrot.slane %v965, 2
      %v1614 = vrot.slane %v965, 4
      %v1615 = vrot.slane %v965, 6
      %v1616 = vrot.slane %v967, 2
      %v1617 = vrot.slane %v967, 4
      %v1618 = vrot.slane %v967, 6
      %v1619 = vrot.slane %v1243, 2
      %v1620 = vrot.slane %v1243, 4
      %v1621 = vrot.slane %v1243, 6
      %v1622 = vrot.slane %v977, 2
      %v1623 = vrot.slane %v977, 4
      %v1624 = vrot.slane %v977, 6
      %v1625 = vrot.slane %v979, 2
      %v1626 = vrot.slane %v979, 4
      %v1627 = vrot.slane %v979, 6
      %v1628 = vrot.slane %v981, 2
      %v1629 = vrot.slane %v981, 4
      %v1630 = vrot.slane %v981, 6
      %v1631 = vrot.slane %v1245, 2
      %v1632 = vrot.slane %v1245, 4
      %v1633 = vrot.slane %v1245, 6
      %v1634 = vrot.slane %v991, 2
      %v1635 = vrot.slane %v991, 4
      %v1636 = vrot.slane %v991, 6
      %v1637 = vrot.slane %v993, 2
      %v1638 = vrot.slane %v993, 4
      %v1639 = vrot.slane %v993, 6
      %v1640 = vrot.slane %v995, 2
      %v1641 = vrot.slane %v995, 4
      %v1642 = vrot.slane %v995, 6
      %v1643 = vrot.slane %v1247, 2
      %v1644 = vrot.slane %v1247, 4
      %v1645 = vrot.slane %v1247, 6
      %v1646 = vrot.slane %v1005, 2
      %v1647 = vrot.slane %v1005, 4
      %v1648 = vrot.slane %v1005, 6
      %v1649 = vrot.slane %v1007, 2
      %v1650 = vrot.slane %v1007, 4
      %v1651 = vrot.slane %v1007, 6
      %v1652 = vrot.slane %v1009, 2
      %v1653 = vrot.slane %v1009, 4
      %v1654 = vrot.slane %v1009, 6
      %v1655 = vrot.slane %v1249, 2
      %v1656 = vrot.slane %v1249, 4
      %v1657 = vrot.slane %v1249, 6
      %v1658 = vrot.slane %v1019, 2
      %v1659 = vrot.slane %v1019, 4
      %v1660 = vrot.slane %v1019, 6
      %v1661 = vrot.slane %v1021, 2
      %v1662 = vrot.slane %v1021, 4
      %v1663 = vrot.slane %v1021, 6
      %v1664 = vrot.slane %v1023, 2
      %v1665 = vrot.slane %v1023, 4
      %v1666 = vrot.slane %v1023, 6
      %v1667 = vrot.slane %v1251, 2
      %v1668 = vrot.slane %v1251, 4
      %v1669 = vrot.slane %v1251, 6
      %v1670 = vrot.slane %v1033, 2
      %v1671 = vrot.slane %v1033, 4
      %v1672 = vrot.slane %v1033, 6
      %v1673 = vrot.slane %v1035, 2
      %v1674 = vrot.slane %v1035, 4
      %v1675 = vrot.slane %v1035, 6
      %v1676 = vrot.slane %v1037, 2
      %v1677 = vrot.slane %v1037, 4
      %v1678 = vrot.slane %v1037, 6
      %v1679 = vrot.slane %v1253, 2
      %v1680 = vrot.slane %v1253, 4
      %v1681 = vrot.slane %v1253, 6
      %v1682 = vrot.slane %v1047, 2
      %v1683 = vrot.slane %v1047, 4
      %v1684 = vrot.slane %v1047, 6
      %v1685 = vrot.slane %v1049, 2
      %v1686 = vrot.slane %v1049, 4
      %v1687 = vrot.slane %v1049, 6
      %v1688 = vrot.slane %v1051, 2
      %v1689 = vrot.slane %v1051, 4
      %v1690 = vrot.slane %v1051, 6
      %v1691 = vrot.slane %v1255, 2
      %v1692 = vrot.slane %v1255, 4
      %v1693 = vrot.slane %v1255, 6
      %v1694 = vrot.slane %v1061, 2
      %v1695 = vrot.slane %v1061, 4
      %v1696 = vrot.slane %v1061, 6
      %v1697 = vrot.slane %v1063, 2
      %v1698 = vrot.slane %v1063, 4
      %v1699 = vrot.slane %v1063, 6
      %v1700 = vrot.slane %v1065, 2
      %v1701 = vrot.slane %v1065, 4
      %v1702 = vrot.slane %v1065, 6
      %v1703 = vrot.slane %v1257, 2
      %v1704 = vrot.slane %v1257, 4
      %v1705 = vrot.slane %v1257, 6
      %v1706 = vrot.slane %v1075, 2
      %v1707 = vrot.slane %v1075, 4
      %v1708 = vrot.slane %v1075, 6
      %v1709 = vrot.slane %v1077, 2
      %v1710 = vrot.slane %v1077, 4
      %v1711 = vrot.slane %v1077, 6
      %v1712 = vrot.slane %v1079, 2
      %v1713 = vrot.slane %v1079, 4
      %v1714 = vrot.slane %v1079, 6
      %v1715 = vrot.slane %v1259, 2
      %v1716 = vrot.slane %v1259, 4
      %v1717 = vrot.slane %v1259, 6
      %v1718 = vrot.slane %v1089, 2
      %v1719 = vrot.slane %v1089, 4
      %v1720 = vrot.slane %v1089, 6
      %v1721 = vrot.slane %v1091, 2
      %v1722 = vrot.slane %v1091, 4
      %v1723 = vrot.slane %v1091, 6
      %v1724 = vrot.slane %v1093, 2
      %v1725 = vrot.slane %v1093, 4
      %v1726 = vrot.slane %v1093, 6
      %v1729 = vrot.slane %v1260, 2
      %v1730 = vrot.slane %v1260, 4
      %v1731 = vrot.slane %v1260, 6
      %v1732 = vrot.slane %v1096, 2
      %v1733 = vrot.slane %v1096, 4
      %v1734 = vrot.slane %v1096, 6
      %v1735 = vrot.slane %v1098, 2
      %v1736 = vrot.slane %v1098, 4
      %v1737 = vrot.slane %v1098, 6
      %v1738 = vrot.slane %v1100, 2
      %v1739 = vrot.slane %v1100, 4
      %v1740 = vrot.slane %v1100, 6
      %v1741 = vperm.slane %v1229, 0
      %v1742 = vperm.slane %v1323, 0
      %v1743 = vperm.slane %v1324, 0
      %v1744 = vperm.slane %v1325, 0
      %v1745 = vperm.slane %v879, 0
      %v1746 = vperm.slane %v1326, 0
      %v1747 = vperm.slane %v1327, 0
      %v1748 = vperm.slane %v1328, 0
      %v1749 = vperm.slane %v881, 0
      %v1750 = vperm.slane %v1329, 0
      %v1751 = vperm.slane %v1330, 0
      %v1752 = vperm.slane %v1331, 0
      %v1753 = vperm.slane %v883, 0
      %v1754 = vperm.slane %v1332, 0
      %v1755 = vperm.slane %v1333, 0
      %v1756 = vperm.slane %v1334, 0
      %v1757 = vperm.slane %v1232, 0
      %v1758 = vperm.slane %v1335, 0
      %v1759 = vperm.slane %v1336, 0
      %v1760 = vperm.slane %v1337, 0
      %v1761 = vperm.slane %v900, 0
      %v1762 = vperm.slane %v1338, 0
      %v1763 = vperm.slane %v1339, 0
      %v1764 = vperm.slane %v1340, 0
      %v1765 = vperm.slane %v902, 0
      %v1766 = vperm.slane %v1341, 0
      %v1767 = vperm.slane %v1342, 0
      %v1768 = vperm.slane %v1343, 0
      %v1769 = vperm.slane %v904, 0
      %v1770 = vperm.slane %v1344, 0
      %v1771 = vperm.slane %v1345, 0
      %v1772 = vperm.slane %v1346, 0
      %v1773 = vperm.slane %v1234, 0
      %v1774 = vperm.slane %v1347, 0
      %v1775 = vperm.slane %v1348, 0
      %v1776 = vperm.slane %v1349, 0
      %v1777 = vperm.slane %v914, 0
      %v1778 = vperm.slane %v1350, 0
      %v1779 = vperm.slane %v1351, 0
      %v1780 = vperm.slane %v1352, 0
      %v1781 = vperm.slane %v916, 0
      %v1782 = vperm.slane %v1353, 0
      %v1783 = vperm.slane %v1354, 0
      %v1784 = vperm.slane %v1355, 0
      %v1785 = vperm.slane %v918, 0
      %v1786 = vperm.slane %v1356, 0
      %v1787 = vperm.slane %v1357, 0
      %v1788 = vperm.slane %v1358, 0
      %v1789 = vperm.slane %v1236, 0
      %v1790 = vperm.slane %v1359, 0
      %v1791 = vperm.slane %v1360, 0
      %v1792 = vperm.slane %v1361, 0
      %v1793 = vperm.slane %v928, 0
      %v1794 = vperm.slane %v1362, 0
      %v1795 = vperm.slane %v1363, 0
      %v1796 = vperm.slane %v1364, 0
      %v1797 = vperm.slane %v930, 0
      %v1798 = vperm.slane %v1365, 0
      %v1799 = vperm.slane %v1366, 0
      %v1800 = vperm.slane %v1367, 0
      %v1801 = vperm.slane %v932, 0
      %v1802 = vperm.slane %v1368, 0
      %v1803 = vperm.slane %v1369, 0
      %v1804 = vperm.slane %v1370, 0
      %v1805 = vperm.slane %v1238, 0
      %v1806 = vperm.slane %v1371, 0
      %v1807 = vperm.slane %v1372, 0
      %v1808 = vperm.slane %v1373, 0
      %v1809 = vperm.slane %v942, 0
      %v1810 = vperm.slane %v1374, 0
      %v1811 = vperm.slane %v1375, 0
      %v1812 = vperm.slane %v1376, 0
      %v1813 = vperm.slane %v944, 0
      %v1814 = vperm.slane %v1377, 0
      %v1815 = vperm.slane %v1378, 0
      %v1816 = vperm.slane %v1379, 0
      %v1817 = vperm.slane %v946, 0
      %v1818 = vperm.slane %v1380, 0
      %v1819 = vperm.slane %v1381, 0
      %v1820 = vperm.slane %v1382, 0
      %v1821 = vperm.slane %v1240, 0
      %v1822 = vperm.slane %v1383, 0
      %v1823 = vperm.slane %v1384, 0
      %v1824 = vperm.slane %v1385, 0
      %v1825 = vperm.slane %v956, 0
      %v1826 = vperm.slane %v1386, 0
      %v1827 = vperm.slane %v1387, 0
      %v1828 = vperm.slane %v1388, 0
      %v1829 = vperm.slane %v958, 0
      %v1830 = vperm.slane %v1389, 0
      %v1831 = vperm.slane %v1390, 0
      %v1832 = vperm.slane %v1391, 0
      %v1833 = vperm.slane %v960, 0
      %v1834 = vperm.slane %v1392, 0
      %v1835 = vperm.slane %v1393, 0
      %v1836 = vperm.slane %v1394, 0
      %v1837 = vperm.slane %v1242, 0
      %v1838 = vperm.slane %v1395, 0
      %v1839 = vperm.slane %v1396, 0
      %v1840 = vperm.slane %v1397, 0
      %v1841 = vperm.slane %v970, 0
      %v1842 = vperm.slane %v1398, 0
      %v1843 = vperm.slane %v1399, 0
      %v1844 = vperm.slane %v1400, 0
      %v1845 = vperm.slane %v972, 0
      %v1846 = vperm.slane %v1401, 0
      %v1847 = vperm.slane %v1402, 0
      %v1848 = vperm.slane %v1403, 0
      %v1849 = vperm.slane %v974, 0
      %v1850 = vperm.slane %v1404, 0
      %v1851 = vperm.slane %v1405, 0
      %v1852 = vperm.slane %v1406, 0
      %v1853 = vperm.slane %v1244, 0
      %v1854 = vperm.slane %v1407, 0
      %v1855 = vperm.slane %v1408, 0
      %v1856 = vperm.slane %v1409, 0
      %v1857 = vperm.slane %v984, 0
      %v1858 = vperm.slane %v1410, 0
      %v1859 = vperm.slane %v1411, 0
      %v1860 = vperm.slane %v1412, 0
      %v1861 = vperm.slane %v986, 0
      %v1862 = vperm.slane %v1413, 0
      %v1863 = vperm.slane %v1414, 0
      %v1864 = vperm.slane %v1415, 0
      %v1865 = vperm.slane %v988, 0
      %v1866 = vperm.slane %v1416, 0
      %v1867 = vperm.slane %v1417, 0
      %v1868 = vperm.slane %v1418, 0
      %v1869 = vperm.slane %v1246, 0
      %v1870 = vperm.slane %v1419, 0
      %v1871 = vperm.slane %v1420, 0
      %v1872 = vperm.slane %v1421, 0
      %v1873 = vperm.slane %v998, 0
      %v1874 = vperm.slane %v1422, 0
      %v1875 = vperm.slane %v1423, 0
      %v1876 = vperm.slane %v1424, 0
      %v1877 = vperm.slane %v1000, 0
      %v1878 = vperm.slane %v1425, 0
      %v1879 = vperm.slane %v1426, 0
      %v1880 = vperm.slane %v1427, 0
      %v1881 = vperm.slane %v1002, 0
      %v1882 = vperm.slane %v1428, 0
      %v1883 = vperm.slane %v1429, 0
      %v1884 = vperm.slane %v1430, 0
      %v1885 = vperm.slane %v1248, 0
      %v1886 = vperm.slane %v1431, 0
      %v1887 = vperm.slane %v1432, 0
      %v1888 = vperm.slane %v1433, 0
      %v1889 = vperm.slane %v1012, 0
      %v1890 = vperm.slane %v1434, 0
      %v1891 = vperm.slane %v1435, 0
      %v1892 = vperm.slane %v1436, 0
      %v1893 = vperm.slane %v1014, 0
      %v1894 = vperm.slane %v1437, 0
      %v1895 = vperm.slane %v1438, 0
      %v1896 = vperm.slane %v1439, 0
      %v1897 = vperm.slane %v1016, 0
      %v1898 = vperm.slane %v1440, 0
      %v1899 = vperm.slane %v1441, 0
      %v1900 = vperm.slane %v1442, 0
      %v1901 = vperm.slane %v1250, 0
      %v1902 = vperm.slane %v1443, 0
      %v1903 = vperm.slane %v1444, 0
      %v1904 = vperm.slane %v1445, 0
      %v1905 = vperm.slane %v1026, 0
      %v1906 = vperm.slane %v1446, 0
      %v1907 = vperm.slane %v1447, 0
      %v1908 = vperm.slane %v1448, 0
      %v1909 = vperm.slane %v1028, 0
      %v1910 = vperm.slane %v1449, 0
      %v1911 = vperm.slane %v1450, 0
      %v1912 = vperm.slane %v1451, 0
      %v1913 = vperm.slane %v1030, 0
      %v1914 = vperm.slane %v1452, 0
      %v1915 = vperm.slane %v1453, 0
      %v1916 = vperm.slane %v1454, 0
      %v1917 = vperm.slane %v1252, 0
      %v1918 = vperm.slane %v1455, 0
      %v1919 = vperm.slane %v1456, 0
      %v1920 = vperm.slane %v1457, 0
      %v1921 = vperm.slane %v1040, 0
      %v1922 = vperm.slane %v1458, 0
      %v1923 = vperm.slane %v1459, 0
      %v1924 = vperm.slane %v1460, 0
      %v1925 = vperm.slane %v1042, 0
      %v1926 = vperm.slane %v1461, 0
      %v1927 = vperm.slane %v1462, 0
      %v1928 = vperm.slane %v1463, 0
      %v1929 = vperm.slane %v1044, 0
      %v1930 = vperm.slane %v1464, 0
      %v1931 = vperm.slane %v1465, 0
      %v1932 = vperm.slane %v1466, 0
      %v1933 = vperm.slane %v1254, 0
      %v1934 = vperm.slane %v1467, 0
      %v1935 = vperm.slane %v1468, 0
      %v1936 = vperm.slane %v1469, 0
      %v1937 = vperm.slane %v1054, 0
      %v1938 = vperm.slane %v1470, 0
      %v1939 = vperm.slane %v1471, 0
      %v1940 = vperm.slane %v1472, 0
      %v1941 = vperm.slane %v1056, 0
      %v1942 = vperm.slane %v1473, 0
      %v1943 = vperm.slane %v1474, 0
      %v1944 = vperm.slane %v1475, 0
      %v1945 = vperm.slane %v1058, 0
      %v1946 = vperm.slane %v1476, 0
      %v1947 = vperm.slane %v1477, 0
      %v1948 = vperm.slane %v1478, 0
      %v1949 = vperm.slane %v1256, 0
      %v1950 = vperm.slane %v1479, 0
      %v1951 = vperm.slane %v1480, 0
      %v1952 = vperm.slane %v1481, 0
      %v1953 = vperm.slane %v1068, 0
      %v1954 = vperm.slane %v1482, 0
      %v1955 = vperm.slane %v1483, 0
      %v1956 = vperm.slane %v1484, 0
      %v1957 = vperm.slane %v1070, 0
      %v1958 = vperm.slane %v1485, 0
      %v1959 = vperm.slane %v1486, 0
      %v1960 = vperm.slane %v1487, 0
      %v1961 = vperm.slane %v1072, 0
      %v1962 = vperm.slane %v1488, 0
      %v1963 = vperm.slane %v1489, 0
      %v1964 = vperm.slane %v1490, 0
      %v1965 = vperm.slane %v1258, 0
      %v1966 = vperm.slane %v1491, 0
      %v1967 = vperm.slane %v1492, 0
      %v1968 = vperm.slane %v1493, 0
      %v1969 = vperm.slane %v1082, 0
      %v1970 = vperm.slane %v1494, 0
      %v1971 = vperm.slane %v1495, 0
      %v1972 = vperm.slane %v1496, 0
      %v1973 = vperm.slane %v1084, 0
      %v1974 = vperm.slane %v1497, 0
      %v1975 = vperm.slane %v1498, 0
      %v1976 = vperm.slane %v1499, 0
      %v1977 = vperm.slane %v1086, 0
      %v1978 = vperm.slane %v1500, 0
      %v1979 = vperm.slane %v1501, 0
      %v1980 = vperm.slane %v1502, 0
      %vm1981 = vcmask 1041409
      %v1982 = vsel %vm1981, %v1742, %v1741
      %vm1983 = vcmask 1042434
      %v1984 = vsel %vm1983, %v1743, %v1982
      %vm1985 = vcmask 1043459
      %v1986 = vsel %vm1985, %v1744, %v1984
      %vm1987 = vcmask 1044484
      %v1988 = vsel %vm1987, %v1745, %v1986
      %vm1989 = vcmask 1045509
      %v1990 = vsel %vm1989, %v1746, %v1988
      %vm1991 = vcmask 1046534
      %v1992 = vsel %vm1991, %v1747, %v1990
      %vm1993 = vcmask 1047559
      %v1994 = vsel %vm1993, %v1748, %v1992
      %v1995 = vsel %vm1981, %v1750, %v1749
      %v1996 = vsel %vm1983, %v1751, %v1995
      %v1997 = vsel %vm1985, %v1752, %v1996
      %v1998 = vsel %vm1987, %v1753, %v1997
      %v1999 = vsel %vm1989, %v1754, %v1998
      %v2000 = vsel %vm1991, %v1755, %v1999
      %v2001 = vsel %vm1993, %v1756, %v2000
      %v2002 = vsel %vm1981, %v1758, %v1757
      %v2003 = vsel %vm1983, %v1759, %v2002
      %v2004 = vsel %vm1985, %v1760, %v2003
      %v2005 = vsel %vm1987, %v1761, %v2004
      %v2006 = vsel %vm1989, %v1762, %v2005
      %v2007 = vsel %vm1991, %v1763, %v2006
      %v2008 = vsel %vm1993, %v1764, %v2007
      %v2009 = vsel %vm1981, %v1766, %v1765
      %v2010 = vsel %vm1983, %v1767, %v2009
      %v2011 = vsel %vm1985, %v1768, %v2010
      %v2012 = vsel %vm1987, %v1769, %v2011
      %v2013 = vsel %vm1989, %v1770, %v2012
      %v2014 = vsel %vm1991, %v1771, %v2013
      %v2015 = vsel %vm1993, %v1772, %v2014
      %v2016 = vsel %vm1981, %v1774, %v1773
      %v2017 = vsel %vm1983, %v1775, %v2016
      %v2018 = vsel %vm1985, %v1776, %v2017
      %v2019 = vsel %vm1987, %v1777, %v2018
      %v2020 = vsel %vm1989, %v1778, %v2019
      %v2021 = vsel %vm1991, %v1779, %v2020
      %v2022 = vsel %vm1993, %v1780, %v2021
      %v2023 = vsel %vm1981, %v1782, %v1781
      %v2024 = vsel %vm1983, %v1783, %v2023
      %v2025 = vsel %vm1985, %v1784, %v2024
      %v2026 = vsel %vm1987, %v1785, %v2025
      %v2027 = vsel %vm1989, %v1786, %v2026
      %v2028 = vsel %vm1991, %v1787, %v2027
      %v2029 = vsel %vm1993, %v1788, %v2028
      %v2030 = vsel %vm1981, %v1790, %v1789
      %v2031 = vsel %vm1983, %v1791, %v2030
      %v2032 = vsel %vm1985, %v1792, %v2031
      %v2033 = vsel %vm1987, %v1793, %v2032
      %v2034 = vsel %vm1989, %v1794, %v2033
      %v2035 = vsel %vm1991, %v1795, %v2034
      %v2036 = vsel %vm1993, %v1796, %v2035
      %v2037 = vsel %vm1981, %v1798, %v1797
      %v2038 = vsel %vm1983, %v1799, %v2037
      %v2039 = vsel %vm1985, %v1800, %v2038
      %v2040 = vsel %vm1987, %v1801, %v2039
      %v2041 = vsel %vm1989, %v1802, %v2040
      %v2042 = vsel %vm1991, %v1803, %v2041
      %v2043 = vsel %vm1993, %v1804, %v2042
      %v2044 = vsel %vm1981, %v1806, %v1805
      %v2045 = vsel %vm1983, %v1807, %v2044
      %v2046 = vsel %vm1985, %v1808, %v2045
      %v2047 = vsel %vm1987, %v1809, %v2046
      %v2048 = vsel %vm1989, %v1810, %v2047
      %v2049 = vsel %vm1991, %v1811, %v2048
      %v2050 = vsel %vm1993, %v1812, %v2049
      %v2051 = vsel %vm1981, %v1814, %v1813
      %v2052 = vsel %vm1983, %v1815, %v2051
      %v2053 = vsel %vm1985, %v1816, %v2052
      %v2054 = vsel %vm1987, %v1817, %v2053
      %v2055 = vsel %vm1989, %v1818, %v2054
      %v2056 = vsel %vm1991, %v1819, %v2055
      %v2057 = vsel %vm1993, %v1820, %v2056
      %v2058 = vsel %vm1981, %v1822, %v1821
      %v2059 = vsel %vm1983, %v1823, %v2058
      %v2060 = vsel %vm1985, %v1824, %v2059
      %v2061 = vsel %vm1987, %v1825, %v2060
      %v2062 = vsel %vm1989, %v1826, %v2061
      %v2063 = vsel %vm1991, %v1827, %v2062
      %v2064 = vsel %vm1993, %v1828, %v2063
      %v2065 = vsel %vm1981, %v1830, %v1829
      %v2066 = vsel %vm1983, %v1831, %v2065
      %v2067 = vsel %vm1985, %v1832, %v2066
      %v2068 = vsel %vm1987, %v1833, %v2067
      %v2069 = vsel %vm1989, %v1834, %v2068
      %v2070 = vsel %vm1991, %v1835, %v2069
      %v2071 = vsel %vm1993, %v1836, %v2070
      %v2072 = vsel %vm1981, %v1838, %v1837
      %v2073 = vsel %vm1983, %v1839, %v2072
      %v2074 = vsel %vm1985, %v1840, %v2073
      %v2075 = vsel %vm1987, %v1841, %v2074
      %v2076 = vsel %vm1989, %v1842, %v2075
      %v2077 = vsel %vm1991, %v1843, %v2076
      %v2078 = vsel %vm1993, %v1844, %v2077
      %v2079 = vsel %vm1981, %v1846, %v1845
      %v2080 = vsel %vm1983, %v1847, %v2079
      %v2081 = vsel %vm1985, %v1848, %v2080
      %v2082 = vsel %vm1987, %v1849, %v2081
      %v2083 = vsel %vm1989, %v1850, %v2082
      %v2084 = vsel %vm1991, %v1851, %v2083
      %v2085 = vsel %vm1993, %v1852, %v2084
      %v2086 = vsel %vm1981, %v1854, %v1853
      %v2087 = vsel %vm1983, %v1855, %v2086
      %v2088 = vsel %vm1985, %v1856, %v2087
      %v2089 = vsel %vm1987, %v1857, %v2088
      %v2090 = vsel %vm1989, %v1858, %v2089
      %v2091 = vsel %vm1991, %v1859, %v2090
      %v2092 = vsel %vm1993, %v1860, %v2091
      %v2093 = vsel %vm1981, %v1862, %v1861
      %v2094 = vsel %vm1983, %v1863, %v2093
      %v2095 = vsel %vm1985, %v1864, %v2094
      %v2096 = vsel %vm1987, %v1865, %v2095
      %v2097 = vsel %vm1989, %v1866, %v2096
      %v2098 = vsel %vm1991, %v1867, %v2097
      %v2099 = vsel %vm1993, %v1868, %v2098
      %v2100 = vsel %vm1981, %v1870, %v1869
      %v2101 = vsel %vm1983, %v1871, %v2100
      %v2102 = vsel %vm1985, %v1872, %v2101
      %v2103 = vsel %vm1987, %v1873, %v2102
      %v2104 = vsel %vm1989, %v1874, %v2103
      %v2105 = vsel %vm1991, %v1875, %v2104
      %v2106 = vsel %vm1993, %v1876, %v2105
      %v2107 = vsel %vm1981, %v1878, %v1877
      %v2108 = vsel %vm1983, %v1879, %v2107
      %v2109 = vsel %vm1985, %v1880, %v2108
      %v2110 = vsel %vm1987, %v1881, %v2109
      %v2111 = vsel %vm1989, %v1882, %v2110
      %v2112 = vsel %vm1991, %v1883, %v2111
      %v2113 = vsel %vm1993, %v1884, %v2112
      %v2114 = vsel %vm1981, %v1886, %v1885
      %v2115 = vsel %vm1983, %v1887, %v2114
      %v2116 = vsel %vm1985, %v1888, %v2115
      %v2117 = vsel %vm1987, %v1889, %v2116
      %v2118 = vsel %vm1989, %v1890, %v2117
      %v2119 = vsel %vm1991, %v1891, %v2118
      %v2120 = vsel %vm1993, %v1892, %v2119
      %v2121 = vsel %vm1981, %v1894, %v1893
      %v2122 = vsel %vm1983, %v1895, %v2121
      %v2123 = vsel %vm1985, %v1896, %v2122
      %v2124 = vsel %vm1987, %v1897, %v2123
      %v2125 = vsel %vm1989, %v1898, %v2124
      %v2126 = vsel %vm1991, %v1899, %v2125
      %v2127 = vsel %vm1993, %v1900, %v2126
      %v2128 = vsel %vm1981, %v1902, %v1901
      %v2129 = vsel %vm1983, %v1903, %v2128
      %v2130 = vsel %vm1985, %v1904, %v2129
      %v2131 = vsel %vm1987, %v1905, %v2130
      %v2132 = vsel %vm1989, %v1906, %v2131
      %v2133 = vsel %vm1991, %v1907, %v2132
      %v2134 = vsel %vm1993, %v1908, %v2133
      %v2135 = vsel %vm1981, %v1910, %v1909
      %v2136 = vsel %vm1983, %v1911, %v2135
      %v2137 = vsel %vm1985, %v1912, %v2136
      %v2138 = vsel %vm1987, %v1913, %v2137
      %v2139 = vsel %vm1989, %v1914, %v2138
      %v2140 = vsel %vm1991, %v1915, %v2139
      %v2141 = vsel %vm1993, %v1916, %v2140
      %v2142 = vsel %vm1981, %v1918, %v1917
      %v2143 = vsel %vm1983, %v1919, %v2142
      %v2144 = vsel %vm1985, %v1920, %v2143
      %v2145 = vsel %vm1987, %v1921, %v2144
      %v2146 = vsel %vm1989, %v1922, %v2145
      %v2147 = vsel %vm1991, %v1923, %v2146
      %v2148 = vsel %vm1993, %v1924, %v2147
      %v2149 = vsel %vm1981, %v1926, %v1925
      %v2150 = vsel %vm1983, %v1927, %v2149
      %v2151 = vsel %vm1985, %v1928, %v2150
      %v2152 = vsel %vm1987, %v1929, %v2151
      %v2153 = vsel %vm1989, %v1930, %v2152
      %v2154 = vsel %vm1991, %v1931, %v2153
      %v2155 = vsel %vm1993, %v1932, %v2154
      %v2156 = vsel %vm1981, %v1934, %v1933
      %v2157 = vsel %vm1983, %v1935, %v2156
      %v2158 = vsel %vm1985, %v1936, %v2157
      %v2159 = vsel %vm1987, %v1937, %v2158
      %v2160 = vsel %vm1989, %v1938, %v2159
      %v2161 = vsel %vm1991, %v1939, %v2160
      %v2162 = vsel %vm1993, %v1940, %v2161
      %v2163 = vsel %vm1981, %v1942, %v1941
      %v2164 = vsel %vm1983, %v1943, %v2163
      %v2165 = vsel %vm1985, %v1944, %v2164
      %v2166 = vsel %vm1987, %v1945, %v2165
      %v2167 = vsel %vm1989, %v1946, %v2166
      %v2168 = vsel %vm1991, %v1947, %v2167
      %v2169 = vsel %vm1993, %v1948, %v2168
      %v2170 = vsel %vm1981, %v1950, %v1949
      %v2171 = vsel %vm1983, %v1951, %v2170
      %v2172 = vsel %vm1985, %v1952, %v2171
      %v2173 = vsel %vm1987, %v1953, %v2172
      %v2174 = vsel %vm1989, %v1954, %v2173
      %v2175 = vsel %vm1991, %v1955, %v2174
      %v2176 = vsel %vm1993, %v1956, %v2175
      %v2177 = vsel %vm1981, %v1958, %v1957
      %v2178 = vsel %vm1983, %v1959, %v2177
      %v2179 = vsel %vm1985, %v1960, %v2178
      %v2180 = vsel %vm1987, %v1961, %v2179
      %v2181 = vsel %vm1989, %v1962, %v2180
      %v2182 = vsel %vm1991, %v1963, %v2181
      %v2183 = vsel %vm1993, %v1964, %v2182
      %v2184 = vsel %vm1981, %v1966, %v1965
      %v2185 = vsel %vm1983, %v1967, %v2184
      %v2186 = vsel %vm1985, %v1968, %v2185
      %v2187 = vsel %vm1987, %v1969, %v2186
      %v2188 = vsel %vm1989, %v1970, %v2187
      %v2189 = vsel %vm1991, %v1971, %v2188
      %v2190 = vsel %vm1993, %v1972, %v2189
      %v2191 = vsel %vm1981, %v1974, %v1973
      %v2192 = vsel %vm1983, %v1975, %v2191
      %v2193 = vsel %vm1985, %v1976, %v2192
      %v2194 = vsel %vm1987, %v1977, %v2193
      %v2195 = vsel %vm1989, %v1978, %v2194
      %v2196 = vsel %vm1991, %v1979, %v2195
      %v2197 = vsel %vm1993, %v1980, %v2196
      %v2228 = vperm.slane %v1229, 1
      %v2229 = vperm.slane %v1323, 1
      %v2230 = vperm.slane %v1324, 1
      %v2231 = vperm.slane %v1325, 1
      %v2232 = vperm.slane %v879, 1
      %v2233 = vperm.slane %v1326, 1
      %v2234 = vperm.slane %v1327, 1
      %v2235 = vperm.slane %v1328, 1
      %v2236 = vperm.slane %v881, 1
      %v2237 = vperm.slane %v1329, 1
      %v2238 = vperm.slane %v1330, 1
      %v2239 = vperm.slane %v1331, 1
      %v2240 = vperm.slane %v883, 1
      %v2241 = vperm.slane %v1332, 1
      %v2242 = vperm.slane %v1333, 1
      %v2243 = vperm.slane %v1334, 1
      %v2244 = vperm.slane %v1232, 1
      %v2245 = vperm.slane %v1335, 1
      %v2246 = vperm.slane %v1336, 1
      %v2247 = vperm.slane %v1337, 1
      %v2248 = vperm.slane %v900, 1
      %v2249 = vperm.slane %v1338, 1
      %v2250 = vperm.slane %v1339, 1
      %v2251 = vperm.slane %v1340, 1
      %v2252 = vperm.slane %v902, 1
      %v2253 = vperm.slane %v1341, 1
      %v2254 = vperm.slane %v1342, 1
      %v2255 = vperm.slane %v1343, 1
      %v2256 = vperm.slane %v904, 1
      %v2257 = vperm.slane %v1344, 1
      %v2258 = vperm.slane %v1345, 1
      %v2259 = vperm.slane %v1346, 1
      %v2260 = vperm.slane %v1234, 1
      %v2261 = vperm.slane %v1347, 1
      %v2262 = vperm.slane %v1348, 1
      %v2263 = vperm.slane %v1349, 1
      %v2264 = vperm.slane %v914, 1
      %v2265 = vperm.slane %v1350, 1
      %v2266 = vperm.slane %v1351, 1
      %v2267 = vperm.slane %v1352, 1
      %v2268 = vperm.slane %v916, 1
      %v2269 = vperm.slane %v1353, 1
      %v2270 = vperm.slane %v1354, 1
      %v2271 = vperm.slane %v1355, 1
      %v2272 = vperm.slane %v918, 1
      %v2273 = vperm.slane %v1356, 1
      %v2274 = vperm.slane %v1357, 1
      %v2275 = vperm.slane %v1358, 1
      %v2276 = vperm.slane %v1236, 1
      %v2277 = vperm.slane %v1359, 1
      %v2278 = vperm.slane %v1360, 1
      %v2279 = vperm.slane %v1361, 1
      %v2280 = vperm.slane %v928, 1
      %v2281 = vperm.slane %v1362, 1
      %v2282 = vperm.slane %v1363, 1
      %v2283 = vperm.slane %v1364, 1
      %v2284 = vperm.slane %v930, 1
      %v2285 = vperm.slane %v1365, 1
      %v2286 = vperm.slane %v1366, 1
      %v2287 = vperm.slane %v1367, 1
      %v2288 = vperm.slane %v932, 1
      %v2289 = vperm.slane %v1368, 1
      %v2290 = vperm.slane %v1369, 1
      %v2291 = vperm.slane %v1370, 1
      %v2292 = vperm.slane %v1238, 1
      %v2293 = vperm.slane %v1371, 1
      %v2294 = vperm.slane %v1372, 1
      %v2295 = vperm.slane %v1373, 1
      %v2296 = vperm.slane %v942, 1
      %v2297 = vperm.slane %v1374, 1
      %v2298 = vperm.slane %v1375, 1
      %v2299 = vperm.slane %v1376, 1
      %v2300 = vperm.slane %v944, 1
      %v2301 = vperm.slane %v1377, 1
      %v2302 = vperm.slane %v1378, 1
      %v2303 = vperm.slane %v1379, 1
      %v2304 = vperm.slane %v946, 1
      %v2305 = vperm.slane %v1380, 1
      %v2306 = vperm.slane %v1381, 1
      %v2307 = vperm.slane %v1382, 1
      %v2308 = vperm.slane %v1240, 1
      %v2309 = vperm.slane %v1383, 1
      %v2310 = vperm.slane %v1384, 1
      %v2311 = vperm.slane %v1385, 1
      %v2312 = vperm.slane %v956, 1
      %v2313 = vperm.slane %v1386, 1
      %v2314 = vperm.slane %v1387, 1
      %v2315 = vperm.slane %v1388, 1
      %v2316 = vperm.slane %v958, 1
      %v2317 = vperm.slane %v1389, 1
      %v2318 = vperm.slane %v1390, 1
      %v2319 = vperm.slane %v1391, 1
      %v2320 = vperm.slane %v960, 1
      %v2321 = vperm.slane %v1392, 1
      %v2322 = vperm.slane %v1393, 1
      %v2323 = vperm.slane %v1394, 1
      %v2324 = vperm.slane %v1242, 1
      %v2325 = vperm.slane %v1395, 1
      %v2326 = vperm.slane %v1396, 1
      %v2327 = vperm.slane %v1397, 1
      %v2328 = vperm.slane %v970, 1
      %v2329 = vperm.slane %v1398, 1
      %v2330 = vperm.slane %v1399, 1
      %v2331 = vperm.slane %v1400, 1
      %v2332 = vperm.slane %v972, 1
      %v2333 = vperm.slane %v1401, 1
      %v2334 = vperm.slane %v1402, 1
      %v2335 = vperm.slane %v1403, 1
      %v2336 = vperm.slane %v974, 1
      %v2337 = vperm.slane %v1404, 1
      %v2338 = vperm.slane %v1405, 1
      %v2339 = vperm.slane %v1406, 1
      %v2340 = vperm.slane %v1244, 1
      %v2341 = vperm.slane %v1407, 1
      %v2342 = vperm.slane %v1408, 1
      %v2343 = vperm.slane %v1409, 1
      %v2344 = vperm.slane %v984, 1
      %v2345 = vperm.slane %v1410, 1
      %v2346 = vperm.slane %v1411, 1
      %v2347 = vperm.slane %v1412, 1
      %v2348 = vperm.slane %v986, 1
      %v2349 = vperm.slane %v1413, 1
      %v2350 = vperm.slane %v1414, 1
      %v2351 = vperm.slane %v1415, 1
      %v2352 = vperm.slane %v988, 1
      %v2353 = vperm.slane %v1416, 1
      %v2354 = vperm.slane %v1417, 1
      %v2355 = vperm.slane %v1418, 1
      %v2356 = vperm.slane %v1246, 1
      %v2357 = vperm.slane %v1419, 1
      %v2358 = vperm.slane %v1420, 1
      %v2359 = vperm.slane %v1421, 1
      %v2360 = vperm.slane %v998, 1
      %v2361 = vperm.slane %v1422, 1
      %v2362 = vperm.slane %v1423, 1
      %v2363 = vperm.slane %v1424, 1
      %v2364 = vperm.slane %v1000, 1
      %v2365 = vperm.slane %v1425, 1
      %v2366 = vperm.slane %v1426, 1
      %v2367 = vperm.slane %v1427, 1
      %v2368 = vperm.slane %v1002, 1
      %v2369 = vperm.slane %v1428, 1
      %v2370 = vperm.slane %v1429, 1
      %v2371 = vperm.slane %v1430, 1
      %v2372 = vperm.slane %v1248, 1
      %v2373 = vperm.slane %v1431, 1
      %v2374 = vperm.slane %v1432, 1
      %v2375 = vperm.slane %v1433, 1
      %v2376 = vperm.slane %v1012, 1
      %v2377 = vperm.slane %v1434, 1
      %v2378 = vperm.slane %v1435, 1
      %v2379 = vperm.slane %v1436, 1
      %v2380 = vperm.slane %v1014, 1
      %v2381 = vperm.slane %v1437, 1
      %v2382 = vperm.slane %v1438, 1
      %v2383 = vperm.slane %v1439, 1
      %v2384 = vperm.slane %v1016, 1
      %v2385 = vperm.slane %v1440, 1
      %v2386 = vperm.slane %v1441, 1
      %v2387 = vperm.slane %v1442, 1
      %v2388 = vperm.slane %v1250, 1
      %v2389 = vperm.slane %v1443, 1
      %v2390 = vperm.slane %v1444, 1
      %v2391 = vperm.slane %v1445, 1
      %v2392 = vperm.slane %v1026, 1
      %v2393 = vperm.slane %v1446, 1
      %v2394 = vperm.slane %v1447, 1
      %v2395 = vperm.slane %v1448, 1
      %v2396 = vperm.slane %v1028, 1
      %v2397 = vperm.slane %v1449, 1
      %v2398 = vperm.slane %v1450, 1
      %v2399 = vperm.slane %v1451, 1
      %v2400 = vperm.slane %v1030, 1
      %v2401 = vperm.slane %v1452, 1
      %v2402 = vperm.slane %v1453, 1
      %v2403 = vperm.slane %v1454, 1
      %v2404 = vperm.slane %v1252, 1
      %v2405 = vperm.slane %v1455, 1
      %v2406 = vperm.slane %v1456, 1
      %v2407 = vperm.slane %v1457, 1
      %v2408 = vperm.slane %v1040, 1
      %v2409 = vperm.slane %v1458, 1
      %v2410 = vperm.slane %v1459, 1
      %v2411 = vperm.slane %v1460, 1
      %v2412 = vperm.slane %v1042, 1
      %v2413 = vperm.slane %v1461, 1
      %v2414 = vperm.slane %v1462, 1
      %v2415 = vperm.slane %v1463, 1
      %v2416 = vperm.slane %v1044, 1
      %v2417 = vperm.slane %v1464, 1
      %v2418 = vperm.slane %v1465, 1
      %v2419 = vperm.slane %v1466, 1
      %v2420 = vperm.slane %v1254, 1
      %v2421 = vperm.slane %v1467, 1
      %v2422 = vperm.slane %v1468, 1
      %v2423 = vperm.slane %v1469, 1
      %v2424 = vperm.slane %v1054, 1
      %v2425 = vperm.slane %v1470, 1
      %v2426 = vperm.slane %v1471, 1
      %v2427 = vperm.slane %v1472, 1
      %v2428 = vperm.slane %v1056, 1
      %v2429 = vperm.slane %v1473, 1
      %v2430 = vperm.slane %v1474, 1
      %v2431 = vperm.slane %v1475, 1
      %v2432 = vperm.slane %v1058, 1
      %v2433 = vperm.slane %v1476, 1
      %v2434 = vperm.slane %v1477, 1
      %v2435 = vperm.slane %v1478, 1
      %v2436 = vperm.slane %v1256, 1
      %v2437 = vperm.slane %v1479, 1
      %v2438 = vperm.slane %v1480, 1
      %v2439 = vperm.slane %v1481, 1
      %v2440 = vperm.slane %v1068, 1
      %v2441 = vperm.slane %v1482, 1
      %v2442 = vperm.slane %v1483, 1
      %v2443 = vperm.slane %v1484, 1
      %v2444 = vperm.slane %v1070, 1
      %v2445 = vperm.slane %v1485, 1
      %v2446 = vperm.slane %v1486, 1
      %v2447 = vperm.slane %v1487, 1
      %v2448 = vperm.slane %v1072, 1
      %v2449 = vperm.slane %v1488, 1
      %v2450 = vperm.slane %v1489, 1
      %v2451 = vperm.slane %v1490, 1
      %v2452 = vperm.slane %v1258, 1
      %v2453 = vperm.slane %v1491, 1
      %v2454 = vperm.slane %v1492, 1
      %v2455 = vperm.slane %v1493, 1
      %v2456 = vperm.slane %v1082, 1
      %v2457 = vperm.slane %v1494, 1
      %v2458 = vperm.slane %v1495, 1
      %v2459 = vperm.slane %v1496, 1
      %v2460 = vperm.slane %v1084, 1
      %v2461 = vperm.slane %v1497, 1
      %v2462 = vperm.slane %v1498, 1
      %v2463 = vperm.slane %v1499, 1
      %v2464 = vperm.slane %v1086, 1
      %v2465 = vperm.slane %v1500, 1
      %v2466 = vperm.slane %v1501, 1
      %v2467 = vperm.slane %v1502, 1
      %v2468 = vsel %vm1981, %v2229, %v2228
      %v2469 = vsel %vm1983, %v2230, %v2468
      %v2470 = vsel %vm1985, %v2231, %v2469
      %v2471 = vsel %vm1987, %v2232, %v2470
      %v2472 = vsel %vm1989, %v2233, %v2471
      %v2473 = vsel %vm1991, %v2234, %v2472
      %v2474 = vsel %vm1993, %v2235, %v2473
      %v2475 = vsel %vm1981, %v2237, %v2236
      %v2476 = vsel %vm1983, %v2238, %v2475
      %v2477 = vsel %vm1985, %v2239, %v2476
      %v2478 = vsel %vm1987, %v2240, %v2477
      %v2479 = vsel %vm1989, %v2241, %v2478
      %v2480 = vsel %vm1991, %v2242, %v2479
      %v2481 = vsel %vm1993, %v2243, %v2480
      %v2482 = vsel %vm1981, %v2245, %v2244
      %v2483 = vsel %vm1983, %v2246, %v2482
      %v2484 = vsel %vm1985, %v2247, %v2483
      %v2485 = vsel %vm1987, %v2248, %v2484
      %v2486 = vsel %vm1989, %v2249, %v2485
      %v2487 = vsel %vm1991, %v2250, %v2486
      %v2488 = vsel %vm1993, %v2251, %v2487
      %v2489 = vsel %vm1981, %v2253, %v2252
      %v2490 = vsel %vm1983, %v2254, %v2489
      %v2491 = vsel %vm1985, %v2255, %v2490
      %v2492 = vsel %vm1987, %v2256, %v2491
      %v2493 = vsel %vm1989, %v2257, %v2492
      %v2494 = vsel %vm1991, %v2258, %v2493
      %v2495 = vsel %vm1993, %v2259, %v2494
      %v2496 = vsel %vm1981, %v2261, %v2260
      %v2497 = vsel %vm1983, %v2262, %v2496
      %v2498 = vsel %vm1985, %v2263, %v2497
      %v2499 = vsel %vm1987, %v2264, %v2498
      %v2500 = vsel %vm1989, %v2265, %v2499
      %v2501 = vsel %vm1991, %v2266, %v2500
      %v2502 = vsel %vm1993, %v2267, %v2501
      %v2503 = vsel %vm1981, %v2269, %v2268
      %v2504 = vsel %vm1983, %v2270, %v2503
      %v2505 = vsel %vm1985, %v2271, %v2504
      %v2506 = vsel %vm1987, %v2272, %v2505
      %v2507 = vsel %vm1989, %v2273, %v2506
      %v2508 = vsel %vm1991, %v2274, %v2507
      %v2509 = vsel %vm1993, %v2275, %v2508
      %v2510 = vsel %vm1981, %v2277, %v2276
      %v2511 = vsel %vm1983, %v2278, %v2510
      %v2512 = vsel %vm1985, %v2279, %v2511
      %v2513 = vsel %vm1987, %v2280, %v2512
      %v2514 = vsel %vm1989, %v2281, %v2513
      %v2515 = vsel %vm1991, %v2282, %v2514
      %v2516 = vsel %vm1993, %v2283, %v2515
      %v2517 = vsel %vm1981, %v2285, %v2284
      %v2518 = vsel %vm1983, %v2286, %v2517
      %v2519 = vsel %vm1985, %v2287, %v2518
      %v2520 = vsel %vm1987, %v2288, %v2519
      %v2521 = vsel %vm1989, %v2289, %v2520
      %v2522 = vsel %vm1991, %v2290, %v2521
      %v2523 = vsel %vm1993, %v2291, %v2522
      %v2524 = vsel %vm1981, %v2293, %v2292
      %v2525 = vsel %vm1983, %v2294, %v2524
      %v2526 = vsel %vm1985, %v2295, %v2525
      %v2527 = vsel %vm1987, %v2296, %v2526
      %v2528 = vsel %vm1989, %v2297, %v2527
      %v2529 = vsel %vm1991, %v2298, %v2528
      %v2530 = vsel %vm1993, %v2299, %v2529
      %v2531 = vsel %vm1981, %v2301, %v2300
      %v2532 = vsel %vm1983, %v2302, %v2531
      %v2533 = vsel %vm1985, %v2303, %v2532
      %v2534 = vsel %vm1987, %v2304, %v2533
      %v2535 = vsel %vm1989, %v2305, %v2534
      %v2536 = vsel %vm1991, %v2306, %v2535
      %v2537 = vsel %vm1993, %v2307, %v2536
      %v2538 = vsel %vm1981, %v2309, %v2308
      %v2539 = vsel %vm1983, %v2310, %v2538
      %v2540 = vsel %vm1985, %v2311, %v2539
      %v2541 = vsel %vm1987, %v2312, %v2540
      %v2542 = vsel %vm1989, %v2313, %v2541
      %v2543 = vsel %vm1991, %v2314, %v2542
      %v2544 = vsel %vm1993, %v2315, %v2543
      %v2545 = vsel %vm1981, %v2317, %v2316
      %v2546 = vsel %vm1983, %v2318, %v2545
      %v2547 = vsel %vm1985, %v2319, %v2546
      %v2548 = vsel %vm1987, %v2320, %v2547
      %v2549 = vsel %vm1989, %v2321, %v2548
      %v2550 = vsel %vm1991, %v2322, %v2549
      %v2551 = vsel %vm1993, %v2323, %v2550
      %v2552 = vsel %vm1981, %v2325, %v2324
      %v2553 = vsel %vm1983, %v2326, %v2552
      %v2554 = vsel %vm1985, %v2327, %v2553
      %v2555 = vsel %vm1987, %v2328, %v2554
      %v2556 = vsel %vm1989, %v2329, %v2555
      %v2557 = vsel %vm1991, %v2330, %v2556
      %v2558 = vsel %vm1993, %v2331, %v2557
      %v2559 = vsel %vm1981, %v2333, %v2332
      %v2560 = vsel %vm1983, %v2334, %v2559
      %v2561 = vsel %vm1985, %v2335, %v2560
      %v2562 = vsel %vm1987, %v2336, %v2561
      %v2563 = vsel %vm1989, %v2337, %v2562
      %v2564 = vsel %vm1991, %v2338, %v2563
      %v2565 = vsel %vm1993, %v2339, %v2564
      %v2566 = vsel %vm1981, %v2341, %v2340
      %v2567 = vsel %vm1983, %v2342, %v2566
      %v2568 = vsel %vm1985, %v2343, %v2567
      %v2569 = vsel %vm1987, %v2344, %v2568
      %v2570 = vsel %vm1989, %v2345, %v2569
      %v2571 = vsel %vm1991, %v2346, %v2570
      %v2572 = vsel %vm1993, %v2347, %v2571
      %v2573 = vsel %vm1981, %v2349, %v2348
      %v2574 = vsel %vm1983, %v2350, %v2573
      %v2575 = vsel %vm1985, %v2351, %v2574
      %v2576 = vsel %vm1987, %v2352, %v2575
      %v2577 = vsel %vm1989, %v2353, %v2576
      %v2578 = vsel %vm1991, %v2354, %v2577
      %v2579 = vsel %vm1993, %v2355, %v2578
      %v2580 = vsel %vm1981, %v2357, %v2356
      %v2581 = vsel %vm1983, %v2358, %v2580
      %v2582 = vsel %vm1985, %v2359, %v2581
      %v2583 = vsel %vm1987, %v2360, %v2582
      %v2584 = vsel %vm1989, %v2361, %v2583
      %v2585 = vsel %vm1991, %v2362, %v2584
      %v2586 = vsel %vm1993, %v2363, %v2585
      %v2587 = vsel %vm1981, %v2365, %v2364
      %v2588 = vsel %vm1983, %v2366, %v2587
      %v2589 = vsel %vm1985, %v2367, %v2588
      %v2590 = vsel %vm1987, %v2368, %v2589
      %v2591 = vsel %vm1989, %v2369, %v2590
      %v2592 = vsel %vm1991, %v2370, %v2591
      %v2593 = vsel %vm1993, %v2371, %v2592
      %v2594 = vsel %vm1981, %v2373, %v2372
      %v2595 = vsel %vm1983, %v2374, %v2594
      %v2596 = vsel %vm1985, %v2375, %v2595
      %v2597 = vsel %vm1987, %v2376, %v2596
      %v2598 = vsel %vm1989, %v2377, %v2597
      %v2599 = vsel %vm1991, %v2378, %v2598
      %v2600 = vsel %vm1993, %v2379, %v2599
      %v2601 = vsel %vm1981, %v2381, %v2380
      %v2602 = vsel %vm1983, %v2382, %v2601
      %v2603 = vsel %vm1985, %v2383, %v2602
      %v2604 = vsel %vm1987, %v2384, %v2603
      %v2605 = vsel %vm1989, %v2385, %v2604
      %v2606 = vsel %vm1991, %v2386, %v2605
      %v2607 = vsel %vm1993, %v2387, %v2606
      %v2608 = vsel %vm1981, %v2389, %v2388
      %v2609 = vsel %vm1983, %v2390, %v2608
      %v2610 = vsel %vm1985, %v2391, %v2609
      %v2611 = vsel %vm1987, %v2392, %v2610
      %v2612 = vsel %vm1989, %v2393, %v2611
      %v2613 = vsel %vm1991, %v2394, %v2612
      %v2614 = vsel %vm1993, %v2395, %v2613
      %v2615 = vsel %vm1981, %v2397, %v2396
      %v2616 = vsel %vm1983, %v2398, %v2615
      %v2617 = vsel %vm1985, %v2399, %v2616
      %v2618 = vsel %vm1987, %v2400, %v2617
      %v2619 = vsel %vm1989, %v2401, %v2618
      %v2620 = vsel %vm1991, %v2402, %v2619
      %v2621 = vsel %vm1993, %v2403, %v2620
      %v2622 = vsel %vm1981, %v2405, %v2404
      %v2623 = vsel %vm1983, %v2406, %v2622
      %v2624 = vsel %vm1985, %v2407, %v2623
      %v2625 = vsel %vm1987, %v2408, %v2624
      %v2626 = vsel %vm1989, %v2409, %v2625
      %v2627 = vsel %vm1991, %v2410, %v2626
      %v2628 = vsel %vm1993, %v2411, %v2627
      %v2629 = vsel %vm1981, %v2413, %v2412
      %v2630 = vsel %vm1983, %v2414, %v2629
      %v2631 = vsel %vm1985, %v2415, %v2630
      %v2632 = vsel %vm1987, %v2416, %v2631
      %v2633 = vsel %vm1989, %v2417, %v2632
      %v2634 = vsel %vm1991, %v2418, %v2633
      %v2635 = vsel %vm1993, %v2419, %v2634
      %v2636 = vsel %vm1981, %v2421, %v2420
      %v2637 = vsel %vm1983, %v2422, %v2636
      %v2638 = vsel %vm1985, %v2423, %v2637
      %v2639 = vsel %vm1987, %v2424, %v2638
      %v2640 = vsel %vm1989, %v2425, %v2639
      %v2641 = vsel %vm1991, %v2426, %v2640
      %v2642 = vsel %vm1993, %v2427, %v2641
      %v2643 = vsel %vm1981, %v2429, %v2428
      %v2644 = vsel %vm1983, %v2430, %v2643
      %v2645 = vsel %vm1985, %v2431, %v2644
      %v2646 = vsel %vm1987, %v2432, %v2645
      %v2647 = vsel %vm1989, %v2433, %v2646
      %v2648 = vsel %vm1991, %v2434, %v2647
      %v2649 = vsel %vm1993, %v2435, %v2648
      %v2650 = vsel %vm1981, %v2437, %v2436
      %v2651 = vsel %vm1983, %v2438, %v2650
      %v2652 = vsel %vm1985, %v2439, %v2651
      %v2653 = vsel %vm1987, %v2440, %v2652
      %v2654 = vsel %vm1989, %v2441, %v2653
      %v2655 = vsel %vm1991, %v2442, %v2654
      %v2656 = vsel %vm1993, %v2443, %v2655
      %v2657 = vsel %vm1981, %v2445, %v2444
      %v2658 = vsel %vm1983, %v2446, %v2657
      %v2659 = vsel %vm1985, %v2447, %v2658
      %v2660 = vsel %vm1987, %v2448, %v2659
      %v2661 = vsel %vm1989, %v2449, %v2660
      %v2662 = vsel %vm1991, %v2450, %v2661
      %v2663 = vsel %vm1993, %v2451, %v2662
      %v2664 = vsel %vm1981, %v2453, %v2452
      %v2665 = vsel %vm1983, %v2454, %v2664
      %v2666 = vsel %vm1985, %v2455, %v2665
      %v2667 = vsel %vm1987, %v2456, %v2666
      %v2668 = vsel %vm1989, %v2457, %v2667
      %v2669 = vsel %vm1991, %v2458, %v2668
      %v2670 = vsel %vm1993, %v2459, %v2669
      %v2671 = vsel %vm1981, %v2461, %v2460
      %v2672 = vsel %vm1983, %v2462, %v2671
      %v2673 = vsel %vm1985, %v2463, %v2672
      %v2674 = vsel %vm1987, %v2464, %v2673
      %v2675 = vsel %vm1989, %v2465, %v2674
      %v2676 = vsel %vm1991, %v2466, %v2675
      %v2677 = vsel %vm1993, %v2467, %v2676
      %2678 = vrot.lane.b32.xlu0 %v2474, 3
      %v2679 = vpop.permute.xlu0 %2678
      %2680 = vrot.lane.b32.xlu0 %v2481, 3
      %v2681 = vpop.permute.xlu0 %2680
      %2682 = vrot.lane.b32.xlu0 %v2488, 3
      %v2683 = vpop.permute.xlu0 %2682
      %2684 = vrot.lane.b32.xlu0 %v2495, 3
      %v2685 = vpop.permute.xlu0 %2684
      %2686 = vrot.lane.b32.xlu0 %v2502, 3
      %v2687 = vpop.permute.xlu0 %2686
      %2688 = vrot.lane.b32.xlu0 %v2509, 3
      %v2689 = vpop.permute.xlu0 %2688
      %2690 = vrot.lane.b32.xlu0 %v2516, 3
      %v2691 = vpop.permute.xlu0 %2690
      %2692 = vrot.lane.b32.xlu0 %v2523, 3
      %v2693 = vpop.permute.xlu0 %2692
      %2694 = vrot.lane.b32.xlu0 %v2530, 3
      %v2695 = vpop.permute.xlu0 %2694
      %2696 = vrot.lane.b32.xlu0 %v2537, 3
      %v2697 = vpop.permute.xlu0 %2696
      %2698 = vrot.lane.b32.xlu0 %v2544, 3
      %v2699 = vpop.permute.xlu0 %2698
      %2700 = vrot.lane.b32.xlu0 %v2551, 3
      %v2701 = vpop.permute.xlu0 %2700
      %2702 = vrot.lane.b32.xlu0 %v2558, 3
      %v2703 = vpop.permute.xlu0 %2702
      %2704 = vrot.lane.b32.xlu0 %v2565, 3
      %v2705 = vpop.permute.xlu0 %2704
      %2706 = vrot.lane.b32.xlu0 %v2572, 3
      %v2707 = vpop.permute.xlu0 %2706
      %2708 = vrot.lane.b32.xlu0 %v2579, 3
      %v2709 = vpop.permute.xlu0 %2708
      %2710 = vrot.lane.b32.xlu0 %v2586, 3
      %v2711 = vpop.permute.xlu0 %2710
      %2712 = vrot.lane.b32.xlu0 %v2593, 3
      %v2713 = vpop.permute.xlu0 %2712
      %2714 = vrot.lane.b32.xlu0 %v2600, 3
      %v2715 = vpop.permute.xlu0 %2714
      %2716 = vrot.lane.b32.xlu0 %v2607, 3
      %v2717 = vpop.permute.xlu0 %2716
      %2718 = vrot.lane.b32.xlu0 %v2614, 3
      %v2719 = vpop.permute.xlu0 %2718
      %2720 = vrot.lane.b32.xlu0 %v2621, 3
      %v2721 = vpop.permute.xlu0 %2720
      %2722 = vrot.lane.b32.xlu0 %v2628, 3
      %v2723 = vpop.permute.xlu0 %2722
      %2724 = vrot.lane.b32.xlu0 %v2635, 3
      %v2725 = vpop.permute.xlu0 %2724
      %2726 = vrot.lane.b32.xlu0 %v2642, 3
      %v2727 = vpop.permute.xlu0 %2726
      %2728 = vrot.lane.b32.xlu0 %v2649, 3
      %v2729 = vpop.permute.xlu0 %2728
      %2730 = vrot.lane.b32.xlu0 %v2656, 3
      %v2731 = vpop.permute.xlu0 %2730
      %2732 = vrot.lane.b32.xlu0 %v2663, 3
      %v2733 = vpop.permute.xlu0 %2732
      %2734 = vrot.lane.b32.xlu0 %v2670, 3
      %v2735 = vpop.permute.xlu0 %2734
      %2736 = vrot.lane.b32.xlu0 %v2677, 3
      %v2737 = vpop.permute.xlu0 %2736
      %v2768 = vperm.slane %v1261, 0
      %v2769 = vperm.slane %v1264, 0
      %v2770 = vperm.slane %v1266, 0
      %v2771 = vperm.slane %v1268, 0
      %v2772 = vperm.slane %v1270, 0
      %v2773 = vperm.slane %v1272, 0
      %v2774 = vperm.slane %v1274, 0
      %v2775 = vperm.slane %v1276, 0
      %v2776 = vperm.slane %v1278, 0
      %v2777 = vperm.slane %v1280, 0
      %v2778 = vperm.slane %v1282, 0
      %v2779 = vperm.slane %v1284, 0
      %v2780 = vperm.slane %v1286, 0
      %v2781 = vperm.slane %v1288, 0
      %v2782 = vperm.slane %v1290, 0
      %v2783 = vsel %vm1981, %v1743, %v1742
      %v2784 = vsel %vm1983, %v1744, %v2783
      %v2785 = vsel %vm1985, %v1745, %v2784
      %v2786 = vsel %vm1987, %v1746, %v2785
      %v2787 = vsel %vm1989, %v1747, %v2786
      %v2788 = vsel %vm1991, %v1748, %v2787
      %v2789 = vsel %vm1993, %v1749, %v2788
      %v2790 = vsel %vm1981, %v1751, %v1750
      %v2791 = vsel %vm1983, %v1752, %v2790
      %v2792 = vsel %vm1985, %v1753, %v2791
      %v2793 = vsel %vm1987, %v1754, %v2792
      %v2794 = vsel %vm1989, %v1755, %v2793
      %v2795 = vsel %vm1991, %v1756, %v2794
      %v2796 = vsel %vm1993, %v2768, %v2795
      %v2797 = vsel %vm1981, %v1759, %v1758
      %v2798 = vsel %vm1983, %v1760, %v2797
      %v2799 = vsel %vm1985, %v1761, %v2798
      %v2800 = vsel %vm1987, %v1762, %v2799
      %v2801 = vsel %vm1989, %v1763, %v2800
      %v2802 = vsel %vm1991, %v1764, %v2801
      %v2803 = vsel %vm1993, %v1765, %v2802
      %v2804 = vsel %vm1981, %v1767, %v1766
      %v2805 = vsel %vm1983, %v1768, %v2804
      %v2806 = vsel %vm1985, %v1769, %v2805
      %v2807 = vsel %vm1987, %v1770, %v2806
      %v2808 = vsel %vm1989, %v1771, %v2807
      %v2809 = vsel %vm1991, %v1772, %v2808
      %v2810 = vsel %vm1993, %v2769, %v2809
      %v2811 = vsel %vm1981, %v1775, %v1774
      %v2812 = vsel %vm1983, %v1776, %v2811
      %v2813 = vsel %vm1985, %v1777, %v2812
      %v2814 = vsel %vm1987, %v1778, %v2813
      %v2815 = vsel %vm1989, %v1779, %v2814
      %v2816 = vsel %vm1991, %v1780, %v2815
      %v2817 = vsel %vm1993, %v1781, %v2816
      %v2818 = vsel %vm1981, %v1783, %v1782
      %v2819 = vsel %vm1983, %v1784, %v2818
      %v2820 = vsel %vm1985, %v1785, %v2819
      %v2821 = vsel %vm1987, %v1786, %v2820
      %v2822 = vsel %vm1989, %v1787, %v2821
      %v2823 = vsel %vm1991, %v1788, %v2822
      %v2824 = vsel %vm1993, %v2770, %v2823
      %v2825 = vsel %vm1981, %v1791, %v1790
      %v2826 = vsel %vm1983, %v1792, %v2825
      %v2827 = vsel %vm1985, %v1793, %v2826
      %v2828 = vsel %vm1987, %v1794, %v2827
      %v2829 = vsel %vm1989, %v1795, %v2828
      %v2830 = vsel %vm1991, %v1796, %v2829
      %v2831 = vsel %vm1993, %v1797, %v2830
      %v2832 = vsel %vm1981, %v1799, %v1798
      %v2833 = vsel %vm1983, %v1800, %v2832
      %v2834 = vsel %vm1985, %v1801, %v2833
      %v2835 = vsel %vm1987, %v1802, %v2834
      %v2836 = vsel %vm1989, %v1803, %v2835
      %v2837 = vsel %vm1991, %v1804, %v2836
      %v2838 = vsel %vm1993, %v2771, %v2837
      %v2839 = vsel %vm1981, %v1807, %v1806
      %v2840 = vsel %vm1983, %v1808, %v2839
      %v2841 = vsel %vm1985, %v1809, %v2840
      %v2842 = vsel %vm1987, %v1810, %v2841
      %v2843 = vsel %vm1989, %v1811, %v2842
      %v2844 = vsel %vm1991, %v1812, %v2843
      %v2845 = vsel %vm1993, %v1813, %v2844
      %v2846 = vsel %vm1981, %v1815, %v1814
      %v2847 = vsel %vm1983, %v1816, %v2846
      %v2848 = vsel %vm1985, %v1817, %v2847
      %v2849 = vsel %vm1987, %v1818, %v2848
      %v2850 = vsel %vm1989, %v1819, %v2849
      %v2851 = vsel %vm1991, %v1820, %v2850
      %v2852 = vsel %vm1993, %v2772, %v2851
      %v2853 = vsel %vm1981, %v1823, %v1822
      %v2854 = vsel %vm1983, %v1824, %v2853
      %v2855 = vsel %vm1985, %v1825, %v2854
      %v2856 = vsel %vm1987, %v1826, %v2855
      %v2857 = vsel %vm1989, %v1827, %v2856
      %v2858 = vsel %vm1991, %v1828, %v2857
      %v2859 = vsel %vm1993, %v1829, %v2858
      %v2860 = vsel %vm1981, %v1831, %v1830
      %v2861 = vsel %vm1983, %v1832, %v2860
      %v2862 = vsel %vm1985, %v1833, %v2861
      %v2863 = vsel %vm1987, %v1834, %v2862
      %v2864 = vsel %vm1989, %v1835, %v2863
      %v2865 = vsel %vm1991, %v1836, %v2864
      %v2866 = vsel %vm1993, %v2773, %v2865
      %v2867 = vsel %vm1981, %v1839, %v1838
      %v2868 = vsel %vm1983, %v1840, %v2867
      %v2869 = vsel %vm1985, %v1841, %v2868
      %v2870 = vsel %vm1987, %v1842, %v2869
      %v2871 = vsel %vm1989, %v1843, %v2870
      %v2872 = vsel %vm1991, %v1844, %v2871
      %v2873 = vsel %vm1993, %v1845, %v2872
      %v2874 = vsel %vm1981, %v1847, %v1846
      %v2875 = vsel %vm1983, %v1848, %v2874
      %v2876 = vsel %vm1985, %v1849, %v2875
      %v2877 = vsel %vm1987, %v1850, %v2876
      %v2878 = vsel %vm1989, %v1851, %v2877
      %v2879 = vsel %vm1991, %v1852, %v2878
      %v2880 = vsel %vm1993, %v2774, %v2879
      %v2881 = vsel %vm1981, %v1855, %v1854
      %v2882 = vsel %vm1983, %v1856, %v2881
      %v2883 = vsel %vm1985, %v1857, %v2882
      %v2884 = vsel %vm1987, %v1858, %v2883
      %v2885 = vsel %vm1989, %v1859, %v2884
      %v2886 = vsel %vm1991, %v1860, %v2885
      %v2887 = vsel %vm1993, %v1861, %v2886
      %v2888 = vsel %vm1981, %v1863, %v1862
      %v2889 = vsel %vm1983, %v1864, %v2888
      %v2890 = vsel %vm1985, %v1865, %v2889
      %v2891 = vsel %vm1987, %v1866, %v2890
      %v2892 = vsel %vm1989, %v1867, %v2891
      %v2893 = vsel %vm1991, %v1868, %v2892
      %v2894 = vsel %vm1993, %v2775, %v2893
      %v2895 = vsel %vm1981, %v1871, %v1870
      %v2896 = vsel %vm1983, %v1872, %v2895
      %v2897 = vsel %vm1985, %v1873, %v2896
      %v2898 = vsel %vm1987, %v1874, %v2897
      %v2899 = vsel %vm1989, %v1875, %v2898
      %v2900 = vsel %vm1991, %v1876, %v2899
      %v2901 = vsel %vm1993, %v1877, %v2900
      %v2902 = vsel %vm1981, %v1879, %v1878
      %v2903 = vsel %vm1983, %v1880, %v2902
      %v2904 = vsel %vm1985, %v1881, %v2903
      %v2905 = vsel %vm1987, %v1882, %v2904
      %v2906 = vsel %vm1989, %v1883, %v2905
      %v2907 = vsel %vm1991, %v1884, %v2906
      %v2908 = vsel %vm1993, %v2776, %v2907
      %v2909 = vsel %vm1981, %v1887, %v1886
      %v2910 = vsel %vm1983, %v1888, %v2909
      %v2911 = vsel %vm1985, %v1889, %v2910
      %v2912 = vsel %vm1987, %v1890, %v2911
      %v2913 = vsel %vm1989, %v1891, %v2912
      %v2914 = vsel %vm1991, %v1892, %v2913
      %v2915 = vsel %vm1993, %v1893, %v2914
      %v2916 = vsel %vm1981, %v1895, %v1894
      %v2917 = vsel %vm1983, %v1896, %v2916
      %v2918 = vsel %vm1985, %v1897, %v2917
      %v2919 = vsel %vm1987, %v1898, %v2918
      %v2920 = vsel %vm1989, %v1899, %v2919
      %v2921 = vsel %vm1991, %v1900, %v2920
      %v2922 = vsel %vm1993, %v2777, %v2921
      %v2923 = vsel %vm1981, %v1903, %v1902
      %v2924 = vsel %vm1983, %v1904, %v2923
      %v2925 = vsel %vm1985, %v1905, %v2924
      %v2926 = vsel %vm1987, %v1906, %v2925
      %v2927 = vsel %vm1989, %v1907, %v2926
      %v2928 = vsel %vm1991, %v1908, %v2927
      %v2929 = vsel %vm1993, %v1909, %v2928
      %v2930 = vsel %vm1981, %v1911, %v1910
      %v2931 = vsel %vm1983, %v1912, %v2930
      %v2932 = vsel %vm1985, %v1913, %v2931
      %v2933 = vsel %vm1987, %v1914, %v2932
      %v2934 = vsel %vm1989, %v1915, %v2933
      %v2935 = vsel %vm1991, %v1916, %v2934
      %v2936 = vsel %vm1993, %v2778, %v2935
      %v2937 = vsel %vm1981, %v1919, %v1918
      %v2938 = vsel %vm1983, %v1920, %v2937
      %v2939 = vsel %vm1985, %v1921, %v2938
      %v2940 = vsel %vm1987, %v1922, %v2939
      %v2941 = vsel %vm1989, %v1923, %v2940
      %v2942 = vsel %vm1991, %v1924, %v2941
      %v2943 = vsel %vm1993, %v1925, %v2942
      %v2944 = vsel %vm1981, %v1927, %v1926
      %v2945 = vsel %vm1983, %v1928, %v2944
      %v2946 = vsel %vm1985, %v1929, %v2945
      %v2947 = vsel %vm1987, %v1930, %v2946
      %v2948 = vsel %vm1989, %v1931, %v2947
      %v2949 = vsel %vm1991, %v1932, %v2948
      %v2950 = vsel %vm1993, %v2779, %v2949
      %v2951 = vsel %vm1981, %v1935, %v1934
      %v2952 = vsel %vm1983, %v1936, %v2951
      %v2953 = vsel %vm1985, %v1937, %v2952
      %v2954 = vsel %vm1987, %v1938, %v2953
      %v2955 = vsel %vm1989, %v1939, %v2954
      %v2956 = vsel %vm1991, %v1940, %v2955
      %v2957 = vsel %vm1993, %v1941, %v2956
      %v2958 = vsel %vm1981, %v1943, %v1942
      %v2959 = vsel %vm1983, %v1944, %v2958
      %v2960 = vsel %vm1985, %v1945, %v2959
      %v2961 = vsel %vm1987, %v1946, %v2960
      %v2962 = vsel %vm1989, %v1947, %v2961
      %v2963 = vsel %vm1991, %v1948, %v2962
      %v2964 = vsel %vm1993, %v2780, %v2963
      %v2965 = vsel %vm1981, %v1951, %v1950
      %v2966 = vsel %vm1983, %v1952, %v2965
      %v2967 = vsel %vm1985, %v1953, %v2966
      %v2968 = vsel %vm1987, %v1954, %v2967
      %v2969 = vsel %vm1989, %v1955, %v2968
      %v2970 = vsel %vm1991, %v1956, %v2969
      %v2971 = vsel %vm1993, %v1957, %v2970
      %v2972 = vsel %vm1981, %v1959, %v1958
      %v2973 = vsel %vm1983, %v1960, %v2972
      %v2974 = vsel %vm1985, %v1961, %v2973
      %v2975 = vsel %vm1987, %v1962, %v2974
      %v2976 = vsel %vm1989, %v1963, %v2975
      %v2977 = vsel %vm1991, %v1964, %v2976
      %v2978 = vsel %vm1993, %v2781, %v2977
      %v2979 = vsel %vm1981, %v1967, %v1966
      %v2980 = vsel %vm1983, %v1968, %v2979
      %v2981 = vsel %vm1985, %v1969, %v2980
      %v2982 = vsel %vm1987, %v1970, %v2981
      %v2983 = vsel %vm1989, %v1971, %v2982
      %v2984 = vsel %vm1991, %v1972, %v2983
      %v2985 = vsel %vm1993, %v1973, %v2984
      %v2986 = vsel %vm1981, %v1975, %v1974
      %v2987 = vsel %vm1983, %v1976, %v2986
      %v2988 = vsel %vm1985, %v1977, %v2987
      %v2989 = vsel %vm1987, %v1978, %v2988
      %v2990 = vsel %vm1989, %v1979, %v2989
      %v2991 = vsel %vm1991, %v1980, %v2990
      %v2992 = vsel %vm1993, %v2782, %v2991
      %2993 = vrot.lane.b32.xlu0 %v2789, 6
      %v2994 = vpop.permute.xlu0 %2993
      %2995 = vrot.lane.b32.xlu0 %v2796, 6
      %v2996 = vpop.permute.xlu0 %2995
      %2997 = vrot.lane.b32.xlu0 %v2803, 6
      %v2998 = vpop.permute.xlu0 %2997
      %2999 = vrot.lane.b32.xlu0 %v2810, 6
      %v3000 = vpop.permute.xlu0 %2999
      %3001 = vrot.lane.b32.xlu0 %v2817, 6
      %v3002 = vpop.permute.xlu0 %3001
      %3003 = vrot.lane.b32.xlu0 %v2824, 6
      %v3004 = vpop.permute.xlu0 %3003
      %3005 = vrot.lane.b32.xlu0 %v2831, 6
      %v3006 = vpop.permute.xlu0 %3005
      %3007 = vrot.lane.b32.xlu0 %v2838, 6
      %v3008 = vpop.permute.xlu0 %3007
      %3009 = vrot.lane.b32.xlu0 %v2845, 6
      %v3010 = vpop.permute.xlu0 %3009
      %3011 = vrot.lane.b32.xlu0 %v2852, 6
      %v3012 = vpop.permute.xlu0 %3011
      %3013 = vrot.lane.b32.xlu0 %v2859, 6
      %v3014 = vpop.permute.xlu0 %3013
      %3015 = vrot.lane.b32.xlu0 %v2866, 6
      %v3016 = vpop.permute.xlu0 %3015
      %3017 = vrot.lane.b32.xlu0 %v2873, 6
      %v3018 = vpop.permute.xlu0 %3017
      %3019 = vrot.lane.b32.xlu0 %v2880, 6
      %v3020 = vpop.permute.xlu0 %3019
      %3021 = vrot.lane.b32.xlu0 %v2887, 6
      %v3022 = vpop.permute.xlu0 %3021
      %3023 = vrot.lane.b32.xlu0 %v2894, 6
      %v3024 = vpop.permute.xlu0 %3023
      %3025 = vrot.lane.b32.xlu0 %v2901, 6
      %v3026 = vpop.permute.xlu0 %3025
      %3027 = vrot.lane.b32.xlu0 %v2908, 6
      %v3028 = vpop.permute.xlu0 %3027
      %3029 = vrot.lane.b32.xlu0 %v2915, 6
      %v3030 = vpop.permute.xlu0 %3029
      %3031 = vrot.lane.b32.xlu0 %v2922, 6
      %v3032 = vpop.permute.xlu0 %3031
      %3033 = vrot.lane.b32.xlu0 %v2929, 6
      %v3034 = vpop.permute.xlu0 %3033
      %3035 = vrot.lane.b32.xlu0 %v2936, 6
      %v3036 = vpop.permute.xlu0 %3035
      %3037 = vrot.lane.b32.xlu0 %v2943, 6
      %v3038 = vpop.permute.xlu0 %3037
      %3039 = vrot.lane.b32.xlu0 %v2950, 6
      %v3040 = vpop.permute.xlu0 %3039
      %3041 = vrot.lane.b32.xlu0 %v2957, 6
      %v3042 = vpop.permute.xlu0 %3041
      %3043 = vrot.lane.b32.xlu0 %v2964, 6
      %v3044 = vpop.permute.xlu0 %3043
      %3045 = vrot.lane.b32.xlu0 %v2971, 6
      %v3046 = vpop.permute.xlu0 %3045
      %3047 = vrot.lane.b32.xlu0 %v2978, 6
      %v3048 = vpop.permute.xlu0 %3047
      %3049 = vrot.lane.b32.xlu0 %v2985, 6
      %v3050 = vpop.permute.xlu0 %3049
      %3051 = vrot.lane.b32.xlu0 %v2992, 6
      %v3052 = vpop.permute.xlu0 %3051
      %v3083 = vperm.slane %v1261, 1
      %v3084 = vperm.slane %v1264, 1
      %v3085 = vperm.slane %v1266, 1
      %v3086 = vperm.slane %v1268, 1
      %v3087 = vperm.slane %v1270, 1
      %v3088 = vperm.slane %v1272, 1
      %v3089 = vperm.slane %v1274, 1
      %v3090 = vperm.slane %v1276, 1
      %v3091 = vperm.slane %v1278, 1
      %v3092 = vperm.slane %v1280, 1
      %v3093 = vperm.slane %v1282, 1
      %v3094 = vperm.slane %v1284, 1
      %v3095 = vperm.slane %v1286, 1
      %v3096 = vperm.slane %v1288, 1
      %v3097 = vperm.slane %v1290, 1
      %v3098 = vsel %vm1981, %v2230, %v2229
      %v3099 = vsel %vm1983, %v2231, %v3098
      %v3100 = vsel %vm1985, %v2232, %v3099
      %v3101 = vsel %vm1987, %v2233, %v3100
      %v3102 = vsel %vm1989, %v2234, %v3101
      %v3103 = vsel %vm1991, %v2235, %v3102
      %v3104 = vsel %vm1993, %v2236, %v3103
      %v3105 = vsel %vm1981, %v2238, %v2237
      %v3106 = vsel %vm1983, %v2239, %v3105
      %v3107 = vsel %vm1985, %v2240, %v3106
      %v3108 = vsel %vm1987, %v2241, %v3107
      %v3109 = vsel %vm1989, %v2242, %v3108
      %v3110 = vsel %vm1991, %v2243, %v3109
      %v3111 = vsel %vm1993, %v3083, %v3110
      %v3112 = vsel %vm1981, %v2246, %v2245
      %v3113 = vsel %vm1983, %v2247, %v3112
      %v3114 = vsel %vm1985, %v2248, %v3113
      %v3115 = vsel %vm1987, %v2249, %v3114
      %v3116 = vsel %vm1989, %v2250, %v3115
      %v3117 = vsel %vm1991, %v2251, %v3116
      %v3118 = vsel %vm1993, %v2252, %v3117
      %v3119 = vsel %vm1981, %v2254, %v2253
      %v3120 = vsel %vm1983, %v2255, %v3119
      %v3121 = vsel %vm1985, %v2256, %v3120
      %v3122 = vsel %vm1987, %v2257, %v3121
      %v3123 = vsel %vm1989, %v2258, %v3122
      %v3124 = vsel %vm1991, %v2259, %v3123
      %v3125 = vsel %vm1993, %v3084, %v3124
      %v3126 = vsel %vm1981, %v2262, %v2261
      %v3127 = vsel %vm1983, %v2263, %v3126
      %v3128 = vsel %vm1985, %v2264, %v3127
      %v3129 = vsel %vm1987, %v2265, %v3128
      %v3130 = vsel %vm1989, %v2266, %v3129
      %v3131 = vsel %vm1991, %v2267, %v3130
      %v3132 = vsel %vm1993, %v2268, %v3131
      %v3133 = vsel %vm1981, %v2270, %v2269
      %v3134 = vsel %vm1983, %v2271, %v3133
      %v3135 = vsel %vm1985, %v2272, %v3134
      %v3136 = vsel %vm1987, %v2273, %v3135
      %v3137 = vsel %vm1989, %v2274, %v3136
      %v3138 = vsel %vm1991, %v2275, %v3137
      %v3139 = vsel %vm1993, %v3085, %v3138
      %v3140 = vsel %vm1981, %v2278, %v2277
      %v3141 = vsel %vm1983, %v2279, %v3140
      %v3142 = vsel %vm1985, %v2280, %v3141
      %v3143 = vsel %vm1987, %v2281, %v3142
      %v3144 = vsel %vm1989, %v2282, %v3143
      %v3145 = vsel %vm1991, %v2283, %v3144
      %v3146 = vsel %vm1993, %v2284, %v3145
      %v3147 = vsel %vm1981, %v2286, %v2285
      %v3148 = vsel %vm1983, %v2287, %v3147
      %v3149 = vsel %vm1985, %v2288, %v3148
      %v3150 = vsel %vm1987, %v2289, %v3149
      %v3151 = vsel %vm1989, %v2290, %v3150
      %v3152 = vsel %vm1991, %v2291, %v3151
      %v3153 = vsel %vm1993, %v3086, %v3152
      %v3154 = vsel %vm1981, %v2294, %v2293
      %v3155 = vsel %vm1983, %v2295, %v3154
      %v3156 = vsel %vm1985, %v2296, %v3155
      %v3157 = vsel %vm1987, %v2297, %v3156
      %v3158 = vsel %vm1989, %v2298, %v3157
      %v3159 = vsel %vm1991, %v2299, %v3158
      %v3160 = vsel %vm1993, %v2300, %v3159
      %v3161 = vsel %vm1981, %v2302, %v2301
      %v3162 = vsel %vm1983, %v2303, %v3161
      %v3163 = vsel %vm1985, %v2304, %v3162
      %v3164 = vsel %vm1987, %v2305, %v3163
      %v3165 = vsel %vm1989, %v2306, %v3164
      %v3166 = vsel %vm1991, %v2307, %v3165
      %v3167 = vsel %vm1993, %v3087, %v3166
      %v3168 = vsel %vm1981, %v2310, %v2309
      %v3169 = vsel %vm1983, %v2311, %v3168
      %v3170 = vsel %vm1985, %v2312, %v3169
      %v3171 = vsel %vm1987, %v2313, %v3170
      %v3172 = vsel %vm1989, %v2314, %v3171
      %v3173 = vsel %vm1991, %v2315, %v3172
      %v3174 = vsel %vm1993, %v2316, %v3173
      %v3175 = vsel %vm1981, %v2318, %v2317
      %v3176 = vsel %vm1983, %v2319, %v3175
      %v3177 = vsel %vm1985, %v2320, %v3176
      %v3178 = vsel %vm1987, %v2321, %v3177
      %v3179 = vsel %vm1989, %v2322, %v3178
      %v3180 = vsel %vm1991, %v2323, %v3179
      %v3181 = vsel %vm1993, %v3088, %v3180
      %v3182 = vsel %vm1981, %v2326, %v2325
      %v3183 = vsel %vm1983, %v2327, %v3182
      %v3184 = vsel %vm1985, %v2328, %v3183
      %v3185 = vsel %vm1987, %v2329, %v3184
      %v3186 = vsel %vm1989, %v2330, %v3185
      %v3187 = vsel %vm1991, %v2331, %v3186
      %v3188 = vsel %vm1993, %v2332, %v3187
      %v3189 = vsel %vm1981, %v2334, %v2333
      %v3190 = vsel %vm1983, %v2335, %v3189
      %v3191 = vsel %vm1985, %v2336, %v3190
      %v3192 = vsel %vm1987, %v2337, %v3191
      %v3193 = vsel %vm1989, %v2338, %v3192
      %v3194 = vsel %vm1991, %v2339, %v3193
      %v3195 = vsel %vm1993, %v3089, %v3194
      %v3196 = vsel %vm1981, %v2342, %v2341
      %v3197 = vsel %vm1983, %v2343, %v3196
      %v3198 = vsel %vm1985, %v2344, %v3197
      %v3199 = vsel %vm1987, %v2345, %v3198
      %v3200 = vsel %vm1989, %v2346, %v3199
      %v3201 = vsel %vm1991, %v2347, %v3200
      %v3202 = vsel %vm1993, %v2348, %v3201
      %v3203 = vsel %vm1981, %v2350, %v2349
      %v3204 = vsel %vm1983, %v2351, %v3203
      %v3205 = vsel %vm1985, %v2352, %v3204
      %v3206 = vsel %vm1987, %v2353, %v3205
      %v3207 = vsel %vm1989, %v2354, %v3206
      %v3208 = vsel %vm1991, %v2355, %v3207
      %v3209 = vsel %vm1993, %v3090, %v3208
      %v3210 = vsel %vm1981, %v2358, %v2357
      %v3211 = vsel %vm1983, %v2359, %v3210
      %v3212 = vsel %vm1985, %v2360, %v3211
      %v3213 = vsel %vm1987, %v2361, %v3212
      %v3214 = vsel %vm1989, %v2362, %v3213
      %v3215 = vsel %vm1991, %v2363, %v3214
      %v3216 = vsel %vm1993, %v2364, %v3215
      %v3217 = vsel %vm1981, %v2366, %v2365
      %v3218 = vsel %vm1983, %v2367, %v3217
      %v3219 = vsel %vm1985, %v2368, %v3218
      %v3220 = vsel %vm1987, %v2369, %v3219
      %v3221 = vsel %vm1989, %v2370, %v3220
      %v3222 = vsel %vm1991, %v2371, %v3221
      %v3223 = vsel %vm1993, %v3091, %v3222
      %v3224 = vsel %vm1981, %v2374, %v2373
      %v3225 = vsel %vm1983, %v2375, %v3224
      %v3226 = vsel %vm1985, %v2376, %v3225
      %v3227 = vsel %vm1987, %v2377, %v3226
      %v3228 = vsel %vm1989, %v2378, %v3227
      %v3229 = vsel %vm1991, %v2379, %v3228
      %v3230 = vsel %vm1993, %v2380, %v3229
      %v3231 = vsel %vm1981, %v2382, %v2381
      %v3232 = vsel %vm1983, %v2383, %v3231
      %v3233 = vsel %vm1985, %v2384, %v3232
      %v3234 = vsel %vm1987, %v2385, %v3233
      %v3235 = vsel %vm1989, %v2386, %v3234
      %v3236 = vsel %vm1991, %v2387, %v3235
      %v3237 = vsel %vm1993, %v3092, %v3236
      %v3238 = vsel %vm1981, %v2390, %v2389
      %v3239 = vsel %vm1983, %v2391, %v3238
      %v3240 = vsel %vm1985, %v2392, %v3239
      %v3241 = vsel %vm1987, %v2393, %v3240
      %v3242 = vsel %vm1989, %v2394, %v3241
      %v3243 = vsel %vm1991, %v2395, %v3242
      %v3244 = vsel %vm1993, %v2396, %v3243
      %v3245 = vsel %vm1981, %v2398, %v2397
      %v3246 = vsel %vm1983, %v2399, %v3245
      %v3247 = vsel %vm1985, %v2400, %v3246
      %v3248 = vsel %vm1987, %v2401, %v3247
      %v3249 = vsel %vm1989, %v2402, %v3248
      %v3250 = vsel %vm1991, %v2403, %v3249
      %v3251 = vsel %vm1993, %v3093, %v3250
      %v3252 = vsel %vm1981, %v2406, %v2405
      %v3253 = vsel %vm1983, %v2407, %v3252
      %v3254 = vsel %vm1985, %v2408, %v3253
      %v3255 = vsel %vm1987, %v2409, %v3254
      %v3256 = vsel %vm1989, %v2410, %v3255
      %v3257 = vsel %vm1991, %v2411, %v3256
      %v3258 = vsel %vm1993, %v2412, %v3257
      %v3259 = vsel %vm1981, %v2414, %v2413
      %v3260 = vsel %vm1983, %v2415, %v3259
      %v3261 = vsel %vm1985, %v2416, %v3260
      %v3262 = vsel %vm1987, %v2417, %v3261
      %v3263 = vsel %vm1989, %v2418, %v3262
      %v3264 = vsel %vm1991, %v2419, %v3263
      %v3265 = vsel %vm1993, %v3094, %v3264
      %v3266 = vsel %vm1981, %v2422, %v2421
      %v3267 = vsel %vm1983, %v2423, %v3266
      %v3268 = vsel %vm1985, %v2424, %v3267
      %v3269 = vsel %vm1987, %v2425, %v3268
      %v3270 = vsel %vm1989, %v2426, %v3269
      %v3271 = vsel %vm1991, %v2427, %v3270
      %v3272 = vsel %vm1993, %v2428, %v3271
      %v3273 = vsel %vm1981, %v2430, %v2429
      %v3274 = vsel %vm1983, %v2431, %v3273
      %v3275 = vsel %vm1985, %v2432, %v3274
      %v3276 = vsel %vm1987, %v2433, %v3275
      %v3277 = vsel %vm1989, %v2434, %v3276
      %v3278 = vsel %vm1991, %v2435, %v3277
      %v3279 = vsel %vm1993, %v3095, %v3278
      %v3280 = vsel %vm1981, %v2438, %v2437
      %v3281 = vsel %vm1983, %v2439, %v3280
      %v3282 = vsel %vm1985, %v2440, %v3281
      %v3283 = vsel %vm1987, %v2441, %v3282
      %v3284 = vsel %vm1989, %v2442, %v3283
      %v3285 = vsel %vm1991, %v2443, %v3284
      %v3286 = vsel %vm1993, %v2444, %v3285
      %v3287 = vsel %vm1981, %v2446, %v2445
      %v3288 = vsel %vm1983, %v2447, %v3287
      %v3289 = vsel %vm1985, %v2448, %v3288
      %v3290 = vsel %vm1987, %v2449, %v3289
      %v3291 = vsel %vm1989, %v2450, %v3290
      %v3292 = vsel %vm1991, %v2451, %v3291
      %v3293 = vsel %vm1993, %v3096, %v3292
      %v3294 = vsel %vm1981, %v2454, %v2453
      %v3295 = vsel %vm1983, %v2455, %v3294
      %v3296 = vsel %vm1985, %v2456, %v3295
      %v3297 = vsel %vm1987, %v2457, %v3296
      %v3298 = vsel %vm1989, %v2458, %v3297
      %v3299 = vsel %vm1991, %v2459, %v3298
      %v3300 = vsel %vm1993, %v2460, %v3299
      %v3301 = vsel %vm1981, %v2462, %v2461
      %v3302 = vsel %vm1983, %v2463, %v3301
      %v3303 = vsel %vm1985, %v2464, %v3302
      %v3304 = vsel %vm1987, %v2465, %v3303
      %v3305 = vsel %vm1989, %v2466, %v3304
      %v3306 = vsel %vm1991, %v2467, %v3305
      %v3307 = vsel %vm1993, %v3097, %v3306
      %3308 = vrot.lane.b32.xlu0 %v3104, 9
      %v3309 = vpop.permute.xlu0 %3308
      %3310 = vrot.lane.b32.xlu0 %v3111, 9
      %v3311 = vpop.permute.xlu0 %3310
      %3312 = vrot.lane.b32.xlu0 %v3118, 9
      %v3313 = vpop.permute.xlu0 %3312
      %3314 = vrot.lane.b32.xlu0 %v3125, 9
      %v3315 = vpop.permute.xlu0 %3314
      %3316 = vrot.lane.b32.xlu0 %v3132, 9
      %v3317 = vpop.permute.xlu0 %3316
      %3318 = vrot.lane.b32.xlu0 %v3139, 9
      %v3319 = vpop.permute.xlu0 %3318
      %3320 = vrot.lane.b32.xlu0 %v3146, 9
      %v3321 = vpop.permute.xlu0 %3320
      %3322 = vrot.lane.b32.xlu0 %v3153, 9
      %v3323 = vpop.permute.xlu0 %3322
      %3324 = vrot.lane.b32.xlu0 %v3160, 9
      %v3325 = vpop.permute.xlu0 %3324
      %3326 = vrot.lane.b32.xlu0 %v3167, 9
      %v3327 = vpop.permute.xlu0 %3326
      %3328 = vrot.lane.b32.xlu0 %v3174, 9
      %v3329 = vpop.permute.xlu0 %3328
      %3330 = vrot.lane.b32.xlu0 %v3181, 9
      %v3331 = vpop.permute.xlu0 %3330
      %3332 = vrot.lane.b32.xlu0 %v3188, 9
      %v3333 = vpop.permute.xlu0 %3332
      %3334 = vrot.lane.b32.xlu0 %v3195, 9
      %v3335 = vpop.permute.xlu0 %3334
      %3336 = vrot.lane.b32.xlu0 %v3202, 9
      %v3337 = vpop.permute.xlu0 %3336
      %3338 = vrot.lane.b32.xlu0 %v3209, 9
      %v3339 = vpop.permute.xlu0 %3338
      %3340 = vrot.lane.b32.xlu0 %v3216, 9
      %v3341 = vpop.permute.xlu0 %3340
      %3342 = vrot.lane.b32.xlu0 %v3223, 9
      %v3343 = vpop.permute.xlu0 %3342
      %3344 = vrot.lane.b32.xlu0 %v3230, 9
      %v3345 = vpop.permute.xlu0 %3344
      %3346 = vrot.lane.b32.xlu0 %v3237, 9
      %v3347 = vpop.permute.xlu0 %3346
      %3348 = vrot.lane.b32.xlu0 %v3244, 9
      %v3349 = vpop.permute.xlu0 %3348
      %3350 = vrot.lane.b32.xlu0 %v3251, 9
      %v3351 = vpop.permute.xlu0 %3350
      %3352 = vrot.lane.b32.xlu0 %v3258, 9
      %v3353 = vpop.permute.xlu0 %3352
      %3354 = vrot.lane.b32.xlu0 %v3265, 9
      %v3355 = vpop.permute.xlu0 %3354
      %3356 = vrot.lane.b32.xlu0 %v3272, 9
      %v3357 = vpop.permute.xlu0 %3356
      %3358 = vrot.lane.b32.xlu0 %v3279, 9
      %v3359 = vpop.permute.xlu0 %3358
      %3360 = vrot.lane.b32.xlu0 %v3286, 9
      %v3361 = vpop.permute.xlu0 %3360
      %3362 = vrot.lane.b32.xlu0 %v3293, 9
      %v3363 = vpop.permute.xlu0 %3362
      %3364 = vrot.lane.b32.xlu0 %v3300, 9
      %v3365 = vpop.permute.xlu0 %3364
      %3366 = vrot.lane.b32.xlu0 %v3307, 9
      %v3367 = vpop.permute.xlu0 %3366
      %v3398 = vperm.slane %v1230, 0
      %v3399 = vperm.slane %v1535, 0
      %v3400 = vperm.slane %v1536, 0
      %v3401 = vperm.slane %v1537, 0
      %v3402 = vperm.slane %v886, 0
      %v3403 = vperm.slane %v1538, 0
      %v3404 = vperm.slane %v1539, 0
      %v3405 = vperm.slane %v1540, 0
      %v3406 = vperm.slane %v888, 0
      %v3407 = vperm.slane %v1541, 0
      %v3408 = vperm.slane %v1542, 0
      %v3409 = vperm.slane %v1543, 0
      %v3410 = vperm.slane %v890, 0
      %v3411 = vperm.slane %v1544, 0
      %v3412 = vperm.slane %v1545, 0
      %v3413 = vperm.slane %v1546, 0
      %v3414 = vperm.slane %v1231, 0
      %v3415 = vperm.slane %v1547, 0
      %v3416 = vperm.slane %v1548, 0
      %v3417 = vperm.slane %v1549, 0
      %v3418 = vperm.slane %v893, 0
      %v3419 = vperm.slane %v1550, 0
      %v3420 = vperm.slane %v1551, 0
      %v3421 = vperm.slane %v1552, 0
      %v3422 = vperm.slane %v895, 0
      %v3423 = vperm.slane %v1553, 0
      %v3424 = vperm.slane %v1554, 0
      %v3425 = vperm.slane %v1555, 0
      %v3426 = vperm.slane %v897, 0
      %v3427 = vperm.slane %v1556, 0
      %v3428 = vperm.slane %v1557, 0
      %v3429 = vperm.slane %v1558, 0
      %v3430 = vperm.slane %v1233, 0
      %v3431 = vperm.slane %v1559, 0
      %v3432 = vperm.slane %v1560, 0
      %v3433 = vperm.slane %v1561, 0
      %v3434 = vperm.slane %v907, 0
      %v3435 = vperm.slane %v1562, 0
      %v3436 = vperm.slane %v1563, 0
      %v3437 = vperm.slane %v1564, 0
      %v3438 = vperm.slane %v909, 0
      %v3439 = vperm.slane %v1565, 0
      %v3440 = vperm.slane %v1566, 0
      %v3441 = vperm.slane %v1567, 0
      %v3442 = vperm.slane %v911, 0
      %v3443 = vperm.slane %v1568, 0
      %v3444 = vperm.slane %v1569, 0
      %v3445 = vperm.slane %v1570, 0
      %v3446 = vperm.slane %v1235, 0
      %v3447 = vperm.slane %v1571, 0
      %v3448 = vperm.slane %v1572, 0
      %v3449 = vperm.slane %v1573, 0
      %v3450 = vperm.slane %v921, 0
      %v3451 = vperm.slane %v1574, 0
      %v3452 = vperm.slane %v1575, 0
      %v3453 = vperm.slane %v1576, 0
      %v3454 = vperm.slane %v923, 0
      %v3455 = vperm.slane %v1577, 0
      %v3456 = vperm.slane %v1578, 0
      %v3457 = vperm.slane %v1579, 0
      %v3458 = vperm.slane %v925, 0
      %v3459 = vperm.slane %v1580, 0
      %v3460 = vperm.slane %v1581, 0
      %v3461 = vperm.slane %v1582, 0
      %v3462 = vperm.slane %v1237, 0
      %v3463 = vperm.slane %v1583, 0
      %v3464 = vperm.slane %v1584, 0
      %v3465 = vperm.slane %v1585, 0
      %v3466 = vperm.slane %v935, 0
      %v3467 = vperm.slane %v1586, 0
      %v3468 = vperm.slane %v1587, 0
      %v3469 = vperm.slane %v1588, 0
      %v3470 = vperm.slane %v937, 0
      %v3471 = vperm.slane %v1589, 0
      %v3472 = vperm.slane %v1590, 0
      %v3473 = vperm.slane %v1591, 0
      %v3474 = vperm.slane %v939, 0
      %v3475 = vperm.slane %v1592, 0
      %v3476 = vperm.slane %v1593, 0
      %v3477 = vperm.slane %v1594, 0
      %v3478 = vperm.slane %v1239, 0
      %v3479 = vperm.slane %v1595, 0
      %v3480 = vperm.slane %v1596, 0
      %v3481 = vperm.slane %v1597, 0
      %v3482 = vperm.slane %v949, 0
      %v3483 = vperm.slane %v1598, 0
      %v3484 = vperm.slane %v1599, 0
      %v3485 = vperm.slane %v1600, 0
      %v3486 = vperm.slane %v951, 0
      %v3487 = vperm.slane %v1601, 0
      %v3488 = vperm.slane %v1602, 0
      %v3489 = vperm.slane %v1603, 0
      %v3490 = vperm.slane %v953, 0
      %v3491 = vperm.slane %v1604, 0
      %v3492 = vperm.slane %v1605, 0
      %v3493 = vperm.slane %v1606, 0
      %v3494 = vperm.slane %v1241, 0
      %v3495 = vperm.slane %v1607, 0
      %v3496 = vperm.slane %v1608, 0
      %v3497 = vperm.slane %v1609, 0
      %v3498 = vperm.slane %v963, 0
      %v3499 = vperm.slane %v1610, 0
      %v3500 = vperm.slane %v1611, 0
      %v3501 = vperm.slane %v1612, 0
      %v3502 = vperm.slane %v965, 0
      %v3503 = vperm.slane %v1613, 0
      %v3504 = vperm.slane %v1614, 0
      %v3505 = vperm.slane %v1615, 0
      %v3506 = vperm.slane %v967, 0
      %v3507 = vperm.slane %v1616, 0
      %v3508 = vperm.slane %v1617, 0
      %v3509 = vperm.slane %v1618, 0
      %v3510 = vperm.slane %v1243, 0
      %v3511 = vperm.slane %v1619, 0
      %v3512 = vperm.slane %v1620, 0
      %v3513 = vperm.slane %v1621, 0
      %v3514 = vperm.slane %v977, 0
      %v3515 = vperm.slane %v1622, 0
      %v3516 = vperm.slane %v1623, 0
      %v3517 = vperm.slane %v1624, 0
      %v3518 = vperm.slane %v979, 0
      %v3519 = vperm.slane %v1625, 0
      %v3520 = vperm.slane %v1626, 0
      %v3521 = vperm.slane %v1627, 0
      %v3522 = vperm.slane %v981, 0
      %v3523 = vperm.slane %v1628, 0
      %v3524 = vperm.slane %v1629, 0
      %v3525 = vperm.slane %v1630, 0
      %v3526 = vperm.slane %v1245, 0
      %v3527 = vperm.slane %v1631, 0
      %v3528 = vperm.slane %v1632, 0
      %v3529 = vperm.slane %v1633, 0
      %v3530 = vperm.slane %v991, 0
      %v3531 = vperm.slane %v1634, 0
      %v3532 = vperm.slane %v1635, 0
      %v3533 = vperm.slane %v1636, 0
      %v3534 = vperm.slane %v993, 0
      %v3535 = vperm.slane %v1637, 0
      %v3536 = vperm.slane %v1638, 0
      %v3537 = vperm.slane %v1639, 0
      %v3538 = vperm.slane %v995, 0
      %v3539 = vperm.slane %v1640, 0
      %v3540 = vperm.slane %v1641, 0
      %v3541 = vperm.slane %v1642, 0
      %v3542 = vperm.slane %v1247, 0
      %v3543 = vperm.slane %v1643, 0
      %v3544 = vperm.slane %v1644, 0
      %v3545 = vperm.slane %v1645, 0
      %v3546 = vperm.slane %v1005, 0
      %v3547 = vperm.slane %v1646, 0
      %v3548 = vperm.slane %v1647, 0
      %v3549 = vperm.slane %v1648, 0
      %v3550 = vperm.slane %v1007, 0
      %v3551 = vperm.slane %v1649, 0
      %v3552 = vperm.slane %v1650, 0
      %v3553 = vperm.slane %v1651, 0
      %v3554 = vperm.slane %v1009, 0
      %v3555 = vperm.slane %v1652, 0
      %v3556 = vperm.slane %v1653, 0
      %v3557 = vperm.slane %v1654, 0
      %v3558 = vperm.slane %v1249, 0
      %v3559 = vperm.slane %v1655, 0
      %v3560 = vperm.slane %v1656, 0
      %v3561 = vperm.slane %v1657, 0
      %v3562 = vperm.slane %v1019, 0
      %v3563 = vperm.slane %v1658, 0
      %v3564 = vperm.slane %v1659, 0
      %v3565 = vperm.slane %v1660, 0
      %v3566 = vperm.slane %v1021, 0
      %v3567 = vperm.slane %v1661, 0
      %v3568 = vperm.slane %v1662, 0
      %v3569 = vperm.slane %v1663, 0
      %v3570 = vperm.slane %v1023, 0
      %v3571 = vperm.slane %v1664, 0
      %v3572 = vperm.slane %v1665, 0
      %v3573 = vperm.slane %v1666, 0
      %v3574 = vperm.slane %v1251, 0
      %v3575 = vperm.slane %v1667, 0
      %v3576 = vperm.slane %v1668, 0
      %v3577 = vperm.slane %v1669, 0
      %v3578 = vperm.slane %v1033, 0
      %v3579 = vperm.slane %v1670, 0
      %v3580 = vperm.slane %v1671, 0
      %v3581 = vperm.slane %v1672, 0
      %v3582 = vperm.slane %v1035, 0
      %v3583 = vperm.slane %v1673, 0
      %v3584 = vperm.slane %v1674, 0
      %v3585 = vperm.slane %v1675, 0
      %v3586 = vperm.slane %v1037, 0
      %v3587 = vperm.slane %v1676, 0
      %v3588 = vperm.slane %v1677, 0
      %v3589 = vperm.slane %v1678, 0
      %v3590 = vperm.slane %v1253, 0
      %v3591 = vperm.slane %v1679, 0
      %v3592 = vperm.slane %v1680, 0
      %v3593 = vperm.slane %v1681, 0
      %v3594 = vperm.slane %v1047, 0
      %v3595 = vperm.slane %v1682, 0
      %v3596 = vperm.slane %v1683, 0
      %v3597 = vperm.slane %v1684, 0
      %v3598 = vperm.slane %v1049, 0
      %v3599 = vperm.slane %v1685, 0
      %v3600 = vperm.slane %v1686, 0
      %v3601 = vperm.slane %v1687, 0
      %v3602 = vperm.slane %v1051, 0
      %v3603 = vperm.slane %v1688, 0
      %v3604 = vperm.slane %v1689, 0
      %v3605 = vperm.slane %v1690, 0
      %v3606 = vperm.slane %v1255, 0
      %v3607 = vperm.slane %v1691, 0
      %v3608 = vperm.slane %v1692, 0
      %v3609 = vperm.slane %v1693, 0
      %v3610 = vperm.slane %v1061, 0
      %v3611 = vperm.slane %v1694, 0
      %v3612 = vperm.slane %v1695, 0
      %v3613 = vperm.slane %v1696, 0
      %v3614 = vperm.slane %v1063, 0
      %v3615 = vperm.slane %v1697, 0
      %v3616 = vperm.slane %v1698, 0
      %v3617 = vperm.slane %v1699, 0
      %v3618 = vperm.slane %v1065, 0
      %v3619 = vperm.slane %v1700, 0
      %v3620 = vperm.slane %v1701, 0
      %v3621 = vperm.slane %v1702, 0
      %v3622 = vperm.slane %v1257, 0
      %v3623 = vperm.slane %v1703, 0
      %v3624 = vperm.slane %v1704, 0
      %v3625 = vperm.slane %v1705, 0
      %v3626 = vperm.slane %v1075, 0
      %v3627 = vperm.slane %v1706, 0
      %v3628 = vperm.slane %v1707, 0
      %v3629 = vperm.slane %v1708, 0
      %v3630 = vperm.slane %v1077, 0
      %v3631 = vperm.slane %v1709, 0
      %v3632 = vperm.slane %v1710, 0
      %v3633 = vperm.slane %v1711, 0
      %v3634 = vperm.slane %v1079, 0
      %v3635 = vperm.slane %v1712, 0
      %v3636 = vperm.slane %v1713, 0
      %v3637 = vperm.slane %v1714, 0
      %v3638 = vperm.slane %v1259, 0
      %v3639 = vperm.slane %v1715, 0
      %v3640 = vperm.slane %v1716, 0
      %v3641 = vperm.slane %v1717, 0
      %v3642 = vperm.slane %v1089, 0
      %v3643 = vperm.slane %v1718, 0
      %v3644 = vperm.slane %v1719, 0
      %v3645 = vperm.slane %v1720, 0
      %v3646 = vperm.slane %v1091, 0
      %v3647 = vperm.slane %v1721, 0
      %v3648 = vperm.slane %v1722, 0
      %v3649 = vperm.slane %v1723, 0
      %v3650 = vperm.slane %v1093, 0
      %v3651 = vperm.slane %v1724, 0
      %v3652 = vperm.slane %v1725, 0
      %v3653 = vperm.slane %v1726, 0
      %v3654 = vsel %vm1981, %v3399, %v3398
      %v3655 = vsel %vm1983, %v3400, %v3654
      %v3656 = vsel %vm1985, %v3401, %v3655
      %v3657 = vsel %vm1987, %v3402, %v3656
      %v3658 = vsel %vm1989, %v3403, %v3657
      %v3659 = vsel %vm1991, %v3404, %v3658
      %v3660 = vsel %vm1993, %v3405, %v3659
      %v3661 = vsel %vm1981, %v3407, %v3406
      %v3662 = vsel %vm1983, %v3408, %v3661
      %v3663 = vsel %vm1985, %v3409, %v3662
      %v3664 = vsel %vm1987, %v3410, %v3663
      %v3665 = vsel %vm1989, %v3411, %v3664
      %v3666 = vsel %vm1991, %v3412, %v3665
      %v3667 = vsel %vm1993, %v3413, %v3666
      %v3668 = vsel %vm1981, %v3415, %v3414
      %v3669 = vsel %vm1983, %v3416, %v3668
      %v3670 = vsel %vm1985, %v3417, %v3669
      %v3671 = vsel %vm1987, %v3418, %v3670
      %v3672 = vsel %vm1989, %v3419, %v3671
      %v3673 = vsel %vm1991, %v3420, %v3672
      %v3674 = vsel %vm1993, %v3421, %v3673
      %v3675 = vsel %vm1981, %v3423, %v3422
      %v3676 = vsel %vm1983, %v3424, %v3675
      %v3677 = vsel %vm1985, %v3425, %v3676
      %v3678 = vsel %vm1987, %v3426, %v3677
      %v3679 = vsel %vm1989, %v3427, %v3678
      %v3680 = vsel %vm1991, %v3428, %v3679
      %v3681 = vsel %vm1993, %v3429, %v3680
      %v3682 = vsel %vm1981, %v3431, %v3430
      %v3683 = vsel %vm1983, %v3432, %v3682
      %v3684 = vsel %vm1985, %v3433, %v3683
      %v3685 = vsel %vm1987, %v3434, %v3684
      %v3686 = vsel %vm1989, %v3435, %v3685
      %v3687 = vsel %vm1991, %v3436, %v3686
      %v3688 = vsel %vm1993, %v3437, %v3687
      %v3689 = vsel %vm1981, %v3439, %v3438
      %v3690 = vsel %vm1983, %v3440, %v3689
      %v3691 = vsel %vm1985, %v3441, %v3690
      %v3692 = vsel %vm1987, %v3442, %v3691
      %v3693 = vsel %vm1989, %v3443, %v3692
      %v3694 = vsel %vm1991, %v3444, %v3693
      %v3695 = vsel %vm1993, %v3445, %v3694
      %v3696 = vsel %vm1981, %v3447, %v3446
      %v3697 = vsel %vm1983, %v3448, %v3696
      %v3698 = vsel %vm1985, %v3449, %v3697
      %v3699 = vsel %vm1987, %v3450, %v3698
      %v3700 = vsel %vm1989, %v3451, %v3699
      %v3701 = vsel %vm1991, %v3452, %v3700
      %v3702 = vsel %vm1993, %v3453, %v3701
      %v3703 = vsel %vm1981, %v3455, %v3454
      %v3704 = vsel %vm1983, %v3456, %v3703
      %v3705 = vsel %vm1985, %v3457, %v3704
      %v3706 = vsel %vm1987, %v3458, %v3705
      %v3707 = vsel %vm1989, %v3459, %v3706
      %v3708 = vsel %vm1991, %v3460, %v3707
      %v3709 = vsel %vm1993, %v3461, %v3708
      %v3710 = vsel %vm1981, %v3463, %v3462
      %v3711 = vsel %vm1983, %v3464, %v3710
      %v3712 = vsel %vm1985, %v3465, %v3711
      %v3713 = vsel %vm1987, %v3466, %v3712
      %v3714 = vsel %vm1989, %v3467, %v3713
      %v3715 = vsel %vm1991, %v3468, %v3714
      %v3716 = vsel %vm1993, %v3469, %v3715
      %v3717 = vsel %vm1981, %v3471, %v3470
      %v3718 = vsel %vm1983, %v3472, %v3717
      %v3719 = vsel %vm1985, %v3473, %v3718
      %v3720 = vsel %vm1987, %v3474, %v3719
      %v3721 = vsel %vm1989, %v3475, %v3720
      %v3722 = vsel %vm1991, %v3476, %v3721
      %v3723 = vsel %vm1993, %v3477, %v3722
      %v3724 = vsel %vm1981, %v3479, %v3478
      %v3725 = vsel %vm1983, %v3480, %v3724
      %v3726 = vsel %vm1985, %v3481, %v3725
      %v3727 = vsel %vm1987, %v3482, %v3726
      %v3728 = vsel %vm1989, %v3483, %v3727
      %v3729 = vsel %vm1991, %v3484, %v3728
      %v3730 = vsel %vm1993, %v3485, %v3729
      %v3731 = vsel %vm1981, %v3487, %v3486
      %v3732 = vsel %vm1983, %v3488, %v3731
      %v3733 = vsel %vm1985, %v3489, %v3732
      %v3734 = vsel %vm1987, %v3490, %v3733
      %v3735 = vsel %vm1989, %v3491, %v3734
      %v3736 = vsel %vm1991, %v3492, %v3735
      %v3737 = vsel %vm1993, %v3493, %v3736
      %v3738 = vsel %vm1981, %v3495, %v3494
      %v3739 = vsel %vm1983, %v3496, %v3738
      %v3740 = vsel %vm1985, %v3497, %v3739
      %v3741 = vsel %vm1987, %v3498, %v3740
      %v3742 = vsel %vm1989, %v3499, %v3741
      %v3743 = vsel %vm1991, %v3500, %v3742
      %v3744 = vsel %vm1993, %v3501, %v3743
      %v3745 = vsel %vm1981, %v3503, %v3502
      %v3746 = vsel %vm1983, %v3504, %v3745
      %v3747 = vsel %vm1985, %v3505, %v3746
      %v3748 = vsel %vm1987, %v3506, %v3747
      %v3749 = vsel %vm1989, %v3507, %v3748
      %v3750 = vsel %vm1991, %v3508, %v3749
      %v3751 = vsel %vm1993, %v3509, %v3750
      %v3752 = vsel %vm1981, %v3511, %v3510
      %v3753 = vsel %vm1983, %v3512, %v3752
      %v3754 = vsel %vm1985, %v3513, %v3753
      %v3755 = vsel %vm1987, %v3514, %v3754
      %v3756 = vsel %vm1989, %v3515, %v3755
      %v3757 = vsel %vm1991, %v3516, %v3756
      %v3758 = vsel %vm1993, %v3517, %v3757
      %v3759 = vsel %vm1981, %v3519, %v3518
      %v3760 = vsel %vm1983, %v3520, %v3759
      %v3761 = vsel %vm1985, %v3521, %v3760
      %v3762 = vsel %vm1987, %v3522, %v3761
      %v3763 = vsel %vm1989, %v3523, %v3762
      %v3764 = vsel %vm1991, %v3524, %v3763
      %v3765 = vsel %vm1993, %v3525, %v3764
      %v3766 = vsel %vm1981, %v3527, %v3526
      %v3767 = vsel %vm1983, %v3528, %v3766
      %v3768 = vsel %vm1985, %v3529, %v3767
      %v3769 = vsel %vm1987, %v3530, %v3768
      %v3770 = vsel %vm1989, %v3531, %v3769
      %v3771 = vsel %vm1991, %v3532, %v3770
      %v3772 = vsel %vm1993, %v3533, %v3771
      %v3773 = vsel %vm1981, %v3535, %v3534
      %v3774 = vsel %vm1983, %v3536, %v3773
      %v3775 = vsel %vm1985, %v3537, %v3774
      %v3776 = vsel %vm1987, %v3538, %v3775
      %v3777 = vsel %vm1989, %v3539, %v3776
      %v3778 = vsel %vm1991, %v3540, %v3777
      %v3779 = vsel %vm1993, %v3541, %v3778
      %v3780 = vsel %vm1981, %v3543, %v3542
      %v3781 = vsel %vm1983, %v3544, %v3780
      %v3782 = vsel %vm1985, %v3545, %v3781
      %v3783 = vsel %vm1987, %v3546, %v3782
      %v3784 = vsel %vm1989, %v3547, %v3783
      %v3785 = vsel %vm1991, %v3548, %v3784
      %v3786 = vsel %vm1993, %v3549, %v3785
      %v3787 = vsel %vm1981, %v3551, %v3550
      %v3788 = vsel %vm1983, %v3552, %v3787
      %v3789 = vsel %vm1985, %v3553, %v3788
      %v3790 = vsel %vm1987, %v3554, %v3789
      %v3791 = vsel %vm1989, %v3555, %v3790
      %v3792 = vsel %vm1991, %v3556, %v3791
      %v3793 = vsel %vm1993, %v3557, %v3792
      %v3794 = vsel %vm1981, %v3559, %v3558
      %v3795 = vsel %vm1983, %v3560, %v3794
      %v3796 = vsel %vm1985, %v3561, %v3795
      %v3797 = vsel %vm1987, %v3562, %v3796
      %v3798 = vsel %vm1989, %v3563, %v3797
      %v3799 = vsel %vm1991, %v3564, %v3798
      %v3800 = vsel %vm1993, %v3565, %v3799
      %v3801 = vsel %vm1981, %v3567, %v3566
      %v3802 = vsel %vm1983, %v3568, %v3801
      %v3803 = vsel %vm1985, %v3569, %v3802
      %v3804 = vsel %vm1987, %v3570, %v3803
      %v3805 = vsel %vm1989, %v3571, %v3804
      %v3806 = vsel %vm1991, %v3572, %v3805
      %v3807 = vsel %vm1993, %v3573, %v3806
      %v3808 = vsel %vm1981, %v3575, %v3574
      %v3809 = vsel %vm1983, %v3576, %v3808
      %v3810 = vsel %vm1985, %v3577, %v3809
      %v3811 = vsel %vm1987, %v3578, %v3810
      %v3812 = vsel %vm1989, %v3579, %v3811
      %v3813 = vsel %vm1991, %v3580, %v3812
      %v3814 = vsel %vm1993, %v3581, %v3813
      %v3815 = vsel %vm1981, %v3583, %v3582
      %v3816 = vsel %vm1983, %v3584, %v3815
      %v3817 = vsel %vm1985, %v3585, %v3816
      %v3818 = vsel %vm1987, %v3586, %v3817
      %v3819 = vsel %vm1989, %v3587, %v3818
      %v3820 = vsel %vm1991, %v3588, %v3819
      %v3821 = vsel %vm1993, %v3589, %v3820
      %v3822 = vsel %vm1981, %v3591, %v3590
      %v3823 = vsel %vm1983, %v3592, %v3822
      %v3824 = vsel %vm1985, %v3593, %v3823
      %v3825 = vsel %vm1987, %v3594, %v3824
      %v3826 = vsel %vm1989, %v3595, %v3825
      %v3827 = vsel %vm1991, %v3596, %v3826
      %v3828 = vsel %vm1993, %v3597, %v3827
      %v3829 = vsel %vm1981, %v3599, %v3598
      %v3830 = vsel %vm1983, %v3600, %v3829
      %v3831 = vsel %vm1985, %v3601, %v3830
      %v3832 = vsel %vm1987, %v3602, %v3831
      %v3833 = vsel %vm1989, %v3603, %v3832
      %v3834 = vsel %vm1991, %v3604, %v3833
      %v3835 = vsel %vm1993, %v3605, %v3834
      %v3836 = vsel %vm1981, %v3607, %v3606
      %v3837 = vsel %vm1983, %v3608, %v3836
      %v3838 = vsel %vm1985, %v3609, %v3837
      %v3839 = vsel %vm1987, %v3610, %v3838
      %v3840 = vsel %vm1989, %v3611, %v3839
      %v3841 = vsel %vm1991, %v3612, %v3840
      %v3842 = vsel %vm1993, %v3613, %v3841
      %v3843 = vsel %vm1981, %v3615, %v3614
      %v3844 = vsel %vm1983, %v3616, %v3843
      %v3845 = vsel %vm1985, %v3617, %v3844
      %v3846 = vsel %vm1987, %v3618, %v3845
      %v3847 = vsel %vm1989, %v3619, %v3846
      %v3848 = vsel %vm1991, %v3620, %v3847
      %v3849 = vsel %vm1993, %v3621, %v3848
      %v3850 = vsel %vm1981, %v3623, %v3622
      %v3851 = vsel %vm1983, %v3624, %v3850
      %v3852 = vsel %vm1985, %v3625, %v3851
      %v3853 = vsel %vm1987, %v3626, %v3852
      %v3854 = vsel %vm1989, %v3627, %v3853
      %v3855 = vsel %vm1991, %v3628, %v3854
      %v3856 = vsel %vm1993, %v3629, %v3855
      %v3857 = vsel %vm1981, %v3631, %v3630
      %v3858 = vsel %vm1983, %v3632, %v3857
      %v3859 = vsel %vm1985, %v3633, %v3858
      %v3860 = vsel %vm1987, %v3634, %v3859
      %v3861 = vsel %vm1989, %v3635, %v3860
      %v3862 = vsel %vm1991, %v3636, %v3861
      %v3863 = vsel %vm1993, %v3637, %v3862
      %v3864 = vsel %vm1981, %v3639, %v3638
      %v3865 = vsel %vm1983, %v3640, %v3864
      %v3866 = vsel %vm1985, %v3641, %v3865
      %v3867 = vsel %vm1987, %v3642, %v3866
      %v3868 = vsel %vm1989, %v3643, %v3867
      %v3869 = vsel %vm1991, %v3644, %v3868
      %v3870 = vsel %vm1993, %v3645, %v3869
      %v3871 = vsel %vm1981, %v3647, %v3646
      %v3872 = vsel %vm1983, %v3648, %v3871
      %v3873 = vsel %vm1985, %v3649, %v3872
      %v3874 = vsel %vm1987, %v3650, %v3873
      %v3875 = vsel %vm1989, %v3651, %v3874
      %v3876 = vsel %vm1991, %v3652, %v3875
      %v3877 = vsel %vm1993, %v3653, %v3876
      %3878 = vrot.lane.b32.xlu0 %v3660, 12
      %v3879 = vpop.permute.xlu0 %3878
      %3880 = vrot.lane.b32.xlu0 %v3667, 12
      %v3881 = vpop.permute.xlu0 %3880
      %3882 = vrot.lane.b32.xlu0 %v3674, 12
      %v3883 = vpop.permute.xlu0 %3882
      %3884 = vrot.lane.b32.xlu0 %v3681, 12
      %v3885 = vpop.permute.xlu0 %3884
      %3886 = vrot.lane.b32.xlu0 %v3688, 12
      %v3887 = vpop.permute.xlu0 %3886
      %3888 = vrot.lane.b32.xlu0 %v3695, 12
      %v3889 = vpop.permute.xlu0 %3888
      %3890 = vrot.lane.b32.xlu0 %v3702, 12
      %v3891 = vpop.permute.xlu0 %3890
      %3892 = vrot.lane.b32.xlu0 %v3709, 12
      %v3893 = vpop.permute.xlu0 %3892
      %3894 = vrot.lane.b32.xlu0 %v3716, 12
      %v3895 = vpop.permute.xlu0 %3894
      %3896 = vrot.lane.b32.xlu0 %v3723, 12
      %v3897 = vpop.permute.xlu0 %3896
      %3898 = vrot.lane.b32.xlu0 %v3730, 12
      %v3899 = vpop.permute.xlu0 %3898
      %3900 = vrot.lane.b32.xlu0 %v3737, 12
      %v3901 = vpop.permute.xlu0 %3900
      %3902 = vrot.lane.b32.xlu0 %v3744, 12
      %v3903 = vpop.permute.xlu0 %3902
      %3904 = vrot.lane.b32.xlu0 %v3751, 12
      %v3905 = vpop.permute.xlu0 %3904
      %3906 = vrot.lane.b32.xlu0 %v3758, 12
      %v3907 = vpop.permute.xlu0 %3906
      %3908 = vrot.lane.b32.xlu0 %v3765, 12
      %v3909 = vpop.permute.xlu0 %3908
      %3910 = vrot.lane.b32.xlu0 %v3772, 12
      %v3911 = vpop.permute.xlu0 %3910
      %3912 = vrot.lane.b32.xlu0 %v3779, 12
      %v3913 = vpop.permute.xlu0 %3912
      %3914 = vrot.lane.b32.xlu0 %v3786, 12
      %v3915 = vpop.permute.xlu0 %3914
      %3916 = vrot.lane.b32.xlu0 %v3793, 12
      %v3917 = vpop.permute.xlu0 %3916
      %3918 = vrot.lane.b32.xlu0 %v3800, 12
      %v3919 = vpop.permute.xlu0 %3918
      %3920 = vrot.lane.b32.xlu0 %v3807, 12
      %v3921 = vpop.permute.xlu0 %3920
      %3922 = vrot.lane.b32.xlu0 %v3814, 12
      %v3923 = vpop.permute.xlu0 %3922
      %3924 = vrot.lane.b32.xlu0 %v3821, 12
      %v3925 = vpop.permute.xlu0 %3924
      %3926 = vrot.lane.b32.xlu0 %v3828, 12
      %v3927 = vpop.permute.xlu0 %3926
      %3928 = vrot.lane.b32.xlu0 %v3835, 12
      %v3929 = vpop.permute.xlu0 %3928
      %3930 = vrot.lane.b32.xlu0 %v3842, 12
      %v3931 = vpop.permute.xlu0 %3930
      %3932 = vrot.lane.b32.xlu0 %v3849, 12
      %v3933 = vpop.permute.xlu0 %3932
      %3934 = vrot.lane.b32.xlu0 %v3856, 12
      %v3935 = vpop.permute.xlu0 %3934
      %3936 = vrot.lane.b32.xlu0 %v3863, 12
      %v3937 = vpop.permute.xlu0 %3936
      %3938 = vrot.lane.b32.xlu0 %v3870, 12
      %v3939 = vpop.permute.xlu0 %3938
      %3940 = vrot.lane.b32.xlu0 %v3877, 12
      %v3941 = vpop.permute.xlu0 %3940
      %v3974 = vperm.slane %v1230, 1
      %v3975 = vperm.slane %v1535, 1
      %v3976 = vperm.slane %v1536, 1
      %v3977 = vperm.slane %v1537, 1
      %v3978 = vperm.slane %v886, 1
      %v3979 = vperm.slane %v1538, 1
      %v3980 = vperm.slane %v1539, 1
      %v3981 = vperm.slane %v1540, 1
      %v3982 = vperm.slane %v888, 1
      %v3983 = vperm.slane %v1541, 1
      %v3984 = vperm.slane %v1542, 1
      %v3985 = vperm.slane %v1543, 1
      %v3986 = vperm.slane %v890, 1
      %v3987 = vperm.slane %v1544, 1
      %v3988 = vperm.slane %v1545, 1
      %v3989 = vperm.slane %v1546, 1
      %v3990 = vperm.slane %v1231, 1
      %v3991 = vperm.slane %v1547, 1
      %v3992 = vperm.slane %v1548, 1
      %v3993 = vperm.slane %v1549, 1
      %v3994 = vperm.slane %v893, 1
      %v3995 = vperm.slane %v1550, 1
      %v3996 = vperm.slane %v1551, 1
      %v3997 = vperm.slane %v1552, 1
      %v3998 = vperm.slane %v895, 1
      %v3999 = vperm.slane %v1553, 1
      %v4000 = vperm.slane %v1554, 1
      %v4001 = vperm.slane %v1555, 1
      %v4002 = vperm.slane %v897, 1
      %v4003 = vperm.slane %v1556, 1
      %v4004 = vperm.slane %v1557, 1
      %v4005 = vperm.slane %v1558, 1
      %v4006 = vperm.slane %v1233, 1
      %v4007 = vperm.slane %v1559, 1
      %v4008 = vperm.slane %v1560, 1
      %v4009 = vperm.slane %v1561, 1
      %v4010 = vperm.slane %v907, 1
      %v4011 = vperm.slane %v1562, 1
      %v4012 = vperm.slane %v1563, 1
      %v4013 = vperm.slane %v1564, 1
      %v4014 = vperm.slane %v909, 1
      %v4015 = vperm.slane %v1565, 1
      %v4016 = vperm.slane %v1566, 1
      %v4017 = vperm.slane %v1567, 1
      %v4018 = vperm.slane %v911, 1
      %v4019 = vperm.slane %v1568, 1
      %v4020 = vperm.slane %v1569, 1
      %v4021 = vperm.slane %v1570, 1
      %v4022 = vperm.slane %v1235, 1
      %v4023 = vperm.slane %v1571, 1
      %v4024 = vperm.slane %v1572, 1
      %v4025 = vperm.slane %v1573, 1
      %v4026 = vperm.slane %v921, 1
      %v4027 = vperm.slane %v1574, 1
      %v4028 = vperm.slane %v1575, 1
      %v4029 = vperm.slane %v1576, 1
      %v4030 = vperm.slane %v923, 1
      %v4031 = vperm.slane %v1577, 1
      %v4032 = vperm.slane %v1578, 1
      %v4033 = vperm.slane %v1579, 1
      %v4034 = vperm.slane %v925, 1
      %v4035 = vperm.slane %v1580, 1
      %v4036 = vperm.slane %v1581, 1
      %v4037 = vperm.slane %v1582, 1
      %v4038 = vperm.slane %v1237, 1
      %v4039 = vperm.slane %v1583, 1
      %v4040 = vperm.slane %v1584, 1
      %v4041 = vperm.slane %v1585, 1
      %v4042 = vperm.slane %v935, 1
      %v4043 = vperm.slane %v1586, 1
      %v4044 = vperm.slane %v1587, 1
      %v4045 = vperm.slane %v1588, 1
      %v4046 = vperm.slane %v937, 1
      %v4047 = vperm.slane %v1589, 1
      %v4048 = vperm.slane %v1590, 1
      %v4049 = vperm.slane %v1591, 1
      %v4050 = vperm.slane %v939, 1
      %v4051 = vperm.slane %v1592, 1
      %v4052 = vperm.slane %v1593, 1
      %v4053 = vperm.slane %v1594, 1
      %v4054 = vperm.slane %v1239, 1
      %v4055 = vperm.slane %v1595, 1
      %v4056 = vperm.slane %v1596, 1
      %v4057 = vperm.slane %v1597, 1
      %v4058 = vperm.slane %v949, 1
      %v4059 = vperm.slane %v1598, 1
      %v4060 = vperm.slane %v1599, 1
      %v4061 = vperm.slane %v1600, 1
      %v4062 = vperm.slane %v951, 1
      %v4063 = vperm.slane %v1601, 1
      %v4064 = vperm.slane %v1602, 1
      %v4065 = vperm.slane %v1603, 1
      %v4066 = vperm.slane %v953, 1
      %v4067 = vperm.slane %v1604, 1
      %v4068 = vperm.slane %v1605, 1
      %v4069 = vperm.slane %v1606, 1
      %v4070 = vperm.slane %v1241, 1
      %v4071 = vperm.slane %v1607, 1
      %v4072 = vperm.slane %v1608, 1
      %v4073 = vperm.slane %v1609, 1
      %v4074 = vperm.slane %v963, 1
      %v4075 = vperm.slane %v1610, 1
      %v4076 = vperm.slane %v1611, 1
      %v4077 = vperm.slane %v1612, 1
      %v4078 = vperm.slane %v965, 1
      %v4079 = vperm.slane %v1613, 1
      %v4080 = vperm.slane %v1614, 1
      %v4081 = vperm.slane %v1615, 1
      %v4082 = vperm.slane %v967, 1
      %v4083 = vperm.slane %v1616, 1
      %v4084 = vperm.slane %v1617, 1
      %v4085 = vperm.slane %v1618, 1
      %v4086 = vperm.slane %v1243, 1
      %v4087 = vperm.slane %v1619, 1
      %v4088 = vperm.slane %v1620, 1
      %v4089 = vperm.slane %v1621, 1
      %v4090 = vperm.slane %v977, 1
      %v4091 = vperm.slane %v1622, 1
      %v4092 = vperm.slane %v1623, 1
      %v4093 = vperm.slane %v1624, 1
      %v4094 = vperm.slane %v979, 1
      %v4095 = vperm.slane %v1625, 1
      %v4096 = vperm.slane %v1626, 1
      %v4097 = vperm.slane %v1627, 1
      %v4098 = vperm.slane %v981, 1
      %v4099 = vperm.slane %v1628, 1
      %v4100 = vperm.slane %v1629, 1
      %v4101 = vperm.slane %v1630, 1
      %v4102 = vperm.slane %v1245, 1
      %v4103 = vperm.slane %v1631, 1
      %v4104 = vperm.slane %v1632, 1
      %v4105 = vperm.slane %v1633, 1
      %v4106 = vperm.slane %v991, 1
      %v4107 = vperm.slane %v1634, 1
      %v4108 = vperm.slane %v1635, 1
      %v4109 = vperm.slane %v1636, 1
      %v4110 = vperm.slane %v993, 1
      %v4111 = vperm.slane %v1637, 1
      %v4112 = vperm.slane %v1638, 1
      %v4113 = vperm.slane %v1639, 1
      %v4114 = vperm.slane %v995, 1
      %v4115 = vperm.slane %v1640, 1
      %v4116 = vperm.slane %v1641, 1
      %v4117 = vperm.slane %v1642, 1
      %v4118 = vperm.slane %v1247, 1
      %v4119 = vperm.slane %v1643, 1
      %v4120 = vperm.slane %v1644, 1
      %v4121 = vperm.slane %v1645, 1
      %v4122 = vperm.slane %v1005, 1
      %v4123 = vperm.slane %v1646, 1
      %v4124 = vperm.slane %v1647, 1
      %v4125 = vperm.slane %v1648, 1
      %v4126 = vperm.slane %v1007, 1
      %v4127 = vperm.slane %v1649, 1
      %v4128 = vperm.slane %v1650, 1
      %v4129 = vperm.slane %v1651, 1
      %v4130 = vperm.slane %v1009, 1
      %v4131 = vperm.slane %v1652, 1
      %v4132 = vperm.slane %v1653, 1
      %v4133 = vperm.slane %v1654, 1
      %v4134 = vperm.slane %v1249, 1
      %v4135 = vperm.slane %v1655, 1
      %v4136 = vperm.slane %v1656, 1
      %v4137 = vperm.slane %v1657, 1
      %v4138 = vperm.slane %v1019, 1
      %v4139 = vperm.slane %v1658, 1
      %v4140 = vperm.slane %v1659, 1
      %v4141 = vperm.slane %v1660, 1
      %v4142 = vperm.slane %v1021, 1
      %v4143 = vperm.slane %v1661, 1
      %v4144 = vperm.slane %v1662, 1
      %v4145 = vperm.slane %v1663, 1
      %v4146 = vperm.slane %v1023, 1
      %v4147 = vperm.slane %v1664, 1
      %v4148 = vperm.slane %v1665, 1
      %v4149 = vperm.slane %v1666, 1
      %v4150 = vperm.slane %v1251, 1
      %v4151 = vperm.slane %v1667, 1
      %v4152 = vperm.slane %v1668, 1
      %v4153 = vperm.slane %v1669, 1
      %v4154 = vperm.slane %v1033, 1
      %v4155 = vperm.slane %v1670, 1
      %v4156 = vperm.slane %v1671, 1
      %v4157 = vperm.slane %v1672, 1
      %v4158 = vperm.slane %v1035, 1
      %v4159 = vperm.slane %v1673, 1
      %v4160 = vperm.slane %v1674, 1
      %v4161 = vperm.slane %v1675, 1
      %v4162 = vperm.slane %v1037, 1
      %v4163 = vperm.slane %v1676, 1
      %v4164 = vperm.slane %v1677, 1
      %v4165 = vperm.slane %v1678, 1
      %v4166 = vperm.slane %v1253, 1
      %v4167 = vperm.slane %v1679, 1
      %v4168 = vperm.slane %v1680, 1
      %v4169 = vperm.slane %v1681, 1
      %v4170 = vperm.slane %v1047, 1
      %v4171 = vperm.slane %v1682, 1
      %v4172 = vperm.slane %v1683, 1
      %v4173 = vperm.slane %v1684, 1
      %v4174 = vperm.slane %v1049, 1
      %v4175 = vperm.slane %v1685, 1
      %v4176 = vperm.slane %v1686, 1
      %v4177 = vperm.slane %v1687, 1
      %v4178 = vperm.slane %v1051, 1
      %v4179 = vperm.slane %v1688, 1
      %v4180 = vperm.slane %v1689, 1
      %v4181 = vperm.slane %v1690, 1
      %v4182 = vperm.slane %v1255, 1
      %v4183 = vperm.slane %v1691, 1
      %v4184 = vperm.slane %v1692, 1
      %v4185 = vperm.slane %v1693, 1
      %v4186 = vperm.slane %v1061, 1
      %v4187 = vperm.slane %v1694, 1
      %v4188 = vperm.slane %v1695, 1
      %v4189 = vperm.slane %v1696, 1
      %v4190 = vperm.slane %v1063, 1
      %v4191 = vperm.slane %v1697, 1
      %v4192 = vperm.slane %v1698, 1
      %v4193 = vperm.slane %v1699, 1
      %v4194 = vperm.slane %v1065, 1
      %v4195 = vperm.slane %v1700, 1
      %v4196 = vperm.slane %v1701, 1
      %v4197 = vperm.slane %v1702, 1
      %v4198 = vperm.slane %v1257, 1
      %v4199 = vperm.slane %v1703, 1
      %v4200 = vperm.slane %v1704, 1
      %v4201 = vperm.slane %v1705, 1
      %v4202 = vperm.slane %v1075, 1
      %v4203 = vperm.slane %v1706, 1
      %v4204 = vperm.slane %v1707, 1
      %v4205 = vperm.slane %v1708, 1
      %v4206 = vperm.slane %v1077, 1
      %v4207 = vperm.slane %v1709, 1
      %v4208 = vperm.slane %v1710, 1
      %v4209 = vperm.slane %v1711, 1
      %v4210 = vperm.slane %v1079, 1
      %v4211 = vperm.slane %v1712, 1
      %v4212 = vperm.slane %v1713, 1
      %v4213 = vperm.slane %v1714, 1
      %v4214 = vperm.slane %v1259, 1
      %v4215 = vperm.slane %v1715, 1
      %v4216 = vperm.slane %v1716, 1
      %v4217 = vperm.slane %v1717, 1
      %v4218 = vperm.slane %v1089, 1
      %v4219 = vperm.slane %v1718, 1
      %v4220 = vperm.slane %v1719, 1
      %v4221 = vperm.slane %v1720, 1
      %v4222 = vperm.slane %v1091, 1
      %v4223 = vperm.slane %v1721, 1
      %v4224 = vperm.slane %v1722, 1
      %v4225 = vperm.slane %v1723, 1
      %v4226 = vperm.slane %v1093, 1
      %v4227 = vperm.slane %v1724, 1
      %v4228 = vperm.slane %v1725, 1
      %v4229 = vperm.slane %v1726, 1
      %v4230 = vsel %vm1981, %v3975, %v3974
      %v4231 = vsel %vm1983, %v3976, %v4230
      %v4232 = vsel %vm1985, %v3977, %v4231
      %v4233 = vsel %vm1987, %v3978, %v4232
      %v4234 = vsel %vm1989, %v3979, %v4233
      %v4235 = vsel %vm1991, %v3980, %v4234
      %v4236 = vsel %vm1993, %v3981, %v4235
      %v4237 = vsel %vm1981, %v3983, %v3982
      %v4238 = vsel %vm1983, %v3984, %v4237
      %v4239 = vsel %vm1985, %v3985, %v4238
      %v4240 = vsel %vm1987, %v3986, %v4239
      %v4241 = vsel %vm1989, %v3987, %v4240
      %v4242 = vsel %vm1991, %v3988, %v4241
      %v4243 = vsel %vm1993, %v3989, %v4242
      %v4244 = vsel %vm1981, %v3991, %v3990
      %v4245 = vsel %vm1983, %v3992, %v4244
      %v4246 = vsel %vm1985, %v3993, %v4245
      %v4247 = vsel %vm1987, %v3994, %v4246
      %v4248 = vsel %vm1989, %v3995, %v4247
      %v4249 = vsel %vm1991, %v3996, %v4248
      %v4250 = vsel %vm1993, %v3997, %v4249
      %v4251 = vsel %vm1981, %v3999, %v3998
      %v4252 = vsel %vm1983, %v4000, %v4251
      %v4253 = vsel %vm1985, %v4001, %v4252
      %v4254 = vsel %vm1987, %v4002, %v4253
      %v4255 = vsel %vm1989, %v4003, %v4254
      %v4256 = vsel %vm1991, %v4004, %v4255
      %v4257 = vsel %vm1993, %v4005, %v4256
      %v4258 = vsel %vm1981, %v4007, %v4006
      %v4259 = vsel %vm1983, %v4008, %v4258
      %v4260 = vsel %vm1985, %v4009, %v4259
      %v4261 = vsel %vm1987, %v4010, %v4260
      %v4262 = vsel %vm1989, %v4011, %v4261
      %v4263 = vsel %vm1991, %v4012, %v4262
      %v4264 = vsel %vm1993, %v4013, %v4263
      %v4265 = vsel %vm1981, %v4015, %v4014
      %v4266 = vsel %vm1983, %v4016, %v4265
      %v4267 = vsel %vm1985, %v4017, %v4266
      %v4268 = vsel %vm1987, %v4018, %v4267
      %v4269 = vsel %vm1989, %v4019, %v4268
      %v4270 = vsel %vm1991, %v4020, %v4269
      %v4271 = vsel %vm1993, %v4021, %v4270
      %v4272 = vsel %vm1981, %v4023, %v4022
      %v4273 = vsel %vm1983, %v4024, %v4272
      %v4274 = vsel %vm1985, %v4025, %v4273
      %v4275 = vsel %vm1987, %v4026, %v4274
      %v4276 = vsel %vm1989, %v4027, %v4275
      %v4277 = vsel %vm1991, %v4028, %v4276
      %v4278 = vsel %vm1993, %v4029, %v4277
      %v4279 = vsel %vm1981, %v4031, %v4030
      %v4280 = vsel %vm1983, %v4032, %v4279
      %v4281 = vsel %vm1985, %v4033, %v4280
      %v4282 = vsel %vm1987, %v4034, %v4281
      %v4283 = vsel %vm1989, %v4035, %v4282
      %v4284 = vsel %vm1991, %v4036, %v4283
      %v4285 = vsel %vm1993, %v4037, %v4284
      %v4286 = vsel %vm1981, %v4039, %v4038
      %v4287 = vsel %vm1983, %v4040, %v4286
      %v4288 = vsel %vm1985, %v4041, %v4287
      %v4289 = vsel %vm1987, %v4042, %v4288
      %v4290 = vsel %vm1989, %v4043, %v4289
      %v4291 = vsel %vm1991, %v4044, %v4290
      %v4292 = vsel %vm1993, %v4045, %v4291
      %v4293 = vsel %vm1981, %v4047, %v4046
      %v4294 = vsel %vm1983, %v4048, %v4293
      %v4295 = vsel %vm1985, %v4049, %v4294
      %v4296 = vsel %vm1987, %v4050, %v4295
      %v4297 = vsel %vm1989, %v4051, %v4296
      %v4298 = vsel %vm1991, %v4052, %v4297
      %v4299 = vsel %vm1993, %v4053, %v4298
      %v4300 = vsel %vm1981, %v4055, %v4054
      %v4301 = vsel %vm1983, %v4056, %v4300
      %v4302 = vsel %vm1985, %v4057, %v4301
      %v4303 = vsel %vm1987, %v4058, %v4302
      %v4304 = vsel %vm1989, %v4059, %v4303
      %v4305 = vsel %vm1991, %v4060, %v4304
      %v4306 = vsel %vm1993, %v4061, %v4305
      %v4307 = vsel %vm1981, %v4063, %v4062
      %v4308 = vsel %vm1983, %v4064, %v4307
      %v4309 = vsel %vm1985, %v4065, %v4308
      %v4310 = vsel %vm1987, %v4066, %v4309
      %v4311 = vsel %vm1989, %v4067, %v4310
      %v4312 = vsel %vm1991, %v4068, %v4311
      %v4313 = vsel %vm1993, %v4069, %v4312
      %v4314 = vsel %vm1981, %v4071, %v4070
      %v4315 = vsel %vm1983, %v4072, %v4314
      %v4316 = vsel %vm1985, %v4073, %v4315
      %v4317 = vsel %vm1987, %v4074, %v4316
      %v4318 = vsel %vm1989, %v4075, %v4317
      %v4319 = vsel %vm1991, %v4076, %v4318
      %v4320 = vsel %vm1993, %v4077, %v4319
      %v4321 = vsel %vm1981, %v4079, %v4078
      %v4322 = vsel %vm1983, %v4080, %v4321
      %v4323 = vsel %vm1985, %v4081, %v4322
      %v4324 = vsel %vm1987, %v4082, %v4323
      %v4325 = vsel %vm1989, %v4083, %v4324
      %v4326 = vsel %vm1991, %v4084, %v4325
      %v4327 = vsel %vm1993, %v4085, %v4326
      %v4328 = vsel %vm1981, %v4087, %v4086
      %v4329 = vsel %vm1983, %v4088, %v4328
      %v4330 = vsel %vm1985, %v4089, %v4329
      %v4331 = vsel %vm1987, %v4090, %v4330
      %v4332 = vsel %vm1989, %v4091, %v4331
      %v4333 = vsel %vm1991, %v4092, %v4332
      %v4334 = vsel %vm1993, %v4093, %v4333
      %v4335 = vsel %vm1981, %v4095, %v4094
      %v4336 = vsel %vm1983, %v4096, %v4335
      %v4337 = vsel %vm1985, %v4097, %v4336
      %v4338 = vsel %vm1987, %v4098, %v4337
      %v4339 = vsel %vm1989, %v4099, %v4338
      %v4340 = vsel %vm1991, %v4100, %v4339
      %v4341 = vsel %vm1993, %v4101, %v4340
      %v4342 = vsel %vm1981, %v4103, %v4102
      %v4343 = vsel %vm1983, %v4104, %v4342
      %v4344 = vsel %vm1985, %v4105, %v4343
      %v4345 = vsel %vm1987, %v4106, %v4344
      %v4346 = vsel %vm1989, %v4107, %v4345
      %v4347 = vsel %vm1991, %v4108, %v4346
      %v4348 = vsel %vm1993, %v4109, %v4347
      %v4349 = vsel %vm1981, %v4111, %v4110
      %v4350 = vsel %vm1983, %v4112, %v4349
      %v4351 = vsel %vm1985, %v4113, %v4350
      %v4352 = vsel %vm1987, %v4114, %v4351
      %v4353 = vsel %vm1989, %v4115, %v4352
      %v4354 = vsel %vm1991, %v4116, %v4353
      %v4355 = vsel %vm1993, %v4117, %v4354
      %v4356 = vsel %vm1981, %v4119, %v4118
      %v4357 = vsel %vm1983, %v4120, %v4356
      %v4358 = vsel %vm1985, %v4121, %v4357
      %v4359 = vsel %vm1987, %v4122, %v4358
      %v4360 = vsel %vm1989, %v4123, %v4359
      %v4361 = vsel %vm1991, %v4124, %v4360
      %v4362 = vsel %vm1993, %v4125, %v4361
      %v4363 = vsel %vm1981, %v4127, %v4126
      %v4364 = vsel %vm1983, %v4128, %v4363
      %v4365 = vsel %vm1985, %v4129, %v4364
      %v4366 = vsel %vm1987, %v4130, %v4365
      %v4367 = vsel %vm1989, %v4131, %v4366
      %v4368 = vsel %vm1991, %v4132, %v4367
      %v4369 = vsel %vm1993, %v4133, %v4368
      %v4370 = vsel %vm1981, %v4135, %v4134
      %v4371 = vsel %vm1983, %v4136, %v4370
      %v4372 = vsel %vm1985, %v4137, %v4371
      %v4373 = vsel %vm1987, %v4138, %v4372
      %v4374 = vsel %vm1989, %v4139, %v4373
      %v4375 = vsel %vm1991, %v4140, %v4374
      %v4376 = vsel %vm1993, %v4141, %v4375
      %v4377 = vsel %vm1981, %v4143, %v4142
      %v4378 = vsel %vm1983, %v4144, %v4377
      %v4379 = vsel %vm1985, %v4145, %v4378
      %v4380 = vsel %vm1987, %v4146, %v4379
      %v4381 = vsel %vm1989, %v4147, %v4380
      %v4382 = vsel %vm1991, %v4148, %v4381
      %v4383 = vsel %vm1993, %v4149, %v4382
      %v4384 = vsel %vm1981, %v4151, %v4150
      %v4385 = vsel %vm1983, %v4152, %v4384
      %v4386 = vsel %vm1985, %v4153, %v4385
      %v4387 = vsel %vm1987, %v4154, %v4386
      %v4388 = vsel %vm1989, %v4155, %v4387
      %v4389 = vsel %vm1991, %v4156, %v4388
      %v4390 = vsel %vm1993, %v4157, %v4389
      %v4391 = vsel %vm1981, %v4159, %v4158
      %v4392 = vsel %vm1983, %v4160, %v4391
      %v4393 = vsel %vm1985, %v4161, %v4392
      %v4394 = vsel %vm1987, %v4162, %v4393
      %v4395 = vsel %vm1989, %v4163, %v4394
      %v4396 = vsel %vm1991, %v4164, %v4395
      %v4397 = vsel %vm1993, %v4165, %v4396
      %v4398 = vsel %vm1981, %v4167, %v4166
      %v4399 = vsel %vm1983, %v4168, %v4398
      %v4400 = vsel %vm1985, %v4169, %v4399
      %v4401 = vsel %vm1987, %v4170, %v4400
      %v4402 = vsel %vm1989, %v4171, %v4401
      %v4403 = vsel %vm1991, %v4172, %v4402
      %v4404 = vsel %vm1993, %v4173, %v4403
      %v4405 = vsel %vm1981, %v4175, %v4174
      %v4406 = vsel %vm1983, %v4176, %v4405
      %v4407 = vsel %vm1985, %v4177, %v4406
      %v4408 = vsel %vm1987, %v4178, %v4407
      %v4409 = vsel %vm1989, %v4179, %v4408
      %v4410 = vsel %vm1991, %v4180, %v4409
      %v4411 = vsel %vm1993, %v4181, %v4410
      %v4412 = vsel %vm1981, %v4183, %v4182
      %v4413 = vsel %vm1983, %v4184, %v4412
      %v4414 = vsel %vm1985, %v4185, %v4413
      %v4415 = vsel %vm1987, %v4186, %v4414
      %v4416 = vsel %vm1989, %v4187, %v4415
      %v4417 = vsel %vm1991, %v4188, %v4416
      %v4418 = vsel %vm1993, %v4189, %v4417
      %v4419 = vsel %vm1981, %v4191, %v4190
      %v4420 = vsel %vm1983, %v4192, %v4419
      %v4421 = vsel %vm1985, %v4193, %v4420
      %v4422 = vsel %vm1987, %v4194, %v4421
      %v4423 = vsel %vm1989, %v4195, %v4422
      %v4424 = vsel %vm1991, %v4196, %v4423
      %v4425 = vsel %vm1993, %v4197, %v4424
      %v4426 = vsel %vm1981, %v4199, %v4198
      %v4427 = vsel %vm1983, %v4200, %v4426
      %v4428 = vsel %vm1985, %v4201, %v4427
      %v4429 = vsel %vm1987, %v4202, %v4428
      %v4430 = vsel %vm1989, %v4203, %v4429
      %v4431 = vsel %vm1991, %v4204, %v4430
      %v4432 = vsel %vm1993, %v4205, %v4431
      %v4433 = vsel %vm1981, %v4207, %v4206
      %v4434 = vsel %vm1983, %v4208, %v4433
      %v4435 = vsel %vm1985, %v4209, %v4434
      %v4436 = vsel %vm1987, %v4210, %v4435
      %v4437 = vsel %vm1989, %v4211, %v4436
      %v4438 = vsel %vm1991, %v4212, %v4437
      %v4439 = vsel %vm1993, %v4213, %v4438
      %v4440 = vsel %vm1981, %v4215, %v4214
      %v4441 = vsel %vm1983, %v4216, %v4440
      %v4442 = vsel %vm1985, %v4217, %v4441
      %v4443 = vsel %vm1987, %v4218, %v4442
      %v4444 = vsel %vm1989, %v4219, %v4443
      %v4445 = vsel %vm1991, %v4220, %v4444
      %v4446 = vsel %vm1993, %v4221, %v4445
      %v4447 = vsel %vm1981, %v4223, %v4222
      %v4448 = vsel %vm1983, %v4224, %v4447
      %v4449 = vsel %vm1985, %v4225, %v4448
      %v4450 = vsel %vm1987, %v4226, %v4449
      %v4451 = vsel %vm1989, %v4227, %v4450
      %v4452 = vsel %vm1991, %v4228, %v4451
      %v4453 = vsel %vm1993, %v4229, %v4452
      %4454 = vrot.lane.b32.xlu0 %v4236, 15
      %v4455 = vpop.permute.xlu0 %4454
      %4456 = vrot.lane.b32.xlu0 %v4243, 15
      %v4457 = vpop.permute.xlu0 %4456
      %4458 = vrot.lane.b32.xlu0 %v4250, 15
      %v4459 = vpop.permute.xlu0 %4458
      %4460 = vrot.lane.b32.xlu0 %v4257, 15
      %v4461 = vpop.permute.xlu0 %4460
      %4462 = vrot.lane.b32.xlu0 %v4264, 15
      %v4463 = vpop.permute.xlu0 %4462
      %4464 = vrot.lane.b32.xlu0 %v4271, 15
      %v4465 = vpop.permute.xlu0 %4464
      %4466 = vrot.lane.b32.xlu0 %v4278, 15
      %v4467 = vpop.permute.xlu0 %4466
      %4468 = vrot.lane.b32.xlu0 %v4285, 15
      %v4469 = vpop.permute.xlu0 %4468
      %4470 = vrot.lane.b32.xlu0 %v4292, 15
      %v4471 = vpop.permute.xlu0 %4470
      %4472 = vrot.lane.b32.xlu0 %v4299, 15
      %v4473 = vpop.permute.xlu0 %4472
      %4474 = vrot.lane.b32.xlu0 %v4306, 15
      %v4475 = vpop.permute.xlu0 %4474
      %4476 = vrot.lane.b32.xlu0 %v4313, 15
      %v4477 = vpop.permute.xlu0 %4476
      %4478 = vrot.lane.b32.xlu0 %v4320, 15
      %v4479 = vpop.permute.xlu0 %4478
      %4480 = vrot.lane.b32.xlu0 %v4327, 15
      %v4481 = vpop.permute.xlu0 %4480
      %4482 = vrot.lane.b32.xlu0 %v4334, 15
      %v4483 = vpop.permute.xlu0 %4482
      %4484 = vrot.lane.b32.xlu0 %v4341, 15
      %v4485 = vpop.permute.xlu0 %4484
      %4486 = vrot.lane.b32.xlu0 %v4348, 15
      %v4487 = vpop.permute.xlu0 %4486
      %4488 = vrot.lane.b32.xlu0 %v4355, 15
      %v4489 = vpop.permute.xlu0 %4488
      %4490 = vrot.lane.b32.xlu0 %v4362, 15
      %v4491 = vpop.permute.xlu0 %4490
      %4492 = vrot.lane.b32.xlu0 %v4369, 15
      %v4493 = vpop.permute.xlu0 %4492
      %4494 = vrot.lane.b32.xlu0 %v4376, 15
      %v4495 = vpop.permute.xlu0 %4494
      %4496 = vrot.lane.b32.xlu0 %v4383, 15
      %v4497 = vpop.permute.xlu0 %4496
      %4498 = vrot.lane.b32.xlu0 %v4390, 15
      %v4499 = vpop.permute.xlu0 %4498
      %4500 = vrot.lane.b32.xlu0 %v4397, 15
      %v4501 = vpop.permute.xlu0 %4500
      %4502 = vrot.lane.b32.xlu0 %v4404, 15
      %v4503 = vpop.permute.xlu0 %4502
      %4504 = vrot.lane.b32.xlu0 %v4411, 15
      %v4505 = vpop.permute.xlu0 %4504
      %4506 = vrot.lane.b32.xlu0 %v4418, 15
      %v4507 = vpop.permute.xlu0 %4506
      %4508 = vrot.lane.b32.xlu0 %v4425, 15
      %v4509 = vpop.permute.xlu0 %4508
      %4510 = vrot.lane.b32.xlu0 %v4432, 15
      %v4511 = vpop.permute.xlu0 %4510
      %4512 = vrot.lane.b32.xlu0 %v4439, 15
      %v4513 = vpop.permute.xlu0 %4512
      %4514 = vrot.lane.b32.xlu0 %v4446, 15
      %v4515 = vpop.permute.xlu0 %4514
      %4516 = vrot.lane.b32.xlu0 %v4453, 15
      %v4517 = vpop.permute.xlu0 %4516
      %v4550 = vperm.slane %v1262, 0
      %v4551 = vperm.slane %v1263, 0
      %v4552 = vperm.slane %v1265, 0
      %v4553 = vperm.slane %v1267, 0
      %v4554 = vperm.slane %v1269, 0
      %v4555 = vperm.slane %v1271, 0
      %v4556 = vperm.slane %v1273, 0
      %v4557 = vperm.slane %v1275, 0
      %v4558 = vperm.slane %v1277, 0
      %v4559 = vperm.slane %v1279, 0
      %v4560 = vperm.slane %v1281, 0
      %v4561 = vperm.slane %v1283, 0
      %v4562 = vperm.slane %v1285, 0
      %v4563 = vperm.slane %v1287, 0
      %v4564 = vperm.slane %v1289, 0
      %v4565 = vperm.slane %v1291, 0
      %v4566 = vsel %vm1981, %v3400, %v3399
      %v4567 = vsel %vm1983, %v3401, %v4566
      %v4568 = vsel %vm1985, %v3402, %v4567
      %v4569 = vsel %vm1987, %v3403, %v4568
      %v4570 = vsel %vm1989, %v3404, %v4569
      %v4571 = vsel %vm1991, %v3405, %v4570
      %v4572 = vsel %vm1993, %v3406, %v4571
      %v4573 = vsel %vm1981, %v3408, %v3407
      %v4574 = vsel %vm1983, %v3409, %v4573
      %v4575 = vsel %vm1985, %v3410, %v4574
      %v4576 = vsel %vm1987, %v3411, %v4575
      %v4577 = vsel %vm1989, %v3412, %v4576
      %v4578 = vsel %vm1991, %v3413, %v4577
      %v4579 = vsel %vm1993, %v4550, %v4578
      %v4580 = vsel %vm1981, %v3416, %v3415
      %v4581 = vsel %vm1983, %v3417, %v4580
      %v4582 = vsel %vm1985, %v3418, %v4581
      %v4583 = vsel %vm1987, %v3419, %v4582
      %v4584 = vsel %vm1989, %v3420, %v4583
      %v4585 = vsel %vm1991, %v3421, %v4584
      %v4586 = vsel %vm1993, %v3422, %v4585
      %v4587 = vsel %vm1981, %v3424, %v3423
      %v4588 = vsel %vm1983, %v3425, %v4587
      %v4589 = vsel %vm1985, %v3426, %v4588
      %v4590 = vsel %vm1987, %v3427, %v4589
      %v4591 = vsel %vm1989, %v3428, %v4590
      %v4592 = vsel %vm1991, %v3429, %v4591
      %v4593 = vsel %vm1993, %v4551, %v4592
      %v4594 = vsel %vm1981, %v3432, %v3431
      %v4595 = vsel %vm1983, %v3433, %v4594
      %v4596 = vsel %vm1985, %v3434, %v4595
      %v4597 = vsel %vm1987, %v3435, %v4596
      %v4598 = vsel %vm1989, %v3436, %v4597
      %v4599 = vsel %vm1991, %v3437, %v4598
      %v4600 = vsel %vm1993, %v3438, %v4599
      %v4601 = vsel %vm1981, %v3440, %v3439
      %v4602 = vsel %vm1983, %v3441, %v4601
      %v4603 = vsel %vm1985, %v3442, %v4602
      %v4604 = vsel %vm1987, %v3443, %v4603
      %v4605 = vsel %vm1989, %v3444, %v4604
      %v4606 = vsel %vm1991, %v3445, %v4605
      %v4607 = vsel %vm1993, %v4552, %v4606
      %v4608 = vsel %vm1981, %v3448, %v3447
      %v4609 = vsel %vm1983, %v3449, %v4608
      %v4610 = vsel %vm1985, %v3450, %v4609
      %v4611 = vsel %vm1987, %v3451, %v4610
      %v4612 = vsel %vm1989, %v3452, %v4611
      %v4613 = vsel %vm1991, %v3453, %v4612
      %v4614 = vsel %vm1993, %v3454, %v4613
      %v4615 = vsel %vm1981, %v3456, %v3455
      %v4616 = vsel %vm1983, %v3457, %v4615
      %v4617 = vsel %vm1985, %v3458, %v4616
      %v4618 = vsel %vm1987, %v3459, %v4617
      %v4619 = vsel %vm1989, %v3460, %v4618
      %v4620 = vsel %vm1991, %v3461, %v4619
      %v4621 = vsel %vm1993, %v4553, %v4620
      %v4622 = vsel %vm1981, %v3464, %v3463
      %v4623 = vsel %vm1983, %v3465, %v4622
      %v4624 = vsel %vm1985, %v3466, %v4623
      %v4625 = vsel %vm1987, %v3467, %v4624
      %v4626 = vsel %vm1989, %v3468, %v4625
      %v4627 = vsel %vm1991, %v3469, %v4626
      %v4628 = vsel %vm1993, %v3470, %v4627
      %v4629 = vsel %vm1981, %v3472, %v3471
      %v4630 = vsel %vm1983, %v3473, %v4629
      %v4631 = vsel %vm1985, %v3474, %v4630
      %v4632 = vsel %vm1987, %v3475, %v4631
      %v4633 = vsel %vm1989, %v3476, %v4632
      %v4634 = vsel %vm1991, %v3477, %v4633
      %v4635 = vsel %vm1993, %v4554, %v4634
      %v4636 = vsel %vm1981, %v3480, %v3479
      %v4637 = vsel %vm1983, %v3481, %v4636
      %v4638 = vsel %vm1985, %v3482, %v4637
      %v4639 = vsel %vm1987, %v3483, %v4638
      %v4640 = vsel %vm1989, %v3484, %v4639
      %v4641 = vsel %vm1991, %v3485, %v4640
      %v4642 = vsel %vm1993, %v3486, %v4641
      %v4643 = vsel %vm1981, %v3488, %v3487
      %v4644 = vsel %vm1983, %v3489, %v4643
      %v4645 = vsel %vm1985, %v3490, %v4644
      %v4646 = vsel %vm1987, %v3491, %v4645
      %v4647 = vsel %vm1989, %v3492, %v4646
      %v4648 = vsel %vm1991, %v3493, %v4647
      %v4649 = vsel %vm1993, %v4555, %v4648
      %v4650 = vsel %vm1981, %v3496, %v3495
      %v4651 = vsel %vm1983, %v3497, %v4650
      %v4652 = vsel %vm1985, %v3498, %v4651
      %v4653 = vsel %vm1987, %v3499, %v4652
      %v4654 = vsel %vm1989, %v3500, %v4653
      %v4655 = vsel %vm1991, %v3501, %v4654
      %v4656 = vsel %vm1993, %v3502, %v4655
      %v4657 = vsel %vm1981, %v3504, %v3503
      %v4658 = vsel %vm1983, %v3505, %v4657
      %v4659 = vsel %vm1985, %v3506, %v4658
      %v4660 = vsel %vm1987, %v3507, %v4659
      %v4661 = vsel %vm1989, %v3508, %v4660
      %v4662 = vsel %vm1991, %v3509, %v4661
      %v4663 = vsel %vm1993, %v4556, %v4662
      %v4664 = vsel %vm1981, %v3512, %v3511
      %v4665 = vsel %vm1983, %v3513, %v4664
      %v4666 = vsel %vm1985, %v3514, %v4665
      %v4667 = vsel %vm1987, %v3515, %v4666
      %v4668 = vsel %vm1989, %v3516, %v4667
      %v4669 = vsel %vm1991, %v3517, %v4668
      %v4670 = vsel %vm1993, %v3518, %v4669
      %v4671 = vsel %vm1981, %v3520, %v3519
      %v4672 = vsel %vm1983, %v3521, %v4671
      %v4673 = vsel %vm1985, %v3522, %v4672
      %v4674 = vsel %vm1987, %v3523, %v4673
      %v4675 = vsel %vm1989, %v3524, %v4674
      %v4676 = vsel %vm1991, %v3525, %v4675
      %v4677 = vsel %vm1993, %v4557, %v4676
      %v4678 = vsel %vm1981, %v3528, %v3527
      %v4679 = vsel %vm1983, %v3529, %v4678
      %v4680 = vsel %vm1985, %v3530, %v4679
      %v4681 = vsel %vm1987, %v3531, %v4680
      %v4682 = vsel %vm1989, %v3532, %v4681
      %v4683 = vsel %vm1991, %v3533, %v4682
      %v4684 = vsel %vm1993, %v3534, %v4683
      %v4685 = vsel %vm1981, %v3536, %v3535
      %v4686 = vsel %vm1983, %v3537, %v4685
      %v4687 = vsel %vm1985, %v3538, %v4686
      %v4688 = vsel %vm1987, %v3539, %v4687
      %v4689 = vsel %vm1989, %v3540, %v4688
      %v4690 = vsel %vm1991, %v3541, %v4689
      %v4691 = vsel %vm1993, %v4558, %v4690
      %v4692 = vsel %vm1981, %v3544, %v3543
      %v4693 = vsel %vm1983, %v3545, %v4692
      %v4694 = vsel %vm1985, %v3546, %v4693
      %v4695 = vsel %vm1987, %v3547, %v4694
      %v4696 = vsel %vm1989, %v3548, %v4695
      %v4697 = vsel %vm1991, %v3549, %v4696
      %v4698 = vsel %vm1993, %v3550, %v4697
      %v4699 = vsel %vm1981, %v3552, %v3551
      %v4700 = vsel %vm1983, %v3553, %v4699
      %v4701 = vsel %vm1985, %v3554, %v4700
      %v4702 = vsel %vm1987, %v3555, %v4701
      %v4703 = vsel %vm1989, %v3556, %v4702
      %v4704 = vsel %vm1991, %v3557, %v4703
      %v4705 = vsel %vm1993, %v4559, %v4704
      %v4706 = vsel %vm1981, %v3560, %v3559
      %v4707 = vsel %vm1983, %v3561, %v4706
      %v4708 = vsel %vm1985, %v3562, %v4707
      %v4709 = vsel %vm1987, %v3563, %v4708
      %v4710 = vsel %vm1989, %v3564, %v4709
      %v4711 = vsel %vm1991, %v3565, %v4710
      %v4712 = vsel %vm1993, %v3566, %v4711
      %v4713 = vsel %vm1981, %v3568, %v3567
      %v4714 = vsel %vm1983, %v3569, %v4713
      %v4715 = vsel %vm1985, %v3570, %v4714
      %v4716 = vsel %vm1987, %v3571, %v4715
      %v4717 = vsel %vm1989, %v3572, %v4716
      %v4718 = vsel %vm1991, %v3573, %v4717
      %v4719 = vsel %vm1993, %v4560, %v4718
      %v4720 = vsel %vm1981, %v3576, %v3575
      %v4721 = vsel %vm1983, %v3577, %v4720
      %v4722 = vsel %vm1985, %v3578, %v4721
      %v4723 = vsel %vm1987, %v3579, %v4722
      %v4724 = vsel %vm1989, %v3580, %v4723
      %v4725 = vsel %vm1991, %v3581, %v4724
      %v4726 = vsel %vm1993, %v3582, %v4725
      %v4727 = vsel %vm1981, %v3584, %v3583
      %v4728 = vsel %vm1983, %v3585, %v4727
      %v4729 = vsel %vm1985, %v3586, %v4728
      %v4730 = vsel %vm1987, %v3587, %v4729
      %v4731 = vsel %vm1989, %v3588, %v4730
      %v4732 = vsel %vm1991, %v3589, %v4731
      %v4733 = vsel %vm1993, %v4561, %v4732
      %v4734 = vsel %vm1981, %v3592, %v3591
      %v4735 = vsel %vm1983, %v3593, %v4734
      %v4736 = vsel %vm1985, %v3594, %v4735
      %v4737 = vsel %vm1987, %v3595, %v4736
      %v4738 = vsel %vm1989, %v3596, %v4737
      %v4739 = vsel %vm1991, %v3597, %v4738
      %v4740 = vsel %vm1993, %v3598, %v4739
      %v4741 = vsel %vm1981, %v3600, %v3599
      %v4742 = vsel %vm1983, %v3601, %v4741
      %v4743 = vsel %vm1985, %v3602, %v4742
      %v4744 = vsel %vm1987, %v3603, %v4743
      %v4745 = vsel %vm1989, %v3604, %v4744
      %v4746 = vsel %vm1991, %v3605, %v4745
      %v4747 = vsel %vm1993, %v4562, %v4746
      %v4748 = vsel %vm1981, %v3608, %v3607
      %v4749 = vsel %vm1983, %v3609, %v4748
      %v4750 = vsel %vm1985, %v3610, %v4749
      %v4751 = vsel %vm1987, %v3611, %v4750
      %v4752 = vsel %vm1989, %v3612, %v4751
      %v4753 = vsel %vm1991, %v3613, %v4752
      %v4754 = vsel %vm1993, %v3614, %v4753
      %v4755 = vsel %vm1981, %v3616, %v3615
      %v4756 = vsel %vm1983, %v3617, %v4755
      %v4757 = vsel %vm1985, %v3618, %v4756
      %v4758 = vsel %vm1987, %v3619, %v4757
      %v4759 = vsel %vm1989, %v3620, %v4758
      %v4760 = vsel %vm1991, %v3621, %v4759
      %v4761 = vsel %vm1993, %v4563, %v4760
      %v4762 = vsel %vm1981, %v3624, %v3623
      %v4763 = vsel %vm1983, %v3625, %v4762
      %v4764 = vsel %vm1985, %v3626, %v4763
      %v4765 = vsel %vm1987, %v3627, %v4764
      %v4766 = vsel %vm1989, %v3628, %v4765
      %v4767 = vsel %vm1991, %v3629, %v4766
      %v4768 = vsel %vm1993, %v3630, %v4767
      %v4769 = vsel %vm1981, %v3632, %v3631
      %v4770 = vsel %vm1983, %v3633, %v4769
      %v4771 = vsel %vm1985, %v3634, %v4770
      %v4772 = vsel %vm1987, %v3635, %v4771
      %v4773 = vsel %vm1989, %v3636, %v4772
      %v4774 = vsel %vm1991, %v3637, %v4773
      %v4775 = vsel %vm1993, %v4564, %v4774
      %v4776 = vsel %vm1981, %v3640, %v3639
      %v4777 = vsel %vm1983, %v3641, %v4776
      %v4778 = vsel %vm1985, %v3642, %v4777
      %v4779 = vsel %vm1987, %v3643, %v4778
      %v4780 = vsel %vm1989, %v3644, %v4779
      %v4781 = vsel %vm1991, %v3645, %v4780
      %v4782 = vsel %vm1993, %v3646, %v4781
      %v4783 = vsel %vm1981, %v3648, %v3647
      %v4784 = vsel %vm1983, %v3649, %v4783
      %v4785 = vsel %vm1985, %v3650, %v4784
      %v4786 = vsel %vm1987, %v3651, %v4785
      %v4787 = vsel %vm1989, %v3652, %v4786
      %v4788 = vsel %vm1991, %v3653, %v4787
      %v4789 = vsel %vm1993, %v4565, %v4788
      %4790 = vrot.lane.b32.xlu0 %v4572, 18
      %v4791 = vpop.permute.xlu0 %4790
      %4792 = vrot.lane.b32.xlu0 %v4579, 18
      %v4793 = vpop.permute.xlu0 %4792
      %4794 = vrot.lane.b32.xlu0 %v4586, 18
      %v4795 = vpop.permute.xlu0 %4794
      %4796 = vrot.lane.b32.xlu0 %v4593, 18
      %v4797 = vpop.permute.xlu0 %4796
      %4798 = vrot.lane.b32.xlu0 %v4600, 18
      %v4799 = vpop.permute.xlu0 %4798
      %4800 = vrot.lane.b32.xlu0 %v4607, 18
      %v4801 = vpop.permute.xlu0 %4800
      %4802 = vrot.lane.b32.xlu0 %v4614, 18
      %v4803 = vpop.permute.xlu0 %4802
      %4804 = vrot.lane.b32.xlu0 %v4621, 18
      %v4805 = vpop.permute.xlu0 %4804
      %4806 = vrot.lane.b32.xlu0 %v4628, 18
      %v4807 = vpop.permute.xlu0 %4806
      %4808 = vrot.lane.b32.xlu0 %v4635, 18
      %v4809 = vpop.permute.xlu0 %4808
      %4810 = vrot.lane.b32.xlu0 %v4642, 18
      %v4811 = vpop.permute.xlu0 %4810
      %4812 = vrot.lane.b32.xlu0 %v4649, 18
      %v4813 = vpop.permute.xlu0 %4812
      %4814 = vrot.lane.b32.xlu0 %v4656, 18
      %v4815 = vpop.permute.xlu0 %4814
      %4816 = vrot.lane.b32.xlu0 %v4663, 18
      %v4817 = vpop.permute.xlu0 %4816
      %4818 = vrot.lane.b32.xlu0 %v4670, 18
      %v4819 = vpop.permute.xlu0 %4818
      %4820 = vrot.lane.b32.xlu0 %v4677, 18
      %v4821 = vpop.permute.xlu0 %4820
      %4822 = vrot.lane.b32.xlu0 %v4684, 18
      %v4823 = vpop.permute.xlu0 %4822
      %4824 = vrot.lane.b32.xlu0 %v4691, 18
      %v4825 = vpop.permute.xlu0 %4824
      %4826 = vrot.lane.b32.xlu0 %v4698, 18
      %v4827 = vpop.permute.xlu0 %4826
      %4828 = vrot.lane.b32.xlu0 %v4705, 18
      %v4829 = vpop.permute.xlu0 %4828
      %4830 = vrot.lane.b32.xlu0 %v4712, 18
      %v4831 = vpop.permute.xlu0 %4830
      %4832 = vrot.lane.b32.xlu0 %v4719, 18
      %v4833 = vpop.permute.xlu0 %4832
      %4834 = vrot.lane.b32.xlu0 %v4726, 18
      %v4835 = vpop.permute.xlu0 %4834
      %4836 = vrot.lane.b32.xlu0 %v4733, 18
      %v4837 = vpop.permute.xlu0 %4836
      %4838 = vrot.lane.b32.xlu0 %v4740, 18
      %v4839 = vpop.permute.xlu0 %4838
      %4840 = vrot.lane.b32.xlu0 %v4747, 18
      %v4841 = vpop.permute.xlu0 %4840
      %4842 = vrot.lane.b32.xlu0 %v4754, 18
      %v4843 = vpop.permute.xlu0 %4842
      %4844 = vrot.lane.b32.xlu0 %v4761, 18
      %v4845 = vpop.permute.xlu0 %4844
      %4846 = vrot.lane.b32.xlu0 %v4768, 18
      %v4847 = vpop.permute.xlu0 %4846
      %4848 = vrot.lane.b32.xlu0 %v4775, 18
      %v4849 = vpop.permute.xlu0 %4848
      %4850 = vrot.lane.b32.xlu0 %v4782, 18
      %v4851 = vpop.permute.xlu0 %4850
      %4852 = vrot.lane.b32.xlu0 %v4789, 18
      %v4853 = vpop.permute.xlu0 %4852
      %v4886 = vperm.slane %v1262, 1
      %v4887 = vperm.slane %v1263, 1
      %v4888 = vperm.slane %v1265, 1
      %v4889 = vperm.slane %v1267, 1
      %v4890 = vperm.slane %v1269, 1
      %v4891 = vperm.slane %v1271, 1
      %v4892 = vperm.slane %v1273, 1
      %v4893 = vperm.slane %v1275, 1
      %v4894 = vperm.slane %v1277, 1
      %v4895 = vperm.slane %v1279, 1
      %v4896 = vperm.slane %v1281, 1
      %v4897 = vperm.slane %v1283, 1
      %v4898 = vperm.slane %v1285, 1
      %v4899 = vperm.slane %v1287, 1
      %v4900 = vperm.slane %v1289, 1
      %v4901 = vperm.slane %v1291, 1
      %v4902 = vsel %vm1981, %v3976, %v3975
      %v4903 = vsel %vm1983, %v3977, %v4902
      %v4904 = vsel %vm1985, %v3978, %v4903
      %v4905 = vsel %vm1987, %v3979, %v4904
      %v4906 = vsel %vm1989, %v3980, %v4905
      %v4907 = vsel %vm1991, %v3981, %v4906
      %v4908 = vsel %vm1993, %v3982, %v4907
      %v4909 = vsel %vm1981, %v3984, %v3983
      %v4910 = vsel %vm1983, %v3985, %v4909
      %v4911 = vsel %vm1985, %v3986, %v4910
      %v4912 = vsel %vm1987, %v3987, %v4911
      %v4913 = vsel %vm1989, %v3988, %v4912
      %v4914 = vsel %vm1991, %v3989, %v4913
      %v4915 = vsel %vm1993, %v4886, %v4914
      %v4916 = vsel %vm1981, %v3992, %v3991
      %v4917 = vsel %vm1983, %v3993, %v4916
      %v4918 = vsel %vm1985, %v3994, %v4917
      %v4919 = vsel %vm1987, %v3995, %v4918
      %v4920 = vsel %vm1989, %v3996, %v4919
      %v4921 = vsel %vm1991, %v3997, %v4920
      %v4922 = vsel %vm1993, %v3998, %v4921
      %v4923 = vsel %vm1981, %v4000, %v3999
      %v4924 = vsel %vm1983, %v4001, %v4923
      %v4925 = vsel %vm1985, %v4002, %v4924
      %v4926 = vsel %vm1987, %v4003, %v4925
      %v4927 = vsel %vm1989, %v4004, %v4926
      %v4928 = vsel %vm1991, %v4005, %v4927
      %v4929 = vsel %vm1993, %v4887, %v4928
      %v4930 = vsel %vm1981, %v4008, %v4007
      %v4931 = vsel %vm1983, %v4009, %v4930
      %v4932 = vsel %vm1985, %v4010, %v4931
      %v4933 = vsel %vm1987, %v4011, %v4932
      %v4934 = vsel %vm1989, %v4012, %v4933
      %v4935 = vsel %vm1991, %v4013, %v4934
      %v4936 = vsel %vm1993, %v4014, %v4935
      %v4937 = vsel %vm1981, %v4016, %v4015
      %v4938 = vsel %vm1983, %v4017, %v4937
      %v4939 = vsel %vm1985, %v4018, %v4938
      %v4940 = vsel %vm1987, %v4019, %v4939
      %v4941 = vsel %vm1989, %v4020, %v4940
      %v4942 = vsel %vm1991, %v4021, %v4941
      %v4943 = vsel %vm1993, %v4888, %v4942
      %v4944 = vsel %vm1981, %v4024, %v4023
      %v4945 = vsel %vm1983, %v4025, %v4944
      %v4946 = vsel %vm1985, %v4026, %v4945
      %v4947 = vsel %vm1987, %v4027, %v4946
      %v4948 = vsel %vm1989, %v4028, %v4947
      %v4949 = vsel %vm1991, %v4029, %v4948
      %v4950 = vsel %vm1993, %v4030, %v4949
      %v4951 = vsel %vm1981, %v4032, %v4031
      %v4952 = vsel %vm1983, %v4033, %v4951
      %v4953 = vsel %vm1985, %v4034, %v4952
      %v4954 = vsel %vm1987, %v4035, %v4953
      %v4955 = vsel %vm1989, %v4036, %v4954
      %v4956 = vsel %vm1991, %v4037, %v4955
      %v4957 = vsel %vm1993, %v4889, %v4956
      %v4958 = vsel %vm1981, %v4040, %v4039
      %v4959 = vsel %vm1983, %v4041, %v4958
      %v4960 = vsel %vm1985, %v4042, %v4959
      %v4961 = vsel %vm1987, %v4043, %v4960
      %v4962 = vsel %vm1989, %v4044, %v4961
      %v4963 = vsel %vm1991, %v4045, %v4962
      %v4964 = vsel %vm1993, %v4046, %v4963
      %v4965 = vsel %vm1981, %v4048, %v4047
      %v4966 = vsel %vm1983, %v4049, %v4965
      %v4967 = vsel %vm1985, %v4050, %v4966
      %v4968 = vsel %vm1987, %v4051, %v4967
      %v4969 = vsel %vm1989, %v4052, %v4968
      %v4970 = vsel %vm1991, %v4053, %v4969
      %v4971 = vsel %vm1993, %v4890, %v4970
      %v4972 = vsel %vm1981, %v4056, %v4055
      %v4973 = vsel %vm1983, %v4057, %v4972
      %v4974 = vsel %vm1985, %v4058, %v4973
      %v4975 = vsel %vm1987, %v4059, %v4974
      %v4976 = vsel %vm1989, %v4060, %v4975
      %v4977 = vsel %vm1991, %v4061, %v4976
      %v4978 = vsel %vm1993, %v4062, %v4977
      %v4979 = vsel %vm1981, %v4064, %v4063
      %v4980 = vsel %vm1983, %v4065, %v4979
      %v4981 = vsel %vm1985, %v4066, %v4980
      %v4982 = vsel %vm1987, %v4067, %v4981
      %v4983 = vsel %vm1989, %v4068, %v4982
      %v4984 = vsel %vm1991, %v4069, %v4983
      %v4985 = vsel %vm1993, %v4891, %v4984
      %v4986 = vsel %vm1981, %v4072, %v4071
      %v4987 = vsel %vm1983, %v4073, %v4986
      %v4988 = vsel %vm1985, %v4074, %v4987
      %v4989 = vsel %vm1987, %v4075, %v4988
      %v4990 = vsel %vm1989, %v4076, %v4989
      %v4991 = vsel %vm1991, %v4077, %v4990
      %v4992 = vsel %vm1993, %v4078, %v4991
      %v4993 = vsel %vm1981, %v4080, %v4079
      %v4994 = vsel %vm1983, %v4081, %v4993
      %v4995 = vsel %vm1985, %v4082, %v4994
      %v4996 = vsel %vm1987, %v4083, %v4995
      %v4997 = vsel %vm1989, %v4084, %v4996
      %v4998 = vsel %vm1991, %v4085, %v4997
      %v4999 = vsel %vm1993, %v4892, %v4998
      %v5000 = vsel %vm1981, %v4088, %v4087
      %v5001 = vsel %vm1983, %v4089, %v5000
      %v5002 = vsel %vm1985, %v4090, %v5001
      %v5003 = vsel %vm1987, %v4091, %v5002
      %v5004 = vsel %vm1989, %v4092, %v5003
      %v5005 = vsel %vm1991, %v4093, %v5004
      %v5006 = vsel %vm1993, %v4094, %v5005
      %v5007 = vsel %vm1981, %v4096, %v4095
      %v5008 = vsel %vm1983, %v4097, %v5007
      %v5009 = vsel %vm1985, %v4098, %v5008
      %v5010 = vsel %vm1987, %v4099, %v5009
      %v5011 = vsel %vm1989, %v4100, %v5010
      %v5012 = vsel %vm1991, %v4101, %v5011
      %v5013 = vsel %vm1993, %v4893, %v5012
      %v5014 = vsel %vm1981, %v4104, %v4103
      %v5015 = vsel %vm1983, %v4105, %v5014
      %v5016 = vsel %vm1985, %v4106, %v5015
      %v5017 = vsel %vm1987, %v4107, %v5016
      %v5018 = vsel %vm1989, %v4108, %v5017
      %v5019 = vsel %vm1991, %v4109, %v5018
      %v5020 = vsel %vm1993, %v4110, %v5019
      %v5021 = vsel %vm1981, %v4112, %v4111
      %v5022 = vsel %vm1983, %v4113, %v5021
      %v5023 = vsel %vm1985, %v4114, %v5022
      %v5024 = vsel %vm1987, %v4115, %v5023
      %v5025 = vsel %vm1989, %v4116, %v5024
      %v5026 = vsel %vm1991, %v4117, %v5025
      %v5027 = vsel %vm1993, %v4894, %v5026
      %v5028 = vsel %vm1981, %v4120, %v4119
      %v5029 = vsel %vm1983, %v4121, %v5028
      %v5030 = vsel %vm1985, %v4122, %v5029
      %v5031 = vsel %vm1987, %v4123, %v5030
      %v5032 = vsel %vm1989, %v4124, %v5031
      %v5033 = vsel %vm1991, %v4125, %v5032
      %v5034 = vsel %vm1993, %v4126, %v5033
      %v5035 = vsel %vm1981, %v4128, %v4127
      %v5036 = vsel %vm1983, %v4129, %v5035
      %v5037 = vsel %vm1985, %v4130, %v5036
      %v5038 = vsel %vm1987, %v4131, %v5037
      %v5039 = vsel %vm1989, %v4132, %v5038
      %v5040 = vsel %vm1991, %v4133, %v5039
      %v5041 = vsel %vm1993, %v4895, %v5040
      %v5042 = vsel %vm1981, %v4136, %v4135
      %v5043 = vsel %vm1983, %v4137, %v5042
      %v5044 = vsel %vm1985, %v4138, %v5043
      %v5045 = vsel %vm1987, %v4139, %v5044
      %v5046 = vsel %vm1989, %v4140, %v5045
      %v5047 = vsel %vm1991, %v4141, %v5046
      %v5048 = vsel %vm1993, %v4142, %v5047
      %v5049 = vsel %vm1981, %v4144, %v4143
      %v5050 = vsel %vm1983, %v4145, %v5049
      %v5051 = vsel %vm1985, %v4146, %v5050
      %v5052 = vsel %vm1987, %v4147, %v5051
      %v5053 = vsel %vm1989, %v4148, %v5052
      %v5054 = vsel %vm1991, %v4149, %v5053
      %v5055 = vsel %vm1993, %v4896, %v5054
      %v5056 = vsel %vm1981, %v4152, %v4151
      %v5057 = vsel %vm1983, %v4153, %v5056
      %v5058 = vsel %vm1985, %v4154, %v5057
      %v5059 = vsel %vm1987, %v4155, %v5058
      %v5060 = vsel %vm1989, %v4156, %v5059
      %v5061 = vsel %vm1991, %v4157, %v5060
      %v5062 = vsel %vm1993, %v4158, %v5061
      %v5063 = vsel %vm1981, %v4160, %v4159
      %v5064 = vsel %vm1983, %v4161, %v5063
      %v5065 = vsel %vm1985, %v4162, %v5064
      %v5066 = vsel %vm1987, %v4163, %v5065
      %v5067 = vsel %vm1989, %v4164, %v5066
      %v5068 = vsel %vm1991, %v4165, %v5067
      %v5069 = vsel %vm1993, %v4897, %v5068
      %v5070 = vsel %vm1981, %v4168, %v4167
      %v5071 = vsel %vm1983, %v4169, %v5070
      %v5072 = vsel %vm1985, %v4170, %v5071
      %v5073 = vsel %vm1987, %v4171, %v5072
      %v5074 = vsel %vm1989, %v4172, %v5073
      %v5075 = vsel %vm1991, %v4173, %v5074
      %v5076 = vsel %vm1993, %v4174, %v5075
      %v5077 = vsel %vm1981, %v4176, %v4175
      %v5078 = vsel %vm1983, %v4177, %v5077
      %v5079 = vsel %vm1985, %v4178, %v5078
      %v5080 = vsel %vm1987, %v4179, %v5079
      %v5081 = vsel %vm1989, %v4180, %v5080
      %v5082 = vsel %vm1991, %v4181, %v5081
      %v5083 = vsel %vm1993, %v4898, %v5082
      %v5084 = vsel %vm1981, %v4184, %v4183
      %v5085 = vsel %vm1983, %v4185, %v5084
      %v5086 = vsel %vm1985, %v4186, %v5085
      %v5087 = vsel %vm1987, %v4187, %v5086
      %v5088 = vsel %vm1989, %v4188, %v5087
      %v5089 = vsel %vm1991, %v4189, %v5088
      %v5090 = vsel %vm1993, %v4190, %v5089
      %v5091 = vsel %vm1981, %v4192, %v4191
      %v5092 = vsel %vm1983, %v4193, %v5091
      %v5093 = vsel %vm1985, %v4194, %v5092
      %v5094 = vsel %vm1987, %v4195, %v5093
      %v5095 = vsel %vm1989, %v4196, %v5094
      %v5096 = vsel %vm1991, %v4197, %v5095
      %v5097 = vsel %vm1993, %v4899, %v5096
      %v5098 = vsel %vm1981, %v4200, %v4199
      %v5099 = vsel %vm1983, %v4201, %v5098
      %v5100 = vsel %vm1985, %v4202, %v5099
      %v5101 = vsel %vm1987, %v4203, %v5100
      %v5102 = vsel %vm1989, %v4204, %v5101
      %v5103 = vsel %vm1991, %v4205, %v5102
      %v5104 = vsel %vm1993, %v4206, %v5103
      %v5105 = vsel %vm1981, %v4208, %v4207
      %v5106 = vsel %vm1983, %v4209, %v5105
      %v5107 = vsel %vm1985, %v4210, %v5106
      %v5108 = vsel %vm1987, %v4211, %v5107
      %v5109 = vsel %vm1989, %v4212, %v5108
      %v5110 = vsel %vm1991, %v4213, %v5109
      %v5111 = vsel %vm1993, %v4900, %v5110
      %v5112 = vsel %vm1981, %v4216, %v4215
      %v5113 = vsel %vm1983, %v4217, %v5112
      %v5114 = vsel %vm1985, %v4218, %v5113
      %v5115 = vsel %vm1987, %v4219, %v5114
      %v5116 = vsel %vm1989, %v4220, %v5115
      %v5117 = vsel %vm1991, %v4221, %v5116
      %v5118 = vsel %vm1993, %v4222, %v5117
      %v5119 = vsel %vm1981, %v4224, %v4223
      %v5120 = vsel %vm1983, %v4225, %v5119
      %v5121 = vsel %vm1985, %v4226, %v5120
      %v5122 = vsel %vm1987, %v4227, %v5121
      %v5123 = vsel %vm1989, %v4228, %v5122
      %v5124 = vsel %vm1991, %v4229, %v5123
      %v5125 = vsel %vm1993, %v4901, %v5124
      %5126 = vrot.lane.b32.xlu0 %v4908, 21
      %v5127 = vpop.permute.xlu0 %5126
      %5128 = vrot.lane.b32.xlu0 %v4915, 21
      %v5129 = vpop.permute.xlu0 %5128
      %5130 = vrot.lane.b32.xlu0 %v4922, 21
      %v5131 = vpop.permute.xlu0 %5130
      %5132 = vrot.lane.b32.xlu0 %v4929, 21
      %v5133 = vpop.permute.xlu0 %5132
      %5134 = vrot.lane.b32.xlu0 %v4936, 21
      %v5135 = vpop.permute.xlu0 %5134
      %5136 = vrot.lane.b32.xlu0 %v4943, 21
      %v5137 = vpop.permute.xlu0 %5136
      %5138 = vrot.lane.b32.xlu0 %v4950, 21
      %v5139 = vpop.permute.xlu0 %5138
      %5140 = vrot.lane.b32.xlu0 %v4957, 21
      %v5141 = vpop.permute.xlu0 %5140
      %5142 = vrot.lane.b32.xlu0 %v4964, 21
      %v5143 = vpop.permute.xlu0 %5142
      %5144 = vrot.lane.b32.xlu0 %v4971, 21
      %v5145 = vpop.permute.xlu0 %5144
      %5146 = vrot.lane.b32.xlu0 %v4978, 21
      %v5147 = vpop.permute.xlu0 %5146
      %5148 = vrot.lane.b32.xlu0 %v4985, 21
      %v5149 = vpop.permute.xlu0 %5148
      %5150 = vrot.lane.b32.xlu0 %v4992, 21
      %v5151 = vpop.permute.xlu0 %5150
      %5152 = vrot.lane.b32.xlu0 %v4999, 21
      %v5153 = vpop.permute.xlu0 %5152
      %5154 = vrot.lane.b32.xlu0 %v5006, 21
      %v5155 = vpop.permute.xlu0 %5154
      %5156 = vrot.lane.b32.xlu0 %v5013, 21
      %v5157 = vpop.permute.xlu0 %5156
      %5158 = vrot.lane.b32.xlu0 %v5020, 21
      %v5159 = vpop.permute.xlu0 %5158
      %5160 = vrot.lane.b32.xlu0 %v5027, 21
      %v5161 = vpop.permute.xlu0 %5160
      %5162 = vrot.lane.b32.xlu0 %v5034, 21
      %v5163 = vpop.permute.xlu0 %5162
      %5164 = vrot.lane.b32.xlu0 %v5041, 21
      %v5165 = vpop.permute.xlu0 %5164
      %5166 = vrot.lane.b32.xlu0 %v5048, 21
      %v5167 = vpop.permute.xlu0 %5166
      %5168 = vrot.lane.b32.xlu0 %v5055, 21
      %v5169 = vpop.permute.xlu0 %5168
      %5170 = vrot.lane.b32.xlu0 %v5062, 21
      %v5171 = vpop.permute.xlu0 %5170
      %5172 = vrot.lane.b32.xlu0 %v5069, 21
      %v5173 = vpop.permute.xlu0 %5172
      %5174 = vrot.lane.b32.xlu0 %v5076, 21
      %v5175 = vpop.permute.xlu0 %5174
      %5176 = vrot.lane.b32.xlu0 %v5083, 21
      %v5177 = vpop.permute.xlu0 %5176
      %5178 = vrot.lane.b32.xlu0 %v5090, 21
      %v5179 = vpop.permute.xlu0 %5178
      %5180 = vrot.lane.b32.xlu0 %v5097, 21
      %v5181 = vpop.permute.xlu0 %5180
      %5182 = vrot.lane.b32.xlu0 %v5104, 21
      %v5183 = vpop.permute.xlu0 %5182
      %5184 = vrot.lane.b32.xlu0 %v5111, 21
      %v5185 = vpop.permute.xlu0 %5184
      %5186 = vrot.lane.b32.xlu0 %v5118, 21
      %v5187 = vpop.permute.xlu0 %5186
      %5188 = vrot.lane.b32.xlu0 %v5125, 21
      %v5189 = vpop.permute.xlu0 %5188
      %v5222 = vperm.slane %v1260, 0
      %v5223 = vperm.slane %v1729, 0
      %v5224 = vperm.slane %v1730, 0
      %v5225 = vperm.slane %v1731, 0
      %v5226 = vperm.slane %v1096, 0
      %v5227 = vperm.slane %v1732, 0
      %v5228 = vperm.slane %v1733, 0
      %v5229 = vperm.slane %v1734, 0
      %v5230 = vperm.slane %v1098, 0
      %v5231 = vperm.slane %v1735, 0
      %v5232 = vperm.slane %v1736, 0
      %v5233 = vperm.slane %v1737, 0
      %v5234 = vperm.slane %v1100, 0
      %v5235 = vperm.slane %v1738, 0
      %v5236 = vperm.slane %v1739, 0
      %v5237 = vperm.slane %v1740, 0
      %v5238 = vsel %vm1981, %v5223, %v5222
      %v5239 = vsel %vm1983, %v5224, %v5238
      %v5240 = vsel %vm1985, %v5225, %v5239
      %v5241 = vsel %vm1987, %v5226, %v5240
      %v5242 = vsel %vm1989, %v5227, %v5241
      %v5243 = vsel %vm1991, %v5228, %v5242
      %v5244 = vsel %vm1993, %v5229, %v5243
      %v5245 = vsel %vm1981, %v5231, %v5230
      %v5246 = vsel %vm1983, %v5232, %v5245
      %v5247 = vsel %vm1985, %v5233, %v5246
      %v5248 = vsel %vm1987, %v5234, %v5247
      %v5249 = vsel %vm1989, %v5235, %v5248
      %v5250 = vsel %vm1991, %v5236, %v5249
      %v5251 = vsel %vm1993, %v5237, %v5250
      %5252 = vrot.lane.b32.xlu0 %v1994, 24
      %v5253 = vpop.permute.xlu0 %5252
      %5254 = vrot.lane.b32.xlu0 %v2001, 24
      %v5255 = vpop.permute.xlu0 %5254
      %5256 = vrot.lane.b32.xlu0 %v2008, 24
      %v5257 = vpop.permute.xlu0 %5256
      %5258 = vrot.lane.b32.xlu0 %v2015, 24
      %v5259 = vpop.permute.xlu0 %5258
      %5260 = vrot.lane.b32.xlu0 %v2022, 24
      %v5261 = vpop.permute.xlu0 %5260
      %5262 = vrot.lane.b32.xlu0 %v2029, 24
      %v5263 = vpop.permute.xlu0 %5262
      %5264 = vrot.lane.b32.xlu0 %v2036, 24
      %v5265 = vpop.permute.xlu0 %5264
      %5266 = vrot.lane.b32.xlu0 %v2043, 24
      %v5267 = vpop.permute.xlu0 %5266
      %5268 = vrot.lane.b32.xlu0 %v2050, 24
      %v5269 = vpop.permute.xlu0 %5268
      %5270 = vrot.lane.b32.xlu0 %v2057, 24
      %v5271 = vpop.permute.xlu0 %5270
      %5272 = vrot.lane.b32.xlu0 %v2064, 24
      %v5273 = vpop.permute.xlu0 %5272
      %5274 = vrot.lane.b32.xlu0 %v2071, 24
      %v5275 = vpop.permute.xlu0 %5274
      %5276 = vrot.lane.b32.xlu0 %v2078, 24
      %v5277 = vpop.permute.xlu0 %5276
      %5278 = vrot.lane.b32.xlu0 %v2085, 24
      %v5279 = vpop.permute.xlu0 %5278
      %5280 = vrot.lane.b32.xlu0 %v2092, 24
      %v5281 = vpop.permute.xlu0 %5280
      %5282 = vrot.lane.b32.xlu0 %v2099, 24
      %v5283 = vpop.permute.xlu0 %5282
      %5284 = vrot.lane.b32.xlu0 %v2106, 24
      %v5285 = vpop.permute.xlu0 %5284
      %5286 = vrot.lane.b32.xlu0 %v2113, 24
      %v5287 = vpop.permute.xlu0 %5286
      %5288 = vrot.lane.b32.xlu0 %v2120, 24
      %v5289 = vpop.permute.xlu0 %5288
      %5290 = vrot.lane.b32.xlu0 %v2127, 24
      %v5291 = vpop.permute.xlu0 %5290
      %5292 = vrot.lane.b32.xlu0 %v2134, 24
      %v5293 = vpop.permute.xlu0 %5292
      %5294 = vrot.lane.b32.xlu0 %v2141, 24
      %v5295 = vpop.permute.xlu0 %5294
      %5296 = vrot.lane.b32.xlu0 %v2148, 24
      %v5297 = vpop.permute.xlu0 %5296
      %5298 = vrot.lane.b32.xlu0 %v2155, 24
      %v5299 = vpop.permute.xlu0 %5298
      %5300 = vrot.lane.b32.xlu0 %v2162, 24
      %v5301 = vpop.permute.xlu0 %5300
      %5302 = vrot.lane.b32.xlu0 %v2169, 24
      %v5303 = vpop.permute.xlu0 %5302
      %5304 = vrot.lane.b32.xlu0 %v2176, 24
      %v5305 = vpop.permute.xlu0 %5304
      %5306 = vrot.lane.b32.xlu0 %v2183, 24
      %v5307 = vpop.permute.xlu0 %5306
      %5308 = vrot.lane.b32.xlu0 %v2190, 24
      %v5309 = vpop.permute.xlu0 %5308
      %5310 = vrot.lane.b32.xlu0 %v2197, 24
      %v5311 = vpop.permute.xlu0 %5310
      %5312 = vrot.lane.b32.xlu0 %v5244, 24
      %v5313 = vpop.permute.xlu0 %5312
      %5314 = vrot.lane.b32.xlu0 %v5251, 24
      %v5315 = vpop.permute.xlu0 %5314
      %v5348 = vperm.slane %v1260, 1
      %v5349 = vperm.slane %v1729, 1
      %v5350 = vperm.slane %v1730, 1
      %v5351 = vperm.slane %v1731, 1
      %v5352 = vperm.slane %v1096, 1
      %v5353 = vperm.slane %v1732, 1
      %v5354 = vperm.slane %v1733, 1
      %v5355 = vperm.slane %v1734, 1
      %v5356 = vperm.slane %v1098, 1
      %v5357 = vperm.slane %v1735, 1
      %v5358 = vperm.slane %v1736, 1
      %v5359 = vperm.slane %v1737, 1
      %v5360 = vperm.slane %v1100, 1
      %v5361 = vperm.slane %v1738, 1
      %v5362 = vperm.slane %v1739, 1
      %v5363 = vperm.slane %v1740, 1
      %v5364 = vsel %vm1981, %v5349, %v5348
      %v5365 = vsel %vm1983, %v5350, %v5364
      %v5366 = vsel %vm1985, %v5351, %v5365
      %v5367 = vsel %vm1987, %v5352, %v5366
      %v5368 = vsel %vm1989, %v5353, %v5367
      %v5369 = vsel %vm1991, %v5354, %v5368
      %v5370 = vsel %vm1993, %v5355, %v5369
      %v5371 = vsel %vm1981, %v5357, %v5356
      %v5372 = vsel %vm1983, %v5358, %v5371
      %v5373 = vsel %vm1985, %v5359, %v5372
      %v5374 = vsel %vm1987, %v5360, %v5373
      %v5375 = vsel %vm1989, %v5361, %v5374
      %v5376 = vsel %vm1991, %v5362, %v5375
      %v5377 = vsel %vm1993, %v5363, %v5376
      %5378 = vrot.lane.b32.xlu0 %v2474, 27
      %v5379 = vpop.permute.xlu0 %5378
      %5380 = vrot.lane.b32.xlu0 %v2481, 27
      %v5381 = vpop.permute.xlu0 %5380
      %5382 = vrot.lane.b32.xlu0 %v2488, 27
      %v5383 = vpop.permute.xlu0 %5382
      %5384 = vrot.lane.b32.xlu0 %v2495, 27
      %v5385 = vpop.permute.xlu0 %5384
      %5386 = vrot.lane.b32.xlu0 %v2502, 27
      %v5387 = vpop.permute.xlu0 %5386
      %5388 = vrot.lane.b32.xlu0 %v2509, 27
      %v5389 = vpop.permute.xlu0 %5388
      %5390 = vrot.lane.b32.xlu0 %v2516, 27
      %v5391 = vpop.permute.xlu0 %5390
      %5392 = vrot.lane.b32.xlu0 %v2523, 27
      %v5393 = vpop.permute.xlu0 %5392
      %5394 = vrot.lane.b32.xlu0 %v2530, 27
      %v5395 = vpop.permute.xlu0 %5394
      %5396 = vrot.lane.b32.xlu0 %v2537, 27
      %v5397 = vpop.permute.xlu0 %5396
      %5398 = vrot.lane.b32.xlu0 %v2544, 27
      %v5399 = vpop.permute.xlu0 %5398
      %5400 = vrot.lane.b32.xlu0 %v2551, 27
      %v5401 = vpop.permute.xlu0 %5400
      %5402 = vrot.lane.b32.xlu0 %v2558, 27
      %v5403 = vpop.permute.xlu0 %5402
      %5404 = vrot.lane.b32.xlu0 %v2565, 27
      %v5405 = vpop.permute.xlu0 %5404
      %5406 = vrot.lane.b32.xlu0 %v2572, 27
      %v5407 = vpop.permute.xlu0 %5406
      %5408 = vrot.lane.b32.xlu0 %v2579, 27
      %v5409 = vpop.permute.xlu0 %5408
      %5410 = vrot.lane.b32.xlu0 %v2586, 27
      %v5411 = vpop.permute.xlu0 %5410
      %5412 = vrot.lane.b32.xlu0 %v2593, 27
      %v5413 = vpop.permute.xlu0 %5412
      %5414 = vrot.lane.b32.xlu0 %v2600, 27
      %v5415 = vpop.permute.xlu0 %5414
      %5416 = vrot.lane.b32.xlu0 %v2607, 27
      %v5417 = vpop.permute.xlu0 %5416
      %5418 = vrot.lane.b32.xlu0 %v2614, 27
      %v5419 = vpop.permute.xlu0 %5418
      %5420 = vrot.lane.b32.xlu0 %v2621, 27
      %v5421 = vpop.permute.xlu0 %5420
      %5422 = vrot.lane.b32.xlu0 %v2628, 27
      %v5423 = vpop.permute.xlu0 %5422
      %5424 = vrot.lane.b32.xlu0 %v2635, 27
      %v5425 = vpop.permute.xlu0 %5424
      %5426 = vrot.lane.b32.xlu0 %v2642, 27
      %v5427 = vpop.permute.xlu0 %5426
      %5428 = vrot.lane.b32.xlu0 %v2649, 27
      %v5429 = vpop.permute.xlu0 %5428
      %5430 = vrot.lane.b32.xlu0 %v2656, 27
      %v5431 = vpop.permute.xlu0 %5430
      %5432 = vrot.lane.b32.xlu0 %v2663, 27
      %v5433 = vpop.permute.xlu0 %5432
      %5434 = vrot.lane.b32.xlu0 %v2670, 27
      %v5435 = vpop.permute.xlu0 %5434
      %5436 = vrot.lane.b32.xlu0 %v2677, 27
      %v5437 = vpop.permute.xlu0 %5436
      %5438 = vrot.lane.b32.xlu0 %v5370, 27
      %v5439 = vpop.permute.xlu0 %5438
      %5440 = vrot.lane.b32.xlu0 %v5377, 27
      %v5441 = vpop.permute.xlu0 %5440
      %v5474 = vperm.slane %v1292, 0
      %v5475 = vsel %vm1981, %v5224, %v5223
      %v5476 = vsel %vm1983, %v5225, %v5475
      %v5477 = vsel %vm1985, %v5226, %v5476
      %v5478 = vsel %vm1987, %v5227, %v5477
      %v5479 = vsel %vm1989, %v5228, %v5478
      %v5480 = vsel %vm1991, %v5229, %v5479
      %v5481 = vsel %vm1993, %v5230, %v5480
      %v5482 = vsel %vm1981, %v5232, %v5231
      %v5483 = vsel %vm1983, %v5233, %v5482
      %v5484 = vsel %vm1985, %v5234, %v5483
      %v5485 = vsel %vm1987, %v5235, %v5484
      %v5486 = vsel %vm1989, %v5236, %v5485
      %v5487 = vsel %vm1991, %v5237, %v5486
      %v5488 = vsel %vm1993, %v5474, %v5487
      %5489 = vrot.lane.b32.xlu0 %v2789, 30
      %v5490 = vpop.permute.xlu0 %5489
      %5491 = vrot.lane.b32.xlu0 %v2796, 30
      %v5492 = vpop.permute.xlu0 %5491
      %5493 = vrot.lane.b32.xlu0 %v2803, 30
      %v5494 = vpop.permute.xlu0 %5493
      %5495 = vrot.lane.b32.xlu0 %v2810, 30
      %v5496 = vpop.permute.xlu0 %5495
      %5497 = vrot.lane.b32.xlu0 %v2817, 30
      %v5498 = vpop.permute.xlu0 %5497
      %5499 = vrot.lane.b32.xlu0 %v2824, 30
      %v5500 = vpop.permute.xlu0 %5499
      %5501 = vrot.lane.b32.xlu0 %v2831, 30
      %v5502 = vpop.permute.xlu0 %5501
      %5503 = vrot.lane.b32.xlu0 %v2838, 30
      %v5504 = vpop.permute.xlu0 %5503
      %5505 = vrot.lane.b32.xlu0 %v2845, 30
      %v5506 = vpop.permute.xlu0 %5505
      %5507 = vrot.lane.b32.xlu0 %v2852, 30
      %v5508 = vpop.permute.xlu0 %5507
      %5509 = vrot.lane.b32.xlu0 %v2859, 30
      %v5510 = vpop.permute.xlu0 %5509
      %5511 = vrot.lane.b32.xlu0 %v2866, 30
      %v5512 = vpop.permute.xlu0 %5511
      %5513 = vrot.lane.b32.xlu0 %v2873, 30
      %v5514 = vpop.permute.xlu0 %5513
      %5515 = vrot.lane.b32.xlu0 %v2880, 30
      %v5516 = vpop.permute.xlu0 %5515
      %5517 = vrot.lane.b32.xlu0 %v2887, 30
      %v5518 = vpop.permute.xlu0 %5517
      %5519 = vrot.lane.b32.xlu0 %v2894, 30
      %v5520 = vpop.permute.xlu0 %5519
      %5521 = vrot.lane.b32.xlu0 %v2901, 30
      %v5522 = vpop.permute.xlu0 %5521
      %5523 = vrot.lane.b32.xlu0 %v2908, 30
      %v5524 = vpop.permute.xlu0 %5523
      %5525 = vrot.lane.b32.xlu0 %v2915, 30
      %v5526 = vpop.permute.xlu0 %5525
      %5527 = vrot.lane.b32.xlu0 %v2922, 30
      %v5528 = vpop.permute.xlu0 %5527
      %5529 = vrot.lane.b32.xlu0 %v2929, 30
      %v5530 = vpop.permute.xlu0 %5529
      %5531 = vrot.lane.b32.xlu0 %v2936, 30
      %v5532 = vpop.permute.xlu0 %5531
      %5533 = vrot.lane.b32.xlu0 %v2943, 30
      %v5534 = vpop.permute.xlu0 %5533
      %5535 = vrot.lane.b32.xlu0 %v2950, 30
      %v5536 = vpop.permute.xlu0 %5535
      %5537 = vrot.lane.b32.xlu0 %v2957, 30
      %v5538 = vpop.permute.xlu0 %5537
      %5539 = vrot.lane.b32.xlu0 %v2964, 30
      %v5540 = vpop.permute.xlu0 %5539
      %5541 = vrot.lane.b32.xlu0 %v2971, 30
      %v5542 = vpop.permute.xlu0 %5541
      %5543 = vrot.lane.b32.xlu0 %v2978, 30
      %v5544 = vpop.permute.xlu0 %5543
      %5545 = vrot.lane.b32.xlu0 %v2985, 30
      %v5546 = vpop.permute.xlu0 %5545
      %5547 = vrot.lane.b32.xlu0 %v2992, 30
      %v5548 = vpop.permute.xlu0 %5547
      %5549 = vrot.lane.b32.xlu0 %v5481, 30
      %v5550 = vpop.permute.xlu0 %5549
      %5551 = vrot.lane.b32.xlu0 %v5488, 30
      %v5552 = vpop.permute.xlu0 %5551
      %v5585 = vperm.slane %v1292, 1
      %v5586 = vsel %vm1981, %v5350, %v5349
      %v5587 = vsel %vm1983, %v5351, %v5586
      %v5588 = vsel %vm1985, %v5352, %v5587
      %v5589 = vsel %vm1987, %v5353, %v5588
      %v5590 = vsel %vm1989, %v5354, %v5589
      %v5591 = vsel %vm1991, %v5355, %v5590
      %v5592 = vsel %vm1993, %v5356, %v5591
      %v5593 = vsel %vm1981, %v5358, %v5357
      %v5594 = vsel %vm1983, %v5359, %v5593
      %v5595 = vsel %vm1985, %v5360, %v5594
      %v5596 = vsel %vm1987, %v5361, %v5595
      %v5597 = vsel %vm1989, %v5362, %v5596
      %v5598 = vsel %vm1991, %v5363, %v5597
      %v5599 = vsel %vm1993, %v5585, %v5598
      %5600 = vrot.lane.b32.xlu0 %v3104, 33
      %v5601 = vpop.permute.xlu0 %5600
      %5602 = vrot.lane.b32.xlu0 %v3111, 33
      %v5603 = vpop.permute.xlu0 %5602
      %5604 = vrot.lane.b32.xlu0 %v3118, 33
      %v5605 = vpop.permute.xlu0 %5604
      %5606 = vrot.lane.b32.xlu0 %v3125, 33
      %v5607 = vpop.permute.xlu0 %5606
      %5608 = vrot.lane.b32.xlu0 %v3132, 33
      %v5609 = vpop.permute.xlu0 %5608
      %5610 = vrot.lane.b32.xlu0 %v3139, 33
      %v5611 = vpop.permute.xlu0 %5610
      %5612 = vrot.lane.b32.xlu0 %v3146, 33
      %v5613 = vpop.permute.xlu0 %5612
      %5614 = vrot.lane.b32.xlu0 %v3153, 33
      %v5615 = vpop.permute.xlu0 %5614
      %5616 = vrot.lane.b32.xlu0 %v3160, 33
      %v5617 = vpop.permute.xlu0 %5616
      %5618 = vrot.lane.b32.xlu0 %v3167, 33
      %v5619 = vpop.permute.xlu0 %5618
      %5620 = vrot.lane.b32.xlu0 %v3174, 33
      %v5621 = vpop.permute.xlu0 %5620
      %5622 = vrot.lane.b32.xlu0 %v3181, 33
      %v5623 = vpop.permute.xlu0 %5622
      %5624 = vrot.lane.b32.xlu0 %v3188, 33
      %v5625 = vpop.permute.xlu0 %5624
      %5626 = vrot.lane.b32.xlu0 %v3195, 33
      %v5627 = vpop.permute.xlu0 %5626
      %5628 = vrot.lane.b32.xlu0 %v3202, 33
      %v5629 = vpop.permute.xlu0 %5628
      %5630 = vrot.lane.b32.xlu0 %v3209, 33
      %v5631 = vpop.permute.xlu0 %5630
      %5632 = vrot.lane.b32.xlu0 %v3216, 33
      %v5633 = vpop.permute.xlu0 %5632
      %5634 = vrot.lane.b32.xlu0 %v3223, 33
      %v5635 = vpop.permute.xlu0 %5634
      %5636 = vrot.lane.b32.xlu0 %v3230, 33
      %v5637 = vpop.permute.xlu0 %5636
      %5638 = vrot.lane.b32.xlu0 %v3237, 33
      %v5639 = vpop.permute.xlu0 %5638
      %5640 = vrot.lane.b32.xlu0 %v3244, 33
      %v5641 = vpop.permute.xlu0 %5640
      %5642 = vrot.lane.b32.xlu0 %v3251, 33
      %v5643 = vpop.permute.xlu0 %5642
      %5644 = vrot.lane.b32.xlu0 %v3258, 33
      %v5645 = vpop.permute.xlu0 %5644
      %5646 = vrot.lane.b32.xlu0 %v3265, 33
      %v5647 = vpop.permute.xlu0 %5646
      %5648 = vrot.lane.b32.xlu0 %v3272, 33
      %v5649 = vpop.permute.xlu0 %5648
      %5650 = vrot.lane.b32.xlu0 %v3279, 33
      %v5651 = vpop.permute.xlu0 %5650
      %5652 = vrot.lane.b32.xlu0 %v3286, 33
      %v5653 = vpop.permute.xlu0 %5652
      %5654 = vrot.lane.b32.xlu0 %v3293, 33
      %v5655 = vpop.permute.xlu0 %5654
      %5656 = vrot.lane.b32.xlu0 %v3300, 33
      %v5657 = vpop.permute.xlu0 %5656
      %5658 = vrot.lane.b32.xlu0 %v3307, 33
      %v5659 = vpop.permute.xlu0 %5658
      %5660 = vrot.lane.b32.xlu0 %v5592, 33
      %v5661 = vpop.permute.xlu0 %5660
      %5662 = vrot.lane.b32.xlu0 %v5599, 33
      %v5663 = vpop.permute.xlu0 %5662
      %5696 = vrot.lane.b32.xlu0 %v3674, 36
      %v5697 = vpop.permute.xlu0 %5696
      %5698 = vrot.lane.b32.xlu0 %v3681, 36
      %v5699 = vpop.permute.xlu0 %5698
      %5700 = vrot.lane.b32.xlu0 %v3688, 36
      %v5701 = vpop.permute.xlu0 %5700
      %5702 = vrot.lane.b32.xlu0 %v3695, 36
      %v5703 = vpop.permute.xlu0 %5702
      %5704 = vrot.lane.b32.xlu0 %v3702, 36
      %v5705 = vpop.permute.xlu0 %5704
      %5706 = vrot.lane.b32.xlu0 %v3709, 36
      %v5707 = vpop.permute.xlu0 %5706
      %5708 = vrot.lane.b32.xlu0 %v3716, 36
      %v5709 = vpop.permute.xlu0 %5708
      %5710 = vrot.lane.b32.xlu0 %v3723, 36
      %v5711 = vpop.permute.xlu0 %5710
      %5712 = vrot.lane.b32.xlu0 %v3730, 36
      %v5713 = vpop.permute.xlu0 %5712
      %5714 = vrot.lane.b32.xlu0 %v3737, 36
      %v5715 = vpop.permute.xlu0 %5714
      %5716 = vrot.lane.b32.xlu0 %v3744, 36
      %v5717 = vpop.permute.xlu0 %5716
      %5718 = vrot.lane.b32.xlu0 %v3751, 36
      %v5719 = vpop.permute.xlu0 %5718
      %5720 = vrot.lane.b32.xlu0 %v3758, 36
      %v5721 = vpop.permute.xlu0 %5720
      %5722 = vrot.lane.b32.xlu0 %v3765, 36
      %v5723 = vpop.permute.xlu0 %5722
      %5724 = vrot.lane.b32.xlu0 %v3772, 36
      %v5725 = vpop.permute.xlu0 %5724
      %5726 = vrot.lane.b32.xlu0 %v3779, 36
      %v5727 = vpop.permute.xlu0 %5726
      %5728 = vrot.lane.b32.xlu0 %v3786, 36
      %v5729 = vpop.permute.xlu0 %5728
      %5730 = vrot.lane.b32.xlu0 %v3793, 36
      %v5731 = vpop.permute.xlu0 %5730
      %5732 = vrot.lane.b32.xlu0 %v3800, 36
      %v5733 = vpop.permute.xlu0 %5732
      %5734 = vrot.lane.b32.xlu0 %v3807, 36
      %v5735 = vpop.permute.xlu0 %5734
      %5736 = vrot.lane.b32.xlu0 %v3814, 36
      %v5737 = vpop.permute.xlu0 %5736
      %5738 = vrot.lane.b32.xlu0 %v3821, 36
      %v5739 = vpop.permute.xlu0 %5738
      %5740 = vrot.lane.b32.xlu0 %v3828, 36
      %v5741 = vpop.permute.xlu0 %5740
      %5742 = vrot.lane.b32.xlu0 %v3835, 36
      %v5743 = vpop.permute.xlu0 %5742
      %5744 = vrot.lane.b32.xlu0 %v3842, 36
      %v5745 = vpop.permute.xlu0 %5744
      %5746 = vrot.lane.b32.xlu0 %v3849, 36
      %v5747 = vpop.permute.xlu0 %5746
      %5748 = vrot.lane.b32.xlu0 %v3856, 36
      %v5749 = vpop.permute.xlu0 %5748
      %5750 = vrot.lane.b32.xlu0 %v3863, 36
      %v5751 = vpop.permute.xlu0 %5750
      %5752 = vrot.lane.b32.xlu0 %v3870, 36
      %v5753 = vpop.permute.xlu0 %5752
      %5754 = vrot.lane.b32.xlu0 %v3877, 36
      %v5755 = vpop.permute.xlu0 %5754
      %5786 = vrot.lane.b32.xlu0 %v4250, 39
      %v5787 = vpop.permute.xlu0 %5786
      %5788 = vrot.lane.b32.xlu0 %v4257, 39
      %v5789 = vpop.permute.xlu0 %5788
      %5790 = vrot.lane.b32.xlu0 %v4264, 39
      %v5791 = vpop.permute.xlu0 %5790
      %5792 = vrot.lane.b32.xlu0 %v4271, 39
      %v5793 = vpop.permute.xlu0 %5792
      %5794 = vrot.lane.b32.xlu0 %v4278, 39
      %v5795 = vpop.permute.xlu0 %5794
      %5796 = vrot.lane.b32.xlu0 %v4285, 39
      %v5797 = vpop.permute.xlu0 %5796
      %5798 = vrot.lane.b32.xlu0 %v4292, 39
      %v5799 = vpop.permute.xlu0 %5798
      %5800 = vrot.lane.b32.xlu0 %v4299, 39
      %v5801 = vpop.permute.xlu0 %5800
      %5802 = vrot.lane.b32.xlu0 %v4306, 39
      %v5803 = vpop.permute.xlu0 %5802
      %5804 = vrot.lane.b32.xlu0 %v4313, 39
      %v5805 = vpop.permute.xlu0 %5804
      %5806 = vrot.lane.b32.xlu0 %v4320, 39
      %v5807 = vpop.permute.xlu0 %5806
      %5808 = vrot.lane.b32.xlu0 %v4327, 39
      %v5809 = vpop.permute.xlu0 %5808
      %5810 = vrot.lane.b32.xlu0 %v4334, 39
      %v5811 = vpop.permute.xlu0 %5810
      %5812 = vrot.lane.b32.xlu0 %v4341, 39
      %v5813 = vpop.permute.xlu0 %5812
      %5814 = vrot.lane.b32.xlu0 %v4348, 39
      %v5815 = vpop.permute.xlu0 %5814
      %5816 = vrot.lane.b32.xlu0 %v4355, 39
      %v5817 = vpop.permute.xlu0 %5816
      %5818 = vrot.lane.b32.xlu0 %v4362, 39
      %v5819 = vpop.permute.xlu0 %5818
      %5820 = vrot.lane.b32.xlu0 %v4369, 39
      %v5821 = vpop.permute.xlu0 %5820
      %5822 = vrot.lane.b32.xlu0 %v4376, 39
      %v5823 = vpop.permute.xlu0 %5822
      %5824 = vrot.lane.b32.xlu0 %v4383, 39
      %v5825 = vpop.permute.xlu0 %5824
      %5826 = vrot.lane.b32.xlu0 %v4390, 39
      %v5827 = vpop.permute.xlu0 %5826
      %5828 = vrot.lane.b32.xlu0 %v4397, 39
      %v5829 = vpop.permute.xlu0 %5828
      %5830 = vrot.lane.b32.xlu0 %v4404, 39
      %v5831 = vpop.permute.xlu0 %5830
      %5832 = vrot.lane.b32.xlu0 %v4411, 39
      %v5833 = vpop.permute.xlu0 %5832
      %5834 = vrot.lane.b32.xlu0 %v4418, 39
      %v5835 = vpop.permute.xlu0 %5834
      %5836 = vrot.lane.b32.xlu0 %v4425, 39
      %v5837 = vpop.permute.xlu0 %5836
      %5838 = vrot.lane.b32.xlu0 %v4432, 39
      %v5839 = vpop.permute.xlu0 %5838
      %5840 = vrot.lane.b32.xlu0 %v4439, 39
      %v5841 = vpop.permute.xlu0 %5840
      %5842 = vrot.lane.b32.xlu0 %v4446, 39
      %v5843 = vpop.permute.xlu0 %5842
      %5844 = vrot.lane.b32.xlu0 %v4453, 39
      %v5845 = vpop.permute.xlu0 %5844
      %5876 = vrot.lane.b32.xlu0 %v4586, 42
      %v5877 = vpop.permute.xlu0 %5876
      %5878 = vrot.lane.b32.xlu0 %v4593, 42
      %v5879 = vpop.permute.xlu0 %5878
      %5880 = vrot.lane.b32.xlu0 %v4600, 42
      %v5881 = vpop.permute.xlu0 %5880
      %5882 = vrot.lane.b32.xlu0 %v4607, 42
      %v5883 = vpop.permute.xlu0 %5882
      %5884 = vrot.lane.b32.xlu0 %v4614, 42
      %v5885 = vpop.permute.xlu0 %5884
      %5886 = vrot.lane.b32.xlu0 %v4621, 42
      %v5887 = vpop.permute.xlu0 %5886
      %5888 = vrot.lane.b32.xlu0 %v4628, 42
      %v5889 = vpop.permute.xlu0 %5888
      %5890 = vrot.lane.b32.xlu0 %v4635, 42
      %v5891 = vpop.permute.xlu0 %5890
      %5892 = vrot.lane.b32.xlu0 %v4642, 42
      %v5893 = vpop.permute.xlu0 %5892
      %5894 = vrot.lane.b32.xlu0 %v4649, 42
      %v5895 = vpop.permute.xlu0 %5894
      %5896 = vrot.lane.b32.xlu0 %v4656, 42
      %v5897 = vpop.permute.xlu0 %5896
      %5898 = vrot.lane.b32.xlu0 %v4663, 42
      %v5899 = vpop.permute.xlu0 %5898
      %5900 = vrot.lane.b32.xlu0 %v4670, 42
      %v5901 = vpop.permute.xlu0 %5900
      %5902 = vrot.lane.b32.xlu0 %v4677, 42
      %v5903 = vpop.permute.xlu0 %5902
      %5904 = vrot.lane.b32.xlu0 %v4684, 42
      %v5905 = vpop.permute.xlu0 %5904
      %5906 = vrot.lane.b32.xlu0 %v4691, 42
      %v5907 = vpop.permute.xlu0 %5906
      %5908 = vrot.lane.b32.xlu0 %v4698, 42
      %v5909 = vpop.permute.xlu0 %5908
      %5910 = vrot.lane.b32.xlu0 %v4705, 42
      %v5911 = vpop.permute.xlu0 %5910
      %5912 = vrot.lane.b32.xlu0 %v4712, 42
      %v5913 = vpop.permute.xlu0 %5912
      %5914 = vrot.lane.b32.xlu0 %v4719, 42
      %v5915 = vpop.permute.xlu0 %5914
      %5916 = vrot.lane.b32.xlu0 %v4726, 42
      %v5917 = vpop.permute.xlu0 %5916
      %5918 = vrot.lane.b32.xlu0 %v4733, 42
      %v5919 = vpop.permute.xlu0 %5918
      %5920 = vrot.lane.b32.xlu0 %v4740, 42
      %v5921 = vpop.permute.xlu0 %5920
      %5922 = vrot.lane.b32.xlu0 %v4747, 42
      %v5923 = vpop.permute.xlu0 %5922
      %5924 = vrot.lane.b32.xlu0 %v4754, 42
      %v5925 = vpop.permute.xlu0 %5924
      %5926 = vrot.lane.b32.xlu0 %v4761, 42
      %v5927 = vpop.permute.xlu0 %5926
      %5928 = vrot.lane.b32.xlu0 %v4768, 42
      %v5929 = vpop.permute.xlu0 %5928
      %5930 = vrot.lane.b32.xlu0 %v4775, 42
      %v5931 = vpop.permute.xlu0 %5930
      %5932 = vrot.lane.b32.xlu0 %v4782, 42
      %v5933 = vpop.permute.xlu0 %5932
      %5934 = vrot.lane.b32.xlu0 %v4789, 42
      %v5935 = vpop.permute.xlu0 %5934
      %5966 = vrot.lane.b32.xlu0 %v4922, 45
      %v5967 = vpop.permute.xlu0 %5966
      %5968 = vrot.lane.b32.xlu0 %v4929, 45
      %v5969 = vpop.permute.xlu0 %5968
      %5970 = vrot.lane.b32.xlu0 %v4936, 45
      %v5971 = vpop.permute.xlu0 %5970
      %5972 = vrot.lane.b32.xlu0 %v4943, 45
      %v5973 = vpop.permute.xlu0 %5972
      %5974 = vrot.lane.b32.xlu0 %v4950, 45
      %v5975 = vpop.permute.xlu0 %5974
      %5976 = vrot.lane.b32.xlu0 %v4957, 45
      %v5977 = vpop.permute.xlu0 %5976
      %5978 = vrot.lane.b32.xlu0 %v4964, 45
      %v5979 = vpop.permute.xlu0 %5978
      %5980 = vrot.lane.b32.xlu0 %v4971, 45
      %v5981 = vpop.permute.xlu0 %5980
      %5982 = vrot.lane.b32.xlu0 %v4978, 45
      %v5983 = vpop.permute.xlu0 %5982
      %5984 = vrot.lane.b32.xlu0 %v4985, 45
      %v5985 = vpop.permute.xlu0 %5984
      %5986 = vrot.lane.b32.xlu0 %v4992, 45
      %v5987 = vpop.permute.xlu0 %5986
      %5988 = vrot.lane.b32.xlu0 %v4999, 45
      %v5989 = vpop.permute.xlu0 %5988
      %5990 = vrot.lane.b32.xlu0 %v5006, 45
      %v5991 = vpop.permute.xlu0 %5990
      %5992 = vrot.lane.b32.xlu0 %v5013, 45
      %v5993 = vpop.permute.xlu0 %5992
      %5994 = vrot.lane.b32.xlu0 %v5020, 45
      %v5995 = vpop.permute.xlu0 %5994
      %5996 = vrot.lane.b32.xlu0 %v5027, 45
      %v5997 = vpop.permute.xlu0 %5996
      %5998 = vrot.lane.b32.xlu0 %v5034, 45
      %v5999 = vpop.permute.xlu0 %5998
      %6000 = vrot.lane.b32.xlu0 %v5041, 45
      %v6001 = vpop.permute.xlu0 %6000
      %6002 = vrot.lane.b32.xlu0 %v5048, 45
      %v6003 = vpop.permute.xlu0 %6002
      %6004 = vrot.lane.b32.xlu0 %v5055, 45
      %v6005 = vpop.permute.xlu0 %6004
      %6006 = vrot.lane.b32.xlu0 %v5062, 45
      %v6007 = vpop.permute.xlu0 %6006
      %6008 = vrot.lane.b32.xlu0 %v5069, 45
      %v6009 = vpop.permute.xlu0 %6008
      %6010 = vrot.lane.b32.xlu0 %v5076, 45
      %v6011 = vpop.permute.xlu0 %6010
      %6012 = vrot.lane.b32.xlu0 %v5083, 45
      %v6013 = vpop.permute.xlu0 %6012
      %6014 = vrot.lane.b32.xlu0 %v5090, 45
      %v6015 = vpop.permute.xlu0 %6014
      %6016 = vrot.lane.b32.xlu0 %v5097, 45
      %v6017 = vpop.permute.xlu0 %6016
      %6018 = vrot.lane.b32.xlu0 %v5104, 45
      %v6019 = vpop.permute.xlu0 %6018
      %6020 = vrot.lane.b32.xlu0 %v5111, 45
      %v6021 = vpop.permute.xlu0 %6020
      %6022 = vrot.lane.b32.xlu0 %v5118, 45
      %v6023 = vpop.permute.xlu0 %6022
      %6024 = vrot.lane.b32.xlu0 %v5125, 45
      %v6025 = vpop.permute.xlu0 %6024
      %vm6056 = vcmask 23552
      %v6057 = vsel %vm6056, %v1994, %v2679
      %v6058 = vsel %vm6056, %v2001, %v2681
      %v6059 = vsel %vm6056, %v2008, %v2683
      %v6060 = vsel %vm6056, %v2015, %v2685
      %v6061 = vsel %vm6056, %v2022, %v2687
      %v6062 = vsel %vm6056, %v2029, %v2689
      %v6063 = vsel %vm6056, %v2036, %v2691
      %v6064 = vsel %vm6056, %v2043, %v2693
      %v6065 = vsel %vm6056, %v2050, %v2695
      %v6066 = vsel %vm6056, %v2057, %v2697
      %v6067 = vsel %vm6056, %v2064, %v2699
      %v6068 = vsel %vm6056, %v2071, %v2701
      %v6069 = vsel %vm6056, %v2078, %v2703
      %v6070 = vsel %vm6056, %v2085, %v2705
      %v6071 = vsel %vm6056, %v2092, %v2707
      %v6072 = vsel %vm6056, %v2099, %v2709
      %v6073 = vsel %vm6056, %v2106, %v2711
      %v6074 = vsel %vm6056, %v2113, %v2713
      %v6075 = vsel %vm6056, %v2120, %v2715
      %v6076 = vsel %vm6056, %v2127, %v2717
      %v6077 = vsel %vm6056, %v2134, %v2719
      %v6078 = vsel %vm6056, %v2141, %v2721
      %v6079 = vsel %vm6056, %v2148, %v2723
      %v6080 = vsel %vm6056, %v2155, %v2725
      %v6081 = vsel %vm6056, %v2162, %v2727
      %v6082 = vsel %vm6056, %v2169, %v2729
      %v6083 = vsel %vm6056, %v2176, %v2731
      %v6084 = vsel %vm6056, %v2183, %v2733
      %v6085 = vsel %vm6056, %v2190, %v2735
      %v6086 = vsel %vm6056, %v2197, %v2737
      %vm6087 = vcmask 48128
      %v6088 = vsel %vm6087, %v6057, %v2994
      %v6089 = vsel %vm6087, %v6058, %v2996
      %v6090 = vsel %vm6087, %v6059, %v2998
      %v6091 = vsel %vm6087, %v6060, %v3000
      %v6092 = vsel %vm6087, %v6061, %v3002
      %v6093 = vsel %vm6087, %v6062, %v3004
      %v6094 = vsel %vm6087, %v6063, %v3006
      %v6095 = vsel %vm6087, %v6064, %v3008
      %v6096 = vsel %vm6087, %v6065, %v3010
      %v6097 = vsel %vm6087, %v6066, %v3012
      %v6098 = vsel %vm6087, %v6067, %v3014
      %v6099 = vsel %vm6087, %v6068, %v3016
      %v6100 = vsel %vm6087, %v6069, %v3018
      %v6101 = vsel %vm6087, %v6070, %v3020
      %v6102 = vsel %vm6087, %v6071, %v3022
      %v6103 = vsel %vm6087, %v6072, %v3024
      %v6104 = vsel %vm6087, %v6073, %v3026
      %v6105 = vsel %vm6087, %v6074, %v3028
      %v6106 = vsel %vm6087, %v6075, %v3030
      %v6107 = vsel %vm6087, %v6076, %v3032
      %v6108 = vsel %vm6087, %v6077, %v3034
      %v6109 = vsel %vm6087, %v6078, %v3036
      %v6110 = vsel %vm6087, %v6079, %v3038
      %v6111 = vsel %vm6087, %v6080, %v3040
      %v6112 = vsel %vm6087, %v6081, %v3042
      %v6113 = vsel %vm6087, %v6082, %v3044
      %v6114 = vsel %vm6087, %v6083, %v3046
      %v6115 = vsel %vm6087, %v6084, %v3048
      %v6116 = vsel %vm6087, %v6085, %v3050
      %v6117 = vsel %vm6087, %v6086, %v3052
      %vm6118 = vcmask 72704
      %v6119 = vsel %vm6118, %v6088, %v3309
      %v6120 = vsel %vm6118, %v6089, %v3311
      %v6121 = vsel %vm6118, %v6090, %v3313
      %v6122 = vsel %vm6118, %v6091, %v3315
      %v6123 = vsel %vm6118, %v6092, %v3317
      %v6124 = vsel %vm6118, %v6093, %v3319
      %v6125 = vsel %vm6118, %v6094, %v3321
      %v6126 = vsel %vm6118, %v6095, %v3323
      %v6127 = vsel %vm6118, %v6096, %v3325
      %v6128 = vsel %vm6118, %v6097, %v3327
      %v6129 = vsel %vm6118, %v6098, %v3329
      %v6130 = vsel %vm6118, %v6099, %v3331
      %v6131 = vsel %vm6118, %v6100, %v3333
      %v6132 = vsel %vm6118, %v6101, %v3335
      %v6133 = vsel %vm6118, %v6102, %v3337
      %v6134 = vsel %vm6118, %v6103, %v3339
      %v6135 = vsel %vm6118, %v6104, %v3341
      %v6136 = vsel %vm6118, %v6105, %v3343
      %v6137 = vsel %vm6118, %v6106, %v3345
      %v6138 = vsel %vm6118, %v6107, %v3347
      %v6139 = vsel %vm6118, %v6108, %v3349
      %v6140 = vsel %vm6118, %v6109, %v3351
      %v6141 = vsel %vm6118, %v6110, %v3353
      %v6142 = vsel %vm6118, %v6111, %v3355
      %v6143 = vsel %vm6118, %v6112, %v3357
      %v6144 = vsel %vm6118, %v6113, %v3359
      %v6145 = vsel %vm6118, %v6114, %v3361
      %v6146 = vsel %vm6118, %v6115, %v3363
      %v6147 = vsel %vm6118, %v6116, %v3365
      %v6148 = vsel %vm6118, %v6117, %v3367
      %vm6149 = vcmask 97280
      %v6150 = vsel %vm6149, %v6119, %v3879
      %v6151 = vsel %vm6149, %v6120, %v3881
      %v6152 = vsel %vm6149, %v6119, %v3883
      %v6153 = vsel %vm6149, %v6120, %v3885
      %v6154 = vsel %vm6149, %v6121, %v3887
      %v6155 = vsel %vm6149, %v6122, %v3889
      %v6156 = vsel %vm6149, %v6123, %v3891
      %v6157 = vsel %vm6149, %v6124, %v3893
      %v6158 = vsel %vm6149, %v6125, %v3895
      %v6159 = vsel %vm6149, %v6126, %v3897
      %v6160 = vsel %vm6149, %v6127, %v3899
      %v6161 = vsel %vm6149, %v6128, %v3901
      %v6162 = vsel %vm6149, %v6129, %v3903
      %v6163 = vsel %vm6149, %v6130, %v3905
      %v6164 = vsel %vm6149, %v6131, %v3907
      %v6165 = vsel %vm6149, %v6132, %v3909
      %v6166 = vsel %vm6149, %v6133, %v3911
      %v6167 = vsel %vm6149, %v6134, %v3913
      %v6168 = vsel %vm6149, %v6135, %v3915
      %v6169 = vsel %vm6149, %v6136, %v3917
      %v6170 = vsel %vm6149, %v6137, %v3919
      %v6171 = vsel %vm6149, %v6138, %v3921
      %v6172 = vsel %vm6149, %v6139, %v3923
      %v6173 = vsel %vm6149, %v6140, %v3925
      %v6174 = vsel %vm6149, %v6141, %v3927
      %v6175 = vsel %vm6149, %v6142, %v3929
      %v6176 = vsel %vm6149, %v6143, %v3931
      %v6177 = vsel %vm6149, %v6144, %v3933
      %v6178 = vsel %vm6149, %v6145, %v3935
      %v6179 = vsel %vm6149, %v6146, %v3937
      %v6180 = vsel %vm6149, %v6147, %v3939
      %v6181 = vsel %vm6149, %v6148, %v3941
      %vm6182 = vcmask 121856
      %v6183 = vsel %vm6182, %v6150, %v4455
      %v6184 = vsel %vm6182, %v6151, %v4457
      %v6185 = vsel %vm6182, %v6152, %v4459
      %v6186 = vsel %vm6182, %v6153, %v4461
      %v6187 = vsel %vm6182, %v6154, %v4463
      %v6188 = vsel %vm6182, %v6155, %v4465
      %v6189 = vsel %vm6182, %v6156, %v4467
      %v6190 = vsel %vm6182, %v6157, %v4469
      %v6191 = vsel %vm6182, %v6158, %v4471
      %v6192 = vsel %vm6182, %v6159, %v4473
      %v6193 = vsel %vm6182, %v6160, %v4475
      %v6194 = vsel %vm6182, %v6161, %v4477
      %v6195 = vsel %vm6182, %v6162, %v4479
      %v6196 = vsel %vm6182, %v6163, %v4481
      %v6197 = vsel %vm6182, %v6164, %v4483
      %v6198 = vsel %vm6182, %v6165, %v4485
      %v6199 = vsel %vm6182, %v6166, %v4487
      %v6200 = vsel %vm6182, %v6167, %v4489
      %v6201 = vsel %vm6182, %v6168, %v4491
      %v6202 = vsel %vm6182, %v6169, %v4493
      %v6203 = vsel %vm6182, %v6170, %v4495
      %v6204 = vsel %vm6182, %v6171, %v4497
      %v6205 = vsel %vm6182, %v6172, %v4499
      %v6206 = vsel %vm6182, %v6173, %v4501
      %v6207 = vsel %vm6182, %v6174, %v4503
      %v6208 = vsel %vm6182, %v6175, %v4505
      %v6209 = vsel %vm6182, %v6176, %v4507
      %v6210 = vsel %vm6182, %v6177, %v4509
      %v6211 = vsel %vm6182, %v6178, %v4511
      %v6212 = vsel %vm6182, %v6179, %v4513
      %v6213 = vsel %vm6182, %v6180, %v4515
      %v6214 = vsel %vm6182, %v6181, %v4517
      %vm6215 = vcmask 146432
      %v6216 = vsel %vm6215, %v6183, %v4791
      %v6217 = vsel %vm6215, %v6184, %v4793
      %v6218 = vsel %vm6215, %v6185, %v4795
      %v6219 = vsel %vm6215, %v6186, %v4797
      %v6220 = vsel %vm6215, %v6187, %v4799
      %v6221 = vsel %vm6215, %v6188, %v4801
      %v6222 = vsel %vm6215, %v6189, %v4803
      %v6223 = vsel %vm6215, %v6190, %v4805
      %v6224 = vsel %vm6215, %v6191, %v4807
      %v6225 = vsel %vm6215, %v6192, %v4809
      %v6226 = vsel %vm6215, %v6193, %v4811
      %v6227 = vsel %vm6215, %v6194, %v4813
      %v6228 = vsel %vm6215, %v6195, %v4815
      %v6229 = vsel %vm6215, %v6196, %v4817
      %v6230 = vsel %vm6215, %v6197, %v4819
      %v6231 = vsel %vm6215, %v6198, %v4821
      %v6232 = vsel %vm6215, %v6199, %v4823
      %v6233 = vsel %vm6215, %v6200, %v4825
      %v6234 = vsel %vm6215, %v6201, %v4827
      %v6235 = vsel %vm6215, %v6202, %v4829
      %v6236 = vsel %vm6215, %v6203, %v4831
      %v6237 = vsel %vm6215, %v6204, %v4833
      %v6238 = vsel %vm6215, %v6205, %v4835
      %v6239 = vsel %vm6215, %v6206, %v4837
      %v6240 = vsel %vm6215, %v6207, %v4839
      %v6241 = vsel %vm6215, %v6208, %v4841
      %v6242 = vsel %vm6215, %v6209, %v4843
      %v6243 = vsel %vm6215, %v6210, %v4845
      %v6244 = vsel %vm6215, %v6211, %v4847
      %v6245 = vsel %vm6215, %v6212, %v4849
      %v6246 = vsel %vm6215, %v6213, %v4851
      %v6247 = vsel %vm6215, %v6214, %v4853
      %vm6248 = vcmask 171008
      %v6249 = vsel %vm6248, %v6216, %v5127
      %v6250 = vsel %vm6248, %v6217, %v5129
      %v6251 = vsel %vm6248, %v6218, %v5131
      %v6252 = vsel %vm6248, %v6219, %v5133
      %v6253 = vsel %vm6248, %v6220, %v5135
      %v6254 = vsel %vm6248, %v6221, %v5137
      %v6255 = vsel %vm6248, %v6222, %v5139
      %v6256 = vsel %vm6248, %v6223, %v5141
      %v6257 = vsel %vm6248, %v6224, %v5143
      %v6258 = vsel %vm6248, %v6225, %v5145
      %v6259 = vsel %vm6248, %v6226, %v5147
      %v6260 = vsel %vm6248, %v6227, %v5149
      %v6261 = vsel %vm6248, %v6228, %v5151
      %v6262 = vsel %vm6248, %v6229, %v5153
      %v6263 = vsel %vm6248, %v6230, %v5155
      %v6264 = vsel %vm6248, %v6231, %v5157
      %v6265 = vsel %vm6248, %v6232, %v5159
      %v6266 = vsel %vm6248, %v6233, %v5161
      %v6267 = vsel %vm6248, %v6234, %v5163
      %v6268 = vsel %vm6248, %v6235, %v5165
      %v6269 = vsel %vm6248, %v6236, %v5167
      %v6270 = vsel %vm6248, %v6237, %v5169
      %v6271 = vsel %vm6248, %v6238, %v5171
      %v6272 = vsel %vm6248, %v6239, %v5173
      %v6273 = vsel %vm6248, %v6240, %v5175
      %v6274 = vsel %vm6248, %v6241, %v5177
      %v6275 = vsel %vm6248, %v6242, %v5179
      %v6276 = vsel %vm6248, %v6243, %v5181
      %v6277 = vsel %vm6248, %v6244, %v5183
      %v6278 = vsel %vm6248, %v6245, %v5185
      %v6279 = vsel %vm6248, %v6246, %v5187
      %v6280 = vsel %vm6248, %v6247, %v5189
      %vm6281 = vcmask 195584
      %v6282 = vsel %vm6281, %v6249, %v5253
      %v6283 = vsel %vm6281, %v6250, %v5255
      %v6284 = vsel %vm6281, %v6251, %v5257
      %v6285 = vsel %vm6281, %v6252, %v5259
      %v6286 = vsel %vm6281, %v6253, %v5261
      %v6287 = vsel %vm6281, %v6254, %v5263
      %v6288 = vsel %vm6281, %v6255, %v5265
      %v6289 = vsel %vm6281, %v6256, %v5267
      %v6290 = vsel %vm6281, %v6257, %v5269
      %v6291 = vsel %vm6281, %v6258, %v5271
      %v6292 = vsel %vm6281, %v6259, %v5273
      %v6293 = vsel %vm6281, %v6260, %v5275
      %v6294 = vsel %vm6281, %v6261, %v5277
      %v6295 = vsel %vm6281, %v6262, %v5279
      %v6296 = vsel %vm6281, %v6263, %v5281
      %v6297 = vsel %vm6281, %v6264, %v5283
      %v6298 = vsel %vm6281, %v6265, %v5285
      %v6299 = vsel %vm6281, %v6266, %v5287
      %v6300 = vsel %vm6281, %v6267, %v5289
      %v6301 = vsel %vm6281, %v6268, %v5291
      %v6302 = vsel %vm6281, %v6269, %v5293
      %v6303 = vsel %vm6281, %v6270, %v5295
      %v6304 = vsel %vm6281, %v6271, %v5297
      %v6305 = vsel %vm6281, %v6272, %v5299
      %v6306 = vsel %vm6281, %v6273, %v5301
      %v6307 = vsel %vm6281, %v6274, %v5303
      %v6308 = vsel %vm6281, %v6275, %v5305
      %v6309 = vsel %vm6281, %v6276, %v5307
      %v6310 = vsel %vm6281, %v6277, %v5309
      %v6311 = vsel %vm6281, %v6278, %v5311
      %v6312 = vsel %vm6281, %v6279, %v5313
      %v6313 = vsel %vm6281, %v6280, %v5315
      %vm6314 = vcmask 220160
      %v6315 = vsel %vm6314, %v6282, %v5379
      %v6316 = vsel %vm6314, %v6283, %v5381
      %v6317 = vsel %vm6314, %v6284, %v5383
      %v6318 = vsel %vm6314, %v6285, %v5385
      %v6319 = vsel %vm6314, %v6286, %v5387
      %v6320 = vsel %vm6314, %v6287, %v5389
      %v6321 = vsel %vm6314, %v6288, %v5391
      %v6322 = vsel %vm6314, %v6289, %v5393
      %v6323 = vsel %vm6314, %v6290, %v5395
      %v6324 = vsel %vm6314, %v6291, %v5397
      %v6325 = vsel %vm6314, %v6292, %v5399
      %v6326 = vsel %vm6314, %v6293, %v5401
      %v6327 = vsel %vm6314, %v6294, %v5403
      %v6328 = vsel %vm6314, %v6295, %v5405
      %v6329 = vsel %vm6314, %v6296, %v5407
      %v6330 = vsel %vm6314, %v6297, %v5409
      %v6331 = vsel %vm6314, %v6298, %v5411
      %v6332 = vsel %vm6314, %v6299, %v5413
      %v6333 = vsel %vm6314, %v6300, %v5415
      %v6334 = vsel %vm6314, %v6301, %v5417
      %v6335 = vsel %vm6314, %v6302, %v5419
      %v6336 = vsel %vm6314, %v6303, %v5421
      %v6337 = vsel %vm6314, %v6304, %v5423
      %v6338 = vsel %vm6314, %v6305, %v5425
      %v6339 = vsel %vm6314, %v6306, %v5427
      %v6340 = vsel %vm6314, %v6307, %v5429
      %v6341 = vsel %vm6314, %v6308, %v5431
      %v6342 = vsel %vm6314, %v6309, %v5433
      %v6343 = vsel %vm6314, %v6310, %v5435
      %v6344 = vsel %vm6314, %v6311, %v5437
      %v6345 = vsel %vm6314, %v6312, %v5439
      %v6346 = vsel %vm6314, %v6313, %v5441
      %vm6347 = vcmask 244736
      %v6348 = vsel %vm6347, %v6315, %v5490
      %v6349 = vsel %vm6347, %v6316, %v5492
      %v6350 = vsel %vm6347, %v6317, %v5494
      %v6351 = vsel %vm6347, %v6318, %v5496
      %v6352 = vsel %vm6347, %v6319, %v5498
      %v6353 = vsel %vm6347, %v6320, %v5500
      %v6354 = vsel %vm6347, %v6321, %v5502
      %v6355 = vsel %vm6347, %v6322, %v5504
      %v6356 = vsel %vm6347, %v6323, %v5506
      %v6357 = vsel %vm6347, %v6324, %v5508
      %v6358 = vsel %vm6347, %v6325, %v5510
      %v6359 = vsel %vm6347, %v6326, %v5512
      %v6360 = vsel %vm6347, %v6327, %v5514
      %v6361 = vsel %vm6347, %v6328, %v5516
      %v6362 = vsel %vm6347, %v6329, %v5518
      %v6363 = vsel %vm6347, %v6330, %v5520
      %v6364 = vsel %vm6347, %v6331, %v5522
      %v6365 = vsel %vm6347, %v6332, %v5524
      %v6366 = vsel %vm6347, %v6333, %v5526
      %v6367 = vsel %vm6347, %v6334, %v5528
      %v6368 = vsel %vm6347, %v6335, %v5530
      %v6369 = vsel %vm6347, %v6336, %v5532
      %v6370 = vsel %vm6347, %v6337, %v5534
      %v6371 = vsel %vm6347, %v6338, %v5536
      %v6372 = vsel %vm6347, %v6339, %v5538
      %v6373 = vsel %vm6347, %v6340, %v5540
      %v6374 = vsel %vm6347, %v6341, %v5542
      %v6375 = vsel %vm6347, %v6342, %v5544
      %v6376 = vsel %vm6347, %v6343, %v5546
      %v6377 = vsel %vm6347, %v6344, %v5548
      %v6378 = vsel %vm6347, %v6345, %v5550
      %v6379 = vsel %vm6347, %v6346, %v5552
      %vm6380 = vcmask 269312
      %v6381 = vsel %vm6380, %v6348, %v5601
      %v6382 = vsel %vm6380, %v6349, %v5603
      %v6383 = vsel %vm6380, %v6350, %v5605
      %v6384 = vsel %vm6380, %v6351, %v5607
      %v6385 = vsel %vm6380, %v6352, %v5609
      %v6386 = vsel %vm6380, %v6353, %v5611
      %v6387 = vsel %vm6380, %v6354, %v5613
      %v6388 = vsel %vm6380, %v6355, %v5615
      %v6389 = vsel %vm6380, %v6356, %v5617
      %v6390 = vsel %vm6380, %v6357, %v5619
      %v6391 = vsel %vm6380, %v6358, %v5621
      %v6392 = vsel %vm6380, %v6359, %v5623
      %v6393 = vsel %vm6380, %v6360, %v5625
      %v6394 = vsel %vm6380, %v6361, %v5627
      %v6395 = vsel %vm6380, %v6362, %v5629
      %v6396 = vsel %vm6380, %v6363, %v5631
      %v6397 = vsel %vm6380, %v6364, %v5633
      %v6398 = vsel %vm6380, %v6365, %v5635
      %v6399 = vsel %vm6380, %v6366, %v5637
      %v6400 = vsel %vm6380, %v6367, %v5639
      %v6401 = vsel %vm6380, %v6368, %v5641
      %v6402 = vsel %vm6380, %v6369, %v5643
      %v6403 = vsel %vm6380, %v6370, %v5645
      %v6404 = vsel %vm6380, %v6371, %v5647
      %v6405 = vsel %vm6380, %v6372, %v5649
      %v6406 = vsel %vm6380, %v6373, %v5651
      %v6407 = vsel %vm6380, %v6374, %v5653
      %v6408 = vsel %vm6380, %v6375, %v5655
      %v6409 = vsel %vm6380, %v6376, %v5657
      %v6410 = vsel %vm6380, %v6377, %v5659
      %v6411 = vsel %vm6380, %v6378, %v5661
      %v6412 = vsel %vm6380, %v6379, %v5663
      %vm6413 = vcmask 293888
      %v6414 = vsel %vm6413, %v6381, %v5697
      %v6415 = vsel %vm6413, %v6382, %v5699
      %v6416 = vsel %vm6413, %v6383, %v5701
      %v6417 = vsel %vm6413, %v6384, %v5703
      %v6418 = vsel %vm6413, %v6385, %v5705
      %v6419 = vsel %vm6413, %v6386, %v5707
      %v6420 = vsel %vm6413, %v6387, %v5709
      %v6421 = vsel %vm6413, %v6388, %v5711
      %v6422 = vsel %vm6413, %v6389, %v5713
      %v6423 = vsel %vm6413, %v6390, %v5715
      %v6424 = vsel %vm6413, %v6391, %v5717
      %v6425 = vsel %vm6413, %v6392, %v5719
      %v6426 = vsel %vm6413, %v6393, %v5721
      %v6427 = vsel %vm6413, %v6394, %v5723
      %v6428 = vsel %vm6413, %v6395, %v5725
      %v6429 = vsel %vm6413, %v6396, %v5727
      %v6430 = vsel %vm6413, %v6397, %v5729
      %v6431 = vsel %vm6413, %v6398, %v5731
      %v6432 = vsel %vm6413, %v6399, %v5733
      %v6433 = vsel %vm6413, %v6400, %v5735
      %v6434 = vsel %vm6413, %v6401, %v5737
      %v6435 = vsel %vm6413, %v6402, %v5739
      %v6436 = vsel %vm6413, %v6403, %v5741
      %v6437 = vsel %vm6413, %v6404, %v5743
      %v6438 = vsel %vm6413, %v6405, %v5745
      %v6439 = vsel %vm6413, %v6406, %v5747
      %v6440 = vsel %vm6413, %v6407, %v5749
      %v6441 = vsel %vm6413, %v6408, %v5751
      %v6442 = vsel %vm6413, %v6409, %v5753
      %v6443 = vsel %vm6413, %v6410, %v5755
      %v6444 = vsel %vm6413, %v6411, %v5753
      %v6445 = vsel %vm6413, %v6412, %v5755
      %vm6446 = vcmask 318464
      %v6447 = vsel %vm6446, %v6414, %v5787
      %v6448 = vsel %vm6446, %v6415, %v5789
      %v6449 = vsel %vm6446, %v6416, %v5791
      %v6450 = vsel %vm6446, %v6417, %v5793
      %v6451 = vsel %vm6446, %v6418, %v5795
      %v6452 = vsel %vm6446, %v6419, %v5797
      %v6453 = vsel %vm6446, %v6420, %v5799
      %v6454 = vsel %vm6446, %v6421, %v5801
      %v6455 = vsel %vm6446, %v6422, %v5803
      %v6456 = vsel %vm6446, %v6423, %v5805
      %v6457 = vsel %vm6446, %v6424, %v5807
      %v6458 = vsel %vm6446, %v6425, %v5809
      %v6459 = vsel %vm6446, %v6426, %v5811
      %v6460 = vsel %vm6446, %v6427, %v5813
      %v6461 = vsel %vm6446, %v6428, %v5815
      %v6462 = vsel %vm6446, %v6429, %v5817
      %v6463 = vsel %vm6446, %v6430, %v5819
      %v6464 = vsel %vm6446, %v6431, %v5821
      %v6465 = vsel %vm6446, %v6432, %v5823
      %v6466 = vsel %vm6446, %v6433, %v5825
      %v6467 = vsel %vm6446, %v6434, %v5827
      %v6468 = vsel %vm6446, %v6435, %v5829
      %v6469 = vsel %vm6446, %v6436, %v5831
      %v6470 = vsel %vm6446, %v6437, %v5833
      %v6471 = vsel %vm6446, %v6438, %v5835
      %v6472 = vsel %vm6446, %v6439, %v5837
      %v6473 = vsel %vm6446, %v6440, %v5839
      %v6474 = vsel %vm6446, %v6441, %v5841
      %v6475 = vsel %vm6446, %v6442, %v5843
      %v6476 = vsel %vm6446, %v6443, %v5845
      %v6477 = vsel %vm6446, %v6444, %v5843
      %v6478 = vsel %vm6446, %v6445, %v5845
      %vm6479 = vcmask 343040
      %v6480 = vsel %vm6479, %v6447, %v5877
      %v6481 = vsel %vm6479, %v6448, %v5879
      %v6482 = vsel %vm6479, %v6449, %v5881
      %v6483 = vsel %vm6479, %v6450, %v5883
      %v6484 = vsel %vm6479, %v6451, %v5885
      %v6485 = vsel %vm6479, %v6452, %v5887
      %v6486 = vsel %vm6479, %v6453, %v5889
      %v6487 = vsel %vm6479, %v6454, %v5891
      %v6488 = vsel %vm6479, %v6455, %v5893
      %v6489 = vsel %vm6479, %v6456, %v5895
      %v6490 = vsel %vm6479, %v6457, %v5897
      %v6491 = vsel %vm6479, %v6458, %v5899
      %v6492 = vsel %vm6479, %v6459, %v5901
      %v6493 = vsel %vm6479, %v6460, %v5903
      %v6494 = vsel %vm6479, %v6461, %v5905
      %v6495 = vsel %vm6479, %v6462, %v5907
      %v6496 = vsel %vm6479, %v6463, %v5909
      %v6497 = vsel %vm6479, %v6464, %v5911
      %v6498 = vsel %vm6479, %v6465, %v5913
      %v6499 = vsel %vm6479, %v6466, %v5915
      %v6500 = vsel %vm6479, %v6467, %v5917
      %v6501 = vsel %vm6479, %v6468, %v5919
      %v6502 = vsel %vm6479, %v6469, %v5921
      %v6503 = vsel %vm6479, %v6470, %v5923
      %v6504 = vsel %vm6479, %v6471, %v5925
      %v6505 = vsel %vm6479, %v6472, %v5927
      %v6506 = vsel %vm6479, %v6473, %v5929
      %v6507 = vsel %vm6479, %v6474, %v5931
      %v6508 = vsel %vm6479, %v6475, %v5933
      %v6509 = vsel %vm6479, %v6476, %v5935
      %v6510 = vsel %vm6479, %v6477, %v5933
      %v6511 = vsel %vm6479, %v6478, %v5935
      %vm6512 = vcmask 367616
      %v6513 = vsel %vm6512, %v6480, %v5967
      %v6514 = vsel %vm6512, %v6481, %v5969
      %v6515 = vsel %vm6512, %v6482, %v5971
      %v6516 = vsel %vm6512, %v6483, %v5973
      %v6517 = vsel %vm6512, %v6484, %v5975
      %v6518 = vsel %vm6512, %v6485, %v5977
      %v6519 = vsel %vm6512, %v6486, %v5979
      %v6520 = vsel %vm6512, %v6487, %v5981
      %v6521 = vsel %vm6512, %v6488, %v5983
      %v6522 = vsel %vm6512, %v6489, %v5985
      %v6523 = vsel %vm6512, %v6490, %v5987
      %v6524 = vsel %vm6512, %v6491, %v5989
      %v6525 = vsel %vm6512, %v6492, %v5991
      %v6526 = vsel %vm6512, %v6493, %v5993
      %v6527 = vsel %vm6512, %v6494, %v5995
      %v6528 = vsel %vm6512, %v6495, %v5997
      %v6529 = vsel %vm6512, %v6496, %v5999
      %v6530 = vsel %vm6512, %v6497, %v6001
      %v6531 = vsel %vm6512, %v6498, %v6003
      %v6532 = vsel %vm6512, %v6499, %v6005
      %v6533 = vsel %vm6512, %v6500, %v6007
      %v6534 = vsel %vm6512, %v6501, %v6009
      %v6535 = vsel %vm6512, %v6502, %v6011
      %v6536 = vsel %vm6512, %v6503, %v6013
      %v6537 = vsel %vm6512, %v6504, %v6015
      %v6538 = vsel %vm6512, %v6505, %v6017
      %v6539 = vsel %vm6512, %v6506, %v6019
      %v6540 = vsel %vm6512, %v6507, %v6021
      %v6541 = vsel %vm6512, %v6508, %v6023
      %v6542 = vsel %vm6512, %v6509, %v6025
      %v6543 = vsel %vm6512, %v6510, %v6023
      %v6544 = vsel %vm6512, %v6511, %v6025
      %v6546 = vperm.slane %v683, 0
      %vm6548 = vcmask 392192
      %v6550 = vsel %vm6548, %v6513, 0
      %v6553 = vsel %vm6548, %v6514, 0
      %v6556 = vsel %vm6548, %v6515, 0
      %v6559 = vsel %vm6548, %v6516, 0
      %v6562 = vsel %vm6548, %v6517, 0
      %v6565 = vsel %vm6548, %v6518, 0
      %v6568 = vsel %vm6548, %v6519, 0
      %v6571 = vsel %vm6548, %v6520, 0
      %v6574 = vsel %vm6548, %v6521, 0
      %v6577 = vsel %vm6548, %v6522, 0
      %v6580 = vsel %vm6548, %v6523, 0
      %v6583 = vsel %vm6548, %v6524, 0
      %v6586 = vsel %vm6548, %v6525, 0
      %v6589 = vsel %vm6548, %v6526, 0
      %v6592 = vsel %vm6548, %v6527, 0
      %v6595 = vsel %vm6548, %v6528, 0
      %v6598 = vsel %vm6548, %v6529, 0
      %v6601 = vsel %vm6548, %v6530, 0
      %v6604 = vsel %vm6548, %v6531, 0
      %v6607 = vsel %vm6548, %v6532, 0
      %v6610 = vsel %vm6548, %v6533, 0
      %v6613 = vsel %vm6548, %v6534, 0
      %v6616 = vsel %vm6548, %v6535, 0
      %v6619 = vsel %vm6548, %v6536, 0
      %v6622 = vsel %vm6548, %v6537, 0
      %v6625 = vsel %vm6548, %v6538, 0
      %v6628 = vsel %vm6548, %v6539, 0
      %v6631 = vsel %vm6548, %v6540, 0
      %v6634 = vsel %vm6548, %v6541, 0
      %v6637 = vsel %vm6548, %v6542, 0
      %v6640 = vsel %vm6548, %v6543, 0
      %v6643 = vsel %vm6548, %v6544, 0
      %6645 = vmatpush.msra.mxu0 0.0
      %6646 = vmatpush.msra.mxu0 0.0
      %6647 = vmatpush.msra.mxu0 0.0
      %6648 = vmatpush.msra.mxu0 0.0
      %6649 = vmatpush.msra.mxu0 0.0
      %6650 = vmatpush.msra.mxu0 0.0
      %6651 = vmatpush.msra.mxu0 0.0
      %6652 = vmatpush.msra.mxu0 0.0
      %6653 = vmatpush.msra.mxu0 0.0
      %6654 = vmatpush.msra.mxu0 0.0
      %6655 = vmatpush.msra.mxu0 %v682
      %6656 = vmatpush.msra.mxu0 %v681
      %6657 = vmatpush.msra.mxu0 %v680
      %6658 = vmatpush.msra.mxu0 %v679
      %6659 = vmatpush.msra.mxu0 %v678
      %6660 = vmatpush.msra.mxu0 %v677
      %6661 = vmatmul.f32.gmra.mxu0 %v6550
      %v6662 = vpop.f32.mrf.mxu0
      %v6663 = vadd.f32 %v6546, %v6662
      %6664 = vmatmul.f32.gmra.mxu0 %v6553
      %v6665 = vpop.f32.mrf.mxu0
      %v6666 = vadd.f32 %v6546, %v6665
      %6667 = vmatmul.f32.gmra.mxu0 %v6556
      %v6668 = vpop.f32.mrf.mxu0
      %v6669 = vadd.f32 %v6546, %v6668
      %6670 = vmatmul.f32.gmra.mxu0 %v6559
      %v6671 = vpop.f32.mrf.mxu0
      %v6672 = vadd.f32 %v6546, %v6671
      %6673 = vmatmul.f32.gmra.mxu0 %v6562
      %v6674 = vpop.f32.mrf.mxu0
      %v6675 = vadd.f32 %v6546, %v6674
      %6676 = vmatmul.f32.gmra.mxu0 %v6565
      %v6677 = vpop.f32.mrf.mxu0
      %v6678 = vadd.f32 %v6546, %v6677
      %6679 = vmatmul.f32.gmra.mxu0 %v6568
      %v6680 = vpop.f32.mrf.mxu0
      %v6681 = vadd.f32 %v6546, %v6680
      %6682 = vmatmul.f32.gmra.mxu0 %v6571
      %v6683 = vpop.f32.mrf.mxu0
      %v6684 = vadd.f32 %v6546, %v6683
      %6685 = vmatmul.f32.gmra.mxu0 %v6574
      %v6686 = vpop.f32.mrf.mxu0
      %v6687 = vadd.f32 %v6546, %v6686
      %6688 = vmatmul.f32.gmra.mxu0 %v6577
      %v6689 = vpop.f32.mrf.mxu0
      %v6690 = vadd.f32 %v6546, %v6689
      %6691 = vmatmul.f32.gmra.mxu0 %v6580
      %v6692 = vpop.f32.mrf.mxu0
      %v6693 = vadd.f32 %v6546, %v6692
      %6694 = vmatmul.f32.gmra.mxu0 %v6583
      %v6695 = vpop.f32.mrf.mxu0
      %v6696 = vadd.f32 %v6546, %v6695
      %6697 = vmatmul.f32.gmra.mxu0 %v6586
      %v6698 = vpop.f32.mrf.mxu0
      %v6699 = vadd.f32 %v6546, %v6698
      %6700 = vmatmul.f32.gmra.mxu0 %v6589
      %v6701 = vpop.f32.mrf.mxu0
      %v6702 = vadd.f32 %v6546, %v6701
      %6703 = vmatmul.f32.gmra.mxu0 %v6592
      %v6704 = vpop.f32.mrf.mxu0
      %v6705 = vadd.f32 %v6546, %v6704
      %6706 = vmatmul.f32.gmra.mxu0 %v6595
      %v6707 = vpop.f32.mrf.mxu0
      %v6708 = vadd.f32 %v6546, %v6707
      %6709 = vmatmul.f32.gmra.mxu0 %v6598
      %v6710 = vpop.f32.mrf.mxu0
      %v6711 = vadd.f32 %v6546, %v6710
      %6712 = vmatmul.f32.gmra.mxu0 %v6601
      %v6713 = vpop.f32.mrf.mxu0
      %v6714 = vadd.f32 %v6546, %v6713
      %6715 = vmatmul.f32.gmra.mxu0 %v6604
      %v6716 = vpop.f32.mrf.mxu0
      %v6717 = vadd.f32 %v6546, %v6716
      %6718 = vmatmul.f32.gmra.mxu0 %v6607
      %v6719 = vpop.f32.mrf.mxu0
      %v6720 = vadd.f32 %v6546, %v6719
      %6721 = vmatmul.f32.gmra.mxu0 %v6610
      %v6722 = vpop.f32.mrf.mxu0
      %v6723 = vadd.f32 %v6546, %v6722
      %6724 = vmatmul.f32.gmra.mxu0 %v6613
      %v6725 = vpop.f32.mrf.mxu0
      %v6726 = vadd.f32 %v6546, %v6725
      %6727 = vmatmul.f32.gmra.mxu0 %v6616
      %v6728 = vpop.f32.mrf.mxu0
      %v6729 = vadd.f32 %v6546, %v6728
      %6730 = vmatmul.f32.gmra.mxu0 %v6619
      %v6731 = vpop.f32.mrf.mxu0
      %v6732 = vadd.f32 %v6546, %v6731
      %6733 = vmatmul.f32.gmra.mxu0 %v6622
      %v6734 = vpop.f32.mrf.mxu0
      %v6735 = vadd.f32 %v6546, %v6734
      %6736 = vmatmul.f32.gmra.mxu0 %v6625
      %v6737 = vpop.f32.mrf.mxu0
      %v6738 = vadd.f32 %v6546, %v6737
      %6739 = vmatmul.f32.gmra.mxu0 %v6628
      %v6740 = vpop.f32.mrf.mxu0
      %v6741 = vadd.f32 %v6546, %v6740
      %6742 = vmatmul.f32.gmra.mxu0 %v6631
      %v6743 = vpop.f32.mrf.mxu0
      %v6744 = vadd.f32 %v6546, %v6743
      %6745 = vmatmul.f32.gmra.mxu0 %v6634
      %v6746 = vpop.f32.mrf.mxu0
      %v6747 = vadd.f32 %v6546, %v6746
      %6748 = vmatmul.f32.gmra.mxu0 %v6637
      %v6749 = vpop.f32.mrf.mxu0
      %v6750 = vadd.f32 %v6546, %v6749
      %6751 = vmatmul.f32.gmra.mxu0 %v6640
      %v6752 = vpop.f32.mrf.mxu0
      %v6753 = vadd.f32 %v6546, %v6752
      %6754 = vmatmul.f32.gmra.mxu0 %v6643
      %v6755 = vpop.f32.mrf.mxu0
      %v6756 = vadd.f32 %v6546, %v6755
      %6757 = vdwg.mxu0
      %vm6758 = vcmp.gt.f32.partialorder %v6663, 0.0
      %vm6759 = vcmp.gt.f32.partialorder %v6666, 0.0
      %vm6760 = vcmp.gt.f32.partialorder %v6669, 0.0
      %vm6761 = vcmp.gt.f32.partialorder %v6672, 0.0
      %vm6762 = vcmp.gt.f32.partialorder %v6675, 0.0
      %vm6763 = vcmp.gt.f32.partialorder %v6678, 0.0
      %vm6764 = vcmp.gt.f32.partialorder %v6681, 0.0
      %vm6765 = vcmp.gt.f32.partialorder %v6684, 0.0
      %vm6766 = vcmp.gt.f32.partialorder %v6687, 0.0
      %vm6767 = vcmp.gt.f32.partialorder %v6690, 0.0
      %vm6768 = vcmp.gt.f32.partialorder %v6693, 0.0
      %vm6769 = vcmp.gt.f32.partialorder %v6696, 0.0
      %vm6770 = vcmp.gt.f32.partialorder %v6699, 0.0
      %vm6771 = vcmp.gt.f32.partialorder %v6702, 0.0
      %vm6772 = vcmp.gt.f32.partialorder %v6705, 0.0
      %vm6773 = vcmp.gt.f32.partialorder %v6708, 0.0
      %vm6774 = vcmp.gt.f32.partialorder %v6711, 0.0
      %vm6775 = vcmp.gt.f32.partialorder %v6714, 0.0
      %vm6776 = vcmp.gt.f32.partialorder %v6717, 0.0
      %vm6777 = vcmp.gt.f32.partialorder %v6720, 0.0
      %vm6778 = vcmp.gt.f32.partialorder %v6723, 0.0
      %vm6779 = vcmp.gt.f32.partialorder %v6726, 0.0
      %vm6780 = vcmp.gt.f32.partialorder %v6729, 0.0
      %vm6781 = vcmp.gt.f32.partialorder %v6732, 0.0
      %vm6782 = vcmp.gt.f32.partialorder %v6735, 0.0
      %vm6783 = vcmp.gt.f32.partialorder %v6738, 0.0
      %vm6784 = vcmp.gt.f32.partialorder %v6741, 0.0
      %vm6785 = vcmp.gt.f32.partialorder %v6744, 0.0
      %vm6786 = vcmp.gt.f32.partialorder %v6747, 0.0
      %vm6787 = vcmp.gt.f32.partialorder %v6750, 0.0
      %vm6788 = vcmp.gt.f32.partialorder %v6753, 0.0
      %vm6789 = vcmp.gt.f32.partialorder %v6756, 0.0
      %v6790 = vmul.f32 %v6663, 0.2
      %v6791 = vmul.f32 %v6666, 0.2
      %v6792 = vmul.f32 %v6669, 0.2
      %v6793 = vmul.f32 %v6672, 0.2
      %v6794 = vmul.f32 %v6675, 0.2
      %v6795 = vmul.f32 %v6678, 0.2
      %v6796 = vmul.f32 %v6681, 0.2
      %v6797 = vmul.f32 %v6684, 0.2
      %v6798 = vmul.f32 %v6687, 0.2
      %v6799 = vmul.f32 %v6690, 0.2
      %v6800 = vmul.f32 %v6693, 0.2
      %v6801 = vmul.f32 %v6696, 0.2
      %v6802 = vmul.f32 %v6699, 0.2
      %v6803 = vmul.f32 %v6702, 0.2
      %v6804 = vmul.f32 %v6705, 0.2
      %v6805 = vmul.f32 %v6708, 0.2
      %v6806 = vmul.f32 %v6711, 0.2
      %v6807 = vmul.f32 %v6714, 0.2
      %v6808 = vmul.f32 %v6717, 0.2
      %v6809 = vmul.f32 %v6720, 0.2
      %v6810 = vmul.f32 %v6723, 0.2
      %v6811 = vmul.f32 %v6726, 0.2
      %v6812 = vmul.f32 %v6729, 0.2
      %v6813 = vmul.f32 %v6732, 0.2
      %v6814 = vmul.f32 %v6735, 0.2
      %v6815 = vmul.f32 %v6738, 0.2
      %v6816 = vmul.f32 %v6741, 0.2
      %v6817 = vmul.f32 %v6744, 0.2
      %v6818 = vmul.f32 %v6747, 0.2
      %v6819 = vmul.f32 %v6750, 0.2
      %v6820 = vmul.f32 %v6753, 0.2
      %v6821 = vmul.f32 %v6756, 0.2
      %v6822 = vsel %vm6758, %v6663, %v6790
      %v6823 = vsel %vm6759, %v6666, %v6791
      %v6824 = vsel %vm6760, %v6669, %v6792
      %v6825 = vsel %vm6761, %v6672, %v6793
      %v6826 = vsel %vm6762, %v6675, %v6794
      %v6827 = vsel %vm6763, %v6678, %v6795
      %v6828 = vsel %vm6764, %v6681, %v6796
      %v6829 = vsel %vm6765, %v6684, %v6797
      %v6830 = vsel %vm6766, %v6687, %v6798
      %v6831 = vsel %vm6767, %v6690, %v6799
      %v6832 = vsel %vm6768, %v6693, %v6800
      %v6833 = vsel %vm6769, %v6696, %v6801
      %v6834 = vsel %vm6770, %v6699, %v6802
      %v6835 = vsel %vm6771, %v6702, %v6803
      %v6836 = vsel %vm6772, %v6705, %v6804
      %v6837 = vsel %vm6773, %v6708, %v6805
      %v6838 = vsel %vm6774, %v6711, %v6806
      %v6839 = vsel %vm6775, %v6714, %v6807
      %v6840 = vsel %vm6776, %v6717, %v6808
      %v6841 = vsel %vm6777, %v6720, %v6809
      %v6842 = vsel %vm6778, %v6723, %v6810
      %v6843 = vsel %vm6779, %v6726, %v6811
      %v6844 = vsel %vm6780, %v6729, %v6812
      %v6845 = vsel %vm6781, %v6732, %v6813
      %v6846 = vsel %vm6782, %v6735, %v6814
      %v6847 = vsel %vm6783, %v6738, %v6815
      %v6848 = vsel %vm6784, %v6741, %v6816
      %v6849 = vsel %vm6785, %v6744, %v6817
      %v6850 = vsel %vm6786, %v6747, %v6818
      %v6851 = vsel %vm6787, %v6750, %v6819
      %v6852 = vsel %vm6788, %v6753, %v6820
      %v6853 = vsel %vm6789, %v6756, %v6821
      %v6854 = vld [vmem:[%s3] sm:$0xff]
      %v6855 = vld [vmem:[%s3 + $0x8] sm:$0xff]
      %v6856 = vld [vmem:[%s3 + $0x10] sm:$0xff]
      %v6857 = vld [vmem:[%s3 + $0x18] sm:$0xff]
      %v6858 = vld [vmem:[%s3 + $0x20] sm:$0xff]
      %v6859 = vld [vmem:[%s3 + $0x28] sm:$0xff]
      %v6860 = vld [vmem:[%s3 + $0x30] sm:$0xff]
      %v6861 = vld [vmem:[%s3 + $0x38] sm:$0xff]
      %v6862 = vld [vmem:[%s3 + $0x40] sm:$0xff]
      %v6863 = vld [vmem:[%s3 + $0x48] sm:$0xff]
      %v6864 = vld [vmem:[%s3 + $0x50] sm:$0xff]
      %v6865 = vld [vmem:[%s3 + $0x58] sm:$0xff]
      %v6866 = vld [vmem:[%s3 + $0x60] sm:$0xff]
      %v6867 = vld [vmem:[%s3 + $0x68] sm:$0xff]
      %v6868 = vld [vmem:[%s3 + $0x70] sm:$0xff]
      %v6869 = vld [vmem:[%s3 + $0x78] sm:$0xff]
      %v6870 = vld [vmem:[%s4] sm:$0x1]
      %v6871 = vld [vmem:[%s5] sm:$0x1]
      %v6872 = vld [vmem:[%s6] sm:$0x1]
      %v6889 = vrot.slane %v6824, 1
      %v6890 = vrot.slane %v6822, 1
      %v6891 = vrot.slane %v6826, 1
      %v6892 = vrot.slane %v6828, 1
      %v6893 = vrot.slane %v6830, 1
      %v6894 = vrot.slane %v6832, 1
      %v6895 = vrot.slane %v6834, 1
      %v6896 = vrot.slane %v6836, 1
      %v6897 = vrot.slane %v6838, 1
      %v6898 = vrot.slane %v6840, 1
      %v6899 = vrot.slane %v6842, 1
      %v6900 = vrot.slane %v6844, 1
      %v6901 = vrot.slane %v6846, 1
      %v6902 = vrot.slane %v6848, 1
      %v6903 = vrot.slane %v6850, 1
      %v6904 = vrot.slane %v6852, 1
      %v6937 = vrot.slane %v6824, 7
      %v6938 = vrot.slane %v6825, 7
      %v6939 = vsel %vm876, %v6937, %v6938
      %v6940 = vrot.slane %v6822, 7
      %v6941 = vrot.slane %v6823, 7
      %v6942 = vsel %vm876, %v6940, %v6941
      %v6943 = vrot.slane %v6826, 7
      %v6944 = vrot.slane %v6827, 7
      %v6945 = vsel %vm876, %v6943, %v6944
      %v6946 = vrot.slane %v6828, 7
      %v6947 = vrot.slane %v6829, 7
      %v6948 = vsel %vm876, %v6946, %v6947
      %v6949 = vrot.slane %v6830, 7
      %v6950 = vrot.slane %v6831, 7
      %v6951 = vsel %vm876, %v6949, %v6950
      %v6952 = vrot.slane %v6832, 7
      %v6953 = vrot.slane %v6833, 7
      %v6954 = vsel %vm876, %v6952, %v6953
      %v6955 = vrot.slane %v6834, 7
      %v6956 = vrot.slane %v6835, 7
      %v6957 = vsel %vm876, %v6955, %v6956
      %v6958 = vrot.slane %v6836, 7
      %v6959 = vrot.slane %v6837, 7
      %v6960 = vsel %vm876, %v6958, %v6959
      %v6961 = vrot.slane %v6838, 7
      %v6962 = vrot.slane %v6839, 7
      %v6963 = vsel %vm876, %v6961, %v6962
      %v6964 = vrot.slane %v6840, 7
      %v6965 = vrot.slane %v6841, 7
      %v6966 = vsel %vm876, %v6964, %v6965
      %v6967 = vrot.slane %v6842, 7
      %v6968 = vrot.slane %v6843, 7
      %v6969 = vsel %vm876, %v6967, %v6968
      %v6970 = vrot.slane %v6844, 7
      %v6971 = vrot.slane %v6845, 7
      %v6972 = vsel %vm876, %v6970, %v6971
      %v6973 = vrot.slane %v6846, 7
      %v6974 = vrot.slane %v6847, 7
      %v6975 = vsel %vm876, %v6973, %v6974
      %v6976 = vrot.slane %v6848, 7
      %v6977 = vrot.slane %v6849, 7
      %v6978 = vsel %vm876, %v6976, %v6977
      %v6979 = vrot.slane %v6850, 7
      %v6980 = vrot.slane %v6851, 7
      %v6981 = vsel %vm876, %v6979, %v6980
      %v6982 = vrot.slane %v6852, 7
      %v6983 = vrot.slane %v6853, 7
      %v6984 = vsel %vm876, %v6982, %v6983
      %v7017 = vrot.slane %v6825, 5
      %v7018 = vrot.slane %v6823, 5
      %v7019 = vrot.slane %v6827, 5
      %v7020 = vrot.slane %v6829, 5
      %v7021 = vrot.slane %v6831, 5
      %v7022 = vrot.slane %v6833, 5
      %v7023 = vrot.slane %v6835, 5
      %v7024 = vrot.slane %v6837, 5
      %v7025 = vrot.slane %v6839, 5
      %v7026 = vrot.slane %v6841, 5
      %v7027 = vrot.slane %v6843, 5
      %v7028 = vrot.slane %v6845, 5
      %v7029 = vrot.slane %v6847, 5
      %v7030 = vrot.slane %v6849, 5
      %v7031 = vrot.slane %v6851, 5
      %v7032 = vrot.slane %v6853, 5
      %v7049 = vsel %vm876, %v6889, %v6937
      %v7050 = vsel %vm876, %v6890, %v6940
      %v7051 = vsel %vm876, %v6891, %v6943
      %v7052 = vsel %vm876, %v6892, %v6946
      %v7053 = vsel %vm876, %v6893, %v6949
      %v7054 = vsel %vm876, %v6894, %v6952
      %v7055 = vsel %vm876, %v6895, %v6955
      %v7056 = vsel %vm876, %v6896, %v6958
      %v7057 = vsel %vm876, %v6897, %v6961
      %v7058 = vsel %vm876, %v6898, %v6964
      %v7059 = vsel %vm876, %v6899, %v6967
      %v7060 = vsel %vm876, %v6900, %v6970
      %v7061 = vsel %vm876, %v6901, %v6973
      %v7062 = vsel %vm876, %v6902, %v6976
      %v7063 = vsel %vm876, %v6903, %v6979
      %v7064 = vsel %vm876, %v6904, %v6982
      %v7065 = vsel %vm876, %v6938, %v7017
      %v7066 = vsel %vm876, %v6941, %v7018
      %v7067 = vsel %vm876, %v6944, %v7019
      %v7068 = vsel %vm876, %v6947, %v7020
      %v7069 = vsel %vm876, %v6950, %v7021
      %v7070 = vsel %vm876, %v6953, %v7022
      %v7071 = vsel %vm876, %v6956, %v7023
      %v7072 = vsel %vm876, %v6959, %v7024
      %v7073 = vsel %vm876, %v6962, %v7025
      %v7074 = vsel %vm876, %v6965, %v7026
      %v7075 = vsel %vm876, %v6968, %v7027
      %v7076 = vsel %vm876, %v6971, %v7028
      %v7077 = vsel %vm876, %v6974, %v7029
      %v7078 = vsel %vm876, %v6977, %v7030
      %v7079 = vsel %vm876, %v6980, %v7031
      %v7080 = vsel %vm876, %v6983, %v7032
      %v7095 = vrot.slane %v7049, 2
      %v7096 = vrot.slane %v7049, 4
      %v7097 = vrot.slane %v7049, 6
      %v7098 = vrot.slane %v6939, 2
      %v7099 = vrot.slane %v6939, 4
      %v7100 = vrot.slane %v6939, 6
      %v7101 = vrot.slane %v7052, 2
      %v7102 = vrot.slane %v7052, 4
      %v7103 = vrot.slane %v7052, 6
      %v7104 = vrot.slane %v6948, 2
      %v7105 = vrot.slane %v6948, 4
      %v7106 = vrot.slane %v6948, 6
      %v7107 = vrot.slane %v7054, 2
      %v7108 = vrot.slane %v7054, 4
      %v7109 = vrot.slane %v7054, 6
      %v7110 = vrot.slane %v6954, 2
      %v7111 = vrot.slane %v6954, 4
      %v7112 = vrot.slane %v6954, 6
      %v7113 = vrot.slane %v7056, 2
      %v7114 = vrot.slane %v7056, 4
      %v7115 = vrot.slane %v7056, 6
      %v7116 = vrot.slane %v6960, 2
      %v7117 = vrot.slane %v6960, 4
      %v7118 = vrot.slane %v6960, 6
      %v7119 = vrot.slane %v7058, 2
      %v7120 = vrot.slane %v7058, 4
      %v7121 = vrot.slane %v7058, 6
      %v7122 = vrot.slane %v6966, 2
      %v7123 = vrot.slane %v6966, 4
      %v7124 = vrot.slane %v6966, 6
      %v7125 = vrot.slane %v7060, 2
      %v7126 = vrot.slane %v7060, 4
      %v7127 = vrot.slane %v7060, 6
      %v7128 = vrot.slane %v6972, 2
      %v7129 = vrot.slane %v6972, 4
      %v7130 = vrot.slane %v6972, 6
      %v7131 = vrot.slane %v7062, 2
      %v7132 = vrot.slane %v7062, 4
      %v7133 = vrot.slane %v7062, 6
      %v7134 = vrot.slane %v6978, 2
      %v7135 = vrot.slane %v6978, 4
      %v7136 = vrot.slane %v6978, 6
      %v7153 = vrot.slane %v7050, 2
      %v7154 = vrot.slane %v7050, 4
      %v7155 = vrot.slane %v7050, 6
      %v7156 = vrot.slane %v6942, 2
      %v7157 = vrot.slane %v6942, 4
      %v7158 = vrot.slane %v6942, 6
      %v7159 = vrot.slane %v7051, 2
      %v7160 = vrot.slane %v7051, 4
      %v7161 = vrot.slane %v7051, 6
      %v7162 = vrot.slane %v6945, 2
      %v7163 = vrot.slane %v6945, 4
      %v7164 = vrot.slane %v6945, 6
      %v7165 = vrot.slane %v7053, 2
      %v7166 = vrot.slane %v7053, 4
      %v7167 = vrot.slane %v7053, 6
      %v7168 = vrot.slane %v6951, 2
      %v7169 = vrot.slane %v6951, 4
      %v7170 = vrot.slane %v6951, 6
      %v7171 = vrot.slane %v7055, 2
      %v7172 = vrot.slane %v7055, 4
      %v7173 = vrot.slane %v7055, 6
      %v7174 = vrot.slane %v6957, 2
      %v7175 = vrot.slane %v6957, 4
      %v7176 = vrot.slane %v6957, 6
      %v7177 = vrot.slane %v7057, 2
      %v7178 = vrot.slane %v7057, 4
      %v7179 = vrot.slane %v7057, 6
      %v7180 = vrot.slane %v6963, 2
      %v7181 = vrot.slane %v6963, 4
      %v7182 = vrot.slane %v6963, 6
      %v7183 = vrot.slane %v7059, 2
      %v7184 = vrot.slane %v7059, 4
      %v7185 = vrot.slane %v7059, 6
      %v7186 = vrot.slane %v6969, 2
      %v7187 = vrot.slane %v6969, 4
      %v7188 = vrot.slane %v6969, 6
      %v7189 = vrot.slane %v7061, 2
      %v7190 = vrot.slane %v7061, 4
      %v7191 = vrot.slane %v7061, 6
      %v7192 = vrot.slane %v6975, 2
      %v7193 = vrot.slane %v6975, 4
      %v7194 = vrot.slane %v6975, 6
      %v7195 = vrot.slane %v7063, 2
      %v7196 = vrot.slane %v7063, 4
      %v7197 = vrot.slane %v7063, 6
      %v7198 = vrot.slane %v6981, 2
      %v7199 = vrot.slane %v6981, 4
      %v7200 = vrot.slane %v6981, 6
      %v7203 = vrot.slane %v7064, 2
      %v7204 = vrot.slane %v7064, 4
      %v7205 = vrot.slane %v7064, 6
      %v7206 = vrot.slane %v6984, 2
      %v7207 = vrot.slane %v6984, 4
      %v7208 = vrot.slane %v6984, 6
      %v7209 = vperm.slane %v7049, 0
      %v7210 = vperm.slane %v7095, 0
      %v7211 = vperm.slane %v7096, 0
      %v7212 = vperm.slane %v7097, 0
      %v7213 = vperm.slane %v6939, 0
      %v7214 = vperm.slane %v7098, 0
      %v7215 = vperm.slane %v7099, 0
      %v7216 = vperm.slane %v7100, 0
      %v7217 = vperm.slane %v7052, 0
      %v7218 = vperm.slane %v7101, 0
      %v7219 = vperm.slane %v7102, 0
      %v7220 = vperm.slane %v7103, 0
      %v7221 = vperm.slane %v6948, 0
      %v7222 = vperm.slane %v7104, 0
      %v7223 = vperm.slane %v7105, 0
      %v7224 = vperm.slane %v7106, 0
      %v7225 = vperm.slane %v7054, 0
      %v7226 = vperm.slane %v7107, 0
      %v7227 = vperm.slane %v7108, 0
      %v7228 = vperm.slane %v7109, 0
      %v7229 = vperm.slane %v6954, 0
      %v7230 = vperm.slane %v7110, 0
      %v7231 = vperm.slane %v7111, 0
      %v7232 = vperm.slane %v7112, 0
      %v7233 = vperm.slane %v7056, 0
      %v7234 = vperm.slane %v7113, 0
      %v7235 = vperm.slane %v7114, 0
      %v7236 = vperm.slane %v7115, 0
      %v7237 = vperm.slane %v6960, 0
      %v7238 = vperm.slane %v7116, 0
      %v7239 = vperm.slane %v7117, 0
      %v7240 = vperm.slane %v7118, 0
      %v7241 = vperm.slane %v7058, 0
      %v7242 = vperm.slane %v7119, 0
      %v7243 = vperm.slane %v7120, 0
      %v7244 = vperm.slane %v7121, 0
      %v7245 = vperm.slane %v6966, 0
      %v7246 = vperm.slane %v7122, 0
      %v7247 = vperm.slane %v7123, 0
      %v7248 = vperm.slane %v7124, 0
      %v7249 = vperm.slane %v7060, 0
      %v7250 = vperm.slane %v7125, 0
      %v7251 = vperm.slane %v7126, 0
      %v7252 = vperm.slane %v7127, 0
      %v7253 = vperm.slane %v6972, 0
      %v7254 = vperm.slane %v7128, 0
      %v7255 = vperm.slane %v7129, 0
      %v7256 = vperm.slane %v7130, 0
      %v7257 = vperm.slane %v7062, 0
      %v7258 = vperm.slane %v7131, 0
      %v7259 = vperm.slane %v7132, 0
      %v7260 = vperm.slane %v7133, 0
      %v7261 = vperm.slane %v6978, 0
      %v7262 = vperm.slane %v7134, 0
      %v7263 = vperm.slane %v7135, 0
      %v7264 = vperm.slane %v7136, 0
      %v7265 = vsel %vm1981, %v7210, %v7209
      %v7266 = vsel %vm1983, %v7211, %v7265
      %v7267 = vsel %vm1985, %v7212, %v7266
      %v7268 = vsel %vm1987, %v7213, %v7267
      %v7269 = vsel %vm1989, %v7214, %v7268
      %v7270 = vsel %vm1991, %v7215, %v7269
      %v7271 = vsel %vm1993, %v7216, %v7270
      %v7272 = vsel %vm1981, %v7218, %v7217
      %v7273 = vsel %vm1983, %v7219, %v7272
      %v7274 = vsel %vm1985, %v7220, %v7273
      %v7275 = vsel %vm1987, %v7221, %v7274
      %v7276 = vsel %vm1989, %v7222, %v7275
      %v7277 = vsel %vm1991, %v7223, %v7276
      %v7278 = vsel %vm1993, %v7224, %v7277
      %v7279 = vsel %vm1981, %v7226, %v7225
      %v7280 = vsel %vm1983, %v7227, %v7279
      %v7281 = vsel %vm1985, %v7228, %v7280
      %v7282 = vsel %vm1987, %v7229, %v7281
      %v7283 = vsel %vm1989, %v7230, %v7282
      %v7284 = vsel %vm1991, %v7231, %v7283
      %v7285 = vsel %vm1993, %v7232, %v7284
      %v7286 = vsel %vm1981, %v7234, %v7233
      %v7287 = vsel %vm1983, %v7235, %v7286
      %v7288 = vsel %vm1985, %v7236, %v7287
      %v7289 = vsel %vm1987, %v7237, %v7288
      %v7290 = vsel %vm1989, %v7238, %v7289
      %v7291 = vsel %vm1991, %v7239, %v7290
      %v7292 = vsel %vm1993, %v7240, %v7291
      %v7293 = vsel %vm1981, %v7242, %v7241
      %v7294 = vsel %vm1983, %v7243, %v7293
      %v7295 = vsel %vm1985, %v7244, %v7294
      %v7296 = vsel %vm1987, %v7245, %v7295
      %v7297 = vsel %vm1989, %v7246, %v7296
      %v7298 = vsel %vm1991, %v7247, %v7297
      %v7299 = vsel %vm1993, %v7248, %v7298
      %v7300 = vsel %vm1981, %v7250, %v7249
      %v7301 = vsel %vm1983, %v7251, %v7300
      %v7302 = vsel %vm1985, %v7252, %v7301
      %v7303 = vsel %vm1987, %v7253, %v7302
      %v7304 = vsel %vm1989, %v7254, %v7303
      %v7305 = vsel %vm1991, %v7255, %v7304
      %v7306 = vsel %vm1993, %v7256, %v7305
      %v7307 = vsel %vm1981, %v7258, %v7257
      %v7308 = vsel %vm1983, %v7259, %v7307
      %v7309 = vsel %vm1985, %v7260, %v7308
      %v7310 = vsel %vm1987, %v7261, %v7309
      %v7311 = vsel %vm1989, %v7262, %v7310
      %v7312 = vsel %vm1991, %v7263, %v7311
      %v7313 = vsel %vm1993, %v7264, %v7312
      %v7321 = vperm.slane %v7049, 1
      %v7322 = vperm.slane %v7095, 1
      %v7323 = vperm.slane %v7096, 1
      %v7324 = vperm.slane %v7097, 1
      %v7325 = vperm.slane %v6939, 1
      %v7326 = vperm.slane %v7098, 1
      %v7327 = vperm.slane %v7099, 1
      %v7328 = vperm.slane %v7100, 1
      %v7329 = vperm.slane %v7052, 1
      %v7330 = vperm.slane %v7101, 1
      %v7331 = vperm.slane %v7102, 1
      %v7332 = vperm.slane %v7103, 1
      %v7333 = vperm.slane %v6948, 1
      %v7334 = vperm.slane %v7104, 1
      %v7335 = vperm.slane %v7105, 1
      %v7336 = vperm.slane %v7106, 1
      %v7337 = vperm.slane %v7054, 1
      %v7338 = vperm.slane %v7107, 1
      %v7339 = vperm.slane %v7108, 1
      %v7340 = vperm.slane %v7109, 1
      %v7341 = vperm.slane %v6954, 1
      %v7342 = vperm.slane %v7110, 1
      %v7343 = vperm.slane %v7111, 1
      %v7344 = vperm.slane %v7112, 1
      %v7345 = vperm.slane %v7056, 1
      %v7346 = vperm.slane %v7113, 1
      %v7347 = vperm.slane %v7114, 1
      %v7348 = vperm.slane %v7115, 1
      %v7349 = vperm.slane %v6960, 1
      %v7350 = vperm.slane %v7116, 1
      %v7351 = vperm.slane %v7117, 1
      %v7352 = vperm.slane %v7118, 1
      %v7353 = vperm.slane %v7058, 1
      %v7354 = vperm.slane %v7119, 1
      %v7355 = vperm.slane %v7120, 1
      %v7356 = vperm.slane %v7121, 1
      %v7357 = vperm.slane %v6966, 1
      %v7358 = vperm.slane %v7122, 1
      %v7359 = vperm.slane %v7123, 1
      %v7360 = vperm.slane %v7124, 1
      %v7361 = vperm.slane %v7060, 1
      %v7362 = vperm.slane %v7125, 1
      %v7363 = vperm.slane %v7126, 1
      %v7364 = vperm.slane %v7127, 1
      %v7365 = vperm.slane %v6972, 1
      %v7366 = vperm.slane %v7128, 1
      %v7367 = vperm.slane %v7129, 1
      %v7368 = vperm.slane %v7130, 1
      %v7369 = vperm.slane %v7062, 1
      %v7370 = vperm.slane %v7131, 1
      %v7371 = vperm.slane %v7132, 1
      %v7372 = vperm.slane %v7133, 1
      %v7373 = vperm.slane %v6978, 1
      %v7374 = vperm.slane %v7134, 1
      %v7375 = vperm.slane %v7135, 1
      %v7376 = vperm.slane %v7136, 1
      %v7377 = vsel %vm1981, %v7322, %v7321
      %v7378 = vsel %vm1983, %v7323, %v7377
      %v7379 = vsel %vm1985, %v7324, %v7378
      %v7380 = vsel %vm1987, %v7325, %v7379
      %v7381 = vsel %vm1989, %v7326, %v7380
      %v7382 = vsel %vm1991, %v7327, %v7381
      %v7383 = vsel %vm1993, %v7328, %v7382
      %v7384 = vsel %vm1981, %v7330, %v7329
      %v7385 = vsel %vm1983, %v7331, %v7384
      %v7386 = vsel %vm1985, %v7332, %v7385
      %v7387 = vsel %vm1987, %v7333, %v7386
      %v7388 = vsel %vm1989, %v7334, %v7387
      %v7389 = vsel %vm1991, %v7335, %v7388
      %v7390 = vsel %vm1993, %v7336, %v7389
      %v7391 = vsel %vm1981, %v7338, %v7337
      %v7392 = vsel %vm1983, %v7339, %v7391
      %v7393 = vsel %vm1985, %v7340, %v7392
      %v7394 = vsel %vm1987, %v7341, %v7393
      %v7395 = vsel %vm1989, %v7342, %v7394
      %v7396 = vsel %vm1991, %v7343, %v7395
      %v7397 = vsel %vm1993, %v7344, %v7396
      %v7398 = vsel %vm1981, %v7346, %v7345
      %v7399 = vsel %vm1983, %v7347, %v7398
      %v7400 = vsel %vm1985, %v7348, %v7399
      %v7401 = vsel %vm1987, %v7349, %v7400
      %v7402 = vsel %vm1989, %v7350, %v7401
      %v7403 = vsel %vm1991, %v7351, %v7402
      %v7404 = vsel %vm1993, %v7352, %v7403
      %v7405 = vsel %vm1981, %v7354, %v7353
      %v7406 = vsel %vm1983, %v7355, %v7405
      %v7407 = vsel %vm1985, %v7356, %v7406
      %v7408 = vsel %vm1987, %v7357, %v7407
      %v7409 = vsel %vm1989, %v7358, %v7408
      %v7410 = vsel %vm1991, %v7359, %v7409
      %v7411 = vsel %vm1993, %v7360, %v7410
      %v7412 = vsel %vm1981, %v7362, %v7361
      %v7413 = vsel %vm1983, %v7363, %v7412
      %v7414 = vsel %vm1985, %v7364, %v7413
      %v7415 = vsel %vm1987, %v7365, %v7414
      %v7416 = vsel %vm1989, %v7366, %v7415
      %v7417 = vsel %vm1991, %v7367, %v7416
      %v7418 = vsel %vm1993, %v7368, %v7417
      %v7419 = vsel %vm1981, %v7370, %v7369
      %v7420 = vsel %vm1983, %v7371, %v7419
      %v7421 = vsel %vm1985, %v7372, %v7420
      %v7422 = vsel %vm1987, %v7373, %v7421
      %v7423 = vsel %vm1989, %v7374, %v7422
      %v7424 = vsel %vm1991, %v7375, %v7423
      %v7425 = vsel %vm1993, %v7376, %v7424
      %7426 = vrot.lane.b32.xlu0 %v7383, 8
      %v7427 = vpop.permute.xlu0 %7426
      %7428 = vrot.lane.b32.xlu0 %v7390, 8
      %v7429 = vpop.permute.xlu0 %7428
      %7430 = vrot.lane.b32.xlu0 %v7397, 8
      %v7431 = vpop.permute.xlu0 %7430
      %7432 = vrot.lane.b32.xlu0 %v7404, 8
      %v7433 = vpop.permute.xlu0 %7432
      %7434 = vrot.lane.b32.xlu0 %v7411, 8
      %v7435 = vpop.permute.xlu0 %7434
      %7436 = vrot.lane.b32.xlu0 %v7418, 8
      %v7437 = vpop.permute.xlu0 %7436
      %7438 = vrot.lane.b32.xlu0 %v7425, 8
      %v7439 = vpop.permute.xlu0 %7438
      %v7447 = vperm.slane %v7065, 0
      %v7448 = vperm.slane %v7068, 0
      %v7449 = vperm.slane %v7070, 0
      %v7450 = vperm.slane %v7072, 0
      %v7451 = vperm.slane %v7074, 0
      %v7452 = vperm.slane %v7076, 0
      %v7453 = vperm.slane %v7078, 0
      %v7454 = vsel %vm1981, %v7211, %v7210
      %v7455 = vsel %vm1983, %v7212, %v7454
      %v7456 = vsel %vm1985, %v7213, %v7455
      %v7457 = vsel %vm1987, %v7214, %v7456
      %v7458 = vsel %vm1989, %v7215, %v7457
      %v7459 = vsel %vm1991, %v7216, %v7458
      %v7460 = vsel %vm1993, %v7447, %v7459
      %v7461 = vsel %vm1981, %v7219, %v7218
      %v7462 = vsel %vm1983, %v7220, %v7461
      %v7463 = vsel %vm1985, %v7221, %v7462
      %v7464 = vsel %vm1987, %v7222, %v7463
      %v7465 = vsel %vm1989, %v7223, %v7464
      %v7466 = vsel %vm1991, %v7224, %v7465
      %v7467 = vsel %vm1993, %v7448, %v7466
      %v7468 = vsel %vm1981, %v7227, %v7226
      %v7469 = vsel %vm1983, %v7228, %v7468
      %v7470 = vsel %vm1985, %v7229, %v7469
      %v7471 = vsel %vm1987, %v7230, %v7470
      %v7472 = vsel %vm1989, %v7231, %v7471
      %v7473 = vsel %vm1991, %v7232, %v7472
      %v7474 = vsel %vm1993, %v7449, %v7473
      %v7475 = vsel %vm1981, %v7235, %v7234
      %v7476 = vsel %vm1983, %v7236, %v7475
      %v7477 = vsel %vm1985, %v7237, %v7476
      %v7478 = vsel %vm1987, %v7238, %v7477
      %v7479 = vsel %vm1989, %v7239, %v7478
      %v7480 = vsel %vm1991, %v7240, %v7479
      %v7481 = vsel %vm1993, %v7450, %v7480
      %v7482 = vsel %vm1981, %v7243, %v7242
      %v7483 = vsel %vm1983, %v7244, %v7482
      %v7484 = vsel %vm1985, %v7245, %v7483
      %v7485 = vsel %vm1987, %v7246, %v7484
      %v7486 = vsel %vm1989, %v7247, %v7485
      %v7487 = vsel %vm1991, %v7248, %v7486
      %v7488 = vsel %vm1993, %v7451, %v7487
      %v7489 = vsel %vm1981, %v7251, %v7250
      %v7490 = vsel %vm1983, %v7252, %v7489
      %v7491 = vsel %vm1985, %v7253, %v7490
      %v7492 = vsel %vm1987, %v7254, %v7491
      %v7493 = vsel %vm1989, %v7255, %v7492
      %v7494 = vsel %vm1991, %v7256, %v7493
      %v7495 = vsel %vm1993, %v7452, %v7494
      %v7496 = vsel %vm1981, %v7259, %v7258
      %v7497 = vsel %vm1983, %v7260, %v7496
      %v7498 = vsel %vm1985, %v7261, %v7497
      %v7499 = vsel %vm1987, %v7262, %v7498
      %v7500 = vsel %vm1989, %v7263, %v7499
      %v7501 = vsel %vm1991, %v7264, %v7500
      %v7502 = vsel %vm1993, %v7453, %v7501
      %7503 = vrot.lane.b32.xlu0 %v7460, 16
      %v7504 = vpop.permute.xlu0 %7503
      %7505 = vrot.lane.b32.xlu0 %v7467, 16
      %v7506 = vpop.permute.xlu0 %7505
      %7507 = vrot.lane.b32.xlu0 %v7474, 16
      %v7508 = vpop.permute.xlu0 %7507
      %7509 = vrot.lane.b32.xlu0 %v7481, 16
      %v7510 = vpop.permute.xlu0 %7509
      %7511 = vrot.lane.b32.xlu0 %v7488, 16
      %v7512 = vpop.permute.xlu0 %7511
      %7513 = vrot.lane.b32.xlu0 %v7495, 16
      %v7514 = vpop.permute.xlu0 %7513
      %7515 = vrot.lane.b32.xlu0 %v7502, 16
      %v7516 = vpop.permute.xlu0 %7515
      %v7524 = vperm.slane %v7065, 1
      %v7525 = vperm.slane %v7068, 1
      %v7526 = vperm.slane %v7070, 1
      %v7527 = vperm.slane %v7072, 1
      %v7528 = vperm.slane %v7074, 1
      %v7529 = vperm.slane %v7076, 1
      %v7530 = vperm.slane %v7078, 1
      %v7531 = vsel %vm1981, %v7323, %v7322
      %v7532 = vsel %vm1983, %v7324, %v7531
      %v7533 = vsel %vm1985, %v7325, %v7532
      %v7534 = vsel %vm1987, %v7326, %v7533
      %v7535 = vsel %vm1989, %v7327, %v7534
      %v7536 = vsel %vm1991, %v7328, %v7535
      %v7537 = vsel %vm1993, %v7524, %v7536
      %v7538 = vsel %vm1981, %v7331, %v7330
      %v7539 = vsel %vm1983, %v7332, %v7538
      %v7540 = vsel %vm1985, %v7333, %v7539
      %v7541 = vsel %vm1987, %v7334, %v7540
      %v7542 = vsel %vm1989, %v7335, %v7541
      %v7543 = vsel %vm1991, %v7336, %v7542
      %v7544 = vsel %vm1993, %v7525, %v7543
      %v7545 = vsel %vm1981, %v7339, %v7338
      %v7546 = vsel %vm1983, %v7340, %v7545
      %v7547 = vsel %vm1985, %v7341, %v7546
      %v7548 = vsel %vm1987, %v7342, %v7547
      %v7549 = vsel %vm1989, %v7343, %v7548
      %v7550 = vsel %vm1991, %v7344, %v7549
      %v7551 = vsel %vm1993, %v7526, %v7550
      %v7552 = vsel %vm1981, %v7347, %v7346
      %v7553 = vsel %vm1983, %v7348, %v7552
      %v7554 = vsel %vm1985, %v7349, %v7553
      %v7555 = vsel %vm1987, %v7350, %v7554
      %v7556 = vsel %vm1989, %v7351, %v7555
      %v7557 = vsel %vm1991, %v7352, %v7556
      %v7558 = vsel %vm1993, %v7527, %v7557
      %v7559 = vsel %vm1981, %v7355, %v7354
      %v7560 = vsel %vm1983, %v7356, %v7559
      %v7561 = vsel %vm1985, %v7357, %v7560
      %v7562 = vsel %vm1987, %v7358, %v7561
      %v7563 = vsel %vm1989, %v7359, %v7562
      %v7564 = vsel %vm1991, %v7360, %v7563
      %v7565 = vsel %vm1993, %v7528, %v7564
      %v7566 = vsel %vm1981, %v7363, %v7362
      %v7567 = vsel %vm1983, %v7364, %v7566
      %v7568 = vsel %vm1985, %v7365, %v7567
      %v7569 = vsel %vm1987, %v7366, %v7568
      %v7570 = vsel %vm1989, %v7367, %v7569
      %v7571 = vsel %vm1991, %v7368, %v7570
      %v7572 = vsel %vm1993, %v7529, %v7571
      %v7573 = vsel %vm1981, %v7371, %v7370
      %v7574 = vsel %vm1983, %v7372, %v7573
      %v7575 = vsel %vm1985, %v7373, %v7574
      %v7576 = vsel %vm1987, %v7374, %v7575
      %v7577 = vsel %vm1989, %v7375, %v7576
      %v7578 = vsel %vm1991, %v7376, %v7577
      %v7579 = vsel %vm1993, %v7530, %v7578
      %7580 = vrot.lane.b32.xlu0 %v7537, 24
      %v7581 = vpop.permute.xlu0 %7580
      %7582 = vrot.lane.b32.xlu0 %v7544, 24
      %v7583 = vpop.permute.xlu0 %7582
      %7584 = vrot.lane.b32.xlu0 %v7551, 24
      %v7585 = vpop.permute.xlu0 %7584
      %7586 = vrot.lane.b32.xlu0 %v7558, 24
      %v7587 = vpop.permute.xlu0 %7586
      %7588 = vrot.lane.b32.xlu0 %v7565, 24
      %v7589 = vpop.permute.xlu0 %7588
      %7590 = vrot.lane.b32.xlu0 %v7572, 24
      %v7591 = vpop.permute.xlu0 %7590
      %7592 = vrot.lane.b32.xlu0 %v7579, 24
      %v7593 = vpop.permute.xlu0 %7592
      %v7601 = vperm.slane %v7050, 0
      %v7602 = vperm.slane %v7153, 0
      %v7603 = vperm.slane %v7154, 0
      %v7604 = vperm.slane %v7155, 0
      %v7605 = vperm.slane %v6942, 0
      %v7606 = vperm.slane %v7156, 0
      %v7607 = vperm.slane %v7157, 0
      %v7608 = vperm.slane %v7158, 0
      %v7609 = vperm.slane %v7051, 0
      %v7610 = vperm.slane %v7159, 0
      %v7611 = vperm.slane %v7160, 0
      %v7612 = vperm.slane %v7161, 0
      %v7613 = vperm.slane %v6945, 0
      %v7614 = vperm.slane %v7162, 0
      %v7615 = vperm.slane %v7163, 0
      %v7616 = vperm.slane %v7164, 0
      %v7617 = vperm.slane %v7053, 0
      %v7618 = vperm.slane %v7165, 0
      %v7619 = vperm.slane %v7166, 0
      %v7620 = vperm.slane %v7167, 0
      %v7621 = vperm.slane %v6951, 0
      %v7622 = vperm.slane %v7168, 0
      %v7623 = vperm.slane %v7169, 0
      %v7624 = vperm.slane %v7170, 0
      %v7625 = vperm.slane %v7055, 0
      %v7626 = vperm.slane %v7171, 0
      %v7627 = vperm.slane %v7172, 0
      %v7628 = vperm.slane %v7173, 0
      %v7629 = vperm.slane %v6957, 0
      %v7630 = vperm.slane %v7174, 0
      %v7631 = vperm.slane %v7175, 0
      %v7632 = vperm.slane %v7176, 0
      %v7633 = vperm.slane %v7057, 0
      %v7634 = vperm.slane %v7177, 0
      %v7635 = vperm.slane %v7178, 0
      %v7636 = vperm.slane %v7179, 0
      %v7637 = vperm.slane %v6963, 0
      %v7638 = vperm.slane %v7180, 0
      %v7639 = vperm.slane %v7181, 0
      %v7640 = vperm.slane %v7182, 0
      %v7641 = vperm.slane %v7059, 0
      %v7642 = vperm.slane %v7183, 0
      %v7643 = vperm.slane %v7184, 0
      %v7644 = vperm.slane %v7185, 0
      %v7645 = vperm.slane %v6969, 0
      %v7646 = vperm.slane %v7186, 0
      %v7647 = vperm.slane %v7187, 0
      %v7648 = vperm.slane %v7188, 0
      %v7649 = vperm.slane %v7061, 0
      %v7650 = vperm.slane %v7189, 0
      %v7651 = vperm.slane %v7190, 0
      %v7652 = vperm.slane %v7191, 0
      %v7653 = vperm.slane %v6975, 0
      %v7654 = vperm.slane %v7192, 0
      %v7655 = vperm.slane %v7193, 0
      %v7656 = vperm.slane %v7194, 0
      %v7657 = vperm.slane %v7063, 0
      %v7658 = vperm.slane %v7195, 0
      %v7659 = vperm.slane %v7196, 0
      %v7660 = vperm.slane %v7197, 0
      %v7661 = vperm.slane %v6981, 0
      %v7662 = vperm.slane %v7198, 0
      %v7663 = vperm.slane %v7199, 0
      %v7664 = vperm.slane %v7200, 0
      %v7665 = vsel %vm1981, %v7602, %v7601
      %v7666 = vsel %vm1983, %v7603, %v7665
      %v7667 = vsel %vm1985, %v7604, %v7666
      %v7668 = vsel %vm1987, %v7605, %v7667
      %v7669 = vsel %vm1989, %v7606, %v7668
      %v7670 = vsel %vm1991, %v7607, %v7669
      %v7671 = vsel %vm1993, %v7608, %v7670
      %v7672 = vsel %vm1981, %v7610, %v7609
      %v7673 = vsel %vm1983, %v7611, %v7672
      %v7674 = vsel %vm1985, %v7612, %v7673
      %v7675 = vsel %vm1987, %v7613, %v7674
      %v7676 = vsel %vm1989, %v7614, %v7675
      %v7677 = vsel %vm1991, %v7615, %v7676
      %v7678 = vsel %vm1993, %v7616, %v7677
      %v7679 = vsel %vm1981, %v7618, %v7617
      %v7680 = vsel %vm1983, %v7619, %v7679
      %v7681 = vsel %vm1985, %v7620, %v7680
      %v7682 = vsel %vm1987, %v7621, %v7681
      %v7683 = vsel %vm1989, %v7622, %v7682
      %v7684 = vsel %vm1991, %v7623, %v7683
      %v7685 = vsel %vm1993, %v7624, %v7684
      %v7686 = vsel %vm1981, %v7626, %v7625
      %v7687 = vsel %vm1983, %v7627, %v7686
      %v7688 = vsel %vm1985, %v7628, %v7687
      %v7689 = vsel %vm1987, %v7629, %v7688
      %v7690 = vsel %vm1989, %v7630, %v7689
      %v7691 = vsel %vm1991, %v7631, %v7690
      %v7692 = vsel %vm1993, %v7632, %v7691
      %v7693 = vsel %vm1981, %v7634, %v7633
      %v7694 = vsel %vm1983, %v7635, %v7693
      %v7695 = vsel %vm1985, %v7636, %v7694
      %v7696 = vsel %vm1987, %v7637, %v7695
      %v7697 = vsel %vm1989, %v7638, %v7696
      %v7698 = vsel %vm1991, %v7639, %v7697
      %v7699 = vsel %vm1993, %v7640, %v7698
      %v7700 = vsel %vm1981, %v7642, %v7641
      %v7701 = vsel %vm1983, %v7643, %v7700
      %v7702 = vsel %vm1985, %v7644, %v7701
      %v7703 = vsel %vm1987, %v7645, %v7702
      %v7704 = vsel %vm1989, %v7646, %v7703
      %v7705 = vsel %vm1991, %v7647, %v7704
      %v7706 = vsel %vm1993, %v7648, %v7705
      %v7707 = vsel %vm1981, %v7650, %v7649
      %v7708 = vsel %vm1983, %v7651, %v7707
      %v7709 = vsel %vm1985, %v7652, %v7708
      %v7710 = vsel %vm1987, %v7653, %v7709
      %v7711 = vsel %vm1989, %v7654, %v7710
      %v7712 = vsel %vm1991, %v7655, %v7711
      %v7713 = vsel %vm1993, %v7656, %v7712
      %v7714 = vsel %vm1981, %v7658, %v7657
      %v7715 = vsel %vm1983, %v7659, %v7714
      %v7716 = vsel %vm1985, %v7660, %v7715
      %v7717 = vsel %vm1987, %v7661, %v7716
      %v7718 = vsel %vm1989, %v7662, %v7717
      %v7719 = vsel %vm1991, %v7663, %v7718
      %v7720 = vsel %vm1993, %v7664, %v7719
      %7721 = vrot.lane.b32.xlu0 %v7671, 32
      %v7722 = vpop.permute.xlu0 %7721
      %7723 = vrot.lane.b32.xlu0 %v7678, 32
      %v7724 = vpop.permute.xlu0 %7723
      %7725 = vrot.lane.b32.xlu0 %v7685, 32
      %v7726 = vpop.permute.xlu0 %7725
      %7727 = vrot.lane.b32.xlu0 %v7692, 32
      %v7728 = vpop.permute.xlu0 %7727
      %7729 = vrot.lane.b32.xlu0 %v7699, 32
      %v7730 = vpop.permute.xlu0 %7729
      %7731 = vrot.lane.b32.xlu0 %v7706, 32
      %v7732 = vpop.permute.xlu0 %7731
      %7733 = vrot.lane.b32.xlu0 %v7713, 32
      %v7734 = vpop.permute.xlu0 %7733
      %7735 = vrot.lane.b32.xlu0 %v7720, 32
      %v7736 = vpop.permute.xlu0 %7735
      %v7745 = vperm.slane %v7050, 1
      %v7746 = vperm.slane %v7153, 1
      %v7747 = vperm.slane %v7154, 1
      %v7748 = vperm.slane %v7155, 1
      %v7749 = vperm.slane %v6942, 1
      %v7750 = vperm.slane %v7156, 1
      %v7751 = vperm.slane %v7157, 1
      %v7752 = vperm.slane %v7158, 1
      %v7753 = vperm.slane %v7051, 1
      %v7754 = vperm.slane %v7159, 1
      %v7755 = vperm.slane %v7160, 1
      %v7756 = vperm.slane %v7161, 1
      %v7757 = vperm.slane %v6945, 1
      %v7758 = vperm.slane %v7162, 1
      %v7759 = vperm.slane %v7163, 1
      %v7760 = vperm.slane %v7164, 1
      %v7761 = vperm.slane %v7053, 1
      %v7762 = vperm.slane %v7165, 1
      %v7763 = vperm.slane %v7166, 1
      %v7764 = vperm.slane %v7167, 1
      %v7765 = vperm.slane %v6951, 1
      %v7766 = vperm.slane %v7168, 1
      %v7767 = vperm.slane %v7169, 1
      %v7768 = vperm.slane %v7170, 1
      %v7769 = vperm.slane %v7055, 1
      %v7770 = vperm.slane %v7171, 1
      %v7771 = vperm.slane %v7172, 1
      %v7772 = vperm.slane %v7173, 1
      %v7773 = vperm.slane %v6957, 1
      %v7774 = vperm.slane %v7174, 1
      %v7775 = vperm.slane %v7175, 1
      %v7776 = vperm.slane %v7176, 1
      %v7777 = vperm.slane %v7057, 1
      %v7778 = vperm.slane %v7177, 1
      %v7779 = vperm.slane %v7178, 1
      %v7780 = vperm.slane %v7179, 1
      %v7781 = vperm.slane %v6963, 1
      %v7782 = vperm.slane %v7180, 1
      %v7783 = vperm.slane %v7181, 1
      %v7784 = vperm.slane %v7182, 1
      %v7785 = vperm.slane %v7059, 1
      %v7786 = vperm.slane %v7183, 1
      %v7787 = vperm.slane %v7184, 1
      %v7788 = vperm.slane %v7185, 1
      %v7789 = vperm.slane %v6969, 1
      %v7790 = vperm.slane %v7186, 1
      %v7791 = vperm.slane %v7187, 1
      %v7792 = vperm.slane %v7188, 1
      %v7793 = vperm.slane %v7061, 1
      %v7794 = vperm.slane %v7189, 1
      %v7795 = vperm.slane %v7190, 1
      %v7796 = vperm.slane %v7191, 1
      %v7797 = vperm.slane %v6975, 1
      %v7798 = vperm.slane %v7192, 1
      %v7799 = vperm.slane %v7193, 1
      %v7800 = vperm.slane %v7194, 1
      %v7801 = vperm.slane %v7063, 1
      %v7802 = vperm.slane %v7195, 1
      %v7803 = vperm.slane %v7196, 1
      %v7804 = vperm.slane %v7197, 1
      %v7805 = vperm.slane %v6981, 1
      %v7806 = vperm.slane %v7198, 1
      %v7807 = vperm.slane %v7199, 1
      %v7808 = vperm.slane %v7200, 1
      %v7809 = vsel %vm1981, %v7746, %v7745
      %v7810 = vsel %vm1983, %v7747, %v7809
      %v7811 = vsel %vm1985, %v7748, %v7810
      %v7812 = vsel %vm1987, %v7749, %v7811
      %v7813 = vsel %vm1989, %v7750, %v7812
      %v7814 = vsel %vm1991, %v7751, %v7813
      %v7815 = vsel %vm1993, %v7752, %v7814
      %v7816 = vsel %vm1981, %v7754, %v7753
      %v7817 = vsel %vm1983, %v7755, %v7816
      %v7818 = vsel %vm1985, %v7756, %v7817
      %v7819 = vsel %vm1987, %v7757, %v7818
      %v7820 = vsel %vm1989, %v7758, %v7819
      %v7821 = vsel %vm1991, %v7759, %v7820
      %v7822 = vsel %vm1993, %v7760, %v7821
      %v7823 = vsel %vm1981, %v7762, %v7761
      %v7824 = vsel %vm1983, %v7763, %v7823
      %v7825 = vsel %vm1985, %v7764, %v7824
      %v7826 = vsel %vm1987, %v7765, %v7825
      %v7827 = vsel %vm1989, %v7766, %v7826
      %v7828 = vsel %vm1991, %v7767, %v7827
      %v7829 = vsel %vm1993, %v7768, %v7828
      %v7830 = vsel %vm1981, %v7770, %v7769
      %v7831 = vsel %vm1983, %v7771, %v7830
      %v7832 = vsel %vm1985, %v7772, %v7831
      %v7833 = vsel %vm1987, %v7773, %v7832
      %v7834 = vsel %vm1989, %v7774, %v7833
      %v7835 = vsel %vm1991, %v7775, %v7834
      %v7836 = vsel %vm1993, %v7776, %v7835
      %v7837 = vsel %vm1981, %v7778, %v7777
      %v7838 = vsel %vm1983, %v7779, %v7837
      %v7839 = vsel %vm1985, %v7780, %v7838
      %v7840 = vsel %vm1987, %v7781, %v7839
      %v7841 = vsel %vm1989, %v7782, %v7840
      %v7842 = vsel %vm1991, %v7783, %v7841
      %v7843 = vsel %vm1993, %v7784, %v7842
      %v7844 = vsel %vm1981, %v7786, %v7785
      %v7845 = vsel %vm1983, %v7787, %v7844
      %v7846 = vsel %vm1985, %v7788, %v7845
      %v7847 = vsel %vm1987, %v7789, %v7846
      %v7848 = vsel %vm1989, %v7790, %v7847
      %v7849 = vsel %vm1991, %v7791, %v7848
      %v7850 = vsel %vm1993, %v7792, %v7849
      %v7851 = vsel %vm1981, %v7794, %v7793
      %v7852 = vsel %vm1983, %v7795, %v7851
      %v7853 = vsel %vm1985, %v7796, %v7852
      %v7854 = vsel %vm1987, %v7797, %v7853
      %v7855 = vsel %vm1989, %v7798, %v7854
      %v7856 = vsel %vm1991, %v7799, %v7855
      %v7857 = vsel %vm1993, %v7800, %v7856
      %v7858 = vsel %vm1981, %v7802, %v7801
      %v7859 = vsel %vm1983, %v7803, %v7858
      %v7860 = vsel %vm1985, %v7804, %v7859
      %v7861 = vsel %vm1987, %v7805, %v7860
      %v7862 = vsel %vm1989, %v7806, %v7861
      %v7863 = vsel %vm1991, %v7807, %v7862
      %v7864 = vsel %vm1993, %v7808, %v7863
      %7865 = vrot.lane.b32.xlu0 %v7815, 40
      %v7866 = vpop.permute.xlu0 %7865
      %7867 = vrot.lane.b32.xlu0 %v7822, 40
      %v7868 = vpop.permute.xlu0 %7867
      %7869 = vrot.lane.b32.xlu0 %v7829, 40
      %v7870 = vpop.permute.xlu0 %7869
      %7871 = vrot.lane.b32.xlu0 %v7836, 40
      %v7872 = vpop.permute.xlu0 %7871
      %7873 = vrot.lane.b32.xlu0 %v7843, 40
      %v7874 = vpop.permute.xlu0 %7873
      %7875 = vrot.lane.b32.xlu0 %v7850, 40
      %v7876 = vpop.permute.xlu0 %7875
      %7877 = vrot.lane.b32.xlu0 %v7857, 40
      %v7878 = vpop.permute.xlu0 %7877
      %7879 = vrot.lane.b32.xlu0 %v7864, 40
      %v7880 = vpop.permute.xlu0 %7879
      %v7889 = vperm.slane %v7066, 0
      %v7890 = vperm.slane %v7067, 0
      %v7891 = vperm.slane %v7069, 0
      %v7892 = vperm.slane %v7071, 0
      %v7893 = vperm.slane %v7073, 0
      %v7894 = vperm.slane %v7075, 0
      %v7895 = vperm.slane %v7077, 0
      %v7896 = vperm.slane %v7079, 0
      %v7897 = vsel %vm1981, %v7603, %v7602
      %v7898 = vsel %vm1983, %v7604, %v7897
      %v7899 = vsel %vm1985, %v7605, %v7898
      %v7900 = vsel %vm1987, %v7606, %v7899
      %v7901 = vsel %vm1989, %v7607, %v7900
      %v7902 = vsel %vm1991, %v7608, %v7901
      %v7903 = vsel %vm1993, %v7889, %v7902
      %v7904 = vsel %vm1981, %v7611, %v7610
      %v7905 = vsel %vm1983, %v7612, %v7904
      %v7906 = vsel %vm1985, %v7613, %v7905
      %v7907 = vsel %vm1987, %v7614, %v7906
      %v7908 = vsel %vm1989, %v7615, %v7907
      %v7909 = vsel %vm1991, %v7616, %v7908
      %v7910 = vsel %vm1993, %v7890, %v7909
      %v7911 = vsel %vm1981, %v7619, %v7618
      %v7912 = vsel %vm1983, %v7620, %v7911
      %v7913 = vsel %vm1985, %v7621, %v7912
      %v7914 = vsel %vm1987, %v7622, %v7913
      %v7915 = vsel %vm1989, %v7623, %v7914
      %v7916 = vsel %vm1991, %v7624, %v7915
      %v7917 = vsel %vm1993, %v7891, %v7916
      %v7918 = vsel %vm1981, %v7627, %v7626
      %v7919 = vsel %vm1983, %v7628, %v7918
      %v7920 = vsel %vm1985, %v7629, %v7919
      %v7921 = vsel %vm1987, %v7630, %v7920
      %v7922 = vsel %vm1989, %v7631, %v7921
      %v7923 = vsel %vm1991, %v7632, %v7922
      %v7924 = vsel %vm1993, %v7892, %v7923
      %v7925 = vsel %vm1981, %v7635, %v7634
      %v7926 = vsel %vm1983, %v7636, %v7925
      %v7927 = vsel %vm1985, %v7637, %v7926
      %v7928 = vsel %vm1987, %v7638, %v7927
      %v7929 = vsel %vm1989, %v7639, %v7928
      %v7930 = vsel %vm1991, %v7640, %v7929
      %v7931 = vsel %vm1993, %v7893, %v7930
      %v7932 = vsel %vm1981, %v7643, %v7642
      %v7933 = vsel %vm1983, %v7644, %v7932
      %v7934 = vsel %vm1985, %v7645, %v7933
      %v7935 = vsel %vm1987, %v7646, %v7934
      %v7936 = vsel %vm1989, %v7647, %v7935
      %v7937 = vsel %vm1991, %v7648, %v7936
      %v7938 = vsel %vm1993, %v7894, %v7937
      %v7939 = vsel %vm1981, %v7651, %v7650
      %v7940 = vsel %vm1983, %v7652, %v7939
      %v7941 = vsel %vm1985, %v7653, %v7940
      %v7942 = vsel %vm1987, %v7654, %v7941
      %v7943 = vsel %vm1989, %v7655, %v7942
      %v7944 = vsel %vm1991, %v7656, %v7943
      %v7945 = vsel %vm1993, %v7895, %v7944
      %v7946 = vsel %vm1981, %v7659, %v7658
      %v7947 = vsel %vm1983, %v7660, %v7946
      %v7948 = vsel %vm1985, %v7661, %v7947
      %v7949 = vsel %vm1987, %v7662, %v7948
      %v7950 = vsel %vm1989, %v7663, %v7949
      %v7951 = vsel %vm1991, %v7664, %v7950
      %v7952 = vsel %vm1993, %v7896, %v7951
      %7953 = vrot.lane.b32.xlu0 %v7903, 48
      %v7954 = vpop.permute.xlu0 %7953
      %7955 = vrot.lane.b32.xlu0 %v7910, 48
      %v7956 = vpop.permute.xlu0 %7955
      %7957 = vrot.lane.b32.xlu0 %v7917, 48
      %v7958 = vpop.permute.xlu0 %7957
      %7959 = vrot.lane.b32.xlu0 %v7924, 48
      %v7960 = vpop.permute.xlu0 %7959
      %7961 = vrot.lane.b32.xlu0 %v7931, 48
      %v7962 = vpop.permute.xlu0 %7961
      %7963 = vrot.lane.b32.xlu0 %v7938, 48
      %v7964 = vpop.permute.xlu0 %7963
      %7965 = vrot.lane.b32.xlu0 %v7945, 48
      %v7966 = vpop.permute.xlu0 %7965
      %7967 = vrot.lane.b32.xlu0 %v7952, 48
      %v7968 = vpop.permute.xlu0 %7967
      %v7977 = vperm.slane %v7066, 1
      %v7978 = vperm.slane %v7067, 1
      %v7979 = vperm.slane %v7069, 1
      %v7980 = vperm.slane %v7071, 1
      %v7981 = vperm.slane %v7073, 1
      %v7982 = vperm.slane %v7075, 1
      %v7983 = vperm.slane %v7077, 1
      %v7984 = vperm.slane %v7079, 1
      %v7985 = vsel %vm1981, %v7747, %v7746
      %v7986 = vsel %vm1983, %v7748, %v7985
      %v7987 = vsel %vm1985, %v7749, %v7986
      %v7988 = vsel %vm1987, %v7750, %v7987
      %v7989 = vsel %vm1989, %v7751, %v7988
      %v7990 = vsel %vm1991, %v7752, %v7989
      %v7991 = vsel %vm1993, %v7977, %v7990
      %v7992 = vsel %vm1981, %v7755, %v7754
      %v7993 = vsel %vm1983, %v7756, %v7992
      %v7994 = vsel %vm1985, %v7757, %v7993
      %v7995 = vsel %vm1987, %v7758, %v7994
      %v7996 = vsel %vm1989, %v7759, %v7995
      %v7997 = vsel %vm1991, %v7760, %v7996
      %v7998 = vsel %vm1993, %v7978, %v7997
      %v7999 = vsel %vm1981, %v7763, %v7762
      %v8000 = vsel %vm1983, %v7764, %v7999
      %v8001 = vsel %vm1985, %v7765, %v8000
      %v8002 = vsel %vm1987, %v7766, %v8001
      %v8003 = vsel %vm1989, %v7767, %v8002
      %v8004 = vsel %vm1991, %v7768, %v8003
      %v8005 = vsel %vm1993, %v7979, %v8004
      %v8006 = vsel %vm1981, %v7771, %v7770
      %v8007 = vsel %vm1983, %v7772, %v8006
      %v8008 = vsel %vm1985, %v7773, %v8007
      %v8009 = vsel %vm1987, %v7774, %v8008
      %v8010 = vsel %vm1989, %v7775, %v8009
      %v8011 = vsel %vm1991, %v7776, %v8010
      %v8012 = vsel %vm1993, %v7980, %v8011
      %v8013 = vsel %vm1981, %v7779, %v7778
      %v8014 = vsel %vm1983, %v7780, %v8013
      %v8015 = vsel %vm1985, %v7781, %v8014
      %v8016 = vsel %vm1987, %v7782, %v8015
      %v8017 = vsel %vm1989, %v7783, %v8016
      %v8018 = vsel %vm1991, %v7784, %v8017
      %v8019 = vsel %vm1993, %v7981, %v8018
      %v8020 = vsel %vm1981, %v7787, %v7786
      %v8021 = vsel %vm1983, %v7788, %v8020
      %v8022 = vsel %vm1985, %v7789, %v8021
      %v8023 = vsel %vm1987, %v7790, %v8022
      %v8024 = vsel %vm1989, %v7791, %v8023
      %v8025 = vsel %vm1991, %v7792, %v8024
      %v8026 = vsel %vm1993, %v7982, %v8025
      %v8027 = vsel %vm1981, %v7795, %v7794
      %v8028 = vsel %vm1983, %v7796, %v8027
      %v8029 = vsel %vm1985, %v7797, %v8028
      %v8030 = vsel %vm1987, %v7798, %v8029
      %v8031 = vsel %vm1989, %v7799, %v8030
      %v8032 = vsel %vm1991, %v7800, %v8031
      %v8033 = vsel %vm1993, %v7983, %v8032
      %v8034 = vsel %vm1981, %v7803, %v7802
      %v8035 = vsel %vm1983, %v7804, %v8034
      %v8036 = vsel %vm1985, %v7805, %v8035
      %v8037 = vsel %vm1987, %v7806, %v8036
      %v8038 = vsel %vm1989, %v7807, %v8037
      %v8039 = vsel %vm1991, %v7808, %v8038
      %v8040 = vsel %vm1993, %v7984, %v8039
      %8041 = vrot.lane.b32.xlu0 %v7991, 56
      %v8042 = vpop.permute.xlu0 %8041
      %8043 = vrot.lane.b32.xlu0 %v7998, 56
      %v8044 = vpop.permute.xlu0 %8043
      %8045 = vrot.lane.b32.xlu0 %v8005, 56
      %v8046 = vpop.permute.xlu0 %8045
      %8047 = vrot.lane.b32.xlu0 %v8012, 56
      %v8048 = vpop.permute.xlu0 %8047
      %8049 = vrot.lane.b32.xlu0 %v8019, 56
      %v8050 = vpop.permute.xlu0 %8049
      %8051 = vrot.lane.b32.xlu0 %v8026, 56
      %v8052 = vpop.permute.xlu0 %8051
      %8053 = vrot.lane.b32.xlu0 %v8033, 56
      %v8054 = vpop.permute.xlu0 %8053
      %8055 = vrot.lane.b32.xlu0 %v8040, 56
      %v8056 = vpop.permute.xlu0 %8055
      %v8065 = vperm.slane %v7064, 0
      %v8066 = vperm.slane %v7203, 0
      %v8067 = vperm.slane %v7204, 0
      %v8068 = vperm.slane %v7205, 0
      %v8069 = vperm.slane %v6984, 0
      %v8070 = vperm.slane %v7206, 0
      %v8071 = vperm.slane %v7207, 0
      %v8072 = vperm.slane %v7208, 0
      %v8073 = vsel %vm1981, %v8066, %v8065
      %v8074 = vsel %vm1983, %v8067, %v8073
      %v8075 = vsel %vm1985, %v8068, %v8074
      %v8076 = vsel %vm1987, %v8069, %v8075
      %v8077 = vsel %vm1989, %v8070, %v8076
      %v8078 = vsel %vm1991, %v8071, %v8077
      %v8079 = vsel %vm1993, %v8072, %v8078
      %8080 = vrot.lane.b32.xlu0 %v7271, 64
      %v8081 = vpop.permute.xlu0 %8080
      %8082 = vrot.lane.b32.xlu0 %v7278, 64
      %v8083 = vpop.permute.xlu0 %8082
      %8084 = vrot.lane.b32.xlu0 %v7285, 64
      %v8085 = vpop.permute.xlu0 %8084
      %8086 = vrot.lane.b32.xlu0 %v7292, 64
      %v8087 = vpop.permute.xlu0 %8086
      %8088 = vrot.lane.b32.xlu0 %v7299, 64
      %v8089 = vpop.permute.xlu0 %8088
      %8090 = vrot.lane.b32.xlu0 %v7306, 64
      %v8091 = vpop.permute.xlu0 %8090
      %8092 = vrot.lane.b32.xlu0 %v7313, 64
      %v8093 = vpop.permute.xlu0 %8092
      %8094 = vrot.lane.b32.xlu0 %v8079, 64
      %v8095 = vpop.permute.xlu0 %8094
      %v8104 = vperm.slane %v7064, 1
      %v8105 = vperm.slane %v7203, 1
      %v8106 = vperm.slane %v7204, 1
      %v8107 = vperm.slane %v7205, 1
      %v8108 = vperm.slane %v6984, 1
      %v8109 = vperm.slane %v7206, 1
      %v8110 = vperm.slane %v7207, 1
      %v8111 = vperm.slane %v7208, 1
      %v8112 = vsel %vm1981, %v8105, %v8104
      %v8113 = vsel %vm1983, %v8106, %v8112
      %v8114 = vsel %vm1985, %v8107, %v8113
      %v8115 = vsel %vm1987, %v8108, %v8114
      %v8116 = vsel %vm1989, %v8109, %v8115
      %v8117 = vsel %vm1991, %v8110, %v8116
      %v8118 = vsel %vm1993, %v8111, %v8117
      %8119 = vrot.lane.b32.xlu0 %v7383, 72
      %v8120 = vpop.permute.xlu0 %8119
      %8121 = vrot.lane.b32.xlu0 %v7390, 72
      %v8122 = vpop.permute.xlu0 %8121
      %8123 = vrot.lane.b32.xlu0 %v7397, 72
      %v8124 = vpop.permute.xlu0 %8123
      %8125 = vrot.lane.b32.xlu0 %v7404, 72
      %v8126 = vpop.permute.xlu0 %8125
      %8127 = vrot.lane.b32.xlu0 %v7411, 72
      %v8128 = vpop.permute.xlu0 %8127
      %8129 = vrot.lane.b32.xlu0 %v7418, 72
      %v8130 = vpop.permute.xlu0 %8129
      %8131 = vrot.lane.b32.xlu0 %v7425, 72
      %v8132 = vpop.permute.xlu0 %8131
      %8133 = vrot.lane.b32.xlu0 %v8118, 72
      %v8134 = vpop.permute.xlu0 %8133
      %v8143 = vperm.slane %v7080, 0
      %v8144 = vsel %vm1981, %v8067, %v8066
      %v8145 = vsel %vm1983, %v8068, %v8144
      %v8146 = vsel %vm1985, %v8069, %v8145
      %v8147 = vsel %vm1987, %v8070, %v8146
      %v8148 = vsel %vm1989, %v8071, %v8147
      %v8149 = vsel %vm1991, %v8072, %v8148
      %v8150 = vsel %vm1993, %v8143, %v8149
      %8151 = vrot.lane.b32.xlu0 %v7460, 80
      %v8152 = vpop.permute.xlu0 %8151
      %8153 = vrot.lane.b32.xlu0 %v7467, 80
      %v8154 = vpop.permute.xlu0 %8153
      %8155 = vrot.lane.b32.xlu0 %v7474, 80
      %v8156 = vpop.permute.xlu0 %8155
      %8157 = vrot.lane.b32.xlu0 %v7481, 80
      %v8158 = vpop.permute.xlu0 %8157
      %8159 = vrot.lane.b32.xlu0 %v7488, 80
      %v8160 = vpop.permute.xlu0 %8159
      %8161 = vrot.lane.b32.xlu0 %v7495, 80
      %v8162 = vpop.permute.xlu0 %8161
      %8163 = vrot.lane.b32.xlu0 %v7502, 80
      %v8164 = vpop.permute.xlu0 %8163
      %8165 = vrot.lane.b32.xlu0 %v8150, 80
      %v8166 = vpop.permute.xlu0 %8165
      %v8175 = vperm.slane %v7080, 1
      %v8176 = vsel %vm1981, %v8106, %v8105
      %v8177 = vsel %vm1983, %v8107, %v8176
      %v8178 = vsel %vm1985, %v8108, %v8177
      %v8179 = vsel %vm1987, %v8109, %v8178
      %v8180 = vsel %vm1989, %v8110, %v8179
      %v8181 = vsel %vm1991, %v8111, %v8180
      %v8182 = vsel %vm1993, %v8175, %v8181
      %8183 = vrot.lane.b32.xlu0 %v7537, 88
      %v8184 = vpop.permute.xlu0 %8183
      %8185 = vrot.lane.b32.xlu0 %v7544, 88
      %v8186 = vpop.permute.xlu0 %8185
      %8187 = vrot.lane.b32.xlu0 %v7551, 88
      %v8188 = vpop.permute.xlu0 %8187
      %8189 = vrot.lane.b32.xlu0 %v7558, 88
      %v8190 = vpop.permute.xlu0 %8189
      %8191 = vrot.lane.b32.xlu0 %v7565, 88
      %v8192 = vpop.permute.xlu0 %8191
      %8193 = vrot.lane.b32.xlu0 %v7572, 88
      %v8194 = vpop.permute.xlu0 %8193
      %8195 = vrot.lane.b32.xlu0 %v7579, 88
      %v8196 = vpop.permute.xlu0 %8195
      %8197 = vrot.lane.b32.xlu0 %v8182, 88
      %v8198 = vpop.permute.xlu0 %8197
      %8207 = vrot.lane.b32.xlu0 %v7678, 96
      %v8208 = vpop.permute.xlu0 %8207
      %8209 = vrot.lane.b32.xlu0 %v7685, 96
      %v8210 = vpop.permute.xlu0 %8209
      %8211 = vrot.lane.b32.xlu0 %v7692, 96
      %v8212 = vpop.permute.xlu0 %8211
      %8213 = vrot.lane.b32.xlu0 %v7699, 96
      %v8214 = vpop.permute.xlu0 %8213
      %8215 = vrot.lane.b32.xlu0 %v7706, 96
      %v8216 = vpop.permute.xlu0 %8215
      %8217 = vrot.lane.b32.xlu0 %v7713, 96
      %v8218 = vpop.permute.xlu0 %8217
      %8219 = vrot.lane.b32.xlu0 %v7720, 96
      %v8220 = vpop.permute.xlu0 %8219
      %8228 = vrot.lane.b32.xlu0 %v7822, 104
      %v8229 = vpop.permute.xlu0 %8228
      %8230 = vrot.lane.b32.xlu0 %v7829, 104
      %v8231 = vpop.permute.xlu0 %8230
      %8232 = vrot.lane.b32.xlu0 %v7836, 104
      %v8233 = vpop.permute.xlu0 %8232
      %8234 = vrot.lane.b32.xlu0 %v7843, 104
      %v8235 = vpop.permute.xlu0 %8234
      %8236 = vrot.lane.b32.xlu0 %v7850, 104
      %v8237 = vpop.permute.xlu0 %8236
      %8238 = vrot.lane.b32.xlu0 %v7857, 104
      %v8239 = vpop.permute.xlu0 %8238
      %8240 = vrot.lane.b32.xlu0 %v7864, 104
      %v8241 = vpop.permute.xlu0 %8240
      %8249 = vrot.lane.b32.xlu0 %v7910, 112
      %v8250 = vpop.permute.xlu0 %8249
      %8251 = vrot.lane.b32.xlu0 %v7917, 112
      %v8252 = vpop.permute.xlu0 %8251
      %8253 = vrot.lane.b32.xlu0 %v7924, 112
      %v8254 = vpop.permute.xlu0 %8253
      %8255 = vrot.lane.b32.xlu0 %v7931, 112
      %v8256 = vpop.permute.xlu0 %8255
      %8257 = vrot.lane.b32.xlu0 %v7938, 112
      %v8258 = vpop.permute.xlu0 %8257
      %8259 = vrot.lane.b32.xlu0 %v7945, 112
      %v8260 = vpop.permute.xlu0 %8259
      %8261 = vrot.lane.b32.xlu0 %v7952, 112
      %v8262 = vpop.permute.xlu0 %8261
      %8270 = vrot.lane.b32.xlu0 %v7998, 120
      %v8271 = vpop.permute.xlu0 %8270
      %8272 = vrot.lane.b32.xlu0 %v8005, 120
      %v8273 = vpop.permute.xlu0 %8272
      %8274 = vrot.lane.b32.xlu0 %v8012, 120
      %v8275 = vpop.permute.xlu0 %8274
      %8276 = vrot.lane.b32.xlu0 %v8019, 120
      %v8277 = vpop.permute.xlu0 %8276
      %8278 = vrot.lane.b32.xlu0 %v8026, 120
      %v8279 = vpop.permute.xlu0 %8278
      %8280 = vrot.lane.b32.xlu0 %v8033, 120
      %v8281 = vpop.permute.xlu0 %8280
      %8282 = vrot.lane.b32.xlu0 %v8040, 120
      %v8283 = vpop.permute.xlu0 %8282
      %vm8291 = vcmask 64512
      %v8292 = vsel %vm8291, %v7271, %v7427
      %v8293 = vsel %vm8291, %v7278, %v7429
      %v8294 = vsel %vm8291, %v7285, %v7431
      %v8295 = vsel %vm8291, %v7292, %v7433
      %v8296 = vsel %vm8291, %v7299, %v7435
      %v8297 = vsel %vm8291, %v7306, %v7437
      %v8298 = vsel %vm8291, %v7313, %v7439
      %vm8299 = vcmask 130048
      %v8300 = vsel %vm8299, %v8292, %v7504
      %v8301 = vsel %vm8299, %v8293, %v7506
      %v8302 = vsel %vm8299, %v8294, %v7508
      %v8303 = vsel %vm8299, %v8295, %v7510
      %v8304 = vsel %vm8299, %v8296, %v7512
      %v8305 = vsel %vm8299, %v8297, %v7514
      %v8306 = vsel %vm8299, %v8298, %v7516
      %v8307 = vsel %vm6281, %v8300, %v7581
      %v8308 = vsel %vm6281, %v8301, %v7583
      %v8309 = vsel %vm6281, %v8302, %v7585
      %v8310 = vsel %vm6281, %v8303, %v7587
      %v8311 = vsel %vm6281, %v8304, %v7589
      %v8312 = vsel %vm6281, %v8305, %v7591
      %v8313 = vsel %vm6281, %v8306, %v7593
      %vm8314 = vcmask 261120
      %v8315 = vsel %vm8314, %v8307, %v7722
      %v8316 = vsel %vm8314, %v8307, %v7724
      %v8317 = vsel %vm8314, %v8308, %v7726
      %v8318 = vsel %vm8314, %v8309, %v7728
      %v8319 = vsel %vm8314, %v8310, %v7730
      %v8320 = vsel %vm8314, %v8311, %v7732
      %v8321 = vsel %vm8314, %v8312, %v7734
      %v8322 = vsel %vm8314, %v8313, %v7736
      %vm8323 = vcmask 326656
      %v8324 = vsel %vm8323, %v8315, %v7866
      %v8325 = vsel %vm8323, %v8316, %v7868
      %v8326 = vsel %vm8323, %v8317, %v7870
      %v8327 = vsel %vm8323, %v8318, %v7872
      %v8328 = vsel %vm8323, %v8319, %v7874
      %v8329 = vsel %vm8323, %v8320, %v7876
      %v8330 = vsel %vm8323, %v8321, %v7878
      %v8331 = vsel %vm8323, %v8322, %v7880
      %v8332 = vsel %vm6548, %v8324, %v7954
      %v8333 = vsel %vm6548, %v8325, %v7956
      %v8334 = vsel %vm6548, %v8326, %v7958
      %v8335 = vsel %vm6548, %v8327, %v7960
      %v8336 = vsel %vm6548, %v8328, %v7962
      %v8337 = vsel %vm6548, %v8329, %v7964
      %v8338 = vsel %vm6548, %v8330, %v7966
      %v8339 = vsel %vm6548, %v8331, %v7968
      %vm8340 = vcmask 457728
      %v8341 = vsel %vm8340, %v8332, %v8042
      %v8342 = vsel %vm8340, %v8333, %v8044
      %v8343 = vsel %vm8340, %v8334, %v8046
      %v8344 = vsel %vm8340, %v8335, %v8048
      %v8345 = vsel %vm8340, %v8336, %v8050
      %v8346 = vsel %vm8340, %v8337, %v8052
      %v8347 = vsel %vm8340, %v8338, %v8054
      %v8348 = vsel %vm8340, %v8339, %v8056
      %vm8349 = vcmask 523264
      %v8350 = vsel %vm8349, %v8341, %v8081
      %v8351 = vsel %vm8349, %v8342, %v8083
      %v8352 = vsel %vm8349, %v8343, %v8085
      %v8353 = vsel %vm8349, %v8344, %v8087
      %v8354 = vsel %vm8349, %v8345, %v8089
      %v8355 = vsel %vm8349, %v8346, %v8091
      %v8356 = vsel %vm8349, %v8347, %v8093
      %v8357 = vsel %vm8349, %v8348, %v8095
      %vm8358 = vcmask 588800
      %v8359 = vsel %vm8358, %v8350, %v8120
      %v8360 = vsel %vm8358, %v8351, %v8122
      %v8361 = vsel %vm8358, %v8352, %v8124
      %v8362 = vsel %vm8358, %v8353, %v8126
      %v8363 = vsel %vm8358, %v8354, %v8128
      %v8364 = vsel %vm8358, %v8355, %v8130
      %v8365 = vsel %vm8358, %v8356, %v8132
      %v8366 = vsel %vm8358, %v8357, %v8134
      %vm8367 = vcmask 654336
      %v8368 = vsel %vm8367, %v8359, %v8152
      %v8369 = vsel %vm8367, %v8360, %v8154
      %v8370 = vsel %vm8367, %v8361, %v8156
      %v8371 = vsel %vm8367, %v8362, %v8158
      %v8372 = vsel %vm8367, %v8363, %v8160
      %v8373 = vsel %vm8367, %v8364, %v8162
      %v8374 = vsel %vm8367, %v8365, %v8164
      %v8375 = vsel %vm8367, %v8366, %v8166
      %vm8376 = vcmask 719872
      %v8377 = vsel %vm8376, %v8368, %v8184
      %v8378 = vsel %vm8376, %v8369, %v8186
      %v8379 = vsel %vm8376, %v8370, %v8188
      %v8380 = vsel %vm8376, %v8371, %v8190
      %v8381 = vsel %vm8376, %v8372, %v8192
      %v8382 = vsel %vm8376, %v8373, %v8194
      %v8383 = vsel %vm8376, %v8374, %v8196
      %v8384 = vsel %vm8376, %v8375, %v8198
      %vm8385 = vcmask 785408
      %v8386 = vsel %vm8385, %v8377, %v8208
      %v8387 = vsel %vm8385, %v8378, %v8210
      %v8388 = vsel %vm8385, %v8379, %v8212
      %v8389 = vsel %vm8385, %v8380, %v8214
      %v8390 = vsel %vm8385, %v8381, %v8216
      %v8391 = vsel %vm8385, %v8382, %v8218
      %v8392 = vsel %vm8385, %v8383, %v8220
      %v8393 = vsel %vm8385, %v8384, %v8220
      %vm8394 = vcmask 850944
      %v8395 = vsel %vm8394, %v8386, %v8229
      %v8396 = vsel %vm8394, %v8387, %v8231
      %v8397 = vsel %vm8394, %v8388, %v8233
      %v8398 = vsel %vm8394, %v8389, %v8235
      %v8399 = vsel %vm8394, %v8390, %v8237
      %v8400 = vsel %vm8394, %v8391, %v8239
      %v8401 = vsel %vm8394, %v8392, %v8241
      %v8402 = vsel %vm8394, %v8393, %v8241
      %vm8403 = vcmask 916480
      %v8404 = vsel %vm8403, %v8395, %v8250
      %v8405 = vsel %vm8403, %v8396, %v8252
      %v8406 = vsel %vm8403, %v8397, %v8254
      %v8407 = vsel %vm8403, %v8398, %v8256
      %v8408 = vsel %vm8403, %v8399, %v8258
      %v8409 = vsel %vm8403, %v8400, %v8260
      %v8410 = vsel %vm8403, %v8401, %v8262
      %v8411 = vsel %vm8403, %v8402, %v8262
      %vm8412 = vcmask 982016
      %v8413 = vsel %vm8412, %v8404, %v8271
      %v8414 = vsel %vm8412, %v8405, %v8273
      %v8415 = vsel %vm8412, %v8406, %v8275
      %v8416 = vsel %vm8412, %v8407, %v8277
      %v8417 = vsel %vm8412, %v8408, %v8279
      %v8418 = vsel %vm8412, %v8409, %v8281
      %v8419 = vsel %vm8412, %v8410, %v8283
      %v8420 = vsel %vm8412, %v8411, %v8283
      %v8422 = vperm.slane %v6870, 0
      %8424 = vmatpush.msra.mxu0 %v6869
      %8425 = vmatpush.msra.mxu0 %v6868
      %8426 = vmatpush.msra.mxu0 %v6867
      %8427 = vmatpush.msra.mxu0 %v6866
      %8428 = vmatpush.msra.mxu0 %v6865
      %8429 = vmatpush.msra.mxu0 %v6864
      %8430 = vmatpush.msra.mxu0 %v6863
      %8431 = vmatpush.msra.mxu0 %v6862
      %8432 = vmatpush.msra.mxu0 %v6861
      %8433 = vmatpush.msra.mxu0 %v6860
      %8434 = vmatpush.msra.mxu0 %v6859
      %8435 = vmatpush.msra.mxu0 %v6858
      %8436 = vmatpush.msra.mxu0 %v6857
      %8437 = vmatpush.msra.mxu0 %v6856
      %8438 = vmatpush.msra.mxu0 %v6855
      %8439 = vmatpush.msra.mxu0 %v6854
      %8440 = vmatmul.f32.gmra.mxu0 %v8413
      %v8441 = vpop.f32.mrf.mxu0
      %v8442 = vadd.f32 %v8422, %v8441
      %8443 = vmatmul.f32.gmra.mxu0 %v8414
      %v8444 = vpop.f32.mrf.mxu0
      %v8445 = vadd.f32 %v8422, %v8444
      %8446 = vmatmul.f32.gmra.mxu0 %v8415
      %v8447 = vpop.f32.mrf.mxu0
      %v8448 = vadd.f32 %v8422, %v8447
      %8449 = vmatmul.f32.gmra.mxu0 %v8416
      %v8450 = vpop.f32.mrf.mxu0
      %v8451 = vadd.f32 %v8422, %v8450
      %8452 = vmatmul.f32.gmra.mxu0 %v8417
      %v8453 = vpop.f32.mrf.mxu0
      %v8454 = vadd.f32 %v8422, %v8453
      %8455 = vmatmul.f32.gmra.mxu0 %v8418
      %v8456 = vpop.f32.mrf.mxu0
      %v8457 = vadd.f32 %v8422, %v8456
      %8458 = vmatmul.f32.gmra.mxu0 %v8419
      %v8459 = vpop.f32.mrf.mxu0
      %v8460 = vadd.f32 %v8422, %v8459
      %8461 = vmatmul.f32.gmra.mxu0 %v8420
      %v8462 = vpop.f32.mrf.mxu0
      %v8463 = vadd.f32 %v8422, %v8462
      %8464 = vdwg.mxu0
      %v8465 = vsel %vm8299, %v8442, 0.0
      %v8466 = vsel %vm8299, %v8445, 0.0
      %v8467 = vadd.f32 %v8465, %v8466
      %v8468 = vsel %vm8299, %v8448, 0.0
      %v8469 = vadd.f32 %v8467, %v8468
      %v8470 = vsel %vm8299, %v8451, 0.0
      %v8471 = vadd.f32 %v8469, %v8470
      %v8472 = vsel %vm8299, %v8454, 0.0
      %v8473 = vadd.f32 %v8471, %v8472
      %v8474 = vsel %vm8299, %v8457, 0.0
      %v8475 = vadd.f32 %v8473, %v8474
      %v8476 = vsel %vm8299, %v8460, 0.0
      %v8477 = vadd.f32 %v8475, %v8476
      %v8478 = vsel %vm8299, %v8463, 0.0
      %v8479 = vadd.f32 %v8477, %v8478
      %v8480 = vrot.slane %v8479, 4
      %v8481 = vadd.f32 %v8479, %v8480
      %v8482 = vrot.slane %v8481, 2
      %v8483 = vadd.f32 %v8481, %v8482
      %v8484 = vrot.slane %v8483, 1
      %v8485 = vadd.f32 %v8483, %v8484
      %v8486 = vrcp.pop 64.0
      %v8487 = vmul.f32 64.0, %v8486
      %v8488 = vsub.f32 1.0, %v8487
      %v8489 = vmul.f32 %v8486, %v8488
      %v8490 = vadd.f32 %v8486, %v8489
      %vm8491 = vweird.f32 %v8486
      %v8492 = vsel %vm8491, %v8486, %v8490
      %v8493 = vmul.f32 %v8485, %v8492
      %v8494 = vsub.f32 %v8442, %v8493
      %v8495 = vsub.f32 %v8445, %v8493
      %v8496 = vsub.f32 %v8448, %v8493
      %v8497 = vsub.f32 %v8451, %v8493
      %v8498 = vsub.f32 %v8454, %v8493
      %v8499 = vsub.f32 %v8457, %v8493
      %v8500 = vsub.f32 %v8460, %v8493
      %v8501 = vsub.f32 %v8463, %v8493
      %v8502 = vmul.f32 %v8494, %v8494
      %v8503 = vmul.f32 %v8495, %v8495
      %v8504 = vmul.f32 %v8496, %v8496
      %v8505 = vmul.f32 %v8497, %v8497
      %v8506 = vmul.f32 %v8498, %v8498
      %v8507 = vmul.f32 %v8499, %v8499
      %v8508 = vmul.f32 %v8500, %v8500
      %v8509 = vmul.f32 %v8501, %v8501
      %v8510 = vsel %vm8299, %v8502, 0.0
      %v8511 = vsel %vm8299, %v8503, 0.0
      %v8512 = vadd.f32 %v8510, %v8511
      %v8513 = vsel %vm8299, %v8504, 0.0
      %v8514 = vadd.f32 %v8512, %v8513
      %v8515 = vsel %vm8299, %v8505, 0.0
      %v8516 = vadd.f32 %v8514, %v8515
      %v8517 = vsel %vm8299, %v8506, 0.0
      %v8518 = vadd.f32 %v8516, %v8517
      %v8519 = vsel %vm8299, %v8507, 0.0
      %v8520 = vadd.f32 %v8518, %v8519
      %v8521 = vsel %vm8299, %v8508, 0.0
      %v8522 = vadd.f32 %v8520, %v8521
      %v8523 = vsel %vm8299, %v8509, 0.0
      %v8524 = vadd.f32 %v8522, %v8523
      %v8525 = vrot.slane %v8524, 4
      %v8526 = vadd.f32 %v8524, %v8525
      %v8527 = vrot.slane %v8526, 2
      %v8528 = vadd.f32 %v8526, %v8527
      %v8529 = vrot.slane %v8528, 1
      %v8530 = vadd.f32 %v8528, %v8529
      %v8531 = vmul.f32 %v8530, %v8492
      %v8532 = vadd.f32 %v8531, 1e-05
      %v8533 = vrsqrt.pop %v8532
      %v8534 = vmul.f32 %v8533, %v8532
      %v8535 = vmul.f32 %v8534, %v8533
      %v8536 = vmul.f32 0.5, %v8535
      %v8537 = vsub.f32 1.5, %v8536
      %v8538 = vmul.f32 %v8533, %v8537
      %vm8539 = vweird.f32 %v8532
      %vm8540 = vweird.f32 %v8533
      %vm8541 = vmor %vm8539, %vm8540
      %v8542 = vsel %vm8541, %v8533, %v8538
      %v8543 = vmul.f32 %v8494, %v8542
      %v8544 = vmul.f32 %v8495, %v8542
      %v8545 = vmul.f32 %v8496, %v8542
      %v8546 = vmul.f32 %v8497, %v8542
      %v8547 = vmul.f32 %v8498, %v8542
      %v8548 = vmul.f32 %v8499, %v8542
      %v8549 = vmul.f32 %v8500, %v8542
      %v8550 = vmul.f32 %v8501, %v8542
      %v8552 = vperm.slane %v6871, 0
      %v8554 = vmul.f32 %v8543, %v8552
      %v8555 = vmul.f32 %v8544, %v8552
      %v8556 = vmul.f32 %v8545, %v8552
      %v8557 = vmul.f32 %v8546, %v8552
      %v8558 = vmul.f32 %v8547, %v8552
      %v8559 = vmul.f32 %v8548, %v8552
      %v8560 = vmul.f32 %v8549, %v8552
      %v8561 = vmul.f32 %v8550, %v8552
      %v8563 = vperm.slane %v6872, 0
      %v8565 = vadd.f32 %v8554, %v8563
      %v8566 = vadd.f32 %v8555, %v8563
      %v8567 = vadd.f32 %v8556, %v8563
      %v8568 = vadd.f32 %v8557, %v8563
      %v8569 = vadd.f32 %v8558, %v8563
      %v8570 = vadd.f32 %v8559, %v8563
      %v8571 = vadd.f32 %v8560, %v8563
      %v8572 = vadd.f32 %v8561, %v8563
      %vm8573 = vcmp.gt.f32.partialorder %v8565, 0.0
      %vm8574 = vcmp.gt.f32.partialorder %v8566, 0.0
      %vm8575 = vcmp.gt.f32.partialorder %v8567, 0.0
      %vm8576 = vcmp.gt.f32.partialorder %v8568, 0.0
      %vm8577 = vcmp.gt.f32.partialorder %v8569, 0.0
      %vm8578 = vcmp.gt.f32.partialorder %v8570, 0.0
      %vm8579 = vcmp.gt.f32.partialorder %v8571, 0.0
      %vm8580 = vcmp.gt.f32.partialorder %v8572, 0.0
      %v8581 = vmul.f32 %v8565, 0.2
      %v8582 = vmul.f32 %v8566, 0.2
      %v8583 = vmul.f32 %v8567, 0.2
      %v8584 = vmul.f32 %v8568, 0.2
      %v8585 = vmul.f32 %v8569, 0.2
      %v8586 = vmul.f32 %v8570, 0.2
      %v8587 = vmul.f32 %v8571, 0.2
      %v8588 = vmul.f32 %v8572, 0.2
      %v8589 = vsel %vm8573, %v8565, %v8581
      %v8590 = vsel %vm8574, %v8566, %v8582
      %v8591 = vsel %vm8575, %v8567, %v8583
      %v8592 = vsel %vm8576, %v8568, %v8584
      %v8593 = vsel %vm8577, %v8569, %v8585
      %v8594 = vsel %vm8578, %v8570, %v8586
      %v8595 = vsel %vm8579, %v8571, %v8587
      %v8596 = vsel %vm8580, %v8572, %v8588
      %v8597 = vld [vmem:[%s7] sm:$0xff]
      %v8598 = vld [vmem:[%s7 + $0x8] sm:$0xff]
      %v8599 = vld [vmem:[%s7 + $0x10] sm:$0xff]
      %v8600 = vld [vmem:[%s7 + $0x18] sm:$0xff]
      %v8601 = vld [vmem:[%s7 + $0x20] sm:$0xff]
      %v8602 = vld [vmem:[%s7 + $0x28] sm:$0xff]
      %v8603 = vld [vmem:[%s7 + $0x30] sm:$0xff]
      %v8604 = vld [vmem:[%s7 + $0x38] sm:$0xff]
      %v8605 = vld [vmem:[%s7 + $0x40] sm:$0xff]
      %v8606 = vld [vmem:[%s7 + $0x48] sm:$0xff]
      %v8607 = vld [vmem:[%s7 + $0x50] sm:$0xff]
      %v8608 = vld [vmem:[%s7 + $0x58] sm:$0xff]
      %v8609 = vld [vmem:[%s7 + $0x60] sm:$0xff]
      %v8610 = vld [vmem:[%s7 + $0x68] sm:$0xff]
      %v8611 = vld [vmem:[%s7 + $0x70] sm:$0xff]
      %v8612 = vld [vmem:[%s7 + $0x78] sm:$0xff]
      %v8613 = vld [vmem:[%s7 + $0x80] sm:$0xff]
      %v8614 = vld [vmem:[%s7 + $0x88] sm:$0xff]
      %v8615 = vld [vmem:[%s7 + $0x90] sm:$0xff]
      %v8616 = vld [vmem:[%s7 + $0x98] sm:$0xff]
      %v8617 = vld [vmem:[%s7 + $0xa0] sm:$0xff]
      %v8618 = vld [vmem:[%s7 + $0xa8] sm:$0xff]
      %v8619 = vld [vmem:[%s7 + $0xb0] sm:$0xff]
      %v8620 = vld [vmem:[%s7 + $0xb8] sm:$0xff]
      %v8621 = vld [vmem:[%s7 + $0xc0] sm:$0xff]
      %v8622 = vld [vmem:[%s7 + $0xc8] sm:$0xff]
      %v8623 = vld [vmem:[%s7 + $0xd0] sm:$0xff]
      %v8624 = vld [vmem:[%s7 + $0xd8] sm:$0xff]
      %v8625 = vld [vmem:[%s7 + $0xe0] sm:$0xff]
      %v8626 = vld [vmem:[%s7 + $0xe8] sm:$0xff]
      %v8627 = vld [vmem:[%s7 + $0xf0] sm:$0xff]
      %v8628 = vld [vmem:[%s7 + $0xf8] sm:$0xff]
      %v8629 = vld [vmem:[%s8] sm:$0x1]
      %v8630 = vld [vmem:[%s9] sm:$0x1]
      %v8631 = vld [vmem:[%s10] sm:$0x1]
      %v8640 = vrot.slane %v8590, 1
      %v8641 = vrot.slane %v8589, 1
      %v8642 = vrot.slane %v8591, 1
      %v8643 = vrot.slane %v8592, 1
      %v8644 = vrot.slane %v8593, 1
      %v8645 = vrot.slane %v8594, 1
      %v8646 = vrot.slane %v8595, 1
      %v8647 = vrot.slane %v8596, 1
      %v8656 = vrot.slane %v8590, 7
      %v8657 = vrot.slane %v8589, 7
      %v8658 = vrot.slane %v8591, 7
      %v8659 = vrot.slane %v8592, 7
      %v8660 = vrot.slane %v8593, 7
      %v8661 = vrot.slane %v8594, 7
      %v8662 = vrot.slane %v8595, 7
      %v8663 = vrot.slane %v8596, 7
      %v8672 = vrot.slane %v8590, 5
      %v8673 = vrot.slane %v8589, 5
      %v8674 = vrot.slane %v8591, 5
      %v8675 = vrot.slane %v8592, 5
      %v8676 = vrot.slane %v8593, 5
      %v8677 = vrot.slane %v8594, 5
      %v8678 = vrot.slane %v8595, 5
      %v8679 = vrot.slane %v8596, 5
      %v8688 = vsel %vm876, %v8640, %v8656
      %v8689 = vsel %vm876, %v8641, %v8657
      %v8690 = vsel %vm876, %v8642, %v8658
      %v8691 = vsel %vm876, %v8643, %v8659
      %v8692 = vsel %vm876, %v8644, %v8660
      %v8693 = vsel %vm876, %v8645, %v8661
      %v8694 = vsel %vm876, %v8646, %v8662
      %v8695 = vsel %vm876, %v8647, %v8663
      %v8696 = vsel %vm876, %v8656, %v8672
      %v8697 = vsel %vm876, %v8657, %v8673
      %v8698 = vsel %vm876, %v8658, %v8674
      %v8699 = vsel %vm876, %v8659, %v8675
      %v8700 = vsel %vm876, %v8660, %v8676
      %v8701 = vsel %vm876, %v8661, %v8677
      %v8702 = vsel %vm876, %v8662, %v8678
      %v8703 = vsel %vm876, %v8663, %v8679
      %v8710 = vrot.slane %v8688, 2
      %v8711 = vrot.slane %v8688, 4
      %v8712 = vrot.slane %v8688, 6
      %v8713 = vrot.slane %v8691, 2
      %v8714 = vrot.slane %v8691, 4
      %v8715 = vrot.slane %v8691, 6
      %v8716 = vrot.slane %v8693, 2
      %v8717 = vrot.slane %v8693, 4
      %v8718 = vrot.slane %v8693, 6
      %v8727 = vrot.slane %v8689, 2
      %v8728 = vrot.slane %v8689, 4
      %v8729 = vrot.slane %v8689, 6
      %v8730 = vrot.slane %v8690, 2
      %v8731 = vrot.slane %v8690, 4
      %v8732 = vrot.slane %v8690, 6
      %v8733 = vrot.slane %v8692, 2
      %v8734 = vrot.slane %v8692, 4
      %v8735 = vrot.slane %v8692, 6
      %v8736 = vrot.slane %v8694, 2
      %v8737 = vrot.slane %v8694, 4
      %v8738 = vrot.slane %v8694, 6
      %v8741 = vrot.slane %v8695, 2
      %v8742 = vrot.slane %v8695, 4
      %v8743 = vrot.slane %v8695, 6
      %v8744 = vperm.slane %v8688, 0
      %v8745 = vperm.slane %v8710, 0
      %v8746 = vperm.slane %v8711, 0
      %v8747 = vperm.slane %v8712, 0
      %v8748 = vperm.slane %v8691, 0
      %v8749 = vperm.slane %v8713, 0
      %v8750 = vperm.slane %v8714, 0
      %v8751 = vperm.slane %v8715, 0
      %v8752 = vperm.slane %v8693, 0
      %v8753 = vperm.slane %v8716, 0
      %v8754 = vperm.slane %v8717, 0
      %v8755 = vperm.slane %v8718, 0
      %v8756 = vsel %vm1981, %v8745, %v8744
      %v8757 = vsel %vm1983, %v8746, %v8756
      %v8758 = vsel %vm1985, %v8747, %v8757
      %v8759 = vsel %vm1987, %v8744, %v8758
      %v8760 = vsel %vm1989, %v8745, %v8759
      %v8761 = vsel %vm1991, %v8746, %v8760
      %v8762 = vsel %vm1993, %v8747, %v8761
      %v8763 = vsel %vm1981, %v8749, %v8748
      %v8764 = vsel %vm1983, %v8750, %v8763
      %v8765 = vsel %vm1985, %v8751, %v8764
      %v8766 = vsel %vm1987, %v8752, %v8765
      %v8767 = vsel %vm1989, %v8753, %v8766
      %v8768 = vsel %vm1991, %v8754, %v8767
      %v8769 = vsel %vm1993, %v8755, %v8768
      %v8772 = vperm.slane %v8688, 1
      %v8773 = vperm.slane %v8710, 1
      %v8774 = vperm.slane %v8711, 1
      %v8775 = vperm.slane %v8712, 1
      %v8776 = vperm.slane %v8691, 1
      %v8777 = vperm.slane %v8713, 1
      %v8778 = vperm.slane %v8714, 1
      %v8779 = vperm.slane %v8715, 1
      %v8780 = vperm.slane %v8693, 1
      %v8781 = vperm.slane %v8716, 1
      %v8782 = vperm.slane %v8717, 1
      %v8783 = vperm.slane %v8718, 1
      %v8784 = vsel %vm1981, %v8773, %v8772
      %v8785 = vsel %vm1983, %v8774, %v8784
      %v8786 = vsel %vm1985, %v8775, %v8785
      %v8787 = vsel %vm1987, %v8772, %v8786
      %v8788 = vsel %vm1989, %v8773, %v8787
      %v8789 = vsel %vm1991, %v8774, %v8788
      %v8790 = vsel %vm1993, %v8775, %v8789
      %v8791 = vsel %vm1981, %v8777, %v8776
      %v8792 = vsel %vm1983, %v8778, %v8791
      %v8793 = vsel %vm1985, %v8779, %v8792
      %v8794 = vsel %vm1987, %v8780, %v8793
      %v8795 = vsel %vm1989, %v8781, %v8794
      %v8796 = vsel %vm1991, %v8782, %v8795
      %v8797 = vsel %vm1993, %v8783, %v8796
      %8798 = vrot.lane.b32.xlu0 %v8790, 16
      %v8799 = vpop.permute.xlu0 %8798
      %8800 = vrot.lane.b32.xlu0 %v8797, 16
      %v8801 = vpop.permute.xlu0 %8800
      %v8804 = vperm.slane %v8696, 0
      %v8805 = vperm.slane %v8699, 0
      %v8806 = vperm.slane %v8701, 0
      %v8807 = vsel %vm1981, %v8746, %v8745
      %v8808 = vsel %vm1983, %v8747, %v8807
      %v8809 = vsel %vm1985, %v8804, %v8808
      %v8810 = vsel %vm1987, %v8745, %v8809
      %v8811 = vsel %vm1989, %v8746, %v8810
      %v8812 = vsel %vm1991, %v8747, %v8811
      %v8813 = vsel %vm1993, %v8804, %v8812
      %v8814 = vsel %vm1981, %v8750, %v8749
      %v8815 = vsel %vm1983, %v8751, %v8814
      %v8816 = vsel %vm1985, %v8805, %v8815
      %v8817 = vsel %vm1987, %v8753, %v8816
      %v8818 = vsel %vm1989, %v8754, %v8817
      %v8819 = vsel %vm1991, %v8755, %v8818
      %v8820 = vsel %vm1993, %v8806, %v8819
      %8821 = vrot.lane.b32.xlu0 %v8813, 32
      %v8822 = vpop.permute.xlu0 %8821
      %8823 = vrot.lane.b32.xlu0 %v8820, 32
      %v8824 = vpop.permute.xlu0 %8823
      %v8827 = vperm.slane %v8696, 1
      %v8828 = vperm.slane %v8699, 1
      %v8829 = vperm.slane %v8701, 1
      %v8830 = vsel %vm1981, %v8774, %v8773
      %v8831 = vsel %vm1983, %v8775, %v8830
      %v8832 = vsel %vm1985, %v8827, %v8831
      %v8833 = vsel %vm1987, %v8773, %v8832
      %v8834 = vsel %vm1989, %v8774, %v8833
      %v8835 = vsel %vm1991, %v8775, %v8834
      %v8836 = vsel %vm1993, %v8827, %v8835
      %v8837 = vsel %vm1981, %v8778, %v8777
      %v8838 = vsel %vm1983, %v8779, %v8837
      %v8839 = vsel %vm1985, %v8828, %v8838
      %v8840 = vsel %vm1987, %v8781, %v8839
      %v8841 = vsel %vm1989, %v8782, %v8840
      %v8842 = vsel %vm1991, %v8783, %v8841
      %v8843 = vsel %vm1993, %v8829, %v8842
      %8844 = vrot.lane.b32.xlu0 %v8836, 48
      %v8845 = vpop.permute.xlu0 %8844
      %8846 = vrot.lane.b32.xlu0 %v8843, 48
      %v8847 = vpop.permute.xlu0 %8846
      %v8850 = vperm.slane %v8689, 0
      %v8851 = vperm.slane %v8727, 0
      %v8852 = vperm.slane %v8728, 0
      %v8853 = vperm.slane %v8729, 0
      %v8854 = vperm.slane %v8690, 0
      %v8855 = vperm.slane %v8730, 0
      %v8856 = vperm.slane %v8731, 0
      %v8857 = vperm.slane %v8732, 0
      %v8858 = vperm.slane %v8692, 0
      %v8859 = vperm.slane %v8733, 0
      %v8860 = vperm.slane %v8734, 0
      %v8861 = vperm.slane %v8735, 0
      %v8862 = vperm.slane %v8694, 0
      %v8863 = vperm.slane %v8736, 0
      %v8864 = vperm.slane %v8737, 0
      %v8865 = vperm.slane %v8738, 0
      %v8866 = vsel %vm1981, %v8851, %v8850
      %v8867 = vsel %vm1983, %v8852, %v8866
      %v8868 = vsel %vm1985, %v8853, %v8867
      %v8869 = vsel %vm1987, %v8854, %v8868
      %v8870 = vsel %vm1989, %v8855, %v8869
      %v8871 = vsel %vm1991, %v8856, %v8870
      %v8872 = vsel %vm1993, %v8857, %v8871
      %v8873 = vsel %vm1981, %v8859, %v8858
      %v8874 = vsel %vm1983, %v8860, %v8873
      %v8875 = vsel %vm1985, %v8861, %v8874
      %v8876 = vsel %vm1987, %v8862, %v8875
      %v8877 = vsel %vm1989, %v8863, %v8876
      %v8878 = vsel %vm1991, %v8864, %v8877
      %v8879 = vsel %vm1993, %v8865, %v8878
      %8880 = vrot.lane.b32.xlu0 %v8872, 64
      %v8881 = vpop.permute.xlu0 %8880
      %8882 = vrot.lane.b32.xlu0 %v8879, 64
      %v8883 = vpop.permute.xlu0 %8882
      %v8886 = vperm.slane %v8689, 1
      %v8887 = vperm.slane %v8727, 1
      %v8888 = vperm.slane %v8728, 1
      %v8889 = vperm.slane %v8729, 1
      %v8890 = vperm.slane %v8690, 1
      %v8891 = vperm.slane %v8730, 1
      %v8892 = vperm.slane %v8731, 1
      %v8893 = vperm.slane %v8732, 1
      %v8894 = vperm.slane %v8692, 1
      %v8895 = vperm.slane %v8733, 1
      %v8896 = vperm.slane %v8734, 1
      %v8897 = vperm.slane %v8735, 1
      %v8898 = vperm.slane %v8694, 1
      %v8899 = vperm.slane %v8736, 1
      %v8900 = vperm.slane %v8737, 1
      %v8901 = vperm.slane %v8738, 1
      %v8902 = vsel %vm1981, %v8887, %v8886
      %v8903 = vsel %vm1983, %v8888, %v8902
      %v8904 = vsel %vm1985, %v8889, %v8903
      %v8905 = vsel %vm1987, %v8890, %v8904
      %v8906 = vsel %vm1989, %v8891, %v8905
      %v8907 = vsel %vm1991, %v8892, %v8906
      %v8908 = vsel %vm1993, %v8893, %v8907
      %v8909 = vsel %vm1981, %v8895, %v8894
      %v8910 = vsel %vm1983, %v8896, %v8909
      %v8911 = vsel %vm1985, %v8897, %v8910
      %v8912 = vsel %vm1987, %v8898, %v8911
      %v8913 = vsel %vm1989, %v8899, %v8912
      %v8914 = vsel %vm1991, %v8900, %v8913
      %v8915 = vsel %vm1993, %v8901, %v8914
      %8916 = vrot.lane.b32.xlu0 %v8908, 80
      %v8917 = vpop.permute.xlu0 %8916
      %8918 = vrot.lane.b32.xlu0 %v8915, 80
      %v8919 = vpop.permute.xlu0 %8918
      %v8922 = vperm.slane %v8697, 0
      %v8923 = vperm.slane %v8698, 0
      %v8924 = vperm.slane %v8700, 0
      %v8925 = vperm.slane %v8702, 0
      %v8926 = vsel %vm1981, %v8852, %v8851
      %v8927 = vsel %vm1983, %v8853, %v8926
      %v8928 = vsel %vm1985, %v8922, %v8927
      %v8929 = vsel %vm1987, %v8855, %v8928
      %v8930 = vsel %vm1989, %v8856, %v8929
      %v8931 = vsel %vm1991, %v8857, %v8930
      %v8932 = vsel %vm1993, %v8923, %v8931
      %v8933 = vsel %vm1981, %v8860, %v8859
      %v8934 = vsel %vm1983, %v8861, %v8933
      %v8935 = vsel %vm1985, %v8924, %v8934
      %v8936 = vsel %vm1987, %v8863, %v8935
      %v8937 = vsel %vm1989, %v8864, %v8936
      %v8938 = vsel %vm1991, %v8865, %v8937
      %v8939 = vsel %vm1993, %v8925, %v8938
      %8940 = vrot.lane.b32.xlu0 %v8932, 96
      %v8941 = vpop.permute.xlu0 %8940
      %8942 = vrot.lane.b32.xlu0 %v8939, 96
      %v8943 = vpop.permute.xlu0 %8942
      %v8946 = vperm.slane %v8697, 1
      %v8947 = vperm.slane %v8698, 1
      %v8948 = vperm.slane %v8700, 1
      %v8949 = vperm.slane %v8702, 1
      %v8950 = vsel %vm1981, %v8888, %v8887
      %v8951 = vsel %vm1983, %v8889, %v8950
      %v8952 = vsel %vm1985, %v8946, %v8951
      %v8953 = vsel %vm1987, %v8891, %v8952
      %v8954 = vsel %vm1989, %v8892, %v8953
      %v8955 = vsel %vm1991, %v8893, %v8954
      %v8956 = vsel %vm1993, %v8947, %v8955
      %v8957 = vsel %vm1981, %v8896, %v8895
      %v8958 = vsel %vm1983, %v8897, %v8957
      %v8959 = vsel %vm1985, %v8948, %v8958
      %v8960 = vsel %vm1987, %v8899, %v8959
      %v8961 = vsel %vm1989, %v8900, %v8960
      %v8962 = vsel %vm1991, %v8901, %v8961
      %v8963 = vsel %vm1993, %v8949, %v8962
      %8964 = vrot.lane.b32.xlu0 %v8956, 112
      %v8965 = vpop.permute.xlu0 %8964
      %8966 = vrot.lane.b32.xlu0 %v8963, 112
      %v8967 = vpop.permute.xlu0 %8966
      %v8970 = vperm.slane %v8695, 0
      %v8971 = vperm.slane %v8741, 0
      %v8972 = vperm.slane %v8742, 0
      %v8973 = vperm.slane %v8743, 0
      %v8974 = vsel %vm1987, %v8748, %v8758
      %v8975 = vsel %vm1989, %v8749, %v8974
      %v8976 = vsel %vm1991, %v8750, %v8975
      %v8977 = vsel %vm1993, %v8751, %v8976
      %v8978 = vsel %vm1981, %v8753, %v8752
      %v8979 = vsel %vm1983, %v8754, %v8978
      %v8980 = vsel %vm1985, %v8755, %v8979
      %v8981 = vsel %vm1987, %v8970, %v8980
      %v8982 = vsel %vm1989, %v8971, %v8981
      %v8983 = vsel %vm1991, %v8972, %v8982
      %v8984 = vsel %vm1993, %v8973, %v8983
      %v8987 = vperm.slane %v8695, 1
      %v8988 = vperm.slane %v8741, 1
      %v8989 = vperm.slane %v8742, 1
      %v8990 = vperm.slane %v8743, 1
      %v8991 = vsel %vm1987, %v8776, %v8786
      %v8992 = vsel %vm1989, %v8777, %v8991
      %v8993 = vsel %vm1991, %v8778, %v8992
      %v8994 = vsel %vm1993, %v8779, %v8993
      %v8995 = vsel %vm1981, %v8781, %v8780
      %v8996 = vsel %vm1983, %v8782, %v8995
      %v8997 = vsel %vm1985, %v8783, %v8996
      %v8998 = vsel %vm1987, %v8987, %v8997
      %v8999 = vsel %vm1989, %v8988, %v8998
      %v9000 = vsel %vm1991, %v8989, %v8999
      %v9001 = vsel %vm1993, %v8990, %v9000
      %9002 = vrot.lane.b32.xlu0 %v8994, 16
      %v9003 = vpop.permute.xlu0 %9002
      %9004 = vrot.lane.b32.xlu0 %v9001, 16
      %v9005 = vpop.permute.xlu0 %9004
      %v9008 = vperm.slane %v8703, 0
      %v9009 = vsel %vm1987, %v8749, %v8809
      %v9010 = vsel %vm1989, %v8750, %v9009
      %v9011 = vsel %vm1991, %v8751, %v9010
      %v9012 = vsel %vm1993, %v8805, %v9011
      %v9013 = vsel %vm1981, %v8754, %v8753
      %v9014 = vsel %vm1983, %v8755, %v9013
      %v9015 = vsel %vm1985, %v8806, %v9014
      %v9016 = vsel %vm1987, %v8971, %v9015
      %v9017 = vsel %vm1989, %v8972, %v9016
      %v9018 = vsel %vm1991, %v8973, %v9017
      %v9019 = vsel %vm1993, %v9008, %v9018
      %9020 = vrot.lane.b32.xlu0 %v9012, 32
      %v9021 = vpop.permute.xlu0 %9020
      %9022 = vrot.lane.b32.xlu0 %v9019, 32
      %v9023 = vpop.permute.xlu0 %9022
      %v9026 = vperm.slane %v8703, 1
      %v9027 = vsel %vm1987, %v8777, %v8832
      %v9028 = vsel %vm1989, %v8778, %v9027
      %v9029 = vsel %vm1991, %v8779, %v9028
      %v9030 = vsel %vm1993, %v8828, %v9029
      %v9031 = vsel %vm1981, %v8782, %v8781
      %v9032 = vsel %vm1983, %v8783, %v9031
      %v9033 = vsel %vm1985, %v8829, %v9032
      %v9034 = vsel %vm1987, %v8988, %v9033
      %v9035 = vsel %vm1989, %v8989, %v9034
      %v9036 = vsel %vm1991, %v8990, %v9035
      %v9037 = vsel %vm1993, %v9026, %v9036
      %9038 = vrot.lane.b32.xlu0 %v9030, 48
      %v9039 = vpop.permute.xlu0 %9038
      %9040 = vrot.lane.b32.xlu0 %v9037, 48
      %v9041 = vpop.permute.xlu0 %9040
      %v9044 = vsel %vm1981, %v8855, %v8854
      %v9045 = vsel %vm1983, %v8856, %v9044
      %v9046 = vsel %vm1985, %v8857, %v9045
      %v9047 = vsel %vm1987, %v8858, %v9046
      %v9048 = vsel %vm1989, %v8859, %v9047
      %v9049 = vsel %vm1991, %v8860, %v9048
      %v9050 = vsel %vm1993, %v8861, %v9049
      %v9051 = vsel %vm1981, %v8863, %v8862
      %v9052 = vsel %vm1983, %v8864, %v9051
      %v9053 = vsel %vm1985, %v8865, %v9052
      %v9054 = vsel %vm1987, %v8862, %v9053
      %v9055 = vsel %vm1989, %v8863, %v9054
      %v9056 = vsel %vm1991, %v8864, %v9055
      %v9057 = vsel %vm1993, %v8865, %v9056
      %9058 = vrot.lane.b32.xlu0 %v9050, 64
      %v9059 = vpop.permute.xlu0 %9058
      %9060 = vrot.lane.b32.xlu0 %v9057, 64
      %v9061 = vpop.permute.xlu0 %9060
      %v9064 = vsel %vm1981, %v8891, %v8890
      %v9065 = vsel %vm1983, %v8892, %v9064
      %v9066 = vsel %vm1985, %v8893, %v9065
      %v9067 = vsel %vm1987, %v8894, %v9066
      %v9068 = vsel %vm1989, %v8895, %v9067
      %v9069 = vsel %vm1991, %v8896, %v9068
      %v9070 = vsel %vm1993, %v8897, %v9069
      %v9071 = vsel %vm1981, %v8899, %v8898
      %v9072 = vsel %vm1983, %v8900, %v9071
      %v9073 = vsel %vm1985, %v8901, %v9072
      %v9074 = vsel %vm1987, %v8898, %v9073
      %v9075 = vsel %vm1989, %v8899, %v9074
      %v9076 = vsel %vm1991, %v8900, %v9075
      %v9077 = vsel %vm1993, %v8901, %v9076
      %9078 = vrot.lane.b32.xlu0 %v9070, 80
      %v9079 = vpop.permute.xlu0 %9078
      %9080 = vrot.lane.b32.xlu0 %v9077, 80
      %v9081 = vpop.permute.xlu0 %9080
      %v9084 = vsel %vm1981, %v8856, %v8855
      %v9085 = vsel %vm1983, %v8857, %v9084
      %v9086 = vsel %vm1985, %v8923, %v9085
      %v9087 = vsel %vm1987, %v8859, %v9086
      %v9088 = vsel %vm1989, %v8860, %v9087
      %v9089 = vsel %vm1991, %v8861, %v9088
      %v9090 = vsel %vm1993, %v8924, %v9089
      %v9091 = vsel %vm1981, %v8864, %v8863
      %v9092 = vsel %vm1983, %v8865, %v9091
      %v9093 = vsel %vm1985, %v8925, %v9092
      %v9094 = vsel %vm1987, %v8863, %v9093
      %v9095 = vsel %vm1989, %v8864, %v9094
      %v9096 = vsel %vm1991, %v8865, %v9095
      %v9097 = vsel %vm1993, %v8925, %v9096
      %9098 = vrot.lane.b32.xlu0 %v9090, 96
      %v9099 = vpop.permute.xlu0 %9098
      %9100 = vrot.lane.b32.xlu0 %v9097, 96
      %v9101 = vpop.permute.xlu0 %9100
      %v9104 = vsel %vm1981, %v8892, %v8891
      %v9105 = vsel %vm1983, %v8893, %v9104
      %v9106 = vsel %vm1985, %v8947, %v9105
      %v9107 = vsel %vm1987, %v8895, %v9106
      %v9108 = vsel %vm1989, %v8896, %v9107
      %v9109 = vsel %vm1991, %v8897, %v9108
      %v9110 = vsel %vm1993, %v8948, %v9109
      %v9111 = vsel %vm1981, %v8900, %v8899
      %v9112 = vsel %vm1983, %v8901, %v9111
      %v9113 = vsel %vm1985, %v8949, %v9112
      %v9114 = vsel %vm1987, %v8899, %v9113
      %v9115 = vsel %vm1989, %v8900, %v9114
      %v9116 = vsel %vm1991, %v8901, %v9115
      %v9117 = vsel %vm1993, %v8949, %v9116
      %9118 = vrot.lane.b32.xlu0 %v9110, 112
      %v9119 = vpop.permute.xlu0 %9118
      %9120 = vrot.lane.b32.xlu0 %v9117, 112
      %v9121 = vpop.permute.xlu0 %9120
      %v9124 = vsel %vm8299, %v8762, %v8799
      %v9125 = vsel %vm8299, %v8769, %v8801
      %v9126 = vsel %vm8314, %v9124, %v8822
      %v9127 = vsel %vm8314, %v9125, %v8824
      %v9128 = vsel %vm6548, %v9126, %v8845
      %v9129 = vsel %vm6548, %v9127, %v8847
      %v9130 = vsel %vm8349, %v9128, %v8881
      %v9131 = vsel %vm8349, %v9129, %v8883
      %v9132 = vsel %vm8367, %v9130, %v8917
      %v9133 = vsel %vm8367, %v9131, %v8919
      %v9134 = vsel %vm8385, %v9132, %v8941
      %v9135 = vsel %vm8385, %v9133, %v8943
      %v9136 = vsel %vm8403, %v9134, %v8965
      %v9137 = vsel %vm8403, %v9135, %v8967
      %v9138 = vsel %vm8299, %v8977, %v9003
      %v9139 = vsel %vm8299, %v8984, %v9005
      %v9140 = vsel %vm8314, %v9138, %v9021
      %v9141 = vsel %vm8314, %v9139, %v9023
      %v9142 = vsel %vm6548, %v9140, %v9039
      %v9143 = vsel %vm6548, %v9141, %v9041
      %v9144 = vsel %vm8349, %v9142, %v9059
      %v9145 = vsel %vm8349, %v9143, %v9061
      %v9146 = vsel %vm8367, %v9144, %v9079
      %v9147 = vsel %vm8367, %v9145, %v9081
      %v9148 = vsel %vm8385, %v9146, %v9099
      %v9149 = vsel %vm8385, %v9147, %v9101
      %v9150 = vsel %vm8403, %v9148, %v9119
      %v9151 = vsel %vm8403, %v9149, %v9121
      %v9153 = vperm.slane %v8629, 0
      %9155 = vmatpush.msra.mxu0 %v8612
      %9156 = vmatpush.msra.mxu0 %v8611
      %9157 = vmatpush.msra.mxu0 %v8610
      %9158 = vmatpush.msra.mxu0 %v8609
      %9159 = vmatpush.msra.mxu0 %v8608
      %9160 = vmatpush.msra.mxu0 %v8607
      %9161 = vmatpush.msra.mxu0 %v8606
      %9162 = vmatpush.msra.mxu0 %v8605
      %9163 = vmatpush.msra.mxu0 %v8604
      %9164 = vmatpush.msra.mxu0 %v8603
      %9165 = vmatpush.msra.mxu0 %v8602
      %9166 = vmatpush.msra.mxu0 %v8601
      %9167 = vmatpush.msra.mxu0 %v8600
      %9168 = vmatpush.msra.mxu0 %v8599
      %9169 = vmatpush.msra.mxu0 %v8598
      %9170 = vmatpush.msra.mxu0 %v8597
      %9171 = vmatmul.f32.gmra.mxu0 %v9136
      %v9172 = vpop.f32.mrf.mxu0
      %v9173 = vadd.f32 %v9153, %v9172
      %9174 = vmatmul.f32.gmra.mxu0 %v9137
      %v9175 = vpop.f32.mrf.mxu0
      %v9176 = vadd.f32 %v9153, %v9175
      %9177 = vdwg.mxu0
      %9178 = vmatpush.msra.mxu0 %v8628
      %9179 = vmatpush.msra.mxu0 %v8627
      %9180 = vmatpush.msra.mxu0 %v8626
      %9181 = vmatpush.msra.mxu0 %v8625
      %9182 = vmatpush.msra.mxu0 %v8624
      %9183 = vmatpush.msra.mxu0 %v8623
      %9184 = vmatpush.msra.mxu0 %v8622
      %9185 = vmatpush.msra.mxu0 %v8621
      %9186 = vmatpush.msra.mxu0 %v8620
      %9187 = vmatpush.msra.mxu0 %v8619
      %9188 = vmatpush.msra.mxu0 %v8618
      %9189 = vmatpush.msra.mxu0 %v8617
      %9190 = vmatpush.msra.mxu0 %v8616
      %9191 = vmatpush.msra.mxu0 %v8615
      %9192 = vmatpush.msra.mxu0 %v8614
      %9193 = vmatpush.msra.mxu0 %v8613
      %9194 = vmatmul.f32.gmra.mxu0 %v9150
      %v9195 = vpop.f32.mrf.mxu0
      %v9196 = vadd.f32 %v9173, %v9195
      %9197 = vmatmul.f32.gmra.mxu0 %v9151
      %v9198 = vpop.f32.mrf.mxu0
      %v9199 = vadd.f32 %v9176, %v9198
      %9200 = vdwg.mxu0
      %v9201 = vsel %vm8314, %v9196, 0.0
      %v9202 = vsel %vm8314, %v9199, 0.0
      %v9203 = vadd.f32 %v9201, %v9202
      %v9204 = vrot.slane %v9203, 4
      %v9205 = vadd.f32 %v9203, %v9204
      %v9206 = vrot.slane %v9205, 2
      %v9207 = vadd.f32 %v9205, %v9206
      %v9208 = vrot.slane %v9207, 1
      %v9209 = vadd.f32 %v9207, %v9208
      %v9210 = vrcp.pop 16.0
      %v9211 = vmul.f32 16.0, %v9210
      %v9212 = vsub.f32 1.0, %v9211
      %v9213 = vmul.f32 %v9210, %v9212
      %v9214 = vadd.f32 %v9210, %v9213
      %vm9215 = vweird.f32 %v9210
      %v9216 = vsel %vm9215, %v9210, %v9214
      %v9217 = vmul.f32 %v9209, %v9216
      %v9218 = vsub.f32 %v9196, %v9217
      %v9219 = vsub.f32 %v9199, %v9217
      %v9220 = vmul.f32 %v9218, %v9218
      %v9221 = vmul.f32 %v9219, %v9219
      %v9222 = vsel %vm8314, %v9220, 0.0
      %v9223 = vsel %vm8314, %v9221, 0.0
      %v9224 = vadd.f32 %v9222, %v9223
      %v9225 = vrot.slane %v9224, 4
      %v9226 = vadd.f32 %v9224, %v9225
      %v9227 = vrot.slane %v9226, 2
      %v9228 = vadd.f32 %v9226, %v9227
      %v9229 = vrot.slane %v9228, 1
      %v9230 = vadd.f32 %v9228, %v9229
      %v9231 = vmul.f32 %v9230, %v9216
      %v9232 = vadd.f32 %v9231, 1e-05
      %v9233 = vrsqrt.pop %v9232
      %v9234 = vmul.f32 %v9233, %v9232
      %v9235 = vmul.f32 %v9234, %v9233
      %v9236 = vmul.f32 0.5, %v9235
      %v9237 = vsub.f32 1.5, %v9236
      %v9238 = vmul.f32 %v9233, %v9237
      %vm9239 = vweird.f32 %v9232
      %vm9240 = vweird.f32 %v9233
      %vm9241 = vmor %vm9239, %vm9240
      %v9242 = vsel %vm9241, %v9233, %v9238
      %v9243 = vmul.f32 %v9218, %v9242
      %v9244 = vmul.f32 %v9219, %v9242
      %v9246 = vperm.slane %v8630, 0
      %v9248 = vmul.f32 %v9243, %v9246
      %v9249 = vmul.f32 %v9244, %v9246
      %v9251 = vperm.slane %v8631, 0
      %v9253 = vadd.f32 %v9248, %v9251
      %v9254 = vadd.f32 %v9249, %v9251
      %vm9255 = vcmp.gt.f32.partialorder %v9253, 0.0
      %vm9256 = vcmp.gt.f32.partialorder %v9254, 0.0
      %v9257 = vmul.f32 %v9253, 0.2
      %v9258 = vmul.f32 %v9254, 0.2
      %v9259 = vsel %vm9255, %v9253, %v9257
      %v9260 = vsel %vm9256, %v9254, %v9258
      %v9263 = vrot.slane %v9259, 4
      %v9264 = vrot.slane %v9260, 4
      %v9265 = vld [vmem:[%s11] sm:$0xff]
      %v9266 = vld [vmem:[%s11 + $0x8] sm:$0xff]
      %v9267 = vld [vmem:[%s11 + $0x10] sm:$0xff]
      %v9268 = vld [vmem:[%s11 + $0x18] sm:$0xff]
      %v9269 = vld [vmem:[%s11 + $0x20] sm:$0xff]
      %v9270 = vld [vmem:[%s11 + $0x28] sm:$0xff]
      %v9271 = vld [vmem:[%s11 + $0x30] sm:$0xff]
      %v9272 = vld [vmem:[%s11 + $0x38] sm:$0xff]
      %v9273 = vld [vmem:[%s11 + $0x40] sm:$0xff]
      %v9274 = vld [vmem:[%s11 + $0x48] sm:$0xff]
      %v9275 = vld [vmem:[%s11 + $0x50] sm:$0xff]
      %v9276 = vld [vmem:[%s11 + $0x58] sm:$0xff]
      %v9277 = vld [vmem:[%s11 + $0x60] sm:$0xff]
      %v9278 = vld [vmem:[%s11 + $0x68] sm:$0xff]
      %v9279 = vld [vmem:[%s11 + $0x70] sm:$0xff]
      %v9280 = vld [vmem:[%s11 + $0x78] sm:$0xff]
      %v9281 = vld [vmem:[%s11 + $0x80] sm:$0xff]
      %v9282 = vld [vmem:[%s11 + $0x88] sm:$0xff]
      %v9283 = vld [vmem:[%s11 + $0x90] sm:$0xff]
      %v9284 = vld [vmem:[%s11 + $0x98] sm:$0xff]
      %v9285 = vld [vmem:[%s11 + $0xa0] sm:$0xff]
      %v9286 = vld [vmem:[%s11 + $0xa8] sm:$0xff]
      %v9287 = vld [vmem:[%s11 + $0xb0] sm:$0xff]
      %v9288 = vld [vmem:[%s11 + $0xb8] sm:$0xff]
      %v9289 = vld [vmem:[%s11 + $0xc0] sm:$0xff]
      %v9290 = vld [vmem:[%s11 + $0xc8] sm:$0xff]
      %v9291 = vld [vmem:[%s11 + $0xd0] sm:$0xff]
      %v9292 = vld [vmem:[%s11 + $0xd8] sm:$0xff]
      %v9293 = vld [vmem:[%s11 + $0xe0] sm:$0xff]
      %v9294 = vld [vmem:[%s11 + $0xe8] sm:$0xff]
      %v9295 = vld [vmem:[%s11 + $0xf0] sm:$0xff]
      %v9296 = vld [vmem:[%s11 + $0xf8] sm:$0xff]
      %v9297 = vld [vmem:[%s11 + $0x100] sm:$0xff]
      %v9298 = vld [vmem:[%s11 + $0x108] sm:$0xff]
      %v9299 = vld [vmem:[%s11 + $0x110] sm:$0xff]
      %v9300 = vld [vmem:[%s11 + $0x118] sm:$0xff]
      %v9301 = vld [vmem:[%s11 + $0x120] sm:$0xff]
      %v9302 = vld [vmem:[%s11 + $0x128] sm:$0xff]
      %v9303 = vld [vmem:[%s11 + $0x130] sm:$0xff]
      %v9304 = vld [vmem:[%s11 + $0x138] sm:$0xff]
      %v9305 = vld [vmem:[%s11 + $0x140] sm:$0xff]
      %v9306 = vld [vmem:[%s11 + $0x148] sm:$0xff]
      %v9307 = vld [vmem:[%s11 + $0x150] sm:$0xff]
      %v9308 = vld [vmem:[%s11 + $0x158] sm:$0xff]
      %v9309 = vld [vmem:[%s11 + $0x160] sm:$0xff]
      %v9310 = vld [vmem:[%s11 + $0x168] sm:$0xff]
      %v9311 = vld [vmem:[%s11 + $0x170] sm:$0xff]
      %v9312 = vld [vmem:[%s11 + $0x178] sm:$0xff]
      %v9313 = vld [vmem:[%s11 + $0x180] sm:$0xff]
      %v9314 = vld [vmem:[%s11 + $0x188] sm:$0xff]
      %v9315 = vld [vmem:[%s11 + $0x190] sm:$0xff]
      %v9316 = vld [vmem:[%s11 + $0x198] sm:$0xff]
      %v9317 = vld [vmem:[%s11 + $0x1a0] sm:$0xff]
      %v9318 = vld [vmem:[%s11 + $0x1a8] sm:$0xff]
      %v9319 = vld [vmem:[%s11 + $0x1b0] sm:$0xff]
      %v9320 = vld [vmem:[%s11 + $0x1b8] sm:$0xff]
      %v9321 = vld [vmem:[%s11 + $0x1c0] sm:$0xff]
      %v9322 = vld [vmem:[%s11 + $0x1c8] sm:$0xff]
      %v9323 = vld [vmem:[%s11 + $0x1d0] sm:$0xff]
      %v9324 = vld [vmem:[%s11 + $0x1d8] sm:$0xff]
      %v9325 = vld [vmem:[%s11 + $0x1e0] sm:$0xff]
      %v9326 = vld [vmem:[%s11 + $0x1e8] sm:$0xff]
      %v9327 = vld [vmem:[%s11 + $0x1f0] sm:$0xff]
      %v9328 = vld [vmem:[%s11 + $0x1f8] sm:$0xff]
      %v9329 = vld [vmem:[%s12] sm:$0x1]
      %v9330 = vld [vmem:[%s13] sm:$0x1]
      %v9331 = vld [vmem:[%s14] sm:$0x1]
      %v9332 = vperm.slane %v9263, 1
      %v9333 = vperm.slane %v9259, 1
      %v9334 = vperm.slane %v9260, 1
      %v9335 = vperm.slane %v9264, 1
      %9340 = vst [vmem:[#allocation1] ss:$2 sm:$0xff] %v9263
      %v9341 = vld.sshfl [vmem:[#allocation1] sm:$0xff pattern:$0x75316420]
      %s9342 = scalar_lea.vmem [#allocation1], 16
      %9343 = vst [vmem:[%s9342] ss:$2 sm:$0xff] %v9259
      %v9344 = vld.sshfl [vmem:[#allocation1 + $0x10] sm:$0xff pattern:$0x75316420]
      %s9345 = scalar_lea.vmem [#allocation1], 32
      %9346 = vst [vmem:[%s9345] ss:$2 sm:$0xff] %v9263
      %v9347 = vld.sshfl [vmem:[#allocation1 + $0x20] sm:$0xff pattern:$0x75316420]
      %s9348 = scalar_lea.vmem [#allocation1], 48
      %9349 = vst [vmem:[%s9348] ss:$2 sm:$0xff] %v9260
      %v9350 = vld.sshfl [vmem:[#allocation1 + $0x30] sm:$0xff pattern:$0x75316420]
      %9351 = vst [vmem:[#allocation1] ss:$2 sm:$0xff] %v9264
      %v9352 = vld.sshfl [vmem:[#allocation1] sm:$0xff pattern:$0x75316420]
      %9353 = vst [vmem:[%s9342] ss:$2 sm:$0xff] %v9260
      %v9354 = vld.sshfl [vmem:[#allocation1 + $0x10] sm:$0xff pattern:$0x75316420]
      %v9355 = vrot.slane %v9341, 7
      %v9356 = vrot.slane %v9344, 7
      %v9357 = vrot.slane %v9347, 7
      %v9358 = vrot.slane %v9350, 7
      %v9359 = vrot.slane %v9352, 7
      %v9360 = vrot.slane %v9354, 7
      %v9367 = vperm.slane %v9263, 2
      %v9368 = vperm.slane %v9259, 2
      %v9369 = vperm.slane %v9260, 2
      %v9370 = vperm.slane %v9264, 2
      %v9375 = vsel %vm876, %v9332, %v9355
      %v9376 = vsel %vm876, %v9333, %v9356
      %v9377 = vsel %vm876, %v9332, %v9357
      %v9378 = vsel %vm876, %v9334, %v9358
      %v9379 = vsel %vm876, %v9335, %v9359
      %v9380 = vsel %vm876, %v9334, %v9360
      %vm9381 = vcmask 1044480
      %v9382 = vsel %vm9381, %v9375, %v9367
      %v9383 = vsel %vm9381, %v9376, %v9368
      %v9384 = vsel %vm9381, %v9377, %v9367
      %v9385 = vsel %vm9381, %v9378, %v9369
      %v9386 = vsel %vm9381, %v9379, %v9370
      %v9387 = vsel %vm9381, %v9380, %v9369
      %v9391 = vrot.slane %v9382, 1
      %v9392 = vrot.slane %v9382, 2
      %v9393 = vrot.slane %v9383, 1
      %v9394 = vrot.slane %v9383, 2
      %v9395 = vrot.slane %v9384, 1
      %v9396 = vrot.slane %v9384, 2
      %9397 = vst [vmem:[#allocation1] sm:$0xff] %v9382
      %s9398 = scalar_lea.vmem [#allocation1], 1
      %v9399 = vld [vmem:[%s9398] ss:$9 sm:$0xff]
      %s9400 = scalar_lea.vmem [#allocation1], 2
      %v9401 = vld [vmem:[%s9400] ss:$9 sm:$0xff]
      %s9402 = scalar_lea.vmem [#allocation1], 3
      %v9403 = vld [vmem:[%s9402] ss:$9 sm:$0xff]
      %9404 = vst [vmem:[#allocation1] sm:$0xff] %v9383
      %v9405 = vld [vmem:[%s9398] ss:$9 sm:$0xff]
      %v9406 = vld [vmem:[%s9400] ss:$9 sm:$0xff]
      %v9407 = vld [vmem:[%s9402] ss:$9 sm:$0xff]
      %9408 = vst [vmem:[#allocation1] sm:$0xff] %v9384
      %v9409 = vld [vmem:[%s9398] ss:$9 sm:$0xff]
      %v9410 = vld [vmem:[%s9400] ss:$9 sm:$0xff]
      %v9411 = vld [vmem:[%s9402] ss:$9 sm:$0xff]
      %9412 = vst [vmem:[#allocation1] sm:$0xff] %v9382
      %s9413 = scalar_lea.vmem [#allocation1], 2
      %v9414 = vld [vmem:[%s9413] ss:$9 sm:$0xff]
      %s9415 = scalar_lea.vmem [#allocation1], 3
      %v9416 = vld [vmem:[%s9415] ss:$9 sm:$0xff]
      %s9417 = scalar_lea.vmem [#allocation1], 4
      %v9418 = vld [vmem:[%s9417] ss:$9 sm:$0xff]
      %9419 = vst [vmem:[#allocation1] sm:$0xff] %v9383
      %v9420 = vld [vmem:[%s9413] ss:$9 sm:$0xff]
      %v9421 = vld [vmem:[%s9415] ss:$9 sm:$0xff]
      %v9422 = vld [vmem:[%s9417] ss:$9 sm:$0xff]
      %9423 = vst [vmem:[#allocation1] sm:$0xff] %v9384
      %v9424 = vld [vmem:[%s9413] ss:$9 sm:$0xff]
      %v9425 = vld [vmem:[%s9415] ss:$9 sm:$0xff]
      %v9426 = vld [vmem:[%s9417] ss:$9 sm:$0xff]
      %9427 = vst [vmem:[#allocation1] sm:$0xff] %v9382
      %s9428 = scalar_lea.vmem [#allocation1], 3
      %v9429 = vld [vmem:[%s9428] ss:$9 sm:$0xff]
      %s9430 = scalar_lea.vmem [#allocation1], 4
      %v9431 = vld [vmem:[%s9430] ss:$9 sm:$0xff]
      %s9432 = scalar_lea.vmem [#allocation1], 5
      %v9433 = vld [vmem:[%s9432] ss:$9 sm:$0xff]
      %9434 = vst [vmem:[#allocation1] sm:$0xff] %v9383
      %v9435 = vld [vmem:[%s9428] ss:$9 sm:$0xff]
      %v9436 = vld [vmem:[%s9430] ss:$9 sm:$0xff]
      %v9437 = vld [vmem:[%s9432] ss:$9 sm:$0xff]
      %9438 = vst [vmem:[#allocation1] sm:$0xff] %v9384
      %v9439 = vld [vmem:[%s9428] ss:$9 sm:$0xff]
      %v9440 = vld [vmem:[%s9430] ss:$9 sm:$0xff]
      %v9441 = vld [vmem:[%s9432] ss:$9 sm:$0xff]
      %v9443 = vrot.slane %v9385, 1
      %v9444 = vrot.slane %v9385, 2
      %9445 = vst [vmem:[#allocation1] sm:$0xff] %v9383
      %s9446 = scalar_lea.vmem [#allocation1], 1
      %v9447 = vld [vmem:[%s9446] ss:$9 sm:$0xff]
      %s9448 = scalar_lea.vmem [#allocation1], 2
      %v9449 = vld [vmem:[%s9448] ss:$9 sm:$0xff]
      %s9450 = scalar_lea.vmem [#allocation1], 3
      %v9451 = vld [vmem:[%s9450] ss:$9 sm:$0xff]
      %9452 = vst [vmem:[#allocation1] sm:$0xff] %v9384
      %v9453 = vld [vmem:[%s9446] ss:$9 sm:$0xff]
      %v9454 = vld [vmem:[%s9448] ss:$9 sm:$0xff]
      %v9455 = vld [vmem:[%s9450] ss:$9 sm:$0xff]
      %9456 = vst [vmem:[#allocation1] sm:$0xff] %v9385
      %v9457 = vld [vmem:[%s9446] ss:$9 sm:$0xff]
      %v9458 = vld [vmem:[%s9448] ss:$9 sm:$0xff]
      %v9459 = vld [vmem:[%s9450] ss:$9 sm:$0xff]
      %9460 = vst [vmem:[#allocation1] sm:$0xff] %v9383
      %s9461 = scalar_lea.vmem [#allocation1], 2
      %v9462 = vld [vmem:[%s9461] ss:$9 sm:$0xff]
      %s9463 = scalar_lea.vmem [#allocation1], 3
      %v9464 = vld [vmem:[%s9463] ss:$9 sm:$0xff]
      %s9465 = scalar_lea.vmem [#allocation1], 4
      %v9466 = vld [vmem:[%s9465] ss:$9 sm:$0xff]
      %9467 = vst [vmem:[#allocation1] sm:$0xff] %v9384
      %v9468 = vld [vmem:[%s9461] ss:$9 sm:$0xff]
      %v9469 = vld [vmem:[%s9463] ss:$9 sm:$0xff]
      %v9470 = vld [vmem:[%s9465] ss:$9 sm:$0xff]
      %9471 = vst [vmem:[#allocation1] sm:$0xff] %v9385
      %v9472 = vld [vmem:[%s9461] ss:$9 sm:$0xff]
      %v9473 = vld [vmem:[%s9463] ss:$9 sm:$0xff]
      %v9474 = vld [vmem:[%s9465] ss:$9 sm:$0xff]
      %9475 = vst [vmem:[#allocation1] sm:$0xff] %v9383
      %s9476 = scalar_lea.vmem [#allocation1], 3
      %v9477 = vld [vmem:[%s9476] ss:$9 sm:$0xff]
      %s9478 = scalar_lea.vmem [#allocation1], 4
      %v9479 = vld [vmem:[%s9478] ss:$9 sm:$0xff]
      %s9480 = scalar_lea.vmem [#allocation1], 5
      %v9481 = vld [vmem:[%s9480] ss:$9 sm:$0xff]
      %9482 = vst [vmem:[#allocation1] sm:$0xff] %v9384
      %v9483 = vld [vmem:[%s9476] ss:$9 sm:$0xff]
      %v9484 = vld [vmem:[%s9478] ss:$9 sm:$0xff]
      %v9485 = vld [vmem:[%s9480] ss:$9 sm:$0xff]
      %9486 = vst [vmem:[#allocation1] sm:$0xff] %v9385
      %v9487 = vld [vmem:[%s9476] ss:$9 sm:$0xff]
      %v9488 = vld [vmem:[%s9478] ss:$9 sm:$0xff]
      %v9489 = vld [vmem:[%s9480] ss:$9 sm:$0xff]
      %v9491 = vrot.slane %v9386, 1
      %v9492 = vrot.slane %v9386, 2
      %9493 = vst [vmem:[#allocation1] sm:$0xff] %v9384
      %s9494 = scalar_lea.vmem [#allocation1], 1
      %v9495 = vld [vmem:[%s9494] ss:$9 sm:$0xff]
      %s9496 = scalar_lea.vmem [#allocation1], 2
      %v9497 = vld [vmem:[%s9496] ss:$9 sm:$0xff]
      %s9498 = scalar_lea.vmem [#allocation1], 3
      %v9499 = vld [vmem:[%s9498] ss:$9 sm:$0xff]
      %9500 = vst [vmem:[#allocation1] sm:$0xff] %v9385
      %v9501 = vld [vmem:[%s9494] ss:$9 sm:$0xff]
      %v9502 = vld [vmem:[%s9496] ss:$9 sm:$0xff]
      %v9503 = vld [vmem:[%s9498] ss:$9 sm:$0xff]
      %9504 = vst [vmem:[#allocation1] sm:$0xff] %v9386
      %v9505 = vld [vmem:[%s9494] ss:$9 sm:$0xff]
      %v9506 = vld [vmem:[%s9496] ss:$9 sm:$0xff]
      %v9507 = vld [vmem:[%s9498] ss:$9 sm:$0xff]
      %9508 = vst [vmem:[#allocation1] sm:$0xff] %v9384
      %s9509 = scalar_lea.vmem [#allocation1], 2
      %v9510 = vld [vmem:[%s9509] ss:$9 sm:$0xff]
      %s9511 = scalar_lea.vmem [#allocation1], 3
      %v9512 = vld [vmem:[%s9511] ss:$9 sm:$0xff]
      %s9513 = scalar_lea.vmem [#allocation1], 4
      %v9514 = vld [vmem:[%s9513] ss:$9 sm:$0xff]
      %9515 = vst [vmem:[#allocation1] sm:$0xff] %v9385
      %v9516 = vld [vmem:[%s9509] ss:$9 sm:$0xff]
      %v9517 = vld [vmem:[%s9511] ss:$9 sm:$0xff]
      %v9518 = vld [vmem:[%s9513] ss:$9 sm:$0xff]
      %9519 = vst [vmem:[#allocation1] sm:$0xff] %v9386
      %v9520 = vld [vmem:[%s9509] ss:$9 sm:$0xff]
      %v9521 = vld [vmem:[%s9511] ss:$9 sm:$0xff]
      %v9522 = vld [vmem:[%s9513] ss:$9 sm:$0xff]
      %9523 = vst [vmem:[#allocation1] sm:$0xff] %v9384
      %s9524 = scalar_lea.vmem [#allocation1], 3
      %v9525 = vld [vmem:[%s9524] ss:$9 sm:$0xff]
      %s9526 = scalar_lea.vmem [#allocation1], 4
      %v9527 = vld [vmem:[%s9526] ss:$9 sm:$0xff]
      %s9528 = scalar_lea.vmem [#allocation1], 5
      %v9529 = vld [vmem:[%s9528] ss:$9 sm:$0xff]
      %9530 = vst [vmem:[#allocation1] sm:$0xff] %v9385
      %v9531 = vld [vmem:[%s9524] ss:$9 sm:$0xff]
      %v9532 = vld [vmem:[%s9526] ss:$9 sm:$0xff]
      %v9533 = vld [vmem:[%s9528] ss:$9 sm:$0xff]
      %9534 = vst [vmem:[#allocation1] sm:$0xff] %v9386
      %v9535 = vld [vmem:[%s9524] ss:$9 sm:$0xff]
      %v9536 = vld [vmem:[%s9526] ss:$9 sm:$0xff]
      %v9537 = vld [vmem:[%s9528] ss:$9 sm:$0xff]
      %v9539 = vrot.slane %v9387, 1
      %v9540 = vrot.slane %v9387, 2
      %9541 = vst [vmem:[#allocation1] sm:$0xff] %v9385
      %s9542 = scalar_lea.vmem [#allocation1], 1
      %v9543 = vld [vmem:[%s9542] ss:$9 sm:$0xff]
      %s9544 = scalar_lea.vmem [#allocation1], 2
      %v9545 = vld [vmem:[%s9544] ss:$9 sm:$0xff]
      %s9546 = scalar_lea.vmem [#allocation1], 3
      %v9547 = vld [vmem:[%s9546] ss:$9 sm:$0xff]
      %9548 = vst [vmem:[#allocation1] sm:$0xff] %v9386
      %v9549 = vld [vmem:[%s9542] ss:$9 sm:$0xff]
      %v9550 = vld [vmem:[%s9544] ss:$9 sm:$0xff]
      %v9551 = vld [vmem:[%s9546] ss:$9 sm:$0xff]
      %9552 = vst [vmem:[#allocation1] sm:$0xff] %v9387
      %v9553 = vld [vmem:[%s9542] ss:$9 sm:$0xff]
      %v9554 = vld [vmem:[%s9544] ss:$9 sm:$0xff]
      %v9555 = vld [vmem:[%s9546] ss:$9 sm:$0xff]
      %9556 = vst [vmem:[#allocation1] sm:$0xff] %v9385
      %s9557 = scalar_lea.vmem [#allocation1], 2
      %v9558 = vld [vmem:[%s9557] ss:$9 sm:$0xff]
      %s9559 = scalar_lea.vmem [#allocation1], 3
      %v9560 = vld [vmem:[%s9559] ss:$9 sm:$0xff]
      %s9561 = scalar_lea.vmem [#allocation1], 4
      %v9562 = vld [vmem:[%s9561] ss:$9 sm:$0xff]
      %9563 = vst [vmem:[#allocation1] sm:$0xff] %v9386
      %v9564 = vld [vmem:[%s9557] ss:$9 sm:$0xff]
      %v9565 = vld [vmem:[%s9559] ss:$9 sm:$0xff]
      %v9566 = vld [vmem:[%s9561] ss:$9 sm:$0xff]
      %9567 = vst [vmem:[#allocation1] sm:$0xff] %v9387
      %v9568 = vld [vmem:[%s9557] ss:$9 sm:$0xff]
      %v9569 = vld [vmem:[%s9559] ss:$9 sm:$0xff]
      %v9570 = vld [vmem:[%s9561] ss:$9 sm:$0xff]
      %9571 = vst [vmem:[#allocation1] sm:$0xff] %v9385
      %s9572 = scalar_lea.vmem [#allocation1], 3
      %v9573 = vld [vmem:[%s9572] ss:$9 sm:$0xff]
      %s9574 = scalar_lea.vmem [#allocation1], 4
      %v9575 = vld [vmem:[%s9574] ss:$9 sm:$0xff]
      %s9576 = scalar_lea.vmem [#allocation1], 5
      %v9577 = vld [vmem:[%s9576] ss:$9 sm:$0xff]
      %9578 = vst [vmem:[#allocation1] sm:$0xff] %v9386
      %v9579 = vld [vmem:[%s9572] ss:$9 sm:$0xff]
      %v9580 = vld [vmem:[%s9574] ss:$9 sm:$0xff]
      %v9581 = vld [vmem:[%s9576] ss:$9 sm:$0xff]
      %9582 = vst [vmem:[#allocation1] sm:$0xff] %v9387
      %v9583 = vld [vmem:[%s9572] ss:$9 sm:$0xff]
      %v9584 = vld [vmem:[%s9574] ss:$9 sm:$0xff]
      %v9585 = vld [vmem:[%s9576] ss:$9 sm:$0xff]
      %9586 = vst [vmem:[#allocation1] ss:$9 sm:$0xff] %v9382
      %s9587 = scalar_lea.vmem [#allocation1], 1
      %9588 = vst [vmem:[%s9587] ss:$9 sm:$0xff] %v9391
      %s9589 = scalar_lea.vmem [#allocation1], 2
      %9590 = vst [vmem:[%s9589] ss:$9 sm:$0xff] %v9392
      %s9591 = scalar_lea.vmem [#allocation1], 3
      %9592 = vst [vmem:[%s9591] ss:$9 sm:$0xff] %v9383
      %s9593 = scalar_lea.vmem [#allocation1], 4
      %9594 = vst [vmem:[%s9593] ss:$9 sm:$0xff] %v9393
      %s9595 = scalar_lea.vmem [#allocation1], 5
      %9596 = vst [vmem:[%s9595] ss:$9 sm:$0xff] %v9394
      %s9597 = scalar_lea.vmem [#allocation1], 6
      %9598 = vst [vmem:[%s9597] ss:$9 sm:$0xff] %v9384
      %s9599 = scalar_lea.vmem [#allocation1], 7
      %9600 = vst [vmem:[%s9599] ss:$9 sm:$0xff] %v9395
      %v9601 = vld [vmem:[#allocation1] sm:$0xff]
      %9602 = vst [vmem:[#allocation1] ss:$9 sm:$0xff] %v9396
      %v9603 = vld [vmem:[#allocation1] sm:$0xff]
      %9606 = vst [vmem:[#allocation1] ss:$9 sm:$0xff] %v9399
      %s9607 = scalar_lea.vmem [#allocation1], 1
      %9608 = vst [vmem:[%s9607] ss:$9 sm:$0xff] %v9401
      %s9609 = scalar_lea.vmem [#allocation1], 2
      %9610 = vst [vmem:[%s9609] ss:$9 sm:$0xff] %v9403
      %s9611 = scalar_lea.vmem [#allocation1], 3
      %9612 = vst [vmem:[%s9611] ss:$9 sm:$0xff] %v9405
      %s9613 = scalar_lea.vmem [#allocation1], 4
      %9614 = vst [vmem:[%s9613] ss:$9 sm:$0xff] %v9406
      %s9615 = scalar_lea.vmem [#allocation1], 5
      %9616 = vst [vmem:[%s9615] ss:$9 sm:$0xff] %v9407
      %s9617 = scalar_lea.vmem [#allocation1], 6
      %9618 = vst [vmem:[%s9617] ss:$9 sm:$0xff] %v9409
      %s9619 = scalar_lea.vmem [#allocation1], 7
      %9620 = vst [vmem:[%s9619] ss:$9 sm:$0xff] %v9410
      %v9621 = vld [vmem:[#allocation1] sm:$0xff]
      %9622 = vst [vmem:[#allocation1] ss:$9 sm:$0xff] %v9411
      %v9623 = vld [vmem:[#allocation1] sm:$0xff]
      %9624 = vrot.lane.b32.xlu0 %v9621, 32
      %v9625 = vpop.permute.xlu0 %9624
      %9626 = vrot.lane.b32.xlu0 %v9623, 32
      %v9627 = vpop.permute.xlu0 %9626
      %9630 = vst [vmem:[#allocation1] ss:$9 sm:$0xff] %v9414
      %s9631 = scalar_lea.vmem [#allocation1], 1
      %9632 = vst [vmem:[%s9631] ss:$9 sm:$0xff] %v9416
      %s9633 = scalar_lea.vmem [#allocation1], 2
      %9634 = vst [vmem:[%s9633] ss:$9 sm:$0xff] %v9418
      %s9635 = scalar_lea.vmem [#allocation1], 3
      %9636 = vst [vmem:[%s9635] ss:$9 sm:$0xff] %v9420
      %s9637 = scalar_lea.vmem [#allocation1], 4
      %9638 = vst [vmem:[%s9637] ss:$9 sm:$0xff] %v9421
      %s9639 = scalar_lea.vmem [#allocation1], 5
      %9640 = vst [vmem:[%s9639] ss:$9 sm:$0xff] %v9422
      %s9641 = scalar_lea.vmem [#allocation1], 6
      %9642 = vst [vmem:[%s9641] ss:$9 sm:$0xff] %v9424
      %s9643 = scalar_lea.vmem [#allocation1], 7
      %9644 = vst [vmem:[%s9643] ss:$9 sm:$0xff] %v9425
      %v9645 = vld [vmem:[#allocation1] sm:$0xff]
      %9646 = vst [vmem:[#allocation1] ss:$9 sm:$0xff] %v9426
      %v9647 = vld [vmem:[#allocation1] sm:$0xff]
      %9648 = vrot.lane.b32.xlu0 %v9645, 64
      %v9649 = vpop.permute.xlu0 %9648
      %9650 = vrot.lane.b32.xlu0 %v9647, 64
      %v9651 = vpop.permute.xlu0 %9650
      %9654 = vst [vmem:[#allocation1] ss:$9 sm:$0xff] %v9429
      %s9655 = scalar_lea.vmem [#allocation1], 1
      %9656 = vst [vmem:[%s9655] ss:$9 sm:$0xff] %v9431
      %s9657 = scalar_lea.vmem [#allocation1], 2
      %9658 = vst [vmem:[%s9657] ss:$9 sm:$0xff] %v9433
      %s9659 = scalar_lea.vmem [#allocation1], 3
      %9660 = vst [vmem:[%s9659] ss:$9 sm:$0xff] %v9435
      %s9661 = scalar_lea.vmem [#allocation1], 4
      %9662 = vst [vmem:[%s9661] ss:$9 sm:$0xff] %v9436
      %s9663 = scalar_lea.vmem [#allocation1], 5
      %9664 = vst [vmem:[%s9663] ss:$9 sm:$0xff] %v9437
      %s9665 = scalar_lea.vmem [#allocation1], 6
      %9666 = vst [vmem:[%s9665] ss:$9 sm:$0xff] %v9439
      %s9667 = scalar_lea.vmem [#allocation1], 7
      %9668 = vst [vmem:[%s9667] ss:$9 sm:$0xff] %v9440
      %v9669 = vld [vmem:[#allocation1] sm:$0xff]
      %9670 = vst [vmem:[#allocation1] ss:$9 sm:$0xff] %v9441
      %v9671 = vld [vmem:[#allocation1] sm:$0xff]
      %9672 = vrot.lane.b32.xlu0 %v9669, 96
      %v9673 = vpop.permute.xlu0 %9672
      %9674 = vrot.lane.b32.xlu0 %v9671, 96
      %v9675 = vpop.permute.xlu0 %9674
      %9678 = vst [vmem:[#allocation1] ss:$9 sm:$0xff] %v9383
      %s9679 = scalar_lea.vmem [#allocation1], 1
      %9680 = vst [vmem:[%s9679] ss:$9 sm:$0xff] %v9393
      %s9681 = scalar_lea.vmem [#allocation1], 2
      %9682 = vst [vmem:[%s9681] ss:$9 sm:$0xff] %v9394
      %s9683 = scalar_lea.vmem [#allocation1], 3
      %9684 = vst [vmem:[%s9683] ss:$9 sm:$0xff] %v9384
      %s9685 = scalar_lea.vmem [#allocation1], 4
      %9686 = vst [vmem:[%s9685] ss:$9 sm:$0xff] %v9395
      %s9687 = scalar_lea.vmem [#allocation1], 5
      %9688 = vst [vmem:[%s9687] ss:$9 sm:$0xff] %v9396
      %s9689 = scalar_lea.vmem [#allocation1], 6
      %9690 = vst [vmem:[%s9689] ss:$9 sm:$0xff] %v9385
      %s9691 = scalar_lea.vmem [#allocation1], 7
      %9692 = vst [vmem:[%s9691] ss:$9 sm:$0xff] %v9443
      %v9693 = vld [vmem:[#allocation1] sm:$0xff]
      %9694 = vst [vmem:[#allocation1] ss:$9 sm:$0xff] %v9444
      %v9695 = vld [vmem:[#allocation1] sm:$0xff]
      %9698 = vst [vmem:[#allocation1] ss:$9 sm:$0xff] %v9447
      %s9699 = scalar_lea.vmem [#allocation1], 1
      %9700 = vst [vmem:[%s9699] ss:$9 sm:$0xff] %v9449
      %s9701 = scalar_lea.vmem [#allocation1], 2
      %9702 = vst [vmem:[%s9701] ss:$9 sm:$0xff] %v9451
      %s9703 = scalar_lea.vmem [#allocation1], 3
      %9704 = vst [vmem:[%s9703] ss:$9 sm:$0xff] %v9453
      %s9705 = scalar_lea.vmem [#allocation1], 4
      %9706 = vst [vmem:[%s9705] ss:$9 sm:$0xff] %v9454
      %s9707 = scalar_lea.vmem [#allocation1], 5
      %9708 = vst [vmem:[%s9707] ss:$9 sm:$0xff] %v9455
      %s9709 = scalar_lea.vmem [#allocation1], 6
      %9710 = vst [vmem:[%s9709] ss:$9 sm:$0xff] %v9457
      %s9711 = scalar_lea.vmem [#allocation1], 7
      %9712 = vst [vmem:[%s9711] ss:$9 sm:$0xff] %v9458
      %v9713 = vld [vmem:[#allocation1] sm:$0xff]
      %9714 = vst [vmem:[#allocation1] ss:$9 sm:$0xff] %v9459
      %v9715 = vld [vmem:[#allocation1] sm:$0xff]
      %9716 = vrot.lane.b32.xlu0 %v9713, 32
      %v9717 = vpop.permute.xlu0 %9716
      %9718 = vrot.lane.b32.xlu0 %v9715, 32
      %v9719 = vpop.permute.xlu0 %9718
      %9722 = vst [vmem:[#allocation1] ss:$9 sm:$0xff] %v9462
      %s9723 = scalar_lea.vmem [#allocation1], 1
      %9724 = vst [vmem:[%s9723] ss:$9 sm:$0xff] %v9464
      %s9725 = scalar_lea.vmem [#allocation1], 2
      %9726 = vst [vmem:[%s9725] ss:$9 sm:$0xff] %v9466
      %s9727 = scalar_lea.vmem [#allocation1], 3
      %9728 = vst [vmem:[%s9727] ss:$9 sm:$0xff] %v9468
      %s9729 = scalar_lea.vmem [#allocation1], 4
      %9730 = vst [vmem:[%s9729] ss:$9 sm:$0xff] %v9469
      %s9731 = scalar_lea.vmem [#allocation1], 5
      %9732 = vst [vmem:[%s9731] ss:$9 sm:$0xff] %v9470
      %s9733 = scalar_lea.vmem [#allocation1], 6
      %9734 = vst [vmem:[%s9733] ss:$9 sm:$0xff] %v9472
      %s9735 = scalar_lea.vmem [#allocation1], 7
      %9736 = vst [vmem:[%s9735] ss:$9 sm:$0xff] %v9473
      %v9737 = vld [vmem:[#allocation1] sm:$0xff]
      %9738 = vst [vmem:[#allocation1] ss:$9 sm:$0xff] %v9474
      %v9739 = vld [vmem:[#allocation1] sm:$0xff]
      %9740 = vrot.lane.b32.xlu0 %v9737, 64
      %v9741 = vpop.permute.xlu0 %9740
      %9742 = vrot.lane.b32.xlu0 %v9739, 64
      %v9743 = vpop.permute.xlu0 %9742
      %9746 = vst [vmem:[#allocation1] ss:$9 sm:$0xff] %v9477
      %s9747 = scalar_lea.vmem [#allocation1], 1
      %9748 = vst [vmem:[%s9747] ss:$9 sm:$0xff] %v9479
      %s9749 = scalar_lea.vmem [#allocation1], 2
      %9750 = vst [vmem:[%s9749] ss:$9 sm:$0xff] %v9481
      %s9751 = scalar_lea.vmem [#allocation1], 3
      %9752 = vst [vmem:[%s9751] ss:$9 sm:$0xff] %v9483
      %s9753 = scalar_lea.vmem [#allocation1], 4
      %9754 = vst [vmem:[%s9753] ss:$9 sm:$0xff] %v9484
      %s9755 = scalar_lea.vmem [#allocation1], 5
      %9756 = vst [vmem:[%s9755] ss:$9 sm:$0xff] %v9485
      %s9757 = scalar_lea.vmem [#allocation1], 6
      %9758 = vst [vmem:[%s9757] ss:$9 sm:$0xff] %v9487
      %s9759 = scalar_lea.vmem [#allocation1], 7
      %9760 = vst [vmem:[%s9759] ss:$9 sm:$0xff] %v9488
      %v9761 = vld [vmem:[#allocation1] sm:$0xff]
      %9762 = vst [vmem:[#allocation1] ss:$9 sm:$0xff] %v9489
      %v9763 = vld [vmem:[#allocation1] sm:$0xff]
      %9764 = vrot.lane.b32.xlu0 %v9761, 96
      %v9765 = vpop.permute.xlu0 %9764
      %9766 = vrot.lane.b32.xlu0 %v9763, 96
      %v9767 = vpop.permute.xlu0 %9766
      %9770 = vst [vmem:[#allocation1] ss:$9 sm:$0xff] %v9384
      %s9771 = scalar_lea.vmem [#allocation1], 1
      %9772 = vst [vmem:[%s9771] ss:$9 sm:$0xff] %v9395
      %s9773 = scalar_lea.vmem [#allocation1], 2
      %9774 = vst [vmem:[%s9773] ss:$9 sm:$0xff] %v9396
      %s9775 = scalar_lea.vmem [#allocation1], 3
      %9776 = vst [vmem:[%s9775] ss:$9 sm:$0xff] %v9385
      %s9777 = scalar_lea.vmem [#allocation1], 4
      %9778 = vst [vmem:[%s9777] ss:$9 sm:$0xff] %v9443
      %s9779 = scalar_lea.vmem [#allocation1], 5
      %9780 = vst [vmem:[%s9779] ss:$9 sm:$0xff] %v9444
      %s9781 = scalar_lea.vmem [#allocation1], 6
      %9782 = vst [vmem:[%s9781] ss:$9 sm:$0xff] %v9386
      %s9783 = scalar_lea.vmem [#allocation1], 7
      %9784 = vst [vmem:[%s9783] ss:$9 sm:$0xff] %v9491
      %v9785 = vld [vmem:[#allocation1] sm:$0xff]
      %9786 = vst [vmem:[#allocation1] ss:$9 sm:$0xff] %v9492
      %v9787 = vld [vmem:[#allocation1] sm:$0xff]
      %9790 = vst [vmem:[#allocation1] ss:$9 sm:$0xff] %v9495
      %s9791 = scalar_lea.vmem [#allocation1], 1
      %9792 = vst [vmem:[%s9791] ss:$9 sm:$0xff] %v9497
      %s9793 = scalar_lea.vmem [#allocation1], 2
      %9794 = vst [vmem:[%s9793] ss:$9 sm:$0xff] %v9499
      %s9795 = scalar_lea.vmem [#allocation1], 3
      %9796 = vst [vmem:[%s9795] ss:$9 sm:$0xff] %v9501
      %s9797 = scalar_lea.vmem [#allocation1], 4
      %9798 = vst [vmem:[%s9797] ss:$9 sm:$0xff] %v9502
      %s9799 = scalar_lea.vmem [#allocation1], 5
      %9800 = vst [vmem:[%s9799] ss:$9 sm:$0xff] %v9503
      %s9801 = scalar_lea.vmem [#allocation1], 6
      %9802 = vst [vmem:[%s9801] ss:$9 sm:$0xff] %v9505
      %s9803 = scalar_lea.vmem [#allocation1], 7
      %9804 = vst [vmem:[%s9803] ss:$9 sm:$0xff] %v9506
      %v9805 = vld [vmem:[#allocation1] sm:$0xff]
      %9806 = vst [vmem:[#allocation1] ss:$9 sm:$0xff] %v9507
      %v9807 = vld [vmem:[#allocation1] sm:$0xff]
      %9808 = vrot.lane.b32.xlu0 %v9805, 32
      %v9809 = vpop.permute.xlu0 %9808
      %9810 = vrot.lane.b32.xlu0 %v9807, 32
      %v9811 = vpop.permute.xlu0 %9810
      %9814 = vst [vmem:[#allocation1] ss:$9 sm:$0xff] %v9510
      %s9815 = scalar_lea.vmem [#allocation1], 1
      %9816 = vst [vmem:[%s9815] ss:$9 sm:$0xff] %v9512
      %s9817 = scalar_lea.vmem [#allocation1], 2
      %9818 = vst [vmem:[%s9817] ss:$9 sm:$0xff] %v9514
      %s9819 = scalar_lea.vmem [#allocation1], 3
      %9820 = vst [vmem:[%s9819] ss:$9 sm:$0xff] %v9516
      %s9821 = scalar_lea.vmem [#allocation1], 4
      %9822 = vst [vmem:[%s9821] ss:$9 sm:$0xff] %v9517
      %s9823 = scalar_lea.vmem [#allocation1], 5
      %9824 = vst [vmem:[%s9823] ss:$9 sm:$0xff] %v9518
      %s9825 = scalar_lea.vmem [#allocation1], 6
      %9826 = vst [vmem:[%s9825] ss:$9 sm:$0xff] %v9520
      %s9827 = scalar_lea.vmem [#allocation1], 7
      %9828 = vst [vmem:[%s9827] ss:$9 sm:$0xff] %v9521
      %v9829 = vld [vmem:[#allocation1] sm:$0xff]
      %9830 = vst [vmem:[#allocation1] ss:$9 sm:$0xff] %v9522
      %v9831 = vld [vmem:[#allocation1] sm:$0xff]
      %9832 = vrot.lane.b32.xlu0 %v9829, 64
      %v9833 = vpop.permute.xlu0 %9832
      %9834 = vrot.lane.b32.xlu0 %v9831, 64
      %v9835 = vpop.permute.xlu0 %9834
      %9838 = vst [vmem:[#allocation1] ss:$9 sm:$0xff] %v9525
      %s9839 = scalar_lea.vmem [#allocation1], 1
      %9840 = vst [vmem:[%s9839] ss:$9 sm:$0xff] %v9527
      %s9841 = scalar_lea.vmem [#allocation1], 2
      %9842 = vst [vmem:[%s9841] ss:$9 sm:$0xff] %v9529
      %s9843 = scalar_lea.vmem [#allocation1], 3
      %9844 = vst [vmem:[%s9843] ss:$9 sm:$0xff] %v9531
      %s9845 = scalar_lea.vmem [#allocation1], 4
      %9846 = vst [vmem:[%s9845] ss:$9 sm:$0xff] %v9532
      %s9847 = scalar_lea.vmem [#allocation1], 5
      %9848 = vst [vmem:[%s9847] ss:$9 sm:$0xff] %v9533
      %s9849 = scalar_lea.vmem [#allocation1], 6
      %9850 = vst [vmem:[%s9849] ss:$9 sm:$0xff] %v9535
      %s9851 = scalar_lea.vmem [#allocation1], 7
      %9852 = vst [vmem:[%s9851] ss:$9 sm:$0xff] %v9536
      %v9853 = vld [vmem:[#allocation1] sm:$0xff]
      %9854 = vst [vmem:[#allocation1] ss:$9 sm:$0xff] %v9537
      %v9855 = vld [vmem:[#allocation1] sm:$0xff]
      %9856 = vrot.lane.b32.xlu0 %v9853, 96
      %v9857 = vpop.permute.xlu0 %9856
      %9858 = vrot.lane.b32.xlu0 %v9855, 96
      %v9859 = vpop.permute.xlu0 %9858
      %9862 = vst [vmem:[#allocation1] ss:$9 sm:$0xff] %v9385
      %s9863 = scalar_lea.vmem [#allocation1], 1
      %9864 = vst [vmem:[%s9863] ss:$9 sm:$0xff] %v9443
      %s9865 = scalar_lea.vmem [#allocation1], 2
      %9866 = vst [vmem:[%s9865] ss:$9 sm:$0xff] %v9444
      %s9867 = scalar_lea.vmem [#allocation1], 3
      %9868 = vst [vmem:[%s9867] ss:$9 sm:$0xff] %v9386
      %s9869 = scalar_lea.vmem [#allocation1], 4
      %9870 = vst [vmem:[%s9869] ss:$9 sm:$0xff] %v9491
      %s9871 = scalar_lea.vmem [#allocation1], 5
      %9872 = vst [vmem:[%s9871] ss:$9 sm:$0xff] %v9492
      %s9873 = scalar_lea.vmem [#allocation1], 6
      %9874 = vst [vmem:[%s9873] ss:$9 sm:$0xff] %v9387
      %s9875 = scalar_lea.vmem [#allocation1], 7
      %9876 = vst [vmem:[%s9875] ss:$9 sm:$0xff] %v9539
      %v9877 = vld [vmem:[#allocation1] sm:$0xff]
      %9878 = vst [vmem:[#allocation1] ss:$9 sm:$0xff] %v9540
      %v9879 = vld [vmem:[#allocation1] sm:$0xff]
      %9882 = vst [vmem:[#allocation1] ss:$9 sm:$0xff] %v9543
      %s9883 = scalar_lea.vmem [#allocation1], 1
      %9884 = vst [vmem:[%s9883] ss:$9 sm:$0xff] %v9545
      %s9885 = scalar_lea.vmem [#allocation1], 2
      %9886 = vst [vmem:[%s9885] ss:$9 sm:$0xff] %v9547
      %s9887 = scalar_lea.vmem [#allocation1], 3
      %9888 = vst [vmem:[%s9887] ss:$9 sm:$0xff] %v9549
      %s9889 = scalar_lea.vmem [#allocation1], 4
      %9890 = vst [vmem:[%s9889] ss:$9 sm:$0xff] %v9550
      %s9891 = scalar_lea.vmem [#allocation1], 5
      %9892 = vst [vmem:[%s9891] ss:$9 sm:$0xff] %v9551
      %s9893 = scalar_lea.vmem [#allocation1], 6
      %9894 = vst [vmem:[%s9893] ss:$9 sm:$0xff] %v9553
      %s9895 = scalar_lea.vmem [#allocation1], 7
      %9896 = vst [vmem:[%s9895] ss:$9 sm:$0xff] %v9554
      %v9897 = vld [vmem:[#allocation1] sm:$0xff]
      %9898 = vst [vmem:[#allocation1] ss:$9 sm:$0xff] %v9555
      %v9899 = vld [vmem:[#allocation1] sm:$0xff]
      %9900 = vrot.lane.b32.xlu0 %v9897, 32
      %v9901 = vpop.permute.xlu0 %9900
      %9902 = vrot.lane.b32.xlu0 %v9899, 32
      %v9903 = vpop.permute.xlu0 %9902
      %9906 = vst [vmem:[#allocation1] ss:$9 sm:$0xff] %v9558
      %s9907 = scalar_lea.vmem [#allocation1], 1
      %9908 = vst [vmem:[%s9907] ss:$9 sm:$0xff] %v9560
      %s9909 = scalar_lea.vmem [#allocation1], 2
      %9910 = vst [vmem:[%s9909] ss:$9 sm:$0xff] %v9562
      %s9911 = scalar_lea.vmem [#allocation1], 3
      %9912 = vst [vmem:[%s9911] ss:$9 sm:$0xff] %v9564
      %s9913 = scalar_lea.vmem [#allocation1], 4
      %9914 = vst [vmem:[%s9913] ss:$9 sm:$0xff] %v9565
      %s9915 = scalar_lea.vmem [#allocation1], 5
      %9916 = vst [vmem:[%s9915] ss:$9 sm:$0xff] %v9566
      %s9917 = scalar_lea.vmem [#allocation1], 6
      %9918 = vst [vmem:[%s9917] ss:$9 sm:$0xff] %v9568
      %s9919 = scalar_lea.vmem [#allocation1], 7
      %9920 = vst [vmem:[%s9919] ss:$9 sm:$0xff] %v9569
      %v9921 = vld [vmem:[#allocation1] sm:$0xff]
      %9922 = vst [vmem:[#allocation1] ss:$9 sm:$0xff] %v9570
      %v9923 = vld [vmem:[#allocation1] sm:$0xff]
      %9924 = vrot.lane.b32.xlu0 %v9921, 64
      %v9925 = vpop.permute.xlu0 %9924
      %9926 = vrot.lane.b32.xlu0 %v9923, 64
      %v9927 = vpop.permute.xlu0 %9926
      %9930 = vst [vmem:[#allocation1] ss:$9 sm:$0xff] %v9573
      %s9931 = scalar_lea.vmem [#allocation1], 1
      %9932 = vst [vmem:[%s9931] ss:$9 sm:$0xff] %v9575
      %s9933 = scalar_lea.vmem [#allocation1], 2
      %9934 = vst [vmem:[%s9933] ss:$9 sm:$0xff] %v9577
      %s9935 = scalar_lea.vmem [#allocation1], 3
      %9936 = vst [vmem:[%s9935] ss:$9 sm:$0xff] %v9579
      %s9937 = scalar_lea.vmem [#allocation1], 4
      %9938 = vst [vmem:[%s9937] ss:$9 sm:$0xff] %v9580
      %s9939 = scalar_lea.vmem [#allocation1], 5
      %9940 = vst [vmem:[%s9939] ss:$9 sm:$0xff] %v9581
      %s9941 = scalar_lea.vmem [#allocation1], 6
      %9942 = vst [vmem:[%s9941] ss:$9 sm:$0xff] %v9583
      %s9943 = scalar_lea.vmem [#allocation1], 7
      %9944 = vst [vmem:[%s9943] ss:$9 sm:$0xff] %v9584
      %v9945 = vld [vmem:[#allocation1] sm:$0xff]
      %9946 = vst [vmem:[#allocation1] ss:$9 sm:$0xff] %v9585
      %v9947 = vld [vmem:[#allocation1] sm:$0xff]
      %9948 = vrot.lane.b32.xlu0 %v9945, 96
      %v9949 = vpop.permute.xlu0 %9948
      %9950 = vrot.lane.b32.xlu0 %v9947, 96
      %v9951 = vpop.permute.xlu0 %9950
      %v9954 = vsel %vm8314, %v9601, %v9625
      %v9955 = vsel %vm8314, %v9603, %v9627
      %v9956 = vsel %vm8349, %v9954, %v9649
      %v9957 = vsel %vm8349, %v9955, %v9651
      %v9958 = vsel %vm8385, %v9956, %v9673
      %v9959 = vsel %vm8385, %v9957, %v9675
      %v9960 = vsel %vm8314, %v9693, %v9717
      %v9961 = vsel %vm8314, %v9695, %v9719
      %v9962 = vsel %vm8349, %v9960, %v9741
      %v9963 = vsel %vm8349, %v9961, %v9743
      %v9964 = vsel %vm8385, %v9962, %v9765
      %v9965 = vsel %vm8385, %v9963, %v9767
      %v9966 = vsel %vm8314, %v9785, %v9809
      %v9967 = vsel %vm8314, %v9787, %v9811
      %v9968 = vsel %vm8349, %v9966, %v9833
      %v9969 = vsel %vm8349, %v9967, %v9835
      %v9970 = vsel %vm8385, %v9968, %v9857
      %v9971 = vsel %vm8385, %v9969, %v9859
      %v9972 = vsel %vm8314, %v9877, %v9901
      %v9973 = vsel %vm8314, %v9879, %v9903
      %v9974 = vsel %vm8349, %v9972, %v9925
      %v9975 = vsel %vm8349, %v9973, %v9927
      %v9976 = vsel %vm8385, %v9974, %v9949
      %v9977 = vsel %vm8385, %v9975, %v9951
      %v9979 = vperm.slane %v9329, 0
      %9981 = vmatpush.msra.mxu0 %v9280
      %9982 = vmatpush.msra.mxu0 %v9279
      %9983 = vmatpush.msra.mxu0 %v9278
      %9984 = vmatpush.msra.mxu0 %v9277
      %9985 = vmatpush.msra.mxu0 %v9276
      %9986 = vmatpush.msra.mxu0 %v9275
      %9987 = vmatpush.msra.mxu0 %v9274
      %9988 = vmatpush.msra.mxu0 %v9273
      %9989 = vmatpush.msra.mxu0 %v9272
      %9990 = vmatpush.msra.mxu0 %v9271
      %9991 = vmatpush.msra.mxu0 %v9270
      %9992 = vmatpush.msra.mxu0 %v9269
      %9993 = vmatpush.msra.mxu0 %v9268
      %9994 = vmatpush.msra.mxu0 %v9267
      %9995 = vmatpush.msra.mxu0 %v9266
      %9996 = vmatpush.msra.mxu0 %v9265
      %9997 = vmatmul.f32.gmra.mxu0 %v9958
      %v9998 = vpop.f32.mrf.mxu0
      %v9999 = vadd.f32 %v9979, %v9998
      %10000 = vmatmul.f32.gmra.mxu0 %v9959
      %v10001 = vpop.f32.mrf.mxu0
      %v10002 = vadd.f32 %v9979, %v10001
      %10003 = vdwg.mxu0
      %10004 = vmatpush.msra.mxu0 %v9296
      %10005 = vmatpush.msra.mxu0 %v9295
      %10006 = vmatpush.msra.mxu0 %v9294
      %10007 = vmatpush.msra.mxu0 %v9293
      %10008 = vmatpush.msra.mxu0 %v9292
      %10009 = vmatpush.msra.mxu0 %v9291
      %10010 = vmatpush.msra.mxu0 %v9290
      %10011 = vmatpush.msra.mxu0 %v9289
      %10012 = vmatpush.msra.mxu0 %v9288
      %10013 = vmatpush.msra.mxu0 %v9287
      %10014 = vmatpush.msra.mxu0 %v9286
      %10015 = vmatpush.msra.mxu0 %v9285
      %10016 = vmatpush.msra.mxu0 %v9284
      %10017 = vmatpush.msra.mxu0 %v9283
      %10018 = vmatpush.msra.mxu0 %v9282
      %10019 = vmatpush.msra.mxu0 %v9281
      %10020 = vmatmul.f32.gmra.mxu0 %v9964
      %v10021 = vpop.f32.mrf.mxu0
      %v10022 = vadd.f32 %v9999, %v10021
      %10023 = vmatmul.f32.gmra.mxu0 %v9965
      %v10024 = vpop.f32.mrf.mxu0
      %v10025 = vadd.f32 %v10002, %v10024
      %10026 = vdwg.mxu0
      %10027 = vmatpush.msra.mxu0 %v9312
      %10028 = vmatpush.msra.mxu0 %v9311
      %10029 = vmatpush.msra.mxu0 %v9310
      %10030 = vmatpush.msra.mxu0 %v9309
      %10031 = vmatpush.msra.mxu0 %v9308
      %10032 = vmatpush.msra.mxu0 %v9307
      %10033 = vmatpush.msra.mxu0 %v9306
      %10034 = vmatpush.msra.mxu0 %v9305
      %10035 = vmatpush.msra.mxu0 %v9304
      %10036 = vmatpush.msra.mxu0 %v9303
      %10037 = vmatpush.msra.mxu0 %v9302
      %10038 = vmatpush.msra.mxu0 %v9301
      %10039 = vmatpush.msra.mxu0 %v9300
      %10040 = vmatpush.msra.mxu0 %v9299
      %10041 = vmatpush.msra.mxu0 %v9298
      %10042 = vmatpush.msra.mxu0 %v9297
      %10043 = vmatmul.f32.gmra.mxu0 %v9970
      %v10044 = vpop.f32.mrf.mxu0
      %v10045 = vadd.f32 %v10022, %v10044
      %10046 = vmatmul.f32.gmra.mxu0 %v9971
      %v10047 = vpop.f32.mrf.mxu0
      %v10048 = vadd.f32 %v10025, %v10047
      %10049 = vdwg.mxu0
      %10050 = vmatpush.msra.mxu0 %v9328
      %10051 = vmatpush.msra.mxu0 %v9327
      %10052 = vmatpush.msra.mxu0 %v9326
      %10053 = vmatpush.msra.mxu0 %v9325
      %10054 = vmatpush.msra.mxu0 %v9324
      %10055 = vmatpush.msra.mxu0 %v9323
      %10056 = vmatpush.msra.mxu0 %v9322
      %10057 = vmatpush.msra.mxu0 %v9321
      %10058 = vmatpush.msra.mxu0 %v9320
      %10059 = vmatpush.msra.mxu0 %v9319
      %10060 = vmatpush.msra.mxu0 %v9318
      %10061 = vmatpush.msra.mxu0 %v9317
      %10062 = vmatpush.msra.mxu0 %v9316
      %10063 = vmatpush.msra.mxu0 %v9315
      %10064 = vmatpush.msra.mxu0 %v9314
      %10065 = vmatpush.msra.mxu0 %v9313
      %10066 = vmatmul.f32.gmra.mxu0 %v9976
      %v10067 = vpop.f32.mrf.mxu0
      %v10068 = vadd.f32 %v10045, %v10067
      %10069 = vmatmul.f32.gmra.mxu0 %v9977
      %v10070 = vpop.f32.mrf.mxu0
      %v10071 = vadd.f32 %v10048, %v10070
      %10072 = vdwg.mxu0
      %v10073 = vsel %vm8349, %v10068, 0.0
      %vm10074 = vcmask 516096
      %v10075 = vsel %vm10074, %v10071, 0.0
      %v10076 = vadd.f32 %v10073, %v10075
      %v10077 = vrot.slane %v10076, 4
      %v10078 = vadd.f32 %v10076, %v10077
      %v10079 = vrot.slane %v10078, 2
      %v10080 = vadd.f32 %v10078, %v10079
      %v10081 = vrot.slane %v10080, 1
      %v10082 = vadd.f32 %v10080, %v10081
      %v10083 = vrcp.pop 9.0
      %v10084 = vmul.f32 9.0, %v10083
      %v10085 = vsub.f32 1.0, %v10084
      %v10086 = vmul.f32 %v10083, %v10085
      %v10087 = vadd.f32 %v10083, %v10086
      %vm10088 = vweird.f32 %v10083
      %v10089 = vsel %vm10088, %v10083, %v10087
      %v10090 = vmul.f32 %v10082, %v10089
      %v10091 = vsub.f32 %v10068, %v10090
      %v10092 = vsub.f32 %v10071, %v10090
      %v10093 = vmul.f32 %v10091, %v10091
      %v10094 = vmul.f32 %v10092, %v10092
      %v10095 = vsel %vm8349, %v10093, 0.0
      %v10096 = vsel %vm10074, %v10094, 0.0
      %v10097 = vadd.f32 %v10095, %v10096
      %v10098 = vrot.slane %v10097, 4
      %v10099 = vadd.f32 %v10097, %v10098
      %v10100 = vrot.slane %v10099, 2
      %v10101 = vadd.f32 %v10099, %v10100
      %v10102 = vrot.slane %v10101, 1
      %v10103 = vadd.f32 %v10101, %v10102
      %v10104 = vmul.f32 %v10103, %v10089
      %v10105 = vadd.f32 %v10104, 1e-05
      %v10106 = vrsqrt.pop %v10105
      %v10107 = vmul.f32 %v10106, %v10105
      %v10108 = vmul.f32 %v10107, %v10106
      %v10109 = vmul.f32 0.5, %v10108
      %v10110 = vsub.f32 1.5, %v10109
      %v10111 = vmul.f32 %v10106, %v10110
      %vm10112 = vweird.f32 %v10105
      %vm10113 = vweird.f32 %v10106
      %vm10114 = vmor %vm10112, %vm10113
      %v10115 = vsel %vm10114, %v10106, %v10111
      %v10116 = vmul.f32 %v10091, %v10115
      %v10117 = vmul.f32 %v10092, %v10115
      %v10119 = vperm.slane %v9330, 0
      %v10121 = vmul.f32 %v10116, %v10119
      %v10122 = vmul.f32 %v10117, %v10119
      %v10124 = vperm.slane %v9331, 0
      %v10126 = vadd.f32 %v10121, %v10124
      %v10127 = vadd.f32 %v10122, %v10124
      %vm10128 = vcmp.gt.f32.partialorder %v10126, 0.0
      %vm10129 = vcmp.gt.f32.partialorder %v10127, 0.0
      %v10130 = vmul.f32 %v10126, 0.2
      %v10131 = vmul.f32 %v10127, 0.2
      %v10132 = vsel %vm10128, %v10126, %v10130
      %v10133 = vsel %vm10129, %v10127, %v10131
      %v10136 = vrot.slane %v10132, 1
      %v10137 = vrot.slane %v10132, 2
      %v10138 = vrot.slane %v10132, 3
      %v10139 = vrot.slane %v10132, 4
      %v10140 = vrot.slane %v10132, 5
      %v10141 = vrot.slane %v10132, 6
      %v10142 = vrot.slane %v10132, 7
      %v10146 = vld [vmem:[%s15] sm:$0xff]
      %v10147 = vld [vmem:[%s15 + $0x8] sm:$0xff]
      %v10148 = vld [vmem:[%s15 + $0x10] sm:$0xff]
      %v10149 = vld [vmem:[%s15 + $0x18] sm:$0xff]
      %v10150 = vld [vmem:[%s15 + $0x20] sm:$0xff]
      %v10151 = vld [vmem:[%s15 + $0x28] sm:$0xff]
      %v10152 = vld [vmem:[%s15 + $0x30] sm:$0xff]
      %v10153 = vld [vmem:[%s15 + $0x38] sm:$0xff]
      %v10154 = vld [vmem:[%s15 + $0x40] sm:$0xff]
      %v10155 = vld [vmem:[%s15 + $0x48] sm:$0xff]
      %v10156 = vld [vmem:[%s15 + $0x50] sm:$0xff]
      %v10157 = vld [vmem:[%s15 + $0x58] sm:$0xff]
      %v10158 = vld [vmem:[%s15 + $0x60] sm:$0xff]
      %v10159 = vld [vmem:[%s15 + $0x68] sm:$0xff]
      %v10160 = vld [vmem:[%s15 + $0x70] sm:$0xff]
      %v10161 = vld [vmem:[%s15 + $0x78] sm:$0xff]
      %v10162 = vld [vmem:[%s15 + $0x80] sm:$0xff]
      %v10163 = vld [vmem:[%s15 + $0x88] sm:$0xff]
      %v10164 = vld [vmem:[%s15 + $0x90] sm:$0xff]
      %v10165 = vld [vmem:[%s15 + $0x98] sm:$0xff]
      %v10166 = vld [vmem:[%s15 + $0xa0] sm:$0xff]
      %v10167 = vld [vmem:[%s15 + $0xa8] sm:$0xff]
      %v10168 = vld [vmem:[%s15 + $0xb0] sm:$0xff]
      %v10169 = vld [vmem:[%s15 + $0xb8] sm:$0xff]
      %v10170 = vld [vmem:[%s15 + $0xc0] sm:$0xff]
      %v10171 = vld [vmem:[%s15 + $0xc8] sm:$0xff]
      %v10172 = vld [vmem:[%s15 + $0xd0] sm:$0xff]
      %v10173 = vld [vmem:[%s15 + $0xd8] sm:$0xff]
      %v10174 = vld [vmem:[%s15 + $0xe0] sm:$0xff]
      %v10175 = vld [vmem:[%s15 + $0xe8] sm:$0xff]
      %v10176 = vld [vmem:[%s15 + $0xf0] sm:$0xff]
      %v10177 = vld [vmem:[%s15 + $0xf8] sm:$0xff]
      %v10178 = vld [vmem:[%s15 + $0x100] sm:$0xff]
      %v10179 = vld [vmem:[%s15 + $0x108] sm:$0xff]
      %v10180 = vld [vmem:[%s15 + $0x110] sm:$0xff]
      %v10181 = vld [vmem:[%s15 + $0x118] sm:$0xff]
      %v10182 = vld [vmem:[%s15 + $0x120] sm:$0xff]
      %v10183 = vld [vmem:[%s15 + $0x128] sm:$0xff]
      %v10184 = vld [vmem:[%s15 + $0x130] sm:$0xff]
      %v10185 = vld [vmem:[%s15 + $0x138] sm:$0xff]
      %v10186 = vld [vmem:[%s15 + $0x140] sm:$0xff]
      %v10187 = vld [vmem:[%s15 + $0x148] sm:$0xff]
      %v10188 = vld [vmem:[%s15 + $0x150] sm:$0xff]
      %v10189 = vld [vmem:[%s15 + $0x158] sm:$0xff]
      %v10190 = vld [vmem:[%s15 + $0x160] sm:$0xff]
      %v10191 = vld [vmem:[%s15 + $0x168] sm:$0xff]
      %v10192 = vld [vmem:[%s15 + $0x170] sm:$0xff]
      %v10193 = vld [vmem:[%s15 + $0x178] sm:$0xff]
      %v10194 = vld [vmem:[%s15 + $0x180] sm:$0xff]
      %v10195 = vld [vmem:[%s15 + $0x188] sm:$0xff]
      %v10196 = vld [vmem:[%s15 + $0x190] sm:$0xff]
      %v10197 = vld [vmem:[%s15 + $0x198] sm:$0xff]
      %v10198 = vld [vmem:[%s15 + $0x1a0] sm:$0xff]
      %v10199 = vld [vmem:[%s15 + $0x1a8] sm:$0xff]
      %v10200 = vld [vmem:[%s15 + $0x1b0] sm:$0xff]
      %v10201 = vld [vmem:[%s15 + $0x1b8] sm:$0xff]
      %v10202 = vld [vmem:[%s15 + $0x1c0] sm:$0xff]
      %v10203 = vld [vmem:[%s15 + $0x1c8] sm:$0xff]
      %v10204 = vld [vmem:[%s15 + $0x1d0] sm:$0xff]
      %v10205 = vld [vmem:[%s15 + $0x1d8] sm:$0xff]
      %v10206 = vld [vmem:[%s15 + $0x1e0] sm:$0xff]
      %v10207 = vld [vmem:[%s15 + $0x1e8] sm:$0xff]
      %v10208 = vld [vmem:[%s15 + $0x1f0] sm:$0xff]
      %v10209 = vld [vmem:[%s15 + $0x1f8] sm:$0xff]
      %v10210 = vld [vmem:[%s15 + $0x200] sm:$0xff]
      %v10211 = vld [vmem:[%s15 + $0x208] sm:$0xff]
      %v10212 = vld [vmem:[%s15 + $0x210] sm:$0xff]
      %v10213 = vld [vmem:[%s15 + $0x218] sm:$0xff]
      %v10214 = vld [vmem:[%s15 + $0x220] sm:$0xff]
      %v10215 = vld [vmem:[%s15 + $0x228] sm:$0xff]
      %v10216 = vld [vmem:[%s15 + $0x230] sm:$0xff]
      %v10217 = vld [vmem:[%s15 + $0x238] sm:$0xff]
      %v10218 = vld [vmem:[%s15 + $0x240] sm:$0xff]
      %v10219 = vld [vmem:[%s15 + $0x248] sm:$0xff]
      %v10220 = vld [vmem:[%s15 + $0x250] sm:$0xff]
      %v10221 = vld [vmem:[%s15 + $0x258] sm:$0xff]
      %v10222 = vld [vmem:[%s15 + $0x260] sm:$0xff]
      %v10223 = vld [vmem:[%s15 + $0x268] sm:$0xff]
      %v10224 = vld [vmem:[%s15 + $0x270] sm:$0xff]
      %v10225 = vld [vmem:[%s15 + $0x278] sm:$0xff]
      %v10226 = vld [vmem:[%s15 + $0x280] sm:$0xff]
      %v10227 = vld [vmem:[%s15 + $0x288] sm:$0xff]
      %v10228 = vld [vmem:[%s15 + $0x290] sm:$0xff]
      %v10229 = vld [vmem:[%s15 + $0x298] sm:$0xff]
      %v10230 = vld [vmem:[%s15 + $0x2a0] sm:$0xff]
      %v10231 = vld [vmem:[%s15 + $0x2a8] sm:$0xff]
      %v10232 = vld [vmem:[%s15 + $0x2b0] sm:$0xff]
      %v10233 = vld [vmem:[%s15 + $0x2b8] sm:$0xff]
      %v10234 = vld [vmem:[%s15 + $0x2c0] sm:$0xff]
      %v10235 = vld [vmem:[%s15 + $0x2c8] sm:$0xff]
      %v10236 = vld [vmem:[%s15 + $0x2d0] sm:$0xff]
      %v10237 = vld [vmem:[%s15 + $0x2d8] sm:$0xff]
      %v10238 = vld [vmem:[%s15 + $0x2e0] sm:$0xff]
      %v10239 = vld [vmem:[%s15 + $0x2e8] sm:$0xff]
      %v10240 = vld [vmem:[%s15 + $0x2f0] sm:$0xff]
      %v10241 = vld [vmem:[%s15 + $0x2f8] sm:$0xff]
      %v10242 = vld [vmem:[%s15 + $0x300] sm:$0xff]
      %v10243 = vld [vmem:[%s15 + $0x308] sm:$0xff]
      %v10244 = vld [vmem:[%s15 + $0x310] sm:$0xff]
      %v10245 = vld [vmem:[%s15 + $0x318] sm:$0xff]
      %v10246 = vld [vmem:[%s15 + $0x320] sm:$0xff]
      %v10247 = vld [vmem:[%s15 + $0x328] sm:$0xff]
      %v10248 = vld [vmem:[%s15 + $0x330] sm:$0xff]
      %v10249 = vld [vmem:[%s15 + $0x338] sm:$0xff]
      %v10250 = vld [vmem:[%s15 + $0x340] sm:$0xff]
      %v10251 = vld [vmem:[%s15 + $0x348] sm:$0xff]
      %v10252 = vld [vmem:[%s15 + $0x350] sm:$0xff]
      %v10253 = vld [vmem:[%s15 + $0x358] sm:$0xff]
      %v10254 = vld [vmem:[%s15 + $0x360] sm:$0xff]
      %v10255 = vld [vmem:[%s15 + $0x368] sm:$0xff]
      %v10256 = vld [vmem:[%s15 + $0x370] sm:$0xff]
      %v10257 = vld [vmem:[%s15 + $0x378] sm:$0xff]
      %v10258 = vld [vmem:[%s15 + $0x380] sm:$0xff]
      %v10259 = vld [vmem:[%s15 + $0x388] sm:$0xff]
      %v10260 = vld [vmem:[%s15 + $0x390] sm:$0xff]
      %v10261 = vld [vmem:[%s15 + $0x398] sm:$0xff]
      %v10262 = vld [vmem:[%s15 + $0x3a0] sm:$0xff]
      %v10263 = vld [vmem:[%s15 + $0x3a8] sm:$0xff]
      %v10264 = vld [vmem:[%s15 + $0x3b0] sm:$0xff]
      %v10265 = vld [vmem:[%s15 + $0x3b8] sm:$0xff]
      %v10266 = vld [vmem:[%s15 + $0x3c0] sm:$0xff]
      %v10267 = vld [vmem:[%s15 + $0x3c8] sm:$0xff]
      %v10268 = vld [vmem:[%s15 + $0x3d0] sm:$0xff]
      %v10269 = vld [vmem:[%s15 + $0x3d8] sm:$0xff]
      %v10270 = vld [vmem:[%s15 + $0x3e0] sm:$0xff]
      %v10271 = vld [vmem:[%s15 + $0x3e8] sm:$0xff]
      %v10272 = vld [vmem:[%s15 + $0x3f0] sm:$0xff]
      %v10273 = vld [vmem:[%s15 + $0x3f8] sm:$0xff]
      %v10274 = vld [vmem:[#allocation2] sm:$0x1]
      %s10275 = scalar_lea.vmem [#allocation1], 1
      %10276 = vst [vmem:[%s10275] ss:$9 sm:$0xff] %v10138
      %s10277 = scalar_lea.vmem [#allocation1], 2
      %10278 = vst [vmem:[%s10277] ss:$9 sm:$0xff] %v10139
      %s10279 = scalar_lea.vmem [#allocation1], 3
      %10280 = vst [vmem:[%s10279] ss:$9 sm:$0xff] %v10140
      %v10281 = vld [vmem:[#allocation1] sm:$0xff]
      %10282 = vst [vmem:[%s10275] ss:$9 sm:$0xff] %v10132
      %10283 = vst [vmem:[%s10277] ss:$9 sm:$0xff] %v10136
      %10284 = vst [vmem:[%s10279] ss:$9 sm:$0xff] %v10137
      %v10285 = vld [vmem:[#allocation1] sm:$0xff]
      %10286 = vst [vmem:[%s10275] ss:$9 sm:$0xff] %v10138
      %10287 = vst [vmem:[%s10277] ss:$9 sm:$0xff] %v10139
      %10288 = vst [vmem:[%s10279] ss:$9 sm:$0xff] %v10140
      %v10289 = vld [vmem:[#allocation1] sm:$0xff]
      %10290 = vst [vmem:[%s10275] ss:$9 sm:$0xff] %v10141
      %10291 = vst [vmem:[%s10277] ss:$9 sm:$0xff] %v10142
      %10292 = vst [vmem:[%s10279] ss:$9 sm:$0xff] %v10133
      %v10293 = vld [vmem:[#allocation1] sm:$0xff]
      %10294 = vst [vmem:[%s10275] ss:$9 sm:$0xff] %v10138
      %10295 = vst [vmem:[%s10277] ss:$9 sm:$0xff] %v10139
      %10296 = vst [vmem:[%s10279] ss:$9 sm:$0xff] %v10140
      %v10297 = vld [vmem:[#allocation1] sm:$0xff]
      %v10303 = vperm.slane %v10139, 0
      %v10304 = vperm.slane %v10136, 0
      %v10305 = vperm.slane %v10142, 0
      %v10309 = vsel %vm876, %v10139, %v10281
      %v10310 = vsel %vm876, %v10136, %v10285
      %v10311 = vsel %vm876, %v10139, %v10289
      %v10312 = vsel %vm876, %v10142, %v10293
      %v10313 = vsel %vm876, %v10139, %v10297
      %vm10314 = vcmask 1043456
      %v10315 = vsel %vm10314, %v10309, %v10303
      %v10316 = vsel %vm10314, %v10310, %v10304
      %v10317 = vsel %vm10314, %v10311, %v10303
      %v10318 = vsel %vm10314, %v10312, %v10305
      %v10319 = vsel %vm10314, %v10313, %v10303
      %v10322 = vrot.slane %v10315, 2
      %v10323 = vrot.slane %v10316, 2
      %vm10324 = vmor %vm876, %vm1983
      %vm10325 = vmor %vm10324, %vm1987
      %vm10326 = vmor %vm10325, %vm1991
      %v10327 = vrot.slane %v10315, 7
      %v10328 = vrot.slane %v10327, 2
      %v10329 = vrot.slane %v10322, 7
      %v10330 = vsel %vm10326, %v10328, %v10329
      %v10331 = vrot.slane %v10316, 7
      %v10332 = vrot.slane %v10331, 2
      %v10333 = vrot.slane %v10323, 7
      %v10334 = vsel %vm10326, %v10332, %v10333
      %10335 = vst.sshfl [vmem:[#allocation1] sm:$0xff pattern:$0x73625140] %v10315
      %s10336 = scalar_lea.vmem [#allocation1], 1
      %v10337 = vld [vmem:[%s10336] ss:$4 sm:$0xff]
      %10338 = vst.sshfl [vmem:[#allocation1 + $0x20] sm:$0xff pattern:$0x73625140] %v10316
      %s10339 = scalar_lea.vmem [#allocation1], 33
      %v10340 = vld [vmem:[%s10339] ss:$4 sm:$0xff]
      %10341 = vst.sshfl [vmem:[#allocation1] sm:$0xff pattern:$0x73625140] %v10315
      %s10342 = scalar_lea.vmem [#allocation1], 1
      %v10343 = vld [vmem:[%s10342] ss:$4 sm:$0xff]
      %s10344 = scalar_lea.vmem [#allocation1], 2
      %v10345 = vld [vmem:[%s10344] ss:$4 sm:$0xff]
      %10346 = vst.sshfl [vmem:[#allocation1 + $0x20] sm:$0xff pattern:$0x73625140] %v10316
      %s10347 = scalar_lea.vmem [#allocation1], 33
      %v10348 = vld [vmem:[%s10347] ss:$4 sm:$0xff]
      %s10349 = scalar_lea.vmem [#allocation1], 34
      %v10350 = vld [vmem:[%s10349] ss:$4 sm:$0xff]
      %v10351 = vrot.slane %v10343, 7
      %v10352 = vrot.slane %v10351, 2
      %v10353 = vrot.slane %v10345, 7
      %v10354 = vsel %vm10326, %v10352, %v10353
      %v10355 = vrot.slane %v10348, 7
      %v10356 = vrot.slane %v10355, 2
      %v10357 = vrot.slane %v10350, 7
      %v10358 = vsel %vm10326, %v10356, %v10357
      %v10360 = vrot.slane %v10317, 2
      %v10361 = vrot.slane %v10317, 7
      %v10362 = vrot.slane %v10361, 2
      %v10363 = vrot.slane %v10360, 7
      %v10364 = vsel %vm10326, %v10362, %v10363
      %10365 = vst.sshfl [vmem:[#allocation1] sm:$0xff pattern:$0x73625140] %v10316
      %s10366 = scalar_lea.vmem [#allocation1], 1
      %v10367 = vld [vmem:[%s10366] ss:$4 sm:$0xff]
      %10368 = vst.sshfl [vmem:[#allocation1 + $0x20] sm:$0xff pattern:$0x73625140] %v10317
      %s10369 = scalar_lea.vmem [#allocation1], 33
      %v10370 = vld [vmem:[%s10369] ss:$4 sm:$0xff]
      %10371 = vst.sshfl [vmem:[#allocation1] sm:$0xff pattern:$0x73625140] %v10316
      %s10372 = scalar_lea.vmem [#allocation1], 1
      %v10373 = vld [vmem:[%s10372] ss:$4 sm:$0xff]
      %s10374 = scalar_lea.vmem [#allocation1], 2
      %v10375 = vld [vmem:[%s10374] ss:$4 sm:$0xff]
      %10376 = vst.sshfl [vmem:[#allocation1 + $0x20] sm:$0xff pattern:$0x73625140] %v10317
      %s10377 = scalar_lea.vmem [#allocation1], 33
      %v10378 = vld [vmem:[%s10377] ss:$4 sm:$0xff]
      %s10379 = scalar_lea.vmem [#allocation1], 34
      %v10380 = vld [vmem:[%s10379] ss:$4 sm:$0xff]
      %v10381 = vrot.slane %v10373, 7
      %v10382 = vrot.slane %v10381, 2
      %v10383 = vrot.slane %v10375, 7
      %v10384 = vsel %vm10326, %v10382, %v10383
      %v10385 = vrot.slane %v10378, 7
      %v10386 = vrot.slane %v10385, 2
      %v10387 = vrot.slane %v10380, 7
      %v10388 = vsel %vm10326, %v10386, %v10387
      %v10390 = vrot.slane %v10318, 2
      %v10391 = vrot.slane %v10318, 7
      %v10392 = vrot.slane %v10391, 2
      %v10393 = vrot.slane %v10390, 7
      %v10394 = vsel %vm10326, %v10392, %v10393
      %10395 = vst.sshfl [vmem:[#allocation1] sm:$0xff pattern:$0x73625140] %v10317
      %s10396 = scalar_lea.vmem [#allocation1], 1
      %v10397 = vld [vmem:[%s10396] ss:$4 sm:$0xff]
      %10398 = vst.sshfl [vmem:[#allocation1 + $0x20] sm:$0xff pattern:$0x73625140] %v10318
      %s10399 = scalar_lea.vmem [#allocation1], 33
      %v10400 = vld [vmem:[%s10399] ss:$4 sm:$0xff]
      %10401 = vst.sshfl [vmem:[#allocation1] sm:$0xff pattern:$0x73625140] %v10317
      %s10402 = scalar_lea.vmem [#allocation1], 1
      %v10403 = vld [vmem:[%s10402] ss:$4 sm:$0xff]
      %s10404 = scalar_lea.vmem [#allocation1], 2
      %v10405 = vld [vmem:[%s10404] ss:$4 sm:$0xff]
      %10406 = vst.sshfl [vmem:[#allocation1 + $0x20] sm:$0xff pattern:$0x73625140] %v10318
      %s10407 = scalar_lea.vmem [#allocation1], 33
      %v10408 = vld [vmem:[%s10407] ss:$4 sm:$0xff]
      %s10409 = scalar_lea.vmem [#allocation1], 34
      %v10410 = vld [vmem:[%s10409] ss:$4 sm:$0xff]
      %v10411 = vrot.slane %v10403, 7
      %v10412 = vrot.slane %v10411, 2
      %v10413 = vrot.slane %v10405, 7
      %v10414 = vsel %vm10326, %v10412, %v10413
      %v10415 = vrot.slane %v10408, 7
      %v10416 = vrot.slane %v10415, 2
      %v10417 = vrot.slane %v10410, 7
      %v10418 = vsel %vm10326, %v10416, %v10417
      %v10420 = vrot.slane %v10319, 2
      %v10421 = vrot.slane %v10319, 7
      %v10422 = vrot.slane %v10421, 2
      %v10423 = vrot.slane %v10420, 7
      %v10424 = vsel %vm10326, %v10422, %v10423
      %10425 = vst.sshfl [vmem:[#allocation1] sm:$0xff pattern:$0x73625140] %v10318
      %s10426 = scalar_lea.vmem [#allocation1], 1
      %v10427 = vld [vmem:[%s10426] ss:$4 sm:$0xff]
      %10428 = vst.sshfl [vmem:[#allocation1 + $0x20] sm:$0xff pattern:$0x73625140] %v10319
      %s10429 = scalar_lea.vmem [#allocation1], 33
      %v10430 = vld [vmem:[%s10429] ss:$4 sm:$0xff]
      %10431 = vst.sshfl [vmem:[#allocation1] sm:$0xff pattern:$0x73625140] %v10318
      %s10432 = scalar_lea.vmem [#allocation1], 1
      %v10433 = vld [vmem:[%s10432] ss:$4 sm:$0xff]
      %s10434 = scalar_lea.vmem [#allocation1], 2
      %v10435 = vld [vmem:[%s10434] ss:$4 sm:$0xff]
      %10436 = vst.sshfl [vmem:[#allocation1 + $0x20] sm:$0xff pattern:$0x73625140] %v10319
      %s10437 = scalar_lea.vmem [#allocation1], 33
      %v10438 = vld [vmem:[%s10437] ss:$4 sm:$0xff]
      %s10439 = scalar_lea.vmem [#allocation1], 34
      %v10440 = vld [vmem:[%s10439] ss:$4 sm:$0xff]
      %v10441 = vrot.slane %v10433, 7
      %v10442 = vrot.slane %v10441, 2
      %v10443 = vrot.slane %v10435, 7
      %v10444 = vsel %vm10326, %v10442, %v10443
      %v10445 = vrot.slane %v10438, 7
      %v10446 = vrot.slane %v10445, 2
      %v10447 = vrot.slane %v10440, 7
      %v10448 = vsel %vm10326, %v10446, %v10447
      %10449 = vst [vmem:[#allocation1] ss:$4 sm:$0xff] %v10315
      %s10450 = scalar_lea.vmem [#allocation1], 1
      %10451 = vst [vmem:[%s10450] ss:$4 sm:$0xff] %v10316
      %v10452 = vld.sshfl [vmem:[#allocation1] sm:$0xff pattern:$0x73625140]
      %10454 = vst [vmem:[#allocation1] ss:$4 sm:$0xff] %v10330
      %s10455 = scalar_lea.vmem [#allocation1], 1
      %10456 = vst [vmem:[%s10455] ss:$4 sm:$0xff] %v10334
      %v10457 = vld.sshfl [vmem:[#allocation1] sm:$0xff pattern:$0x73625140]
      %10458 = vrot.lane.b32.xlu0 %v10457, 64
      %v10459 = vpop.permute.xlu0 %10458
      %10461 = vst [vmem:[#allocation1] ss:$4 sm:$0xff] %v10337
      %s10462 = scalar_lea.vmem [#allocation1], 1
      %10463 = vst [vmem:[%s10462] ss:$4 sm:$0xff] %v10340
      %v10464 = vld.sshfl [vmem:[#allocation1] sm:$0xff pattern:$0x73625140]
      %10466 = vst [vmem:[#allocation1] ss:$4 sm:$0xff] %v10354
      %s10467 = scalar_lea.vmem [#allocation1], 1
      %10468 = vst [vmem:[%s10467] ss:$4 sm:$0xff] %v10358
      %v10469 = vld.sshfl [vmem:[#allocation1] sm:$0xff pattern:$0x73625140]
      %10470 = vrot.lane.b32.xlu0 %v10469, 64
      %v10471 = vpop.permute.xlu0 %10470
      %10473 = vst [vmem:[#allocation1] ss:$4 sm:$0xff] %v10316
      %s10474 = scalar_lea.vmem [#allocation1], 1
      %10475 = vst [vmem:[%s10474] ss:$4 sm:$0xff] %v10317
      %v10476 = vld.sshfl [vmem:[#allocation1] sm:$0xff pattern:$0x73625140]
      %10478 = vst [vmem:[#allocation1] ss:$4 sm:$0xff] %v10334
      %s10479 = scalar_lea.vmem [#allocation1], 1
      %10480 = vst [vmem:[%s10479] ss:$4 sm:$0xff] %v10364
      %v10481 = vld.sshfl [vmem:[#allocation1] sm:$0xff pattern:$0x73625140]
      %10482 = vrot.lane.b32.xlu0 %v10481, 64
      %v10483 = vpop.permute.xlu0 %10482
      %10485 = vst [vmem:[#allocation1] ss:$4 sm:$0xff] %v10367
      %s10486 = scalar_lea.vmem [#allocation1], 1
      %10487 = vst [vmem:[%s10486] ss:$4 sm:$0xff] %v10370
      %v10488 = vld.sshfl [vmem:[#allocation1] sm:$0xff pattern:$0x73625140]
      %10490 = vst [vmem:[#allocation1] ss:$4 sm:$0xff] %v10384
      %s10491 = scalar_lea.vmem [#allocation1], 1
      %10492 = vst [vmem:[%s10491] ss:$4 sm:$0xff] %v10388
      %v10493 = vld.sshfl [vmem:[#allocation1] sm:$0xff pattern:$0x73625140]
      %10494 = vrot.lane.b32.xlu0 %v10493, 64
      %v10495 = vpop.permute.xlu0 %10494
      %10497 = vst [vmem:[#allocation1] ss:$4 sm:$0xff] %v10317
      %s10498 = scalar_lea.vmem [#allocation1], 1
      %10499 = vst [vmem:[%s10498] ss:$4 sm:$0xff] %v10318
      %v10500 = vld.sshfl [vmem:[#allocation1] sm:$0xff pattern:$0x73625140]
      %10502 = vst [vmem:[#allocation1] ss:$4 sm:$0xff] %v10364
      %s10503 = scalar_lea.vmem [#allocation1], 1
      %10504 = vst [vmem:[%s10503] ss:$4 sm:$0xff] %v10394
      %v10505 = vld.sshfl [vmem:[#allocation1] sm:$0xff pattern:$0x73625140]
      %10506 = vrot.lane.b32.xlu0 %v10505, 64
      %v10507 = vpop.permute.xlu0 %10506
      %10509 = vst [vmem:[#allocation1] ss:$4 sm:$0xff] %v10397
      %s10510 = scalar_lea.vmem [#allocation1], 1
      %10511 = vst [vmem:[%s10510] ss:$4 sm:$0xff] %v10400
      %v10512 = vld.sshfl [vmem:[#allocation1] sm:$0xff pattern:$0x73625140]
      %10514 = vst [vmem:[#allocation1] ss:$4 sm:$0xff] %v10414
      %s10515 = scalar_lea.vmem [#allocation1], 1
      %10516 = vst [vmem:[%s10515] ss:$4 sm:$0xff] %v10418
      %v10517 = vld.sshfl [vmem:[#allocation1] sm:$0xff pattern:$0x73625140]
      %10518 = vrot.lane.b32.xlu0 %v10517, 64
      %v10519 = vpop.permute.xlu0 %10518
      %10521 = vst [vmem:[#allocation1] ss:$4 sm:$0xff] %v10318
      %s10522 = scalar_lea.vmem [#allocation1], 1
      %10523 = vst [vmem:[%s10522] ss:$4 sm:$0xff] %v10319
      %v10524 = vld.sshfl [vmem:[#allocation1] sm:$0xff pattern:$0x73625140]
      %10526 = vst [vmem:[#allocation1] ss:$4 sm:$0xff] %v10394
      %s10527 = scalar_lea.vmem [#allocation1], 1
      %10528 = vst [vmem:[%s10527] ss:$4 sm:$0xff] %v10424
      %v10529 = vld.sshfl [vmem:[#allocation1] sm:$0xff pattern:$0x73625140]
      %10530 = vrot.lane.b32.xlu0 %v10529, 64
      %v10531 = vpop.permute.xlu0 %10530
      %10533 = vst [vmem:[#allocation1] ss:$4 sm:$0xff] %v10427
      %s10534 = scalar_lea.vmem [#allocation1], 1
      %10535 = vst [vmem:[%s10534] ss:$4 sm:$0xff] %v10430
      %v10536 = vld.sshfl [vmem:[#allocation1] sm:$0xff pattern:$0x73625140]
      %10538 = vst [vmem:[#allocation1] ss:$4 sm:$0xff] %v10444
      %s10539 = scalar_lea.vmem [#allocation1], 1
      %10540 = vst [vmem:[%s10539] ss:$4 sm:$0xff] %v10448
      %v10541 = vld.sshfl [vmem:[#allocation1] sm:$0xff pattern:$0x73625140]
      %10542 = vrot.lane.b32.xlu0 %v10541, 64
      %v10543 = vpop.permute.xlu0 %10542
      %v10545 = vsel %vm8349, %v10452, %v10459
      %v10546 = vsel %vm8349, %v10464, %v10471
      %v10547 = vsel %vm8349, %v10476, %v10483
      %v10548 = vsel %vm8349, %v10488, %v10495
      %v10549 = vsel %vm8349, %v10500, %v10507
      %v10550 = vsel %vm8349, %v10512, %v10519
      %v10551 = vsel %vm8349, %v10524, %v10531
      %v10552 = vsel %vm8349, %v10536, %v10543
      %v10554 = vperm.slane %v10274, 0
      %10556 = vmatpush.msra.mxu0 %v10161
      %10557 = vmatpush.msra.mxu0 %v10160
      %10558 = vmatpush.msra.mxu0 %v10159
      %10559 = vmatpush.msra.mxu0 %v10158
      %10560 = vmatpush.msra.mxu0 %v10157
      %10561 = vmatpush.msra.mxu0 %v10156
      %10562 = vmatpush.msra.mxu0 %v10155
      %10563 = vmatpush.msra.mxu0 %v10154
      %10564 = vmatpush.msra.mxu0 %v10153
      %10565 = vmatpush.msra.mxu0 %v10152
      %10566 = vmatpush.msra.mxu0 %v10151
      %10567 = vmatpush.msra.mxu0 %v10150
      %10568 = vmatpush.msra.mxu0 %v10149
      %10569 = vmatpush.msra.mxu0 %v10148
      %10570 = vmatpush.msra.mxu0 %v10147
      %10571 = vmatpush.msra.mxu0 %v10146
      %10572 = vmatmul.f32.gmra.mxu0 %v10545
      %v10573 = vpop.f32.mrf.mxu0
      %v10574 = vadd.f32 %v10554, %v10573
      %10575 = vdwg.mxu0
      %10576 = vmatpush.msra.mxu0 %v10177
      %10577 = vmatpush.msra.mxu0 %v10176
      %10578 = vmatpush.msra.mxu0 %v10175
      %10579 = vmatpush.msra.mxu0 %v10174
      %10580 = vmatpush.msra.mxu0 %v10173
      %10581 = vmatpush.msra.mxu0 %v10172
      %10582 = vmatpush.msra.mxu0 %v10171
      %10583 = vmatpush.msra.mxu0 %v10170
      %10584 = vmatpush.msra.mxu0 %v10169
      %10585 = vmatpush.msra.mxu0 %v10168
      %10586 = vmatpush.msra.mxu0 %v10167
      %10587 = vmatpush.msra.mxu0 %v10166
      %10588 = vmatpush.msra.mxu0 %v10165
      %10589 = vmatpush.msra.mxu0 %v10164
      %10590 = vmatpush.msra.mxu0 %v10163
      %10591 = vmatpush.msra.mxu0 %v10162
      %10592 = vmatmul.f32.gmra.mxu0 %v10546
      %v10593 = vpop.f32.mrf.mxu0
      %v10594 = vadd.f32 %v10574, %v10593
      %10595 = vdwg.mxu0
      %10596 = vmatpush.msra.mxu0 %v10193
      %10597 = vmatpush.msra.mxu0 %v10192
      %10598 = vmatpush.msra.mxu0 %v10191
      %10599 = vmatpush.msra.mxu0 %v10190
      %10600 = vmatpush.msra.mxu0 %v10189
      %10601 = vmatpush.msra.mxu0 %v10188
      %10602 = vmatpush.msra.mxu0 %v10187
      %10603 = vmatpush.msra.mxu0 %v10186
      %10604 = vmatpush.msra.mxu0 %v10185
      %10605 = vmatpush.msra.mxu0 %v10184
      %10606 = vmatpush.msra.mxu0 %v10183
      %10607 = vmatpush.msra.mxu0 %v10182
      %10608 = vmatpush.msra.mxu0 %v10181
      %10609 = vmatpush.msra.mxu0 %v10180
      %10610 = vmatpush.msra.mxu0 %v10179
      %10611 = vmatpush.msra.mxu0 %v10178
      %10612 = vmatmul.f32.gmra.mxu0 %v10547
      %v10613 = vpop.f32.mrf.mxu0
      %v10614 = vadd.f32 %v10594, %v10613
      %10615 = vdwg.mxu0
      %10616 = vmatpush.msra.mxu0 %v10209
      %10617 = vmatpush.msra.mxu0 %v10208
      %10618 = vmatpush.msra.mxu0 %v10207
      %10619 = vmatpush.msra.mxu0 %v10206
      %10620 = vmatpush.msra.mxu0 %v10205
      %10621 = vmatpush.msra.mxu0 %v10204
      %10622 = vmatpush.msra.mxu0 %v10203
      %10623 = vmatpush.msra.mxu0 %v10202
      %10624 = vmatpush.msra.mxu0 %v10201
      %10625 = vmatpush.msra.mxu0 %v10200
      %10626 = vmatpush.msra.mxu0 %v10199
      %10627 = vmatpush.msra.mxu0 %v10198
      %10628 = vmatpush.msra.mxu0 %v10197
      %10629 = vmatpush.msra.mxu0 %v10196
      %10630 = vmatpush.msra.mxu0 %v10195
      %10631 = vmatpush.msra.mxu0 %v10194
      %10632 = vmatmul.f32.gmra.mxu0 %v10548
      %v10633 = vpop.f32.mrf.mxu0
      %v10634 = vadd.f32 %v10614, %v10633
      %10635 = vdwg.mxu0
      %10636 = vmatpush.msra.mxu0 %v10225
      %10637 = vmatpush.msra.mxu0 %v10224
      %10638 = vmatpush.msra.mxu0 %v10223
      %10639 = vmatpush.msra.mxu0 %v10222
      %10640 = vmatpush.msra.mxu0 %v10221
      %10641 = vmatpush.msra.mxu0 %v10220
      %10642 = vmatpush.msra.mxu0 %v10219
      %10643 = vmatpush.msra.mxu0 %v10218
      %10644 = vmatpush.msra.mxu0 %v10217
      %10645 = vmatpush.msra.mxu0 %v10216
      %10646 = vmatpush.msra.mxu0 %v10215
      %10647 = vmatpush.msra.mxu0 %v10214
      %10648 = vmatpush.msra.mxu0 %v10213
      %10649 = vmatpush.msra.mxu0 %v10212
      %10650 = vmatpush.msra.mxu0 %v10211
      %10651 = vmatpush.msra.mxu0 %v10210
      %10652 = vmatmul.f32.gmra.mxu0 %v10549
      %v10653 = vpop.f32.mrf.mxu0
      %v10654 = vadd.f32 %v10634, %v10653
      %10655 = vdwg.mxu0
      %10656 = vmatpush.msra.mxu0 %v10241
      %10657 = vmatpush.msra.mxu0 %v10240
      %10658 = vmatpush.msra.mxu0 %v10239
      %10659 = vmatpush.msra.mxu0 %v10238
      %10660 = vmatpush.msra.mxu0 %v10237
      %10661 = vmatpush.msra.mxu0 %v10236
      %10662 = vmatpush.msra.mxu0 %v10235
      %10663 = vmatpush.msra.mxu0 %v10234
      %10664 = vmatpush.msra.mxu0 %v10233
      %10665 = vmatpush.msra.mxu0 %v10232
      %10666 = vmatpush.msra.mxu0 %v10231
      %10667 = vmatpush.msra.mxu0 %v10230
      %10668 = vmatpush.msra.mxu0 %v10229
      %10669 = vmatpush.msra.mxu0 %v10228
      %10670 = vmatpush.msra.mxu0 %v10227
      %10671 = vmatpush.msra.mxu0 %v10226
      %10672 = vmatmul.f32.gmra.mxu0 %v10550
      %v10673 = vpop.f32.mrf.mxu0
      %v10674 = vadd.f32 %v10654, %v10673
      %10675 = vdwg.mxu0
      %10676 = vmatpush.msra.mxu0 %v10257
      %10677 = vmatpush.msra.mxu0 %v10256
      %10678 = vmatpush.msra.mxu0 %v10255
      %10679 = vmatpush.msra.mxu0 %v10254
      %10680 = vmatpush.msra.mxu0 %v10253
      %10681 = vmatpush.msra.mxu0 %v10252
      %10682 = vmatpush.msra.mxu0 %v10251
      %10683 = vmatpush.msra.mxu0 %v10250
      %10684 = vmatpush.msra.mxu0 %v10249
      %10685 = vmatpush.msra.mxu0 %v10248
      %10686 = vmatpush.msra.mxu0 %v10247
      %10687 = vmatpush.msra.mxu0 %v10246
      %10688 = vmatpush.msra.mxu0 %v10245
      %10689 = vmatpush.msra.mxu0 %v10244
      %10690 = vmatpush.msra.mxu0 %v10243
      %10691 = vmatpush.msra.mxu0 %v10242
      %10692 = vmatmul.f32.gmra.mxu0 %v10551
      %v10693 = vpop.f32.mrf.mxu0
      %v10694 = vadd.f32 %v10674, %v10693
      %10695 = vdwg.mxu0
      %10696 = vmatpush.msra.mxu0 %v10273
      %10697 = vmatpush.msra.mxu0 %v10272
      %10698 = vmatpush.msra.mxu0 %v10271
      %10699 = vmatpush.msra.mxu0 %v10270
      %10700 = vmatpush.msra.mxu0 %v10269
      %10701 = vmatpush.msra.mxu0 %v10268
      %10702 = vmatpush.msra.mxu0 %v10267
      %10703 = vmatpush.msra.mxu0 %v10266
      %10704 = vmatpush.msra.mxu0 %v10265
      %10705 = vmatpush.msra.mxu0 %v10264
      %10706 = vmatpush.msra.mxu0 %v10263
      %10707 = vmatpush.msra.mxu0 %v10262
      %10708 = vmatpush.msra.mxu0 %v10261
      %10709 = vmatpush.msra.mxu0 %v10260
      %10710 = vmatpush.msra.mxu0 %v10259
      %10711 = vmatpush.msra.mxu0 %v10258
      %10712 = vmatmul.f32.gmra.mxu0 %v10552
      %v10713 = vpop.f32.mrf.mxu0
      %v10714 = vadd.f32 %v10694, %v10713
      %10715 = vdwg.mxu0
      %v10716 = vmul.f32 %v10714, 0.5
      %v10717 = vtanh.pop %v10716
      %v10718 = vadd.f32 %v10717, 1.0
      %v10719 = vmul.f32 %v10718, 0.5
      %vm10720 = vcmask 3072
      %10721 = vst.msk [vmem:[%s548] sm:$0xf] %vm10720, %v10719
      %p10722 = scmp.lt.s32.totalorder %s30, 1
      %s10723 = scalar_select %p10722, %s30, 1
      %s10724 = smul.addr %s10723, 4
      %s10725 = scalar_lea.vmem %s17, %s10724
      // Predicated region
      $region89: #{discriminator_forward.1} parent=87 // pred_check
        %p10726 = pneg %p410
      $region90: #{discriminator_forward.1} parent=87 // pred_check_branch
        %10728 = sbr.rel (%p10726) target = $region92
      $region91: #{discriminator_forward.1} parent=87 // pred_region
        _
      $region92: #{discriminator_forward.1} parent=87 // pred_fallthru
        _
    $region88: #{discriminator_forward.1} parent=5 // pred_fallthru
      _
    %p10729 = scmp.le.s32.totalorder 2, %s25
    // Predicated region
    $region93: #{discriminator_forward.1} parent=5 // pred_check
      %p10730 = pneg %p10729
    $region94: #{discriminator_forward.1} parent=5 // pred_check_branch
      %10732 = sbr.rel (%p10730) target = $region96
    $region95: #{discriminator_forward.1} parent=5 // pred_region
      %s10733 = ssub.s32 %s25, 2
      // Predicated region
      $region97: #{discriminator_forward.1} parent=95 // pred_check
        %p10734 = pneg %p416
      $region98: #{discriminator_forward.1} parent=95 // pred_check_branch
        %10736 = sbr.rel (%p10734) target = $region100
      $region99: #{discriminator_forward.1} parent=95 // pred_region
        %p10737 = scmp.lt.s32.totalorder %s31, 1
        %s10738 = scalar_select %p10737, %s31, 1
        %s10739 = smul.addr %s10738, 4
        %s10740 = scalar_lea.vmem %s17, %s10739
      $region100: #{discriminator_forward.1} parent=95 // pred_fallthru
        _
    $region96: #{discriminator_forward.1} parent=5 // pred_fallthru
      _
  $region6: #{discriminator_forward.1} parent=0 // loop_footer
    %s29 = sadd.s32 1, %s25
  $region7: #{discriminator_forward.1} parent=0 // loop_footer_branch
    %24 = sbr.rel target = $region3
  $region8: #{discriminator_forward.1} parent=0 // loop_exit
    _

</llo_original>
